<compile_context>
chip_gen: v7x
topology: tpu7x:2x2x1
jax: 0.10.0
libtpu: 0.0.40
codegen_flags: <defaults>
</compile_context>

<pallas_src>
import functools

import jax
import jax.numpy as jnp
from jax.experimental import pallas as pl
from jax.experimental.pallas import tpu as pltpu

NEG_SLOPE = 0.01  # torch.nn.LeakyReLU default negative_slope


def _drb_kernel(x_ref, m_ref, w0, w1, w2, w3, w4, b_ref, o_ref, act_ref,
                *, H, W, F, W_pad, res_scale):
    """Fused DenseResidualBlock for one batch element.

    x_ref:   (1, F, (H+2)*W_pad)   spatially zero-padded input, flattened spatial
    m_ref:   (1, H*W_pad)          1.0 where the flattened column is a valid pixel
    w0..w4:  (9, F, (i+1)*F)       per-tap conv weights, tap t = kh*3 + kw
    b_ref:   (5, F, 1)             biases
    o_ref:   (1, F, H*W_pad)       output (valid columns sliced out in wrapper)
    act_ref: (5F, (H+2)*W_pad + 2) channel-major dense-concat scratch
    """
    w_refs = (w0, w1, w2, w3, w4)
    HWp = H * W_pad                 # flattened output length (incl. 2 pad cols/row)
    Lx = (H + 2) * W_pad            # flattened padded-input length
    L = act_ref.shape[1]
    interior = W_pad + 1            # scratch offset of output position p = 0

    # ---- per-image scratch init: halo only (interior is fully overwritten) ----
    act_ref[:, 0:interior] = jnp.zeros((5 * F, interior), act_ref.dtype)
    act_ref[:, interior + HWp:L] = jnp.zeros((5 * F, L - interior - HWp),
                                             act_ref.dtype)
    # Input already carries its zero halo -> one aligned copy into channel block 0.
    act_ref[0:F, 0:Lx] = x_ref[0].astype(act_ref.dtype)

    valid = m_ref[...] > 0.5        # (1, HWp): False on the 2 pad columns per row

    for i in range(5):
        cin = (i + 1) * F
        w = w_refs[i]
        acc = None
        # 9 accumulated matmuls over contiguous shifted slices (no im2col).
        for kh in range(3):
            for kw in range(3):
                t = kh * 3 + kw
                off = kh * W_pad + kw
                tap = act_ref[0:cin, off:off + HWp]             # (cin, HWp)
                d = jnp.dot(w[t], tap, preferred_element_type=jnp.float32)
                acc = d if acc is None else acc + d             # (F, HWp) f32
        acc = acc + b_ref[i].astype(jnp.float32)                # + (F, 1) bias

        if i < 4:
            y = jnp.where(acc > 0, acc, NEG_SLOPE * acc)        # LeakyReLU (f32)
            # Keep the pad columns exactly zero so the next layer's halo is valid.
            y = jnp.where(valid, y, 0.0)
            act_ref[(i + 1) * F:(i + 2) * F,
                    interior:interior + HWp] = y.astype(act_ref.dtype)
        else:
            # Final layer: no non-linearity, scaled residual (read x fresh, f32).
            x0 = x_ref[0, :, interior:interior + HWp].astype(jnp.float32)
            o_ref[0] = (acc * res_scale + x0).astype(o_ref.dtype)


def dense_residual_block(x_nchw, params, res_scale=0.2, *,
                         matmul_dtype=jnp.float32):
    """Forward pass matching PyTorch DenseResidualBlock. x_nchw: (N, C, H, W)."""
    N, C, H, W = x_nchw.shape
    F = C
    W_pad = W + 2
    Lx = (H + 2) * W_pad
    HWp = H * W_pad
    L = Lx + 2                      # +2 covers the (kh=2, kw=2) tap-read overhang

    # Layout plumbing: zero-pad spatially once in HBM, flatten padded spatial.
    x_pad = jnp.pad(x_nchw, ((0, 0), (0, 0), (1, 1), (1, 1)))
    x_flat = x_pad.reshape(N, F, Lx)

    # HWIO (3,3,cin,F) -> per-tap (9, F, cin), tap order t = kh*3 + kw.
    w_taps = [jnp.transpose(w.reshape(9, w.shape[2], F), (0, 2, 1))
              .astype(matmul_dtype) for (w, _) in params]
    b = jnp.stack([bb.astype(jnp.float32) for (_, bb) in params],
                  axis=0).reshape(5, F, 1)

    # Valid-column mask over the flattened padded spatial axis (host-computed).
    col = jnp.arange(HWp, dtype=jnp.int32) % W_pad
    mask = (col < W).astype(jnp.float32).reshape(1, HWp)

    act_dtype = matmul_dtype
    kernel = functools.partial(_drb_kernel, H=H, W=W, F=F, W_pad=W_pad,
                               res_scale=float(res_scale))

    in_specs = [pl.BlockSpec((1, F, Lx), lambda n: (n, 0, 0)),
                pl.BlockSpec((1, HWp), lambda n: (0, 0))]
    in_specs += [pl.BlockSpec(w.shape, lambda n: (0, 0, 0)) for w in w_taps]
    in_specs += [pl.BlockSpec((5, F, 1), lambda n: (0, 0, 0))]

    # Explicit VMEM budget: scratch + double-buffered in/out blocks + weights + slack.
    act_isz = jnp.dtype(act_dtype).itemsize
    x_isz = jnp.dtype(x_nchw.dtype).itemsize
    scratch_b = 5 * F * L * act_isz
    in_b = F * Lx * x_isz
    out_b = F * HWp * x_isz
    w_b = 9 * 15 * F * F * act_isz
    work_b = 4 * F * HWp * 4 + (1 << 20)
    vmem_limit = int(min(max(scratch_b + 2 * (in_b + out_b) + 2 * w_b + work_b,
                             16 << 20), 100 << 20))

    flops = 2 * N * H * W * 9 * 15 * F * F
    bytes_accessed = int(N * (in_b + out_b) + 5 * w_b // 2 * 2
                         + 5 * F * 4 + HWp * 4)

    out_flat = pl.pallas_call(
        kernel,
        out_shape=jax.ShapeDtypeStruct((N, F, HWp), x_nchw.dtype),
        grid=(N,),
        in_specs=in_specs,
        out_specs=pl.BlockSpec((1, F, HWp), lambda n: (n, 0, 0)),
        scratch_shapes=[pltpu.VMEM((5 * F, L), act_dtype)],
        compiler_params=pltpu.CompilerParams(
            dimension_semantics=("parallel",),
            vmem_limit_bytes=vmem_limit),
        cost_estimate=pl.CostEstimate(flops=flops, transcendentals=0,
                                      bytes_accessed=bytes_accessed),
    )(x_flat, mask, *w_taps, b)

    # Drop the 2 pad columns per row -> NCHW, matching PyTorch.
    return out_flat.reshape(N, F, H, W_pad)[:, :, :, :W]


def init_dense_residual_block_params(key, filters):
    """Deterministic param init; layer i has Cin = (i+1)*filters, Cout = filters."""
    params = []
    for i in range(5):
        cin = (i + 1) * filters
        kw_key, kb_key, key = jax.random.split(key, 3)
        fan_in = cin * 3 * 3
        bound = 1.0 / jnp.sqrt(fan_in)
        w = jax.random.uniform(
            kw_key, (3, 3, cin, filters), jnp.float32, -bound, bound)  # HWIO
        b = jax.random.uniform(kb_key, (filters,), jnp.float32, -bound, bound)
        params.append((w, b))
    return params


# ---------------- pure-JAX reference for verification ----------------
def _conv3x3_ref(x_nhwc, w_hwio, b):
    y = jax.lax.conv_general_dilated(
        x_nhwc, w_hwio, window_strides=(1, 1), padding="SAME",
        dimension_numbers=("NHWC", "HWIO", "NHWC"))
    return y + b[None, None, None, :]


def dense_residual_block_ref(x_nchw, params, res_scale=0.2):
    x = jnp.transpose(x_nchw, (0, 2, 3, 1))                # NHWC
    inputs = x
    for i in range(4):
        w, b = params[i]
        out = _conv3x3_ref(inputs, w, b)
        out = jnp.where(out > 0, out, NEG_SLOPE * out)
        inputs = jnp.concatenate([inputs, out], axis=-1)
    w, b = params[4]
    out = _conv3x3_ref(inputs, w, b)
    out = out * res_scale + x
    return jnp.transpose(out, (0, 3, 1, 2))                # back to NCHW


if __name__ == "__main__":
    key = jax.random.PRNGKey(0)
    kx, kp = jax.random.split(key)

    N, C, H, W = 2, 4, 16, 16
    x = jax.random.normal(kx, (N, C, H, W), jnp.float32)   # NCHW, like PyTorch
    params = init_dense_residual_block_params(kp, C)

    out = dense_residual_block(x, params, res_scale=0.2)
    out = jax.block_until_ready(out)

    ref = dense_residual_block_ref(x, params, res_scale=0.2)
    assert out.shape == (N, C, H, W)
    assert jnp.allclose(out, ref, atol=1e-4, rtol=1e-4), "mismatch vs JAX reference"

    print("KERNEL_OK")
</pallas_src>

<mosaic_0001>
module attributes {stable_mosaic.version = 11 : i64} {
  func.func @_drb_kernel(%arg0: i32, %arg1: memref<1x4x324xf32, #tpu.memory_space<vmem>>, %arg2: memref<1x288xf32, #tpu.memory_space<vmem>>, %arg3: memref<9x4x4xf32, #tpu.memory_space<vmem>>, %arg4: memref<9x4x8xf32, #tpu.memory_space<vmem>>, %arg5: memref<9x4x12xf32, #tpu.memory_space<vmem>>, %arg6: memref<9x4x16xf32, #tpu.memory_space<vmem>>, %arg7: memref<9x4x20xf32, #tpu.memory_space<vmem>>, %arg8: memref<5x4x1xf32, #tpu.memory_space<vmem>>, %arg9: memref<1x4x288xf32, #tpu.memory_space<vmem>>, %arg10: memref<20x326xf32, #tpu.memory_space<vmem>>) attributes {dimension_semantics = [#tpu.dimension_semantics<parallel>], iteration_bounds = array<i64: 2>, scalar_prefetch = 0 : i64, scratch_operands = 1 : i64, tpu.core_type = #tpu.core_type<tc>, window_params = [{transform_indices = @transform_0, window_bounds = array<i64: 1, 4, 324>}, {pipeline_mode = #tpu.pipeline_mode<synchronous>, transform_indices = @transform_1, window_bounds = array<i64: 1, 288>}, {pipeline_mode = #tpu.pipeline_mode<synchronous>, transform_indices = @transform_2, window_bounds = array<i64: 9, 4, 4>}, {pipeline_mode = #tpu.pipeline_mode<synchronous>, transform_indices = @transform_3, window_bounds = array<i64: 9, 4, 8>}, {pipeline_mode = #tpu.pipeline_mode<synchronous>, transform_indices = @transform_4, window_bounds = array<i64: 9, 4, 12>}, {pipeline_mode = #tpu.pipeline_mode<synchronous>, transform_indices = @transform_5, window_bounds = array<i64: 9, 4, 16>}, {pipeline_mode = #tpu.pipeline_mode<synchronous>, transform_indices = @transform_6, window_bounds = array<i64: 9, 4, 20>}, {pipeline_mode = #tpu.pipeline_mode<synchronous>, transform_indices = @transform_7, window_bounds = array<i64: 5, 4, 1>}, {transform_indices = @transform_8, window_bounds = array<i64: 1, 4, 288>}]} {
    %cst = arith.constant 0.000000e+00 : f32
    %0 = vector.broadcast %cst : f32 to vector<20x19xf32>
    %c0 = arith.constant 0 : index
    %c0_0 = arith.constant 0 : index
    %1 = vector.load %arg10[%c0, %c0_0] : memref<20x326xf32, #tpu.memory_space<vmem>>, vector<20x19xf32>
    tpu.vector_store %arg10[%c0, %c0_0], %0 {strides = array<i32>} : memref<20x326xf32, #tpu.memory_space<vmem>>, vector<20x19xf32>,
    %cst_1 = arith.constant 0.000000e+00 : f32
    %2 = vector.broadcast %cst_1 : f32 to vector<20x19xf32>
    %c0_2 = arith.constant 0 : index
    %c307 = arith.constant 307 : index
    %3 = vector.load %arg10[%c0_2, %c307] : memref<20x326xf32, #tpu.memory_space<vmem>>, vector<20x19xf32>
    tpu.vector_store %arg10[%c0_2, %c307], %2 {strides = array<i32>} : memref<20x326xf32, #tpu.memory_space<vmem>>, vector<20x19xf32>,
    %c0_3 = arith.constant 0 : index
    %c0_4 = arith.constant 0 : index
    %c0_5 = arith.constant 0 : index
    %4 = vector.load %arg1[%c0_3, %c0_4, %c0_5] : memref<1x4x324xf32, #tpu.memory_space<vmem>>, vector<1x4x324xf32>
    %5 = vector.shape_cast %4 : vector<1x4x324xf32> to vector<4x324xf32>
    %c0_6 = arith.constant 0 : index
    %c0_7 = arith.constant 0 : index
    %6 = vector.load %arg10[%c0_6, %c0_7] : memref<20x326xf32, #tpu.memory_space<vmem>>, vector<4x324xf32>
    tpu.vector_store %arg10[%c0_6, %c0_7], %5 {strides = array<i32>} : memref<20x326xf32, #tpu.memory_space<vmem>>, vector<4x324xf32>,
    %c0_8 = arith.constant 0 : index
    %c0_9 = arith.constant 0 : index
    %7 = vector.load %arg2[%c0_8, %c0_9] : memref<1x288xf32, #tpu.memory_space<vmem>>, vector<1x288xf32>
    %cst_10 = arith.constant 5.000000e-01 : f32
    %8 = vector.broadcast %cst_10 : f32 to vector<1x288xf32>
    %9 = arith.cmpf ogt, %7, %8 : vector<1x288xf32>
    %c0_11 = arith.constant 0 : index
    %c0_12 = arith.constant 0 : index
    %10 = vector.load %arg10[%c0_11, %c0_12] : memref<20x326xf32, #tpu.memory_space<vmem>>, vector<4x288xf32>
    %c0_13 = arith.constant 0 : index
    %c0_14 = arith.constant 0 : index
    %c0_15 = arith.constant 0 : index
    %11 = vector.load %arg3[%c0_13, %c0_14, %c0_15] : memref<9x4x4xf32, #tpu.memory_space<vmem>>, vector<1x4x4xf32>
    %12 = vector.shape_cast %11 : vector<1x4x4xf32> to vector<4x4xf32>
    %cst_16 = arith.constant dense<0.000000e+00> : vector<4x288xf32>
    %13 = tpu.matmul %12, %10, %cst_16 {dimension_numbers = #tpu.dot_dimension_numbers<[1], [0], [0], [1], [0, 0, 1, 1], [], []>} : vector<4x4xf32>, vector<4x288xf32>, vector<4x288xf32> -> vector<4x288xf32>
    %c0_17 = arith.constant 0 : index
    %c1 = arith.constant 1 : index
    %14 = vector.load %arg10[%c0_17, %c1] : memref<20x326xf32, #tpu.memory_space<vmem>>, vector<4x288xf32>
    %c1_18 = arith.constant 1 : index
    %c0_19 = arith.constant 0 : index
    %c0_20 = arith.constant 0 : index
    %15 = vector.load %arg3[%c1_18, %c0_19, %c0_20] : memref<9x4x4xf32, #tpu.memory_space<vmem>>, vector<1x4x4xf32>
    %16 = vector.shape_cast %15 : vector<1x4x4xf32> to vector<4x4xf32>
    %cst_21 = arith.constant dense<0.000000e+00> : vector<4x288xf32>
    %17 = tpu.matmul %16, %14, %cst_21 {dimension_numbers = #tpu.dot_dimension_numbers<[1], [0], [0], [1], [0, 0, 1, 1], [], []>} : vector<4x4xf32>, vector<4x288xf32>, vector<4x288xf32> -> vector<4x288xf32>
    %18 = arith.addf %13, %17 : vector<4x288xf32>
    %c0_22 = arith.constant 0 : index
    %c2 = arith.constant 2 : index
    %19 = vector.load %arg10[%c0_22, %c2] : memref<20x326xf32, #tpu.memory_space<vmem>>, vector<4x288xf32>
    %c2_23 = arith.constant 2 : index
    %c0_24 = arith.constant 0 : index
    %c0_25 = arith.constant 0 : index
    %20 = vector.load %arg3[%c2_23, %c0_24, %c0_25] : memref<9x4x4xf32, #tpu.memory_space<vmem>>, vector<1x4x4xf32>
    %21 = vector.shape_cast %20 : vector<1x4x4xf32> to vector<4x4xf32>
    %cst_26 = arith.constant dense<0.000000e+00> : vector<4x288xf32>
    %22 = tpu.matmul %21, %19, %cst_26 {dimension_numbers = #tpu.dot_dimension_numbers<[1], [0], [0], [1], [0, 0, 1, 1], [], []>} : vector<4x4xf32>, vector<4x288xf32>, vector<4x288xf32> -> vector<4x288xf32>
    %23 = arith.addf %18, %22 : vector<4x288xf32>
    %c0_27 = arith.constant 0 : index
    %c18 = arith.constant 18 : index
    %24 = vector.load %arg10[%c0_27, %c18] : memref<20x326xf32, #tpu.memory_space<vmem>>, vector<4x288xf32>
    %c3 = arith.constant 3 : index
    %c0_28 = arith.constant 0 : index
    %c0_29 = arith.constant 0 : index
    %25 = vector.load %arg3[%c3, %c0_28, %c0_29] : memref<9x4x4xf32, #tpu.memory_space<vmem>>, vector<1x4x4xf32>
    %26 = vector.shape_cast %25 : vector<1x4x4xf32> to vector<4x4xf32>
    %cst_30 = arith.constant dense<0.000000e+00> : vector<4x288xf32>
    %27 = tpu.matmul %26, %24, %cst_30 {dimension_numbers = #tpu.dot_dimension_numbers<[1], [0], [0], [1], [0, 0, 1, 1], [], []>} : vector<4x4xf32>, vector<4x288xf32>, vector<4x288xf32> -> vector<4x288xf32>
    %28 = arith.addf %23, %27 : vector<4x288xf32>
    %c0_31 = arith.constant 0 : index
    %c19 = arith.constant 19 : index
    %29 = vector.load %arg10[%c0_31, %c19] : memref<20x326xf32, #tpu.memory_space<vmem>>, vector<4x288xf32>
    %c4 = arith.constant 4 : index
    %c0_32 = arith.constant 0 : index
    %c0_33 = arith.constant 0 : index
    %30 = vector.load %arg3[%c4, %c0_32, %c0_33] : memref<9x4x4xf32, #tpu.memory_space<vmem>>, vector<1x4x4xf32>
    %31 = vector.shape_cast %30 : vector<1x4x4xf32> to vector<4x4xf32>
    %cst_34 = arith.constant dense<0.000000e+00> : vector<4x288xf32>
    %32 = tpu.matmul %31, %29, %cst_34 {dimension_numbers = #tpu.dot_dimension_numbers<[1], [0], [0], [1], [0, 0, 1, 1], [], []>} : vector<4x4xf32>, vector<4x288xf32>, vector<4x288xf32> -> vector<4x288xf32>
    %33 = arith.addf %28, %32 : vector<4x288xf32>
    %c0_35 = arith.constant 0 : index
    %c20 = arith.constant 20 : index
    %34 = vector.load %arg10[%c0_35, %c20] : memref<20x326xf32, #tpu.memory_space<vmem>>, vector<4x288xf32>
    %c5 = arith.constant 5 : index
    %c0_36 = arith.constant 0 : index
    %c0_37 = arith.constant 0 : index
    %35 = vector.load %arg3[%c5, %c0_36, %c0_37] : memref<9x4x4xf32, #tpu.memory_space<vmem>>, vector<1x4x4xf32>
    %36 = vector.shape_cast %35 : vector<1x4x4xf32> to vector<4x4xf32>
    %cst_38 = arith.constant dense<0.000000e+00> : vector<4x288xf32>
    %37 = tpu.matmul %36, %34, %cst_38 {dimension_numbers = #tpu.dot_dimension_numbers<[1], [0], [0], [1], [0, 0, 1, 1], [], []>} : vector<4x4xf32>, vector<4x288xf32>, vector<4x288xf32> -> vector<4x288xf32>
    %38 = arith.addf %33, %37 : vector<4x288xf32>
    %c0_39 = arith.constant 0 : index
    %c36 = arith.constant 36 : index
    %39 = vector.load %arg10[%c0_39, %c36] : memref<20x326xf32, #tpu.memory_space<vmem>>, vector<4x288xf32>
    %c6 = arith.constant 6 : index
    %c0_40 = arith.constant 0 : index
    %c0_41 = arith.constant 0 : index
    %40 = vector.load %arg3[%c6, %c0_40, %c0_41] : memref<9x4x4xf32, #tpu.memory_space<vmem>>, vector<1x4x4xf32>
    %41 = vector.shape_cast %40 : vector<1x4x4xf32> to vector<4x4xf32>
    %cst_42 = arith.constant dense<0.000000e+00> : vector<4x288xf32>
    %42 = tpu.matmul %41, %39, %cst_42 {dimension_numbers = #tpu.dot_dimension_numbers<[1], [0], [0], [1], [0, 0, 1, 1], [], []>} : vector<4x4xf32>, vector<4x288xf32>, vector<4x288xf32> -> vector<4x288xf32>
    %43 = arith.addf %38, %42 : vector<4x288xf32>
    %c0_43 = arith.constant 0 : index
    %c37 = arith.constant 37 : index
    %44 = vector.load %arg10[%c0_43, %c37] : memref<20x326xf32, #tpu.memory_space<vmem>>, vector<4x288xf32>
    %c7 = arith.constant 7 : index
    %c0_44 = arith.constant 0 : index
    %c0_45 = arith.constant 0 : index
    %45 = vector.load %arg3[%c7, %c0_44, %c0_45] : memref<9x4x4xf32, #tpu.memory_space<vmem>>, vector<1x4x4xf32>
    %46 = vector.shape_cast %45 : vector<1x4x4xf32> to vector<4x4xf32>
    %cst_46 = arith.constant dense<0.000000e+00> : vector<4x288xf32>
    %47 = tpu.matmul %46, %44, %cst_46 {dimension_numbers = #tpu.dot_dimension_numbers<[1], [0], [0], [1], [0, 0, 1, 1], [], []>} : vector<4x4xf32>, vector<4x288xf32>, vector<4x288xf32> -> vector<4x288xf32>
    %48 = arith.addf %43, %47 : vector<4x288xf32>
    %c0_47 = arith.constant 0 : index
    %c38 = arith.constant 38 : index
    %49 = vector.load %arg10[%c0_47, %c38] : memref<20x326xf32, #tpu.memory_space<vmem>>, vector<4x288xf32>
    %c8 = arith.constant 8 : index
    %c0_48 = arith.constant 0 : index
    %c0_49 = arith.constant 0 : index
    %50 = vector.load %arg3[%c8, %c0_48, %c0_49] : memref<9x4x4xf32, #tpu.memory_space<vmem>>, vector<1x4x4xf32>
    %51 = vector.shape_cast %50 : vector<1x4x4xf32> to vector<4x4xf32>
    %cst_50 = arith.constant dense<0.000000e+00> : vector<4x288xf32>
    %52 = tpu.matmul %51, %49, %cst_50 {dimension_numbers = #tpu.dot_dimension_numbers<[1], [0], [0], [1], [0, 0, 1, 1], [], []>} : vector<4x4xf32>, vector<4x288xf32>, vector<4x288xf32> -> vector<4x288xf32>
    %53 = arith.addf %48, %52 : vector<4x288xf32>
    %c0_51 = arith.constant 0 : index
    %c0_52 = arith.constant 0 : index
    %c0_53 = arith.constant 0 : index
    %54 = vector.load %arg8[%c0_51, %c0_52, %c0_53] : memref<5x4x1xf32, #tpu.memory_space<vmem>>, vector<1x4x1xf32>
    %55 = vector.shape_cast %54 : vector<1x4x1xf32> to vector<4x1xf32>
    %56 = vector.broadcast %55 : vector<4x1xf32> to vector<4x288xf32>
    %57 = arith.addf %53, %56 : vector<4x288xf32>
    %cst_54 = arith.constant 0.000000e+00 : f32
    %58 = vector.broadcast %cst_54 : f32 to vector<4x288xf32>
    %59 = arith.cmpf ogt, %57, %58 : vector<4x288xf32>
    %cst_55 = arith.constant 0.00999999977 : f32
    %60 = vector.broadcast %cst_55 : f32 to vector<4x288xf32>
    %61 = arith.mulf %60, %57 : vector<4x288xf32>
    %62 = arith.select %59, %57, %61 : vector<4x288xi1>, vector<4x288xf32>
    %cst_56 = arith.constant 0.000000e+00 : f32
    %63 = vector.shape_cast %9 : vector<1x288xi1> to vector<1x288xi1>
    %64 = vector.broadcast %63 : vector<1x288xi1> to vector<4x288xi1>
    %65 = vector.broadcast %cst_56 : f32 to vector<4x288xf32>
    %66 = arith.select %64, %62, %65 : vector<4x288xi1>, vector<4x288xf32>
    %c4_57 = arith.constant 4 : index
    %c19_58 = arith.constant 19 : index
    %67 = vector.load %arg10[%c4_57, %c19_58] : memref<20x326xf32, #tpu.memory_space<vmem>>, vector<4x288xf32>
    tpu.vector_store %arg10[%c4_57, %c19_58], %66 {strides = array<i32>} : memref<20x326xf32, #tpu.memory_space<vmem>>, vector<4x288xf32>,
    %c0_59 = arith.constant 0 : index
    %c0_60 = arith.constant 0 : index
    %68 = vector.load %arg10[%c0_59, %c0_60] : memref<20x326xf32, #tpu.memory_space<vmem>>, vector<8x288xf32>
    %c0_61 = arith.constant 0 : index
    %c0_62 = arith.constant 0 : index
    %c0_63 = arith.constant 0 : index
    %69 = vector.load %arg4[%c0_61, %c0_62, %c0_63] : memref<9x4x8xf32, #tpu.memory_space<vmem>>, vector<1x4x8xf32>
    %70 = vector.shape_cast %69 : vector<1x4x8xf32> to vector<4x8xf32>
    %cst_64 = arith.constant dense<0.000000e+00> : vector<4x288xf32>
    %71 = tpu.matmul %70, %68, %cst_64 {dimension_numbers = #tpu.dot_dimension_numbers<[1], [0], [0], [1], [0, 0, 1, 1], [], []>} : vector<4x8xf32>, vector<8x288xf32>, vector<4x288xf32> -> vector<4x288xf32>
    %c0_65 = arith.constant 0 : index
    %c1_66 = arith.constant 1 : index
    %72 = vector.load %arg10[%c0_65, %c1_66] : memref<20x326xf32, #tpu.memory_space<vmem>>, vector<8x288xf32>
    %c1_67 = arith.constant 1 : index
    %c0_68 = arith.constant 0 : index
    %c0_69 = arith.constant 0 : index
    %73 = vector.load %arg4[%c1_67, %c0_68, %c0_69] : memref<9x4x8xf32, #tpu.memory_space<vmem>>, vector<1x4x8xf32>
    %74 = vector.shape_cast %73 : vector<1x4x8xf32> to vector<4x8xf32>
    %cst_70 = arith.constant dense<0.000000e+00> : vector<4x288xf32>
    %75 = tpu.matmul %74, %72, %cst_70 {dimension_numbers = #tpu.dot_dimension_numbers<[1], [0], [0], [1], [0, 0, 1, 1], [], []>} : vector<4x8xf32>, vector<8x288xf32>, vector<4x288xf32> -> vector<4x288xf32>
    %76 = arith.addf %71, %75 : vector<4x288xf32>
    %c0_71 = arith.constant 0 : index
    %c2_72 = arith.constant 2 : index
    %77 = vector.load %arg10[%c0_71, %c2_72] : memref<20x326xf32, #tpu.memory_space<vmem>>, vector<8x288xf32>
    %c2_73 = arith.constant 2 : index
    %c0_74 = arith.constant 0 : index
    %c0_75 = arith.constant 0 : index
    %78 = vector.load %arg4[%c2_73, %c0_74, %c0_75] : memref<9x4x8xf32, #tpu.memory_space<vmem>>, vector<1x4x8xf32>
    %79 = vector.shape_cast %78 : vector<1x4x8xf32> to vector<4x8xf32>
    %cst_76 = arith.constant dense<0.000000e+00> : vector<4x288xf32>
    %80 = tpu.matmul %79, %77, %cst_76 {dimension_numbers = #tpu.dot_dimension_numbers<[1], [0], [0], [1], [0, 0, 1, 1], [], []>} : vector<4x8xf32>, vector<8x288xf32>, vector<4x288xf32> -> vector<4x288xf32>
    %81 = arith.addf %76, %80 : vector<4x288xf32>
    %c0_77 = arith.constant 0 : index
    %c18_78 = arith.constant 18 : index
    %82 = vector.load %arg10[%c0_77, %c18_78] : memref<20x326xf32, #tpu.memory_space<vmem>>, vector<8x288xf32>
    %c3_79 = arith.constant 3 : index
    %c0_80 = arith.constant 0 : index
    %c0_81 = arith.constant 0 : index
    %83 = vector.load %arg4[%c3_79, %c0_80, %c0_81] : memref<9x4x8xf32, #tpu.memory_space<vmem>>, vector<1x4x8xf32>
    %84 = vector.shape_cast %83 : vector<1x4x8xf32> to vector<4x8xf32>
    %cst_82 = arith.constant dense<0.000000e+00> : vector<4x288xf32>
    %85 = tpu.matmul %84, %82, %cst_82 {dimension_numbers = #tpu.dot_dimension_numbers<[1], [0], [0], [1], [0, 0, 1, 1], [], []>} : vector<4x8xf32>, vector<8x288xf32>, vector<4x288xf32> -> vector<4x288xf32>
    %86 = arith.addf %81, %85 : vector<4x288xf32>
    %c0_83 = arith.constant 0 : index
    %c19_84 = arith.constant 19 : index
    %87 = vector.load %arg10[%c0_83, %c19_84] : memref<20x326xf32, #tpu.memory_space<vmem>>, vector<8x288xf32>
    %c4_85 = arith.constant 4 : index
    %c0_86 = arith.constant 0 : index
    %c0_87 = arith.constant 0 : index
    %88 = vector.load %arg4[%c4_85, %c0_86, %c0_87] : memref<9x4x8xf32, #tpu.memory_space<vmem>>, vector<1x4x8xf32>
    %89 = vector.shape_cast %88 : vector<1x4x8xf32> to vector<4x8xf32>
    %cst_88 = arith.constant dense<0.000000e+00> : vector<4x288xf32>
    %90 = tpu.matmul %89, %87, %cst_88 {dimension_numbers = #tpu.dot_dimension_numbers<[1], [0], [0], [1], [0, 0, 1, 1], [], []>} : vector<4x8xf32>, vector<8x288xf32>, vector<4x288xf32> -> vector<4x288xf32>
    %91 = arith.addf %86, %90 : vector<4x288xf32>
    %c0_89 = arith.constant 0 : index
    %c20_90 = arith.constant 20 : index
    %92 = vector.load %arg10[%c0_89, %c20_90] : memref<20x326xf32, #tpu.memory_space<vmem>>, vector<8x288xf32>
    %c5_91 = arith.constant 5 : index
    %c0_92 = arith.constant 0 : index
    %c0_93 = arith.constant 0 : index
    %93 = vector.load %arg4[%c5_91, %c0_92, %c0_93] : memref<9x4x8xf32, #tpu.memory_space<vmem>>, vector<1x4x8xf32>
    %94 = vector.shape_cast %93 : vector<1x4x8xf32> to vector<4x8xf32>
    %cst_94 = arith.constant dense<0.000000e+00> : vector<4x288xf32>
    %95 = tpu.matmul %94, %92, %cst_94 {dimension_numbers = #tpu.dot_dimension_numbers<[1], [0], [0], [1], [0, 0, 1, 1], [], []>} : vector<4x8xf32>, vector<8x288xf32>, vector<4x288xf32> -> vector<4x288xf32>
    %96 = arith.addf %91, %95 : vector<4x288xf32>
    %c0_95 = arith.constant 0 : index
    %c36_96 = arith.constant 36 : index
    %97 = vector.load %arg10[%c0_95, %c36_96] : memref<20x326xf32, #tpu.memory_space<vmem>>, vector<8x288xf32>
    %c6_97 = arith.constant 6 : index
    %c0_98 = arith.constant 0 : index
    %c0_99 = arith.constant 0 : index
    %98 = vector.load %arg4[%c6_97, %c0_98, %c0_99] : memref<9x4x8xf32, #tpu.memory_space<vmem>>, vector<1x4x8xf32>
    %99 = vector.shape_cast %98 : vector<1x4x8xf32> to vector<4x8xf32>
    %cst_100 = arith.constant dense<0.000000e+00> : vector<4x288xf32>
    %100 = tpu.matmul %99, %97, %cst_100 {dimension_numbers = #tpu.dot_dimension_numbers<[1], [0], [0], [1], [0, 0, 1, 1], [], []>} : vector<4x8xf32>, vector<8x288xf32>, vector<4x288xf32> -> vector<4x288xf32>
    %101 = arith.addf %96, %100 : vector<4x288xf32>
    %c0_101 = arith.constant 0 : index
    %c37_102 = arith.constant 37 : index
    %102 = vector.load %arg10[%c0_101, %c37_102] : memref<20x326xf32, #tpu.memory_space<vmem>>, vector<8x288xf32>
    %c7_103 = arith.constant 7 : index
    %c0_104 = arith.constant 0 : index
    %c0_105 = arith.constant 0 : index
    %103 = vector.load %arg4[%c7_103, %c0_104, %c0_105] : memref<9x4x8xf32, #tpu.memory_space<vmem>>, vector<1x4x8xf32>
    %104 = vector.shape_cast %103 : vector<1x4x8xf32> to vector<4x8xf32>
    %cst_106 = arith.constant dense<0.000000e+00> : vector<4x288xf32>
    %105 = tpu.matmul %104, %102, %cst_106 {dimension_numbers = #tpu.dot_dimension_numbers<[1], [0], [0], [1], [0, 0, 1, 1], [], []>} : vector<4x8xf32>, vector<8x288xf32>, vector<4x288xf32> -> vector<4x288xf32>
    %106 = arith.addf %101, %105 : vector<4x288xf32>
    %c0_107 = arith.constant 0 : index
    %c38_108 = arith.constant 38 : index
    %107 = vector.load %arg10[%c0_107, %c38_108] : memref<20x326xf32, #tpu.memory_space<vmem>>, vector<8x288xf32>
    %c8_109 = arith.constant 8 : index
    %c0_110 = arith.constant 0 : index
    %c0_111 = arith.constant 0 : index
    %108 = vector.load %arg4[%c8_109, %c0_110, %c0_111] : memref<9x4x8xf32, #tpu.memory_space<vmem>>, vector<1x4x8xf32>
    %109 = vector.shape_cast %108 : vector<1x4x8xf32> to vector<4x8xf32>
    %cst_112 = arith.constant dense<0.000000e+00> : vector<4x288xf32>
    %110 = tpu.matmul %109, %107, %cst_112 {dimension_numbers = #tpu.dot_dimension_numbers<[1], [0], [0], [1], [0, 0, 1, 1], [], []>} : vector<4x8xf32>, vector<8x288xf32>, vector<4x288xf32> -> vector<4x288xf32>
    %111 = arith.addf %106, %110 : vector<4x288xf32>
    %c1_113 = arith.constant 1 : index
    %c0_114 = arith.constant 0 : index
    %c0_115 = arith.constant 0 : index
    %112 = vector.load %arg8[%c1_113, %c0_114, %c0_115] : memref<5x4x1xf32, #tpu.memory_space<vmem>>, vector<1x4x1xf32>
    %113 = vector.shape_cast %112 : vector<1x4x1xf32> to vector<4x1xf32>
    %114 = vector.broadcast %113 : vector<4x1xf32> to vector<4x288xf32>
    %115 = arith.addf %111, %114 : vector<4x288xf32>
    %cst_116 = arith.constant 0.000000e+00 : f32
    %116 = vector.broadcast %cst_116 : f32 to vector<4x288xf32>
    %117 = arith.cmpf ogt, %115, %116 : vector<4x288xf32>
    %cst_117 = arith.constant 0.00999999977 : f32
    %118 = vector.broadcast %cst_117 : f32 to vector<4x288xf32>
    %119 = arith.mulf %118, %115 : vector<4x288xf32>
    %120 = arith.select %117, %115, %119 : vector<4x288xi1>, vector<4x288xf32>
    %cst_118 = arith.constant 0.000000e+00 : f32
    %121 = vector.shape_cast %9 : vector<1x288xi1> to vector<1x288xi1>
    %122 = vector.broadcast %121 : vector<1x288xi1> to vector<4x288xi1>
    %123 = vector.broadcast %cst_118 : f32 to vector<4x288xf32>
    %124 = arith.select %122, %120, %123 : vector<4x288xi1>, vector<4x288xf32>
    %c8_119 = arith.constant 8 : index
    %c19_120 = arith.constant 19 : index
    %125 = vector.load %arg10[%c8_119, %c19_120] : memref<20x326xf32, #tpu.memory_space<vmem>>, vector<4x288xf32>
    tpu.vector_store %arg10[%c8_119, %c19_120], %124 {strides = array<i32>} : memref<20x326xf32, #tpu.memory_space<vmem>>, vector<4x288xf32>,
    %c0_121 = arith.constant 0 : index
    %c0_122 = arith.constant 0 : index
    %126 = vector.load %arg10[%c0_121, %c0_122] : memref<20x326xf32, #tpu.memory_space<vmem>>, vector<12x288xf32>
    %c0_123 = arith.constant 0 : index
    %c0_124 = arith.constant 0 : index
    %c0_125 = arith.constant 0 : index
    %127 = vector.load %arg5[%c0_123, %c0_124, %c0_125] : memref<9x4x12xf32, #tpu.memory_space<vmem>>, vector<1x4x12xf32>
    %128 = vector.shape_cast %127 : vector<1x4x12xf32> to vector<4x12xf32>
    %cst_126 = arith.constant dense<0.000000e+00> : vector<4x288xf32>
    %129 = tpu.matmul %128, %126, %cst_126 {dimension_numbers = #tpu.dot_dimension_numbers<[1], [0], [0], [1], [0, 0, 1, 1], [], []>} : vector<4x12xf32>, vector<12x288xf32>, vector<4x288xf32> -> vector<4x288xf32>
    %c0_127 = arith.constant 0 : index
    %c1_128 = arith.constant 1 : index
    %130 = vector.load %arg10[%c0_127, %c1_128] : memref<20x326xf32, #tpu.memory_space<vmem>>, vector<12x288xf32>
    %c1_129 = arith.constant 1 : index
    %c0_130 = arith.constant 0 : index
    %c0_131 = arith.constant 0 : index
    %131 = vector.load %arg5[%c1_129, %c0_130, %c0_131] : memref<9x4x12xf32, #tpu.memory_space<vmem>>, vector<1x4x12xf32>
    %132 = vector.shape_cast %131 : vector<1x4x12xf32> to vector<4x12xf32>
    %cst_132 = arith.constant dense<0.000000e+00> : vector<4x288xf32>
    %133 = tpu.matmul %132, %130, %cst_132 {dimension_numbers = #tpu.dot_dimension_numbers<[1], [0], [0], [1], [0, 0, 1, 1], [], []>} : vector<4x12xf32>, vector<12x288xf32>, vector<4x288xf32> -> vector<4x288xf32>
    %134 = arith.addf %129, %133 : vector<4x288xf32>
    %c0_133 = arith.constant 0 : index
    %c2_134 = arith.constant 2 : index
    %135 = vector.load %arg10[%c0_133, %c2_134] : memref<20x326xf32, #tpu.memory_space<vmem>>, vector<12x288xf32>
    %c2_135 = arith.constant 2 : index
    %c0_136 = arith.constant 0 : index
    %c0_137 = arith.constant 0 : index
    %136 = vector.load %arg5[%c2_135, %c0_136, %c0_137] : memref<9x4x12xf32, #tpu.memory_space<vmem>>, vector<1x4x12xf32>
    %137 = vector.shape_cast %136 : vector<1x4x12xf32> to vector<4x12xf32>
    %cst_138 = arith.constant dense<0.000000e+00> : vector<4x288xf32>
    %138 = tpu.matmul %137, %135, %cst_138 {dimension_numbers = #tpu.dot_dimension_numbers<[1], [0], [0], [1], [0, 0, 1, 1], [], []>} : vector<4x12xf32>, vector<12x288xf32>, vector<4x288xf32> -> vector<4x288xf32>
    %139 = arith.addf %134, %138 : vector<4x288xf32>
    %c0_139 = arith.constant 0 : index
    %c18_140 = arith.constant 18 : index
    %140 = vector.load %arg10[%c0_139, %c18_140] : memref<20x326xf32, #tpu.memory_space<vmem>>, vector<12x288xf32>
    %c3_141 = arith.constant 3 : index
    %c0_142 = arith.constant 0 : index
    %c0_143 = arith.constant 0 : index
    %141 = vector.load %arg5[%c3_141, %c0_142, %c0_143] : memref<9x4x12xf32, #tpu.memory_space<vmem>>, vector<1x4x12xf32>
    %142 = vector.shape_cast %141 : vector<1x4x12xf32> to vector<4x12xf32>
    %cst_144 = arith.constant dense<0.000000e+00> : vector<4x288xf32>
    %143 = tpu.matmul %142, %140, %cst_144 {dimension_numbers = #tpu.dot_dimension_numbers<[1], [0], [0], [1], [0, 0, 1, 1], [], []>} : vector<4x12xf32>, vector<12x288xf32>, vector<4x288xf32> -> vector<4x288xf32>
    %144 = arith.addf %139, %143 : vector<4x288xf32>
    %c0_145 = arith.constant 0 : index
    %c19_146 = arith.constant 19 : index
    %145 = vector.load %arg10[%c0_145, %c19_146] : memref<20x326xf32, #tpu.memory_space<vmem>>, vector<12x288xf32>
    %c4_147 = arith.constant 4 : index
    %c0_148 = arith.constant 0 : index
    %c0_149 = arith.constant 0 : index
    %146 = vector.load %arg5[%c4_147, %c0_148, %c0_149] : memref<9x4x12xf32, #tpu.memory_space<vmem>>, vector<1x4x12xf32>
    %147 = vector.shape_cast %146 : vector<1x4x12xf32> to vector<4x12xf32>
    %cst_150 = arith.constant dense<0.000000e+00> : vector<4x288xf32>
    %148 = tpu.matmul %147, %145, %cst_150 {dimension_numbers = #tpu.dot_dimension_numbers<[1], [0], [0], [1], [0, 0, 1, 1], [], []>} : vector<4x12xf32>, vector<12x288xf32>, vector<4x288xf32> -> vector<4x288xf32>
    %149 = arith.addf %144, %148 : vector<4x288xf32>
    %c0_151 = arith.constant 0 : index
    %c20_152 = arith.constant 20 : index
    %150 = vector.load %arg10[%c0_151, %c20_152] : memref<20x326xf32, #tpu.memory_space<vmem>>, vector<12x288xf32>
    %c5_153 = arith.constant 5 : index
    %c0_154 = arith.constant 0 : index
    %c0_155 = arith.constant 0 : index
    %151 = vector.load %arg5[%c5_153, %c0_154, %c0_155] : memref<9x4x12xf32, #tpu.memory_space<vmem>>, vector<1x4x12xf32>
    %152 = vector.shape_cast %151 : vector<1x4x12xf32> to vector<4x12xf32>
    %cst_156 = arith.constant dense<0.000000e+00> : vector<4x288xf32>
    %153 = tpu.matmul %152, %150, %cst_156 {dimension_numbers = #tpu.dot_dimension_numbers<[1], [0], [0], [1], [0, 0, 1, 1], [], []>} : vector<4x12xf32>, vector<12x288xf32>, vector<4x288xf32> -> vector<4x288xf32>
    %154 = arith.addf %149, %153 : vector<4x288xf32>
    %c0_157 = arith.constant 0 : index
    %c36_158 = arith.constant 36 : index
    %155 = vector.load %arg10[%c0_157, %c36_158] : memref<20x326xf32, #tpu.memory_space<vmem>>, vector<12x288xf32>
    %c6_159 = arith.constant 6 : index
    %c0_160 = arith.constant 0 : index
    %c0_161 = arith.constant 0 : index
    %156 = vector.load %arg5[%c6_159, %c0_160, %c0_161] : memref<9x4x12xf32, #tpu.memory_space<vmem>>, vector<1x4x12xf32>
    %157 = vector.shape_cast %156 : vector<1x4x12xf32> to vector<4x12xf32>
    %cst_162 = arith.constant dense<0.000000e+00> : vector<4x288xf32>
    %158 = tpu.matmul %157, %155, %cst_162 {dimension_numbers = #tpu.dot_dimension_numbers<[1], [0], [0], [1], [0, 0, 1, 1], [], []>} : vector<4x12xf32>, vector<12x288xf32>, vector<4x288xf32> -> vector<4x288xf32>
    %159 = arith.addf %154, %158 : vector<4x288xf32>
    %c0_163 = arith.constant 0 : index
    %c37_164 = arith.constant 37 : index
    %160 = vector.load %arg10[%c0_163, %c37_164] : memref<20x326xf32, #tpu.memory_space<vmem>>, vector<12x288xf32>
    %c7_165 = arith.constant 7 : index
    %c0_166 = arith.constant 0 : index
    %c0_167 = arith.constant 0 : index
    %161 = vector.load %arg5[%c7_165, %c0_166, %c0_167] : memref<9x4x12xf32, #tpu.memory_space<vmem>>, vector<1x4x12xf32>
    %162 = vector.shape_cast %161 : vector<1x4x12xf32> to vector<4x12xf32>
    %cst_168 = arith.constant dense<0.000000e+00> : vector<4x288xf32>
    %163 = tpu.matmul %162, %160, %cst_168 {dimension_numbers = #tpu.dot_dimension_numbers<[1], [0], [0], [1], [0, 0, 1, 1], [], []>} : vector<4x12xf32>, vector<12x288xf32>, vector<4x288xf32> -> vector<4x288xf32>
    %164 = arith.addf %159, %163 : vector<4x288xf32>
    %c0_169 = arith.constant 0 : index
    %c38_170 = arith.constant 38 : index
    %165 = vector.load %arg10[%c0_169, %c38_170] : memref<20x326xf32, #tpu.memory_space<vmem>>, vector<12x288xf32>
    %c8_171 = arith.constant 8 : index
    %c0_172 = arith.constant 0 : index
    %c0_173 = arith.constant 0 : index
    %166 = vector.load %arg5[%c8_171, %c0_172, %c0_173] : memref<9x4x12xf32, #tpu.memory_space<vmem>>, vector<1x4x12xf32>
    %167 = vector.shape_cast %166 : vector<1x4x12xf32> to vector<4x12xf32>
    %cst_174 = arith.constant dense<0.000000e+00> : vector<4x288xf32>
    %168 = tpu.matmul %167, %165, %cst_174 {dimension_numbers = #tpu.dot_dimension_numbers<[1], [0], [0], [1], [0, 0, 1, 1], [], []>} : vector<4x12xf32>, vector<12x288xf32>, vector<4x288xf32> -> vector<4x288xf32>
    %169 = arith.addf %164, %168 : vector<4x288xf32>
    %c2_175 = arith.constant 2 : index
    %c0_176 = arith.constant 0 : index
    %c0_177 = arith.constant 0 : index
    %170 = vector.load %arg8[%c2_175, %c0_176, %c0_177] : memref<5x4x1xf32, #tpu.memory_space<vmem>>, vector<1x4x1xf32>
    %171 = vector.shape_cast %170 : vector<1x4x1xf32> to vector<4x1xf32>
    %172 = vector.broadcast %171 : vector<4x1xf32> to vector<4x288xf32>
    %173 = arith.addf %169, %172 : vector<4x288xf32>
    %cst_178 = arith.constant 0.000000e+00 : f32
    %174 = vector.broadcast %cst_178 : f32 to vector<4x288xf32>
    %175 = arith.cmpf ogt, %173, %174 : vector<4x288xf32>
    %cst_179 = arith.constant 0.00999999977 : f32
    %176 = vector.broadcast %cst_179 : f32 to vector<4x288xf32>
    %177 = arith.mulf %176, %173 : vector<4x288xf32>
    %178 = arith.select %175, %173, %177 : vector<4x288xi1>, vector<4x288xf32>
    %cst_180 = arith.constant 0.000000e+00 : f32
    %179 = vector.shape_cast %9 : vector<1x288xi1> to vector<1x288xi1>
    %180 = vector.broadcast %179 : vector<1x288xi1> to vector<4x288xi1>
    %181 = vector.broadcast %cst_180 : f32 to vector<4x288xf32>
    %182 = arith.select %180, %178, %181 : vector<4x288xi1>, vector<4x288xf32>
    %c12 = arith.constant 12 : index
    %c19_181 = arith.constant 19 : index
    %183 = vector.load %arg10[%c12, %c19_181] : memref<20x326xf32, #tpu.memory_space<vmem>>, vector<4x288xf32>
    tpu.vector_store %arg10[%c12, %c19_181], %182 {strides = array<i32>} : memref<20x326xf32, #tpu.memory_space<vmem>>, vector<4x288xf32>,
    %c0_182 = arith.constant 0 : index
    %c0_183 = arith.constant 0 : index
    %184 = vector.load %arg10[%c0_182, %c0_183] : memref<20x326xf32, #tpu.memory_space<vmem>>, vector<16x288xf32>
    %c0_184 = arith.constant 0 : index
    %c0_185 = arith.constant 0 : index
    %c0_186 = arith.constant 0 : index
    %185 = vector.load %arg6[%c0_184, %c0_185, %c0_186] : memref<9x4x16xf32, #tpu.memory_space<vmem>>, vector<1x4x16xf32>
    %186 = vector.shape_cast %185 : vector<1x4x16xf32> to vector<4x16xf32>
    %cst_187 = arith.constant dense<0.000000e+00> : vector<4x288xf32>
    %187 = tpu.matmul %186, %184, %cst_187 {dimension_numbers = #tpu.dot_dimension_numbers<[1], [0], [0], [1], [0, 0, 1, 1], [], []>} : vector<4x16xf32>, vector<16x288xf32>, vector<4x288xf32> -> vector<4x288xf32>
    %c0_188 = arith.constant 0 : index
    %c1_189 = arith.constant 1 : index
    %188 = vector.load %arg10[%c0_188, %c1_189] : memref<20x326xf32, #tpu.memory_space<vmem>>, vector<16x288xf32>
    %c1_190 = arith.constant 1 : index
    %c0_191 = arith.constant 0 : index
    %c0_192 = arith.constant 0 : index
    %189 = vector.load %arg6[%c1_190, %c0_191, %c0_192] : memref<9x4x16xf32, #tpu.memory_space<vmem>>, vector<1x4x16xf32>
    %190 = vector.shape_cast %189 : vector<1x4x16xf32> to vector<4x16xf32>
    %cst_193 = arith.constant dense<0.000000e+00> : vector<4x288xf32>
    %191 = tpu.matmul %190, %188, %cst_193 {dimension_numbers = #tpu.dot_dimension_numbers<[1], [0], [0], [1], [0, 0, 1, 1], [], []>} : vector<4x16xf32>, vector<16x288xf32>, vector<4x288xf32> -> vector<4x288xf32>
    %192 = arith.addf %187, %191 : vector<4x288xf32>
    %c0_194 = arith.constant 0 : index
    %c2_195 = arith.constant 2 : index
    %193 = vector.load %arg10[%c0_194, %c2_195] : memref<20x326xf32, #tpu.memory_space<vmem>>, vector<16x288xf32>
    %c2_196 = arith.constant 2 : index
    %c0_197 = arith.constant 0 : index
    %c0_198 = arith.constant 0 : index
    %194 = vector.load %arg6[%c2_196, %c0_197, %c0_198] : memref<9x4x16xf32, #tpu.memory_space<vmem>>, vector<1x4x16xf32>
    %195 = vector.shape_cast %194 : vector<1x4x16xf32> to vector<4x16xf32>
    %cst_199 = arith.constant dense<0.000000e+00> : vector<4x288xf32>
    %196 = tpu.matmul %195, %193, %cst_199 {dimension_numbers = #tpu.dot_dimension_numbers<[1], [0], [0], [1], [0, 0, 1, 1], [], []>} : vector<4x16xf32>, vector<16x288xf32>, vector<4x288xf32> -> vector<4x288xf32>
    %197 = arith.addf %192, %196 : vector<4x288xf32>
    %c0_200 = arith.constant 0 : index
    %c18_201 = arith.constant 18 : index
    %198 = vector.load %arg10[%c0_200, %c18_201] : memref<20x326xf32, #tpu.memory_space<vmem>>, vector<16x288xf32>
    %c3_202 = arith.constant 3 : index
    %c0_203 = arith.constant 0 : index
    %c0_204 = arith.constant 0 : index
    %199 = vector.load %arg6[%c3_202, %c0_203, %c0_204] : memref<9x4x16xf32, #tpu.memory_space<vmem>>, vector<1x4x16xf32>
    %200 = vector.shape_cast %199 : vector<1x4x16xf32> to vector<4x16xf32>
    %cst_205 = arith.constant dense<0.000000e+00> : vector<4x288xf32>
    %201 = tpu.matmul %200, %198, %cst_205 {dimension_numbers = #tpu.dot_dimension_numbers<[1], [0], [0], [1], [0, 0, 1, 1], [], []>} : vector<4x16xf32>, vector<16x288xf32>, vector<4x288xf32> -> vector<4x288xf32>
    %202 = arith.addf %197, %201 : vector<4x288xf32>
    %c0_206 = arith.constant 0 : index
    %c19_207 = arith.constant 19 : index
    %203 = vector.load %arg10[%c0_206, %c19_207] : memref<20x326xf32, #tpu.memory_space<vmem>>, vector<16x288xf32>
    %c4_208 = arith.constant 4 : index
    %c0_209 = arith.constant 0 : index
    %c0_210 = arith.constant 0 : index
    %204 = vector.load %arg6[%c4_208, %c0_209, %c0_210] : memref<9x4x16xf32, #tpu.memory_space<vmem>>, vector<1x4x16xf32>
    %205 = vector.shape_cast %204 : vector<1x4x16xf32> to vector<4x16xf32>
    %cst_211 = arith.constant dense<0.000000e+00> : vector<4x288xf32>
    %206 = tpu.matmul %205, %203, %cst_211 {dimension_numbers = #tpu.dot_dimension_numbers<[1], [0], [0], [1], [0, 0, 1, 1], [], []>} : vector<4x16xf32>, vector<16x288xf32>, vector<4x288xf32> -> vector<4x288xf32>
    %207 = arith.addf %202, %206 : vector<4x288xf32>
    %c0_212 = arith.constant 0 : index
    %c20_213 = arith.constant 20 : index
    %208 = vector.load %arg10[%c0_212, %c20_213] : memref<20x326xf32, #tpu.memory_space<vmem>>, vector<16x288xf32>
    %c5_214 = arith.constant 5 : index
    %c0_215 = arith.constant 0 : index
    %c0_216 = arith.constant 0 : index
    %209 = vector.load %arg6[%c5_214, %c0_215, %c0_216] : memref<9x4x16xf32, #tpu.memory_space<vmem>>, vector<1x4x16xf32>
    %210 = vector.shape_cast %209 : vector<1x4x16xf32> to vector<4x16xf32>
    %cst_217 = arith.constant dense<0.000000e+00> : vector<4x288xf32>
    %211 = tpu.matmul %210, %208, %cst_217 {dimension_numbers = #tpu.dot_dimension_numbers<[1], [0], [0], [1], [0, 0, 1, 1], [], []>} : vector<4x16xf32>, vector<16x288xf32>, vector<4x288xf32> -> vector<4x288xf32>
    %212 = arith.addf %207, %211 : vector<4x288xf32>
    %c0_218 = arith.constant 0 : index
    %c36_219 = arith.constant 36 : index
    %213 = vector.load %arg10[%c0_218, %c36_219] : memref<20x326xf32, #tpu.memory_space<vmem>>, vector<16x288xf32>
    %c6_220 = arith.constant 6 : index
    %c0_221 = arith.constant 0 : index
    %c0_222 = arith.constant 0 : index
    %214 = vector.load %arg6[%c6_220, %c0_221, %c0_222] : memref<9x4x16xf32, #tpu.memory_space<vmem>>, vector<1x4x16xf32>
    %215 = vector.shape_cast %214 : vector<1x4x16xf32> to vector<4x16xf32>
    %cst_223 = arith.constant dense<0.000000e+00> : vector<4x288xf32>
    %216 = tpu.matmul %215, %213, %cst_223 {dimension_numbers = #tpu.dot_dimension_numbers<[1], [0], [0], [1], [0, 0, 1, 1], [], []>} : vector<4x16xf32>, vector<16x288xf32>, vector<4x288xf32> -> vector<4x288xf32>
    %217 = arith.addf %212, %216 : vector<4x288xf32>
    %c0_224 = arith.constant 0 : index
    %c37_225 = arith.constant 37 : index
    %218 = vector.load %arg10[%c0_224, %c37_225] : memref<20x326xf32, #tpu.memory_space<vmem>>, vector<16x288xf32>
    %c7_226 = arith.constant 7 : index
    %c0_227 = arith.constant 0 : index
    %c0_228 = arith.constant 0 : index
    %219 = vector.load %arg6[%c7_226, %c0_227, %c0_228] : memref<9x4x16xf32, #tpu.memory_space<vmem>>, vector<1x4x16xf32>
    %220 = vector.shape_cast %219 : vector<1x4x16xf32> to vector<4x16xf32>
    %cst_229 = arith.constant dense<0.000000e+00> : vector<4x288xf32>
    %221 = tpu.matmul %220, %218, %cst_229 {dimension_numbers = #tpu.dot_dimension_numbers<[1], [0], [0], [1], [0, 0, 1, 1], [], []>} : vector<4x16xf32>, vector<16x288xf32>, vector<4x288xf32> -> vector<4x288xf32>
    %222 = arith.addf %217, %221 : vector<4x288xf32>
    %c0_230 = arith.constant 0 : index
    %c38_231 = arith.constant 38 : index
    %223 = vector.load %arg10[%c0_230, %c38_231] : memref<20x326xf32, #tpu.memory_space<vmem>>, vector<16x288xf32>
    %c8_232 = arith.constant 8 : index
    %c0_233 = arith.constant 0 : index
    %c0_234 = arith.constant 0 : index
    %224 = vector.load %arg6[%c8_232, %c0_233, %c0_234] : memref<9x4x16xf32, #tpu.memory_space<vmem>>, vector<1x4x16xf32>
    %225 = vector.shape_cast %224 : vector<1x4x16xf32> to vector<4x16xf32>
    %cst_235 = arith.constant dense<0.000000e+00> : vector<4x288xf32>
    %226 = tpu.matmul %225, %223, %cst_235 {dimension_numbers = #tpu.dot_dimension_numbers<[1], [0], [0], [1], [0, 0, 1, 1], [], []>} : vector<4x16xf32>, vector<16x288xf32>, vector<4x288xf32> -> vector<4x288xf32>
    %227 = arith.addf %222, %226 : vector<4x288xf32>
    %c3_236 = arith.constant 3 : index
    %c0_237 = arith.constant 0 : index
    %c0_238 = arith.constant 0 : index
    %228 = vector.load %arg8[%c3_236, %c0_237, %c0_238] : memref<5x4x1xf32, #tpu.memory_space<vmem>>, vector<1x4x1xf32>
    %229 = vector.shape_cast %228 : vector<1x4x1xf32> to vector<4x1xf32>
    %230 = vector.broadcast %229 : vector<4x1xf32> to vector<4x288xf32>
    %231 = arith.addf %227, %230 : vector<4x288xf32>
    %cst_239 = arith.constant 0.000000e+00 : f32
    %232 = vector.broadcast %cst_239 : f32 to vector<4x288xf32>
    %233 = arith.cmpf ogt, %231, %232 : vector<4x288xf32>
    %cst_240 = arith.constant 0.00999999977 : f32
    %234 = vector.broadcast %cst_240 : f32 to vector<4x288xf32>
    %235 = arith.mulf %234, %231 : vector<4x288xf32>
    %236 = arith.select %233, %231, %235 : vector<4x288xi1>, vector<4x288xf32>
    %cst_241 = arith.constant 0.000000e+00 : f32
    %237 = vector.shape_cast %9 : vector<1x288xi1> to vector<1x288xi1>
    %238 = vector.broadcast %237 : vector<1x288xi1> to vector<4x288xi1>
    %239 = vector.broadcast %cst_241 : f32 to vector<4x288xf32>
    %240 = arith.select %238, %236, %239 : vector<4x288xi1>, vector<4x288xf32>
    %c16 = arith.constant 16 : index
    %c19_242 = arith.constant 19 : index
    %241 = vector.load %arg10[%c16, %c19_242] : memref<20x326xf32, #tpu.memory_space<vmem>>, vector<4x288xf32>
    tpu.vector_store %arg10[%c16, %c19_242], %240 {strides = array<i32>} : memref<20x326xf32, #tpu.memory_space<vmem>>, vector<4x288xf32>,
    %c0_243 = arith.constant 0 : index
    %c0_244 = arith.constant 0 : index
    %242 = vector.load %arg10[%c0_243, %c0_244] : memref<20x326xf32, #tpu.memory_space<vmem>>, vector<20x288xf32>
    %c0_245 = arith.constant 0 : index
    %c0_246 = arith.constant 0 : index
    %c0_247 = arith.constant 0 : index
    %243 = vector.load %arg7[%c0_245, %c0_246, %c0_247] : memref<9x4x20xf32, #tpu.memory_space<vmem>>, vector<1x4x20xf32>
    %244 = vector.shape_cast %243 : vector<1x4x20xf32> to vector<4x20xf32>
    %cst_248 = arith.constant dense<0.000000e+00> : vector<4x288xf32>
    %245 = tpu.matmul %244, %242, %cst_248 {dimension_numbers = #tpu.dot_dimension_numbers<[1], [0], [0], [1], [0, 0, 1, 1], [], []>} : vector<4x20xf32>, vector<20x288xf32>, vector<4x288xf32> -> vector<4x288xf32>
    %c0_249 = arith.constant 0 : index
    %c1_250 = arith.constant 1 : index
    %246 = vector.load %arg10[%c0_249, %c1_250] : memref<20x326xf32, #tpu.memory_space<vmem>>, vector<20x288xf32>
    %c1_251 = arith.constant 1 : index
    %c0_252 = arith.constant 0 : index
    %c0_253 = arith.constant 0 : index
    %247 = vector.load %arg7[%c1_251, %c0_252, %c0_253] : memref<9x4x20xf32, #tpu.memory_space<vmem>>, vector<1x4x20xf32>
    %248 = vector.shape_cast %247 : vector<1x4x20xf32> to vector<4x20xf32>
    %cst_254 = arith.constant dense<0.000000e+00> : vector<4x288xf32>
    %249 = tpu.matmul %248, %246, %cst_254 {dimension_numbers = #tpu.dot_dimension_numbers<[1], [0], [0], [1], [0, 0, 1, 1], [], []>} : vector<4x20xf32>, vector<20x288xf32>, vector<4x288xf32> -> vector<4x288xf32>
    %250 = arith.addf %245, %249 : vector<4x288xf32>
    %c0_255 = arith.constant 0 : index
    %c2_256 = arith.constant 2 : index
    %251 = vector.load %arg10[%c0_255, %c2_256] : memref<20x326xf32, #tpu.memory_space<vmem>>, vector<20x288xf32>
    %c2_257 = arith.constant 2 : index
    %c0_258 = arith.constant 0 : index
    %c0_259 = arith.constant 0 : index
    %252 = vector.load %arg7[%c2_257, %c0_258, %c0_259] : memref<9x4x20xf32, #tpu.memory_space<vmem>>, vector<1x4x20xf32>
    %253 = vector.shape_cast %252 : vector<1x4x20xf32> to vector<4x20xf32>
    %cst_260 = arith.constant dense<0.000000e+00> : vector<4x288xf32>
    %254 = tpu.matmul %253, %251, %cst_260 {dimension_numbers = #tpu.dot_dimension_numbers<[1], [0], [0], [1], [0, 0, 1, 1], [], []>} : vector<4x20xf32>, vector<20x288xf32>, vector<4x288xf32> -> vector<4x288xf32>
    %255 = arith.addf %250, %254 : vector<4x288xf32>
    %c0_261 = arith.constant 0 : index
    %c18_262 = arith.constant 18 : index
    %256 = vector.load %arg10[%c0_261, %c18_262] : memref<20x326xf32, #tpu.memory_space<vmem>>, vector<20x288xf32>
    %c3_263 = arith.constant 3 : index
    %c0_264 = arith.constant 0 : index
    %c0_265 = arith.constant 0 : index
    %257 = vector.load %arg7[%c3_263, %c0_264, %c0_265] : memref<9x4x20xf32, #tpu.memory_space<vmem>>, vector<1x4x20xf32>
    %258 = vector.shape_cast %257 : vector<1x4x20xf32> to vector<4x20xf32>
    %cst_266 = arith.constant dense<0.000000e+00> : vector<4x288xf32>
    %259 = tpu.matmul %258, %256, %cst_266 {dimension_numbers = #tpu.dot_dimension_numbers<[1], [0], [0], [1], [0, 0, 1, 1], [], []>} : vector<4x20xf32>, vector<20x288xf32>, vector<4x288xf32> -> vector<4x288xf32>
    %260 = arith.addf %255, %259 : vector<4x288xf32>
    %c0_267 = arith.constant 0 : index
    %c19_268 = arith.constant 19 : index
    %261 = vector.load %arg10[%c0_267, %c19_268] : memref<20x326xf32, #tpu.memory_space<vmem>>, vector<20x288xf32>
    %c4_269 = arith.constant 4 : index
    %c0_270 = arith.constant 0 : index
    %c0_271 = arith.constant 0 : index
    %262 = vector.load %arg7[%c4_269, %c0_270, %c0_271] : memref<9x4x20xf32, #tpu.memory_space<vmem>>, vector<1x4x20xf32>
    %263 = vector.shape_cast %262 : vector<1x4x20xf32> to vector<4x20xf32>
    %cst_272 = arith.constant dense<0.000000e+00> : vector<4x288xf32>
    %264 = tpu.matmul %263, %261, %cst_272 {dimension_numbers = #tpu.dot_dimension_numbers<[1], [0], [0], [1], [0, 0, 1, 1], [], []>} : vector<4x20xf32>, vector<20x288xf32>, vector<4x288xf32> -> vector<4x288xf32>
    %265 = arith.addf %260, %264 : vector<4x288xf32>
    %c0_273 = arith.constant 0 : index
    %c20_274 = arith.constant 20 : index
    %266 = vector.load %arg10[%c0_273, %c20_274] : memref<20x326xf32, #tpu.memory_space<vmem>>, vector<20x288xf32>
    %c5_275 = arith.constant 5 : index
    %c0_276 = arith.constant 0 : index
    %c0_277 = arith.constant 0 : index
    %267 = vector.load %arg7[%c5_275, %c0_276, %c0_277] : memref<9x4x20xf32, #tpu.memory_space<vmem>>, vector<1x4x20xf32>
    %268 = vector.shape_cast %267 : vector<1x4x20xf32> to vector<4x20xf32>
    %cst_278 = arith.constant dense<0.000000e+00> : vector<4x288xf32>
    %269 = tpu.matmul %268, %266, %cst_278 {dimension_numbers = #tpu.dot_dimension_numbers<[1], [0], [0], [1], [0, 0, 1, 1], [], []>} : vector<4x20xf32>, vector<20x288xf32>, vector<4x288xf32> -> vector<4x288xf32>
    %270 = arith.addf %265, %269 : vector<4x288xf32>
    %c0_279 = arith.constant 0 : index
    %c36_280 = arith.constant 36 : index
    %271 = vector.load %arg10[%c0_279, %c36_280] : memref<20x326xf32, #tpu.memory_space<vmem>>, vector<20x288xf32>
    %c6_281 = arith.constant 6 : index
    %c0_282 = arith.constant 0 : index
    %c0_283 = arith.constant 0 : index
    %272 = vector.load %arg7[%c6_281, %c0_282, %c0_283] : memref<9x4x20xf32, #tpu.memory_space<vmem>>, vector<1x4x20xf32>
    %273 = vector.shape_cast %272 : vector<1x4x20xf32> to vector<4x20xf32>
    %cst_284 = arith.constant dense<0.000000e+00> : vector<4x288xf32>
    %274 = tpu.matmul %273, %271, %cst_284 {dimension_numbers = #tpu.dot_dimension_numbers<[1], [0], [0], [1], [0, 0, 1, 1], [], []>} : vector<4x20xf32>, vector<20x288xf32>, vector<4x288xf32> -> vector<4x288xf32>
    %275 = arith.addf %270, %274 : vector<4x288xf32>
    %c0_285 = arith.constant 0 : index
    %c37_286 = arith.constant 37 : index
    %276 = vector.load %arg10[%c0_285, %c37_286] : memref<20x326xf32, #tpu.memory_space<vmem>>, vector<20x288xf32>
    %c7_287 = arith.constant 7 : index
    %c0_288 = arith.constant 0 : index
    %c0_289 = arith.constant 0 : index
    %277 = vector.load %arg7[%c7_287, %c0_288, %c0_289] : memref<9x4x20xf32, #tpu.memory_space<vmem>>, vector<1x4x20xf32>
    %278 = vector.shape_cast %277 : vector<1x4x20xf32> to vector<4x20xf32>
    %cst_290 = arith.constant dense<0.000000e+00> : vector<4x288xf32>
    %279 = tpu.matmul %278, %276, %cst_290 {dimension_numbers = #tpu.dot_dimension_numbers<[1], [0], [0], [1], [0, 0, 1, 1], [], []>} : vector<4x20xf32>, vector<20x288xf32>, vector<4x288xf32> -> vector<4x288xf32>
    %280 = arith.addf %275, %279 : vector<4x288xf32>
    %c0_291 = arith.constant 0 : index
    %c38_292 = arith.constant 38 : index
    %281 = vector.load %arg10[%c0_291, %c38_292] : memref<20x326xf32, #tpu.memory_space<vmem>>, vector<20x288xf32>
    %c8_293 = arith.constant 8 : index
    %c0_294 = arith.constant 0 : index
    %c0_295 = arith.constant 0 : index
    %282 = vector.load %arg7[%c8_293, %c0_294, %c0_295] : memref<9x4x20xf32, #tpu.memory_space<vmem>>, vector<1x4x20xf32>
    %283 = vector.shape_cast %282 : vector<1x4x20xf32> to vector<4x20xf32>
    %cst_296 = arith.constant dense<0.000000e+00> : vector<4x288xf32>
    %284 = tpu.matmul %283, %281, %cst_296 {dimension_numbers = #tpu.dot_dimension_numbers<[1], [0], [0], [1], [0, 0, 1, 1], [], []>} : vector<4x20xf32>, vector<20x288xf32>, vector<4x288xf32> -> vector<4x288xf32>
    %285 = arith.addf %280, %284 : vector<4x288xf32>
    %c4_297 = arith.constant 4 : index
    %c0_298 = arith.constant 0 : index
    %c0_299 = arith.constant 0 : index
    %286 = vector.load %arg8[%c4_297, %c0_298, %c0_299] : memref<5x4x1xf32, #tpu.memory_space<vmem>>, vector<1x4x1xf32>
    %287 = vector.shape_cast %286 : vector<1x4x1xf32> to vector<4x1xf32>
    %288 = vector.broadcast %287 : vector<4x1xf32> to vector<4x288xf32>
    %289 = arith.addf %285, %288 : vector<4x288xf32>
    %c0_300 = arith.constant 0 : index
    %c0_301 = arith.constant 0 : index
    %c19_302 = arith.constant 19 : index
    %290 = vector.load %arg1[%c0_300, %c0_301, %c19_302] : memref<1x4x324xf32, #tpu.memory_space<vmem>>, vector<1x4x288xf32>
    %291 = vector.shape_cast %290 : vector<1x4x288xf32> to vector<4x288xf32>
    %cst_303 = arith.constant 2.000000e-01 : f32
    %292 = vector.broadcast %cst_303 : f32 to vector<4x288xf32>
    %293 = arith.mulf %289, %292 : vector<4x288xf32>
    %294 = arith.addf %293, %291 : vector<4x288xf32>
    %c0_304 = arith.constant 0 : index
    %c0_305 = arith.constant 0 : index
    %c0_306 = arith.constant 0 : index
    %295 = vector.load %arg9[%c0_304, %c0_305, %c0_306] : memref<1x4x288xf32, #tpu.memory_space<vmem>>, vector<1x4x288xf32>
    %296 = vector.shape_cast %295 : vector<1x4x288xf32> to vector<4x288xf32>
    %297 = vector.shape_cast %294 : vector<4x288xf32> to vector<1x4x288xf32>
    tpu.vector_store %arg9[%c0_304, %c0_305, %c0_306], %297 {strides = array<i32>} : memref<1x4x288xf32, #tpu.memory_space<vmem>>, vector<1x4x288xf32>,
    return
  }
  func.func @transform_0(%arg0: i32) -> (i32, i32, i32) {
    %c0_i32 = arith.constant 0 : i32
    %c0_i32_0 = arith.constant 0 : i32
    %c0_i32_1 = arith.constant 0 : i32
    return %arg0, %c0_i32, %c0_i32_0 : i32, i32, i32
  }
  func.func @transform_1(%arg0: i32) -> (i32, i32) {
    %c0_i32 = arith.constant 0 : i32
    %c0_i32_0 = arith.constant 0 : i32
    %c0_i32_1 = arith.constant 0 : i32
    return %c0_i32, %c0_i32_0 : i32, i32
  }
  func.func @transform_2(%arg0: i32) -> (i32, i32, i32) {
    %c0_i32 = arith.constant 0 : i32
    %c0_i32_0 = arith.constant 0 : i32
    %c0_i32_1 = arith.constant 0 : i32
    %c0_i32_2 = arith.constant 0 : i32
    return %c0_i32, %c0_i32_0, %c0_i32_1 : i32, i32, i32
  }
  func.func @transform_3(%arg0: i32) -> (i32, i32, i32) {
    %c0_i32 = arith.constant 0 : i32
    %c0_i32_0 = arith.constant 0 : i32
    %c0_i32_1 = arith.constant 0 : i32
    %c0_i32_2 = arith.constant 0 : i32
    return %c0_i32, %c0_i32_0, %c0_i32_1 : i32, i32, i32
  }
  func.func @transform_4(%arg0: i32) -> (i32, i32, i32) {
    %c0_i32 = arith.constant 0 : i32
    %c0_i32_0 = arith.constant 0 : i32
    %c0_i32_1 = arith.constant 0 : i32
    %c0_i32_2 = arith.constant 0 : i32
    return %c0_i32, %c0_i32_0, %c0_i32_1 : i32, i32, i32
  }
  func.func @transform_5(%arg0: i32) -> (i32, i32, i32) {
    %c0_i32 = arith.constant 0 : i32
    %c0_i32_0 = arith.constant 0 : i32
    %c0_i32_1 = arith.constant 0 : i32
    %c0_i32_2 = arith.constant 0 : i32
    return %c0_i32, %c0_i32_0, %c0_i32_1 : i32, i32, i32
  }
  func.func @transform_6(%arg0: i32) -> (i32, i32, i32) {
    %c0_i32 = arith.constant 0 : i32
    %c0_i32_0 = arith.constant 0 : i32
    %c0_i32_1 = arith.constant 0 : i32
    %c0_i32_2 = arith.constant 0 : i32
    return %c0_i32, %c0_i32_0, %c0_i32_1 : i32, i32, i32
  }
  func.func @transform_7(%arg0: i32) -> (i32, i32, i32) {
    %c0_i32 = arith.constant 0 : i32
    %c0_i32_0 = arith.constant 0 : i32
    %c0_i32_1 = arith.constant 0 : i32
    %c0_i32_2 = arith.constant 0 : i32
    return %c0_i32, %c0_i32_0, %c0_i32_1 : i32, i32, i32
  }
  func.func @transform_8(%arg0: i32) -> (i32, i32, i32) {
    %c0_i32 = arith.constant 0 : i32
    %c0_i32_0 = arith.constant 0 : i32
    %c0_i32_1 = arith.constant 0 : i32
    return %arg0, %c0_i32, %c0_i32_0 : i32, i32, i32
  }
}

</mosaic_0001>

<llo_original>
// kernel: tpu_custom_call.1
$region0: #{tpu_custom_call.1}
  #allocation0 [shape = 'u32[]', space=smem, size = 0x4, offset = 0x4, fixed_abs, tag = 'smem constant byte address 0x4 - core index']
  #allocation1 [shape = 'u32[144,128]{1,0:T(1,128)}', space=vmem, size = 0x12000, scoped, tag = 'internal scratch']
  #allocation2 [shape = 'f32[20,326]{1,0:T(8,128)}', space=vmem, size = 0x9000, scoped, tag = 'scratch operand']
  %s0 = inlined_call_operand.hbm [shape: f32[2,4,324], index: 0, kind: input, shape index: {}]
  %s1 = inlined_call_operand.vmem [shape: f32[1,288], index: 1, kind: input, shape index: {}]
  %s2 = inlined_call_operand.vmem [shape: f32[9,4,4], index: 2, kind: input, shape index: {}]
  %s3 = inlined_call_operand.vmem [shape: f32[9,4,8], index: 3, kind: input, shape index: {}]
  %s4 = inlined_call_operand.vmem [shape: f32[9,4,12], index: 4, kind: input, shape index: {}]
  %s5 = inlined_call_operand.vmem [shape: f32[9,4,16], index: 5, kind: input, shape index: {}]
  %s6 = inlined_call_operand.vmem [shape: f32[9,4,20], index: 6, kind: input, shape index: {}]
  %s7 = inlined_call_operand.vmem [shape: f32[5,4,1], index: 7, kind: input, shape index: {}]
  %s8 = inlined_call_operand.hbm [shape: f32[2,4,288], index: 8, kind: output, shape index: {}]
  %s9 = sld [smem:[#allocation0]]
  $region69: #{tpu_custom_call.1} parent=0
    _
  %s11 = ssub.s32 1, %s9
  %s12 = scalar_select 0, %s11, %s9
  $region1: #{tpu_custom_call.1} parent=0
    #allocation3 [shape = 'u8[12288]{0}', space=vmem, size = 0x3000, scoped, tag = 'input window, operand 0']
    #allocation4 [shape = 's32[2]{0}', space=sflag, size = 0x8, scoped, tag = 'scoped memory for tpu_custom_call.1']
    #allocation5 [shape = 's32[2]{0}', space=sflag, size = 0x8, scoped, tag = 'scoped memory for tpu_custom_call.1']
    #allocation6 [shape = 'u8[12288]{0}', space=vmem, size = 0x3000, scoped, tag = 'output window, operand 0']
    %13 = vsyncpa [#allocation4], 0
    %s14 = scalar_lea.sflag [#allocation4], 1
    %15 = vsyncpa %s14, 0
    %16 = vsyncpa [#allocation5], 0
    %s17 = scalar_lea.sflag [#allocation5], 1
    %18 = vsyncpa %s17, 0
    loop: start=0, step=1, limit=4
    $region2: #{tpu_custom_call.1} parent=1 // loop_pre_header
      _
    $region3: #{tpu_custom_call.1} parent=1 // loop_header
      %s20 = sphi 0, %s24
      %p21 = scmp.ge.s32.totalorder %s20, 4
      %s30 = sphi 0, %s32
      %s33 = sphi 0, %s30
      %s34 = sphi 0, %s33
      %s50 = sphi 0, %s34
      %s54 = sphi 0, %s54
      %s56 = sphi 0, %s54
      %s57 = sphi 0, %s56
      %s71 = sphi 0, %s57
      %s75 = sphi 0, %s75
      %s77 = sphi 0, %s75
      %s78 = sphi 0, %s77
      %s92 = sphi 0, %s78
      %s96 = sphi 0, %s96
      %s98 = sphi 0, %s96
      %s99 = sphi 0, %s98
      %s113 = sphi 0, %s99
      %s117 = sphi 0, %s117
      %s119 = sphi 0, %s117
      %s120 = sphi 0, %s119
      %s134 = sphi 0, %s120
      %s138 = sphi 0, %s138
      %s140 = sphi 0, %s138
      %s141 = sphi 0, %s140
      %s155 = sphi 0, %s141
      %s159 = sphi 0, %s159
      %s161 = sphi 0, %s159
      %s162 = sphi 0, %s161
      %s176 = sphi 0, %s162
      %s180 = sphi 0, %s180
      %s182 = sphi 0, %s180
      %s183 = sphi 0, %s182
      %s197 = sphi 0, %s183
      %s203 = sphi 0, %s205
      %s206 = sphi 0, %s203
      %s207 = sphi 0, %s206
      %s223 = sphi 0, %s207
    $region4: #{tpu_custom_call.1} parent=1 // loop_header_branch
      %23 = sbr.rel (%p21) target = $region8
    $region5: #{tpu_custom_call.1} parent=1 // loop_body
      %s25 = ssub.s32 %s20, 1
      %s26 = ssub.s32 %s20, 2
      %s27 = sadd.s32 %s20, 1
      %s28 = ssub.s32 %s20, %s27
      %p29 = scmp.eq.s32.totalorder %s28, 0
      %s31 = sadd.s32 %s30, 1
      %s32 = scalar_select %p29, %s30, %s31
      %p35 = pneg %p29
      %p36 = scmp.eq.s32.totalorder %s20, 1
      %p37 = por %p35, %p36
      %p38 = scmp.ne.s32.totalorder %s30, %s33
      %p39 = scmp.eq.s32.totalorder %s20, 0
      %p40 = por %p38, %p39
      %p41 = scmp.ne.s32.totalorder %s30, %s33
      %p42 = scmp.eq.s32.totalorder %s25, 1
      %p43 = por %p41, %p42
      %p44 = scmp.ne.s32.totalorder %s33, %s34
      %p45 = scmp.eq.s32.totalorder %s25, 0
      %p46 = por %p44, %p45
      %p47 = scmp.ne.s32.totalorder %s33, %s34
      %p48 = scmp.eq.s32.totalorder %s26, 1
      %p49 = por %p47, %p48
      %p51 = scmp.ne.s32.totalorder %s34, %s50
      %p52 = scmp.eq.s32.totalorder %s26, 0
      %p53 = por %p51, %p52
      %s55 = sadd.s32 %s54, 1
      %p58 = scmp.eq.s32.totalorder %s20, 1
      %p59 = scmp.ne.s32.totalorder %s54, %s56
      %p60 = scmp.eq.s32.totalorder %s20, 0
      %p61 = por %p59, %p60
      %p62 = scmp.ne.s32.totalorder %s54, %s56
      %p63 = scmp.eq.s32.totalorder %s25, 1
      %p64 = por %p62, %p63
      %p65 = scmp.ne.s32.totalorder %s56, %s57
      %p66 = scmp.eq.s32.totalorder %s25, 0
      %p67 = por %p65, %p66
      %p68 = scmp.ne.s32.totalorder %s56, %s57
      %p69 = scmp.eq.s32.totalorder %s26, 1
      %p70 = por %p68, %p69
      %p72 = scmp.ne.s32.totalorder %s57, %s71
      %p73 = scmp.eq.s32.totalorder %s26, 0
      %p74 = por %p72, %p73
      %s76 = sadd.s32 %s75, 1
      %p79 = scmp.eq.s32.totalorder %s20, 1
      %p80 = scmp.ne.s32.totalorder %s75, %s77
      %p81 = scmp.eq.s32.totalorder %s20, 0
      %p82 = por %p80, %p81
      %p83 = scmp.ne.s32.totalorder %s75, %s77
      %p84 = scmp.eq.s32.totalorder %s25, 1
      %p85 = por %p83, %p84
      %p86 = scmp.ne.s32.totalorder %s77, %s78
      %p87 = scmp.eq.s32.totalorder %s25, 0
      %p88 = por %p86, %p87
      %p89 = scmp.ne.s32.totalorder %s77, %s78
      %p90 = scmp.eq.s32.totalorder %s26, 1
      %p91 = por %p89, %p90
      %p93 = scmp.ne.s32.totalorder %s78, %s92
      %p94 = scmp.eq.s32.totalorder %s26, 0
      %p95 = por %p93, %p94
      %s97 = sadd.s32 %s96, 1
      %p100 = scmp.eq.s32.totalorder %s20, 1
      %p101 = scmp.ne.s32.totalorder %s96, %s98
      %p102 = scmp.eq.s32.totalorder %s20, 0
      %p103 = por %p101, %p102
      %p104 = scmp.ne.s32.totalorder %s96, %s98
      %p105 = scmp.eq.s32.totalorder %s25, 1
      %p106 = por %p104, %p105
      %p107 = scmp.ne.s32.totalorder %s98, %s99
      %p108 = scmp.eq.s32.totalorder %s25, 0
      %p109 = por %p107, %p108
      %p110 = scmp.ne.s32.totalorder %s98, %s99
      %p111 = scmp.eq.s32.totalorder %s26, 1
      %p112 = por %p110, %p111
      %p114 = scmp.ne.s32.totalorder %s99, %s113
      %p115 = scmp.eq.s32.totalorder %s26, 0
      %p116 = por %p114, %p115
      %s118 = sadd.s32 %s117, 1
      %p121 = scmp.eq.s32.totalorder %s20, 1
      %p122 = scmp.ne.s32.totalorder %s117, %s119
      %p123 = scmp.eq.s32.totalorder %s20, 0
      %p124 = por %p122, %p123
      %p125 = scmp.ne.s32.totalorder %s117, %s119
      %p126 = scmp.eq.s32.totalorder %s25, 1
      %p127 = por %p125, %p126
      %p128 = scmp.ne.s32.totalorder %s119, %s120
      %p129 = scmp.eq.s32.totalorder %s25, 0
      %p130 = por %p128, %p129
      %p131 = scmp.ne.s32.totalorder %s119, %s120
      %p132 = scmp.eq.s32.totalorder %s26, 1
      %p133 = por %p131, %p132
      %p135 = scmp.ne.s32.totalorder %s120, %s134
      %p136 = scmp.eq.s32.totalorder %s26, 0
      %p137 = por %p135, %p136
      %s139 = sadd.s32 %s138, 1
      %p142 = scmp.eq.s32.totalorder %s20, 1
      %p143 = scmp.ne.s32.totalorder %s138, %s140
      %p144 = scmp.eq.s32.totalorder %s20, 0
      %p145 = por %p143, %p144
      %p146 = scmp.ne.s32.totalorder %s138, %s140
      %p147 = scmp.eq.s32.totalorder %s25, 1
      %p148 = por %p146, %p147
      %p149 = scmp.ne.s32.totalorder %s140, %s141
      %p150 = scmp.eq.s32.totalorder %s25, 0
      %p151 = por %p149, %p150
      %p152 = scmp.ne.s32.totalorder %s140, %s141
      %p153 = scmp.eq.s32.totalorder %s26, 1
      %p154 = por %p152, %p153
      %p156 = scmp.ne.s32.totalorder %s141, %s155
      %p157 = scmp.eq.s32.totalorder %s26, 0
      %p158 = por %p156, %p157
      %s160 = sadd.s32 %s159, 1
      %p163 = scmp.eq.s32.totalorder %s20, 1
      %p164 = scmp.ne.s32.totalorder %s159, %s161
      %p165 = scmp.eq.s32.totalorder %s20, 0
      %p166 = por %p164, %p165
      %p167 = scmp.ne.s32.totalorder %s159, %s161
      %p168 = scmp.eq.s32.totalorder %s25, 1
      %p169 = por %p167, %p168
      %p170 = scmp.ne.s32.totalorder %s161, %s162
      %p171 = scmp.eq.s32.totalorder %s25, 0
      %p172 = por %p170, %p171
      %p173 = scmp.ne.s32.totalorder %s161, %s162
      %p174 = scmp.eq.s32.totalorder %s26, 1
      %p175 = por %p173, %p174
      %p177 = scmp.ne.s32.totalorder %s162, %s176
      %p178 = scmp.eq.s32.totalorder %s26, 0
      %p179 = por %p177, %p178
      %s181 = sadd.s32 %s180, 1
      %p184 = scmp.eq.s32.totalorder %s20, 1
      %p185 = scmp.ne.s32.totalorder %s180, %s182
      %p186 = scmp.eq.s32.totalorder %s20, 0
      %p187 = por %p185, %p186
      %p188 = scmp.ne.s32.totalorder %s180, %s182
      %p189 = scmp.eq.s32.totalorder %s25, 1
      %p190 = por %p188, %p189
      %p191 = scmp.ne.s32.totalorder %s182, %s183
      %p192 = scmp.eq.s32.totalorder %s25, 0
      %p193 = por %p191, %p192
      %p194 = scmp.ne.s32.totalorder %s182, %s183
      %p195 = scmp.eq.s32.totalorder %s26, 1
      %p196 = por %p194, %p195
      %p198 = scmp.ne.s32.totalorder %s183, %s197
      %p199 = scmp.eq.s32.totalorder %s26, 0
      %p200 = por %p198, %p199
      %s201 = ssub.s32 %s20, %s27
      %p202 = scmp.eq.s32.totalorder %s201, 0
      %s204 = sadd.s32 %s203, 1
      %s205 = scalar_select %p202, %s203, %s204
      %p208 = pneg %p202
      %p209 = scmp.eq.s32.totalorder %s20, 1
      %p210 = por %p208, %p209
      %p211 = scmp.ne.s32.totalorder %s203, %s206
      %p212 = scmp.eq.s32.totalorder %s20, 0
      %p213 = por %p211, %p212
      %p214 = scmp.ne.s32.totalorder %s203, %s206
      %p215 = scmp.eq.s32.totalorder %s25, 1
      %p216 = por %p214, %p215
      %p217 = scmp.ne.s32.totalorder %s206, %s207
      %p218 = scmp.eq.s32.totalorder %s25, 0
      %p219 = por %p217, %p218
      %p220 = scmp.ne.s32.totalorder %s206, %s207
      %p221 = scmp.eq.s32.totalorder %s26, 1
      %p222 = por %p220, %p221
      %p224 = scmp.ne.s32.totalorder %s207, %s223
      %p225 = scmp.eq.s32.totalorder %s26, 0
      %p226 = por %p224, %p225
      %p227 = scmp.le.s32.totalorder 1, %s20
      %p228 = scmp.lt.s32.totalorder %s20, 3
      %p229 = pnand %p227, %p228
      %p230 = pneg %p229
      // Predicated region
      $region9: #{tpu_custom_call.1} parent=5 // pred_check
        _
      $region10: #{tpu_custom_call.1} parent=5 // pred_check_branch
        %232 = sbr.rel (%p229) target = $region12
      $region11: #{tpu_custom_call.1} parent=5 // pred_region
        %s233 = ssub.s32 %s20, 1
        // Predicated region
        $region13: #{tpu_custom_call.1} parent=11 // pred_check
          %p234 = pneg %p67
        $region14: #{tpu_custom_call.1} parent=11 // pred_check_branch
          %236 = sbr.rel (%p234) target = $region16
        $region15: #{tpu_custom_call.1} parent=11 // pred_region
          _
        $region16: #{tpu_custom_call.1} parent=11 // pred_fallthru
          _
        // Predicated region
        $region17: #{tpu_custom_call.1} parent=11 // pred_check
          %p237 = pneg %p88
        $region18: #{tpu_custom_call.1} parent=11 // pred_check_branch
          %239 = sbr.rel (%p237) target = $region20
        $region19: #{tpu_custom_call.1} parent=11 // pred_region
          _
        $region20: #{tpu_custom_call.1} parent=11 // pred_fallthru
          _
        // Predicated region
        $region21: #{tpu_custom_call.1} parent=11 // pred_check
          %p240 = pneg %p109
        $region22: #{tpu_custom_call.1} parent=11 // pred_check_branch
          %242 = sbr.rel (%p240) target = $region24
        $region23: #{tpu_custom_call.1} parent=11 // pred_region
          _
        $region24: #{tpu_custom_call.1} parent=11 // pred_fallthru
          _
        // Predicated region
        $region25: #{tpu_custom_call.1} parent=11 // pred_check
          %p243 = pneg %p130
        $region26: #{tpu_custom_call.1} parent=11 // pred_check_branch
          %245 = sbr.rel (%p243) target = $region28
        $region27: #{tpu_custom_call.1} parent=11 // pred_region
          _
        $region28: #{tpu_custom_call.1} parent=11 // pred_fallthru
          _
        // Predicated region
        $region29: #{tpu_custom_call.1} parent=11 // pred_check
          %p246 = pneg %p151
        $region30: #{tpu_custom_call.1} parent=11 // pred_check_branch
          %248 = sbr.rel (%p246) target = $region32
        $region31: #{tpu_custom_call.1} parent=11 // pred_region
          _
        $region32: #{tpu_custom_call.1} parent=11 // pred_fallthru
          _
        // Predicated region
        $region33: #{tpu_custom_call.1} parent=11 // pred_check
          %p249 = pneg %p172
        $region34: #{tpu_custom_call.1} parent=11 // pred_check_branch
          %251 = sbr.rel (%p249) target = $region36
        $region35: #{tpu_custom_call.1} parent=11 // pred_region
          _
        $region36: #{tpu_custom_call.1} parent=11 // pred_fallthru
          _
        // Predicated region
        $region37: #{tpu_custom_call.1} parent=11 // pred_check
          %p252 = pneg %p193
        $region38: #{tpu_custom_call.1} parent=11 // pred_check_branch
          %254 = sbr.rel (%p252) target = $region40
        $region39: #{tpu_custom_call.1} parent=11 // pred_region
          _
        $region40: #{tpu_custom_call.1} parent=11 // pred_fallthru
          _
      $region12: #{tpu_custom_call.1} parent=5 // pred_fallthru
        _
      %p255 = scmp.lt.s32.totalorder %s20, 2
      // Predicated region
      $region41: #{tpu_custom_call.1} parent=5 // pred_check
        %p256 = pneg %p255
      $region42: #{tpu_custom_call.1} parent=5 // pred_check_branch
        %258 = sbr.rel (%p256) target = $region44
      $region43: #{tpu_custom_call.1} parent=5 // pred_region
        // Predicated region
        $region45: #{tpu_custom_call.1} parent=43 // pred_check
          %p259 = pneg %p40
        $region46: #{tpu_custom_call.1} parent=43 // pred_check_branch
          %261 = sbr.rel (%p259) target = $region48
        $region47: #{tpu_custom_call.1} parent=43 // pred_region
          %s262 = sand.u32 %s30, 1
          %s263 = scalar_lea.sflag [#allocation4], %s262
          %s264 = sand.u32 %s30, 1
          %s265 = smul.addr %s264, 12
          %s266 = scalar_lea.vmem [#allocation3], %s265
          %s268 = ssub.s32 192, 192
          %269 = vsyncadd %s263, %s268
          %s270 = smul.addr %s20, 3
          %s271 = smul.addr %s270, 64
          %s272 = scalar_lea.hbm %s0, %s271
          %s274 = sshll.u32 %s266, 4
          %s275 = int_to_ptr.vmem [resolvable:$true] %s274
          %277 = dma.hbm_to_vmem [thread:$0]  %s272, 192, %s275, %s263
        $region48: #{tpu_custom_call.1} parent=43 // pred_fallthru
          _
      $region44: #{tpu_custom_call.1} parent=5 // pred_fallthru
        _
      %p278 = scmp.le.s32.totalorder 1, %s20
      %p279 = scmp.lt.s32.totalorder %s20, 3
      %p280 = pnand %p278, %p279
      %p281 = pneg %p280
      // Predicated region
      $region49: #{tpu_custom_call.1} parent=5 // pred_check
        _
      $region50: #{tpu_custom_call.1} parent=5 // pred_check_branch
        %283 = sbr.rel (%p280) target = $region52
      $region51: #{tpu_custom_call.1} parent=5 // pred_region
        %s284 = ssub.s32 %s20, 1
        %s285 = sand.u32 %s33, 1
        %s286 = scalar_lea.sflag [#allocation4], %s285
        %s287 = sand.u32 %s33, 1
        %s288 = smul.addr %s287, 12
        %s289 = scalar_lea.vmem [#allocation3], %s288
        // Predicated region
        $region53: #{tpu_custom_call.1} parent=51 // pred_check
          %p290 = pneg %p46
        $region54: #{tpu_custom_call.1} parent=51 // pred_check_branch
          %292 = sbr.rel (%p290) target = $region56
        $region55: #{tpu_custom_call.1} parent=51 // pred_region
          %293 = dma.done %s286, 192
        $region56: #{tpu_custom_call.1} parent=51 // pred_fallthru
          _
        %s294 = sand.u32 %s33, 1
        %s295 = scalar_lea.sflag [#allocation4], %s294
        %s296 = sand.u32 %s33, 1
        %s297 = smul.addr %s296, 12
        %s298 = scalar_lea.vmem [#allocation3], %s297
        %p299 = pneg %p46
        %p300 = pneg %p43
        %p301 = pneg %p67
        %p302 = pneg %p64
        %p303 = pneg %p88
        %p304 = pneg %p85
        %p305 = pneg %p109
        %p306 = pneg %p106
        %p307 = pneg %p130
        %p308 = pneg %p127
        %p309 = pneg %p151
        %p310 = pneg %p148
        %p311 = pneg %p172
        %p312 = pneg %p169
        %p313 = pneg %p193
        %p314 = pneg %p190
        %p315 = pneg %p219
        %p316 = pneg %p216
        %s317 = sand.u32 %s206, 1
        %s318 = scalar_lea.sflag [#allocation5], %s317
        %s319 = sand.u32 %s206, 1
        %s320 = smul.addr %s319, 12
        %s321 = scalar_lea.vmem [#allocation6], %s320
        %vm322 = vcmask 154624
        %323 = vst.msk [vmem:[#allocation2] sm:$0xff] %vm322, 0.0
        %324 = vst.msk [vmem:[#allocation2 + $0x18] sm:$0xff] %vm322, 0.0
        %vm325 = vcmask 150528
        %326 = vst.msk [vmem:[#allocation2 + $0x30] sm:$0xf] %vm325, 0.0
        %vm327 = vcmask 572824
        %328 = vst.msk [vmem:[#allocation2 + $0x10] sm:$0xff] %vm327, 0.0
        %329 = vst.msk [vmem:[#allocation2 + $0x28] sm:$0xff] %vm327, 0.0
        %vm330 = vcmask 568728
        %331 = vst.msk [vmem:[#allocation2 + $0x40] sm:$0xf] %vm330, 0.0
        %v332 = vld [vmem:[%s289] sm:$0xff]
        %v333 = vld [vmem:[%s289 + $0x8] sm:$0xf]
        %v335 = vcombine.high %v332, %v332
        %337 = vst [vmem:[#allocation2] sm:$0xf] %v332
        %338 = vst [vmem:[#allocation2 + $0x8] sm:$0xf] %v335
        %vm339 = vcmask 551936
        %340 = vst.msk [vmem:[#allocation2 + $0x10] sm:$0xf] %vm339, %v333
        %v341 = vld [vmem:[%s1] sm:$0x7]
        %vm342 = vcmp.gt.f32.partialorder %v341, 0.5
        %v343 = vld [vmem:[#allocation2] sm:$0xf]
        %v344 = vld [vmem:[#allocation2 + $0x8] sm:$0xf]
        %v345 = vld [vmem:[#allocation2 + $0x10] sm:$0xf]
        %v346 = vld [vmem:[%s2] sm:$0xf]
        %s347 = scalar_lea.vmem %s2, 4
        %v348 = vld [vmem:[%s347] sm:$0xf]
        %352 = vrot.lane.b32.xlu0 %v343, 127
        %v353 = vpop.permute.xlu0 %352
        %354 = vrot.lane.b32.xlu0 %v344, 127
        %v355 = vpop.permute.xlu0 %354
        %356 = vrot.lane.b32.xlu0 %v345, 127
        %v357 = vpop.permute.xlu0 %356
        %vm358 = vcmask 1039360
        %v359 = vsel %vm358, %v353, %v355
        %v360 = vsel %vm358, %v355, %v357
        %vm361 = vcmask 31744
        %v363 = vsel %vm361, %v348, 0
        %vm365 = vcmask 1043456
        %v366 = vsel %vm365, %v359, 0
        %v368 = vsel %vm365, %v360, 0
        %v370 = vsel %vm365, %v357, 0
        %372 = vmatprep.subr.mxu0 %v368
        %373 = vmatpush1.msra.mxu0 %v366
        %374 = vmatprep.subr.mxu0 0.0
        %375 = vmatpush1.msra.mxu0 0.0
        %376 = vmatprep.subr.mxu0 0.0
        %377 = vmatpush1.msra.mxu0 0.0
        %378 = vmatprep.subr.mxu0 0.0
        %379 = vmatpush1.msra.mxu0 0.0
        %380 = vmatprep.subr.mxu0 0.0
        %381 = vmatpush1.msra.mxu0 0.0
        %382 = vmatprep.subr.mxu0 0.0
        %383 = vmatpush1.msra.mxu0 0.0
        %384 = vmatprep.subr.mxu0 0.0
        %385 = vmatpush1.msra.mxu0 0.0
        %386 = vmatprep.subr.mxu0 0.0
        %387 = vmatpush1.msra.mxu0 0.0
        %388 = vmatprep.subr.mxu0 0.0
        %389 = vmatpush1.msra.mxu0 0.0
        %390 = vmatprep.subr.mxu0 0.0
        %391 = vmatpush1.msra.mxu0 0.0
        %392 = vmatprep.subr.mxu0 0.0
        %393 = vmatpush1.msra.mxu0 0.0
        %394 = vmatprep.subr.mxu0 0.0
        %395 = vmatpush1.msra.mxu0 0.0
        %396 = vmatprep.subr.mxu0 0.0
        %397 = vmatpush1.msra.mxu0 0.0
        %398 = vmatprep.subr.mxu0 0.0
        %399 = vmatpush1.msra.mxu0 0.0
        %400 = vmatprep.subr.mxu0 0.0
        %401 = vmatpush1.msra.mxu0 0.0
        %402 = vmatprep.subr.mxu0 0.0
        %403 = vmatpush1.msra.mxu0 0.0
        %404 = vmatprep.subr.mxu0 0.0
        %405 = vmatpush1.msra.mxu0 0.0
        %406 = vmatprep.subr.mxu0 0.0
        %407 = vmatpush1.msra.mxu0 0.0
        %408 = vmatprep.subr.mxu0 0.0
        %409 = vmatpush1.msra.mxu0 0.0
        %410 = vmatprep.subr.mxu0 0.0
        %411 = vmatpush1.msra.mxu0 0.0
        %412 = vmatprep.subr.mxu0 0.0
        %413 = vmatpush1.msra.mxu0 0.0
        %414 = vmatprep.subr.mxu0 0.0
        %415 = vmatpush1.msra.mxu0 0.0
        %416 = vmatprep.subr.mxu0 0.0
        %417 = vmatpush1.msra.mxu0 0.0
        %418 = vmatprep.subr.mxu0 0.0
        %419 = vmatpush1.msra.mxu0 0.0
        %420 = vmatprep.subr.mxu0 0.0
        %421 = vmatpush1.msra.mxu0 0.0
        %422 = vmatprep.subr.mxu0 0.0
        %423 = vmatpush1.msra.mxu0 0.0
        %424 = vmatprep.subr.mxu0 0.0
        %425 = vmatpush1.msra.mxu0 0.0
        %426 = vmatprep.subr.mxu0 0.0
        %427 = vmatpush1.msra.mxu0 0.0
        %428 = vmatprep.subr.mxu0 0.0
        %429 = vmatpush1.msra.mxu0 0.0
        %430 = vmatprep.subr.mxu0 0.0
        %431 = vmatpush1.msra.mxu0 0.0
        %432 = vmatprep.subr.mxu0 0.0
        %433 = vmatpush1.msra.mxu0 0.0
        %434 = vmatprep.subr.mxu0 0.0
        %435 = vmatpush1.msra.mxu0 0.0
        %436 = vmatprep.mubr.f32.mxu0 0.0
        %437 = vmatmul.mubr.f32.gmra.mrb[0].mxu0 %v363
        %v438 = vpop.f32.mrb[0].mxu0
        %v439 = vadd.f32 0.0, %v438
        %v440 = vpop.f32.mrb[0].mxu0
        %v441 = vadd.f32 0.0, %v440
        %442 = vdwg.mxu0
        %443 = vmatprep.subr.mxu0 0.0
        %444 = vmatpush1.msra.mxu0 %v370
        %445 = vmatprep.subr.mxu0 0.0
        %446 = vmatpush1.msra.mxu0 0.0
        %447 = vmatprep.subr.mxu0 0.0
        %448 = vmatpush1.msra.mxu0 0.0
        %449 = vmatprep.subr.mxu0 0.0
        %450 = vmatpush1.msra.mxu0 0.0
        %451 = vmatprep.subr.mxu0 0.0
        %452 = vmatpush1.msra.mxu0 0.0
        %453 = vmatprep.subr.mxu0 0.0
        %454 = vmatpush1.msra.mxu0 0.0
        %455 = vmatprep.subr.mxu0 0.0
        %456 = vmatpush1.msra.mxu0 0.0
        %457 = vmatprep.subr.mxu0 0.0
        %458 = vmatpush1.msra.mxu0 0.0
        %459 = vmatprep.subr.mxu0 0.0
        %460 = vmatpush1.msra.mxu0 0.0
        %461 = vmatprep.subr.mxu0 0.0
        %462 = vmatpush1.msra.mxu0 0.0
        %463 = vmatprep.subr.mxu0 0.0
        %464 = vmatpush1.msra.mxu0 0.0
        %465 = vmatprep.subr.mxu0 0.0
        %466 = vmatpush1.msra.mxu0 0.0
        %467 = vmatprep.subr.mxu0 0.0
        %468 = vmatpush1.msra.mxu0 0.0
        %469 = vmatprep.subr.mxu0 0.0
        %470 = vmatpush1.msra.mxu0 0.0
        %471 = vmatprep.subr.mxu0 0.0
        %472 = vmatpush1.msra.mxu0 0.0
        %473 = vmatprep.subr.mxu0 0.0
        %474 = vmatpush1.msra.mxu0 0.0
        %475 = vmatprep.subr.mxu0 0.0
        %476 = vmatpush1.msra.mxu0 0.0
        %477 = vmatprep.subr.mxu0 0.0
        %478 = vmatpush1.msra.mxu0 0.0
        %479 = vmatprep.subr.mxu0 0.0
        %480 = vmatpush1.msra.mxu0 0.0
        %481 = vmatprep.subr.mxu0 0.0
        %482 = vmatpush1.msra.mxu0 0.0
        %483 = vmatprep.subr.mxu0 0.0
        %484 = vmatpush1.msra.mxu0 0.0
        %485 = vmatprep.subr.mxu0 0.0
        %486 = vmatpush1.msra.mxu0 0.0
        %487 = vmatprep.subr.mxu0 0.0
        %488 = vmatpush1.msra.mxu0 0.0
        %489 = vmatprep.subr.mxu0 0.0
        %490 = vmatpush1.msra.mxu0 0.0
        %491 = vmatprep.subr.mxu0 0.0
        %492 = vmatpush1.msra.mxu0 0.0
        %493 = vmatprep.subr.mxu0 0.0
        %494 = vmatpush1.msra.mxu0 0.0
        %495 = vmatprep.subr.mxu0 0.0
        %496 = vmatpush1.msra.mxu0 0.0
        %497 = vmatprep.subr.mxu0 0.0
        %498 = vmatpush1.msra.mxu0 0.0
        %499 = vmatprep.subr.mxu0 0.0
        %500 = vmatpush1.msra.mxu0 0.0
        %501 = vmatprep.subr.mxu0 0.0
        %502 = vmatpush1.msra.mxu0 0.0
        %503 = vmatprep.subr.mxu0 0.0
        %504 = vmatpush1.msra.mxu0 0.0
        %505 = vmatprep.subr.mxu0 0.0
        %506 = vmatpush1.msra.mxu0 0.0
        %507 = vmatprep.mubr.f32.mxu0 0.0
        %508 = vmatmul.mubr.f32.gmra.mrb[0].mxu0 %v363
        %v509 = vpop.f32.mrb[0].mxu0
        %v510 = vadd.f32 0.0, %v509
        %v511 = vpop.f32.mrb[0].mxu0
        %512 = vdwg.mxu0
        %v514 = vsel %vm361, %v346, 0
        %v516 = vsel %vm365, %v343, 0
        %v518 = vsel %vm365, %v344, 0
        %v520 = vsel %vm365, %v345, 0
        %522 = vmatprep.subr.mxu0 %v518
        %523 = vmatpush1.msra.mxu0 %v516
        %524 = vmatprep.subr.mxu0 0.0
        %525 = vmatpush1.msra.mxu0 0.0
        %526 = vmatprep.subr.mxu0 0.0
        %527 = vmatpush1.msra.mxu0 0.0
        %528 = vmatprep.subr.mxu0 0.0
        %529 = vmatpush1.msra.mxu0 0.0
        %530 = vmatprep.subr.mxu0 0.0
        %531 = vmatpush1.msra.mxu0 0.0
        %532 = vmatprep.subr.mxu0 0.0
        %533 = vmatpush1.msra.mxu0 0.0
        %534 = vmatprep.subr.mxu0 0.0
        %535 = vmatpush1.msra.mxu0 0.0
        %536 = vmatprep.subr.mxu0 0.0
        %537 = vmatpush1.msra.mxu0 0.0
        %538 = vmatprep.subr.mxu0 0.0
        %539 = vmatpush1.msra.mxu0 0.0
        %540 = vmatprep.subr.mxu0 0.0
        %541 = vmatpush1.msra.mxu0 0.0
        %542 = vmatprep.subr.mxu0 0.0
        %543 = vmatpush1.msra.mxu0 0.0
        %544 = vmatprep.subr.mxu0 0.0
        %545 = vmatpush1.msra.mxu0 0.0
        %546 = vmatprep.subr.mxu0 0.0
        %547 = vmatpush1.msra.mxu0 0.0
        %548 = vmatprep.subr.mxu0 0.0
        %549 = vmatpush1.msra.mxu0 0.0
        %550 = vmatprep.subr.mxu0 0.0
        %551 = vmatpush1.msra.mxu0 0.0
        %552 = vmatprep.subr.mxu0 0.0
        %553 = vmatpush1.msra.mxu0 0.0
        %554 = vmatprep.subr.mxu0 0.0
        %555 = vmatpush1.msra.mxu0 0.0
        %556 = vmatprep.subr.mxu0 0.0
        %557 = vmatpush1.msra.mxu0 0.0
        %558 = vmatprep.subr.mxu0 0.0
        %559 = vmatpush1.msra.mxu0 0.0
        %560 = vmatprep.subr.mxu0 0.0
        %561 = vmatpush1.msra.mxu0 0.0
        %562 = vmatprep.subr.mxu0 0.0
        %563 = vmatpush1.msra.mxu0 0.0
        %564 = vmatprep.subr.mxu0 0.0
        %565 = vmatpush1.msra.mxu0 0.0
        %566 = vmatprep.subr.mxu0 0.0
        %567 = vmatpush1.msra.mxu0 0.0
        %568 = vmatprep.subr.mxu0 0.0
        %569 = vmatpush1.msra.mxu0 0.0
        %570 = vmatprep.subr.mxu0 0.0
        %571 = vmatpush1.msra.mxu0 0.0
        %572 = vmatprep.subr.mxu0 0.0
        %573 = vmatpush1.msra.mxu0 0.0
        %574 = vmatprep.subr.mxu0 0.0
        %575 = vmatpush1.msra.mxu0 0.0
        %576 = vmatprep.subr.mxu0 0.0
        %577 = vmatpush1.msra.mxu0 0.0
        %578 = vmatprep.subr.mxu0 0.0
        %579 = vmatpush1.msra.mxu0 0.0
        %580 = vmatprep.subr.mxu0 0.0
        %581 = vmatpush1.msra.mxu0 0.0
        %582 = vmatprep.subr.mxu0 0.0
        %583 = vmatpush1.msra.mxu0 0.0
        %584 = vmatprep.subr.mxu0 0.0
        %585 = vmatpush1.msra.mxu0 0.0
        %586 = vmatprep.mubr.f32.mxu0 0.0
        %587 = vmatmul.mubr.f32.gmra.mrb[0].mxu0 %v514
        %v588 = vpop.f32.mrb[0].mxu0
        %v589 = vadd.f32 %v439, %v588
        %v590 = vpop.f32.mrb[0].mxu0
        %v591 = vadd.f32 %v441, %v590
        %592 = vdwg.mxu0
        %593 = vmatprep.subr.mxu0 0.0
        %594 = vmatpush1.msra.mxu0 %v520
        %595 = vmatprep.subr.mxu0 0.0
        %596 = vmatpush1.msra.mxu0 0.0
        %597 = vmatprep.subr.mxu0 0.0
        %598 = vmatpush1.msra.mxu0 0.0
        %599 = vmatprep.subr.mxu0 0.0
        %600 = vmatpush1.msra.mxu0 0.0
        %601 = vmatprep.subr.mxu0 0.0
        %602 = vmatpush1.msra.mxu0 0.0
        %603 = vmatprep.subr.mxu0 0.0
        %604 = vmatpush1.msra.mxu0 0.0
        %605 = vmatprep.subr.mxu0 0.0
        %606 = vmatpush1.msra.mxu0 0.0
        %607 = vmatprep.subr.mxu0 0.0
        %608 = vmatpush1.msra.mxu0 0.0
        %609 = vmatprep.subr.mxu0 0.0
        %610 = vmatpush1.msra.mxu0 0.0
        %611 = vmatprep.subr.mxu0 0.0
        %612 = vmatpush1.msra.mxu0 0.0
        %613 = vmatprep.subr.mxu0 0.0
        %614 = vmatpush1.msra.mxu0 0.0
        %615 = vmatprep.subr.mxu0 0.0
        %616 = vmatpush1.msra.mxu0 0.0
        %617 = vmatprep.subr.mxu0 0.0
        %618 = vmatpush1.msra.mxu0 0.0
        %619 = vmatprep.subr.mxu0 0.0
        %620 = vmatpush1.msra.mxu0 0.0
        %621 = vmatprep.subr.mxu0 0.0
        %622 = vmatpush1.msra.mxu0 0.0
        %623 = vmatprep.subr.mxu0 0.0
        %624 = vmatpush1.msra.mxu0 0.0
        %625 = vmatprep.subr.mxu0 0.0
        %626 = vmatpush1.msra.mxu0 0.0
        %627 = vmatprep.subr.mxu0 0.0
        %628 = vmatpush1.msra.mxu0 0.0
        %629 = vmatprep.subr.mxu0 0.0
        %630 = vmatpush1.msra.mxu0 0.0
        %631 = vmatprep.subr.mxu0 0.0
        %632 = vmatpush1.msra.mxu0 0.0
        %633 = vmatprep.subr.mxu0 0.0
        %634 = vmatpush1.msra.mxu0 0.0
        %635 = vmatprep.subr.mxu0 0.0
        %636 = vmatpush1.msra.mxu0 0.0
        %637 = vmatprep.subr.mxu0 0.0
        %638 = vmatpush1.msra.mxu0 0.0
        %639 = vmatprep.subr.mxu0 0.0
        %640 = vmatpush1.msra.mxu0 0.0
        %641 = vmatprep.subr.mxu0 0.0
        %642 = vmatpush1.msra.mxu0 0.0
        %643 = vmatprep.subr.mxu0 0.0
        %644 = vmatpush1.msra.mxu0 0.0
        %645 = vmatprep.subr.mxu0 0.0
        %646 = vmatpush1.msra.mxu0 0.0
        %647 = vmatprep.subr.mxu0 0.0
        %648 = vmatpush1.msra.mxu0 0.0
        %649 = vmatprep.subr.mxu0 0.0
        %650 = vmatpush1.msra.mxu0 0.0
        %651 = vmatprep.subr.mxu0 0.0
        %652 = vmatpush1.msra.mxu0 0.0
        %653 = vmatprep.subr.mxu0 0.0
        %654 = vmatpush1.msra.mxu0 0.0
        %655 = vmatprep.subr.mxu0 0.0
        %656 = vmatpush1.msra.mxu0 0.0
        %657 = vmatprep.mubr.f32.mxu0 0.0
        %658 = vmatmul.mubr.f32.gmra.mrb[0].mxu0 %v514
        %v659 = vpop.f32.mrb[0].mxu0
        %v660 = vadd.f32 %v510, %v659
        %v661 = vpop.f32.mrb[0].mxu0
        %662 = vdwg.mxu0
        %s663 = scalar_lea.vmem %s2, 8
        %v664 = vld [vmem:[%s663] sm:$0xf]
        %665 = vrot.lane.b32.xlu0 %v343, 126
        %v666 = vpop.permute.xlu0 %665
        %667 = vrot.lane.b32.xlu0 %v344, 126
        %v668 = vpop.permute.xlu0 %667
        %669 = vrot.lane.b32.xlu0 %v345, 126
        %v670 = vpop.permute.xlu0 %669
        %vm671 = vcmask 1031168
        %v672 = vsel %vm671, %v666, %v668
        %v673 = vsel %vm671, %v668, %v670
        %v675 = vsel %vm361, %v664, 0
        %v677 = vsel %vm365, %v672, 0
        %v679 = vsel %vm365, %v673, 0
        %v681 = vsel %vm365, %v670, 0
        %683 = vmatprep.subr.mxu0 %v679
        %684 = vmatpush1.msra.mxu0 %v677
        %685 = vmatprep.subr.mxu0 0.0
        %686 = vmatpush1.msra.mxu0 0.0
        %687 = vmatprep.subr.mxu0 0.0
        %688 = vmatpush1.msra.mxu0 0.0
        %689 = vmatprep.subr.mxu0 0.0
        %690 = vmatpush1.msra.mxu0 0.0
        %691 = vmatprep.subr.mxu0 0.0
        %692 = vmatpush1.msra.mxu0 0.0
        %693 = vmatprep.subr.mxu0 0.0
        %694 = vmatpush1.msra.mxu0 0.0
        %695 = vmatprep.subr.mxu0 0.0
        %696 = vmatpush1.msra.mxu0 0.0
        %697 = vmatprep.subr.mxu0 0.0
        %698 = vmatpush1.msra.mxu0 0.0
        %699 = vmatprep.subr.mxu0 0.0
        %700 = vmatpush1.msra.mxu0 0.0
        %701 = vmatprep.subr.mxu0 0.0
        %702 = vmatpush1.msra.mxu0 0.0
        %703 = vmatprep.subr.mxu0 0.0
        %704 = vmatpush1.msra.mxu0 0.0
        %705 = vmatprep.subr.mxu0 0.0
        %706 = vmatpush1.msra.mxu0 0.0
        %707 = vmatprep.subr.mxu0 0.0
        %708 = vmatpush1.msra.mxu0 0.0
        %709 = vmatprep.subr.mxu0 0.0
        %710 = vmatpush1.msra.mxu0 0.0
        %711 = vmatprep.subr.mxu0 0.0
        %712 = vmatpush1.msra.mxu0 0.0
        %713 = vmatprep.subr.mxu0 0.0
        %714 = vmatpush1.msra.mxu0 0.0
        %715 = vmatprep.subr.mxu0 0.0
        %716 = vmatpush1.msra.mxu0 0.0
        %717 = vmatprep.subr.mxu0 0.0
        %718 = vmatpush1.msra.mxu0 0.0
        %719 = vmatprep.subr.mxu0 0.0
        %720 = vmatpush1.msra.mxu0 0.0
        %721 = vmatprep.subr.mxu0 0.0
        %722 = vmatpush1.msra.mxu0 0.0
        %723 = vmatprep.subr.mxu0 0.0
        %724 = vmatpush1.msra.mxu0 0.0
        %725 = vmatprep.subr.mxu0 0.0
        %726 = vmatpush1.msra.mxu0 0.0
        %727 = vmatprep.subr.mxu0 0.0
        %728 = vmatpush1.msra.mxu0 0.0
        %729 = vmatprep.subr.mxu0 0.0
        %730 = vmatpush1.msra.mxu0 0.0
        %731 = vmatprep.subr.mxu0 0.0
        %732 = vmatpush1.msra.mxu0 0.0
        %733 = vmatprep.subr.mxu0 0.0
        %734 = vmatpush1.msra.mxu0 0.0
        %735 = vmatprep.subr.mxu0 0.0
        %736 = vmatpush1.msra.mxu0 0.0
        %737 = vmatprep.subr.mxu0 0.0
        %738 = vmatpush1.msra.mxu0 0.0
        %739 = vmatprep.subr.mxu0 0.0
        %740 = vmatpush1.msra.mxu0 0.0
        %741 = vmatprep.subr.mxu0 0.0
        %742 = vmatpush1.msra.mxu0 0.0
        %743 = vmatprep.subr.mxu0 0.0
        %744 = vmatpush1.msra.mxu0 0.0
        %745 = vmatprep.subr.mxu0 0.0
        %746 = vmatpush1.msra.mxu0 0.0
        %747 = vmatprep.mubr.f32.mxu0 0.0
        %748 = vmatmul.mubr.f32.gmra.mrb[0].mxu0 %v675
        %v749 = vpop.f32.mrb[0].mxu0
        %v750 = vadd.f32 0.0, %v749
        %v751 = vpop.f32.mrb[0].mxu0
        %v752 = vadd.f32 0.0, %v751
        %753 = vdwg.mxu0
        %754 = vmatprep.subr.mxu0 0.0
        %755 = vmatpush1.msra.mxu0 %v681
        %756 = vmatprep.subr.mxu0 0.0
        %757 = vmatpush1.msra.mxu0 0.0
        %758 = vmatprep.subr.mxu0 0.0
        %759 = vmatpush1.msra.mxu0 0.0
        %760 = vmatprep.subr.mxu0 0.0
        %761 = vmatpush1.msra.mxu0 0.0
        %762 = vmatprep.subr.mxu0 0.0
        %763 = vmatpush1.msra.mxu0 0.0
        %764 = vmatprep.subr.mxu0 0.0
        %765 = vmatpush1.msra.mxu0 0.0
        %766 = vmatprep.subr.mxu0 0.0
        %767 = vmatpush1.msra.mxu0 0.0
        %768 = vmatprep.subr.mxu0 0.0
        %769 = vmatpush1.msra.mxu0 0.0
        %770 = vmatprep.subr.mxu0 0.0
        %771 = vmatpush1.msra.mxu0 0.0
        %772 = vmatprep.subr.mxu0 0.0
        %773 = vmatpush1.msra.mxu0 0.0
        %774 = vmatprep.subr.mxu0 0.0
        %775 = vmatpush1.msra.mxu0 0.0
        %776 = vmatprep.subr.mxu0 0.0
        %777 = vmatpush1.msra.mxu0 0.0
        %778 = vmatprep.subr.mxu0 0.0
        %779 = vmatpush1.msra.mxu0 0.0
        %780 = vmatprep.subr.mxu0 0.0
        %781 = vmatpush1.msra.mxu0 0.0
        %782 = vmatprep.subr.mxu0 0.0
        %783 = vmatpush1.msra.mxu0 0.0
        %784 = vmatprep.subr.mxu0 0.0
        %785 = vmatpush1.msra.mxu0 0.0
        %786 = vmatprep.subr.mxu0 0.0
        %787 = vmatpush1.msra.mxu0 0.0
        %788 = vmatprep.subr.mxu0 0.0
        %789 = vmatpush1.msra.mxu0 0.0
        %790 = vmatprep.subr.mxu0 0.0
        %791 = vmatpush1.msra.mxu0 0.0
        %792 = vmatprep.subr.mxu0 0.0
        %793 = vmatpush1.msra.mxu0 0.0
        %794 = vmatprep.subr.mxu0 0.0
        %795 = vmatpush1.msra.mxu0 0.0
        %796 = vmatprep.subr.mxu0 0.0
        %797 = vmatpush1.msra.mxu0 0.0
        %798 = vmatprep.subr.mxu0 0.0
        %799 = vmatpush1.msra.mxu0 0.0
        %800 = vmatprep.subr.mxu0 0.0
        %801 = vmatpush1.msra.mxu0 0.0
        %802 = vmatprep.subr.mxu0 0.0
        %803 = vmatpush1.msra.mxu0 0.0
        %804 = vmatprep.subr.mxu0 0.0
        %805 = vmatpush1.msra.mxu0 0.0
        %806 = vmatprep.subr.mxu0 0.0
        %807 = vmatpush1.msra.mxu0 0.0
        %808 = vmatprep.subr.mxu0 0.0
        %809 = vmatpush1.msra.mxu0 0.0
        %810 = vmatprep.subr.mxu0 0.0
        %811 = vmatpush1.msra.mxu0 0.0
        %812 = vmatprep.subr.mxu0 0.0
        %813 = vmatpush1.msra.mxu0 0.0
        %814 = vmatprep.subr.mxu0 0.0
        %815 = vmatpush1.msra.mxu0 0.0
        %816 = vmatprep.subr.mxu0 0.0
        %817 = vmatpush1.msra.mxu0 0.0
        %818 = vmatprep.mubr.f32.mxu0 0.0
        %819 = vmatmul.mubr.f32.gmra.mrb[0].mxu0 %v675
        %v820 = vpop.f32.mrb[0].mxu0
        %v821 = vadd.f32 0.0, %v820
        %v822 = vpop.f32.mrb[0].mxu0
        %823 = vdwg.mxu0
        %v824 = vadd.f32 %v589, %v750
        %v825 = vadd.f32 %v591, %v752
        %v826 = vadd.f32 %v660, %v821
        %s827 = scalar_lea.vmem %s2, 12
        %v828 = vld [vmem:[%s827] sm:$0xf]
        %829 = vrot.lane.b32.xlu0 %v343, 110
        %v830 = vpop.permute.xlu0 %829
        %831 = vrot.lane.b32.xlu0 %v344, 110
        %v832 = vpop.permute.xlu0 %831
        %833 = vrot.lane.b32.xlu0 %v345, 110
        %v834 = vpop.permute.xlu0 %833
        %vm835 = vcmask 900096
        %v836 = vsel %vm835, %v830, %v832
        %v837 = vsel %vm835, %v832, %v834
        %v839 = vsel %vm361, %v828, 0
        %v841 = vsel %vm365, %v836, 0
        %v843 = vsel %vm365, %v837, 0
        %v845 = vsel %vm365, %v834, 0
        %847 = vmatprep.subr.mxu0 %v843
        %848 = vmatpush1.msra.mxu0 %v841
        %849 = vmatprep.subr.mxu0 0.0
        %850 = vmatpush1.msra.mxu0 0.0
        %851 = vmatprep.subr.mxu0 0.0
        %852 = vmatpush1.msra.mxu0 0.0
        %853 = vmatprep.subr.mxu0 0.0
        %854 = vmatpush1.msra.mxu0 0.0
        %855 = vmatprep.subr.mxu0 0.0
        %856 = vmatpush1.msra.mxu0 0.0
        %857 = vmatprep.subr.mxu0 0.0
        %858 = vmatpush1.msra.mxu0 0.0
        %859 = vmatprep.subr.mxu0 0.0
        %860 = vmatpush1.msra.mxu0 0.0
        %861 = vmatprep.subr.mxu0 0.0
        %862 = vmatpush1.msra.mxu0 0.0
        %863 = vmatprep.subr.mxu0 0.0
        %864 = vmatpush1.msra.mxu0 0.0
        %865 = vmatprep.subr.mxu0 0.0
        %866 = vmatpush1.msra.mxu0 0.0
        %867 = vmatprep.subr.mxu0 0.0
        %868 = vmatpush1.msra.mxu0 0.0
        %869 = vmatprep.subr.mxu0 0.0
        %870 = vmatpush1.msra.mxu0 0.0
        %871 = vmatprep.subr.mxu0 0.0
        %872 = vmatpush1.msra.mxu0 0.0
        %873 = vmatprep.subr.mxu0 0.0
        %874 = vmatpush1.msra.mxu0 0.0
        %875 = vmatprep.subr.mxu0 0.0
        %876 = vmatpush1.msra.mxu0 0.0
        %877 = vmatprep.subr.mxu0 0.0
        %878 = vmatpush1.msra.mxu0 0.0
        %879 = vmatprep.subr.mxu0 0.0
        %880 = vmatpush1.msra.mxu0 0.0
        %881 = vmatprep.subr.mxu0 0.0
        %882 = vmatpush1.msra.mxu0 0.0
        %883 = vmatprep.subr.mxu0 0.0
        %884 = vmatpush1.msra.mxu0 0.0
        %885 = vmatprep.subr.mxu0 0.0
        %886 = vmatpush1.msra.mxu0 0.0
        %887 = vmatprep.subr.mxu0 0.0
        %888 = vmatpush1.msra.mxu0 0.0
        %889 = vmatprep.subr.mxu0 0.0
        %890 = vmatpush1.msra.mxu0 0.0
        %891 = vmatprep.subr.mxu0 0.0
        %892 = vmatpush1.msra.mxu0 0.0
        %893 = vmatprep.subr.mxu0 0.0
        %894 = vmatpush1.msra.mxu0 0.0
        %895 = vmatprep.subr.mxu0 0.0
        %896 = vmatpush1.msra.mxu0 0.0
        %897 = vmatprep.subr.mxu0 0.0
        %898 = vmatpush1.msra.mxu0 0.0
        %899 = vmatprep.subr.mxu0 0.0
        %900 = vmatpush1.msra.mxu0 0.0
        %901 = vmatprep.subr.mxu0 0.0
        %902 = vmatpush1.msra.mxu0 0.0
        %903 = vmatprep.subr.mxu0 0.0
        %904 = vmatpush1.msra.mxu0 0.0
        %905 = vmatprep.subr.mxu0 0.0
        %906 = vmatpush1.msra.mxu0 0.0
        %907 = vmatprep.subr.mxu0 0.0
        %908 = vmatpush1.msra.mxu0 0.0
        %909 = vmatprep.subr.mxu0 0.0
        %910 = vmatpush1.msra.mxu0 0.0
        %911 = vmatprep.mubr.f32.mxu0 0.0
        %912 = vmatmul.mubr.f32.gmra.mrb[0].mxu0 %v839
        %v913 = vpop.f32.mrb[0].mxu0
        %v914 = vadd.f32 0.0, %v913
        %v915 = vpop.f32.mrb[0].mxu0
        %v916 = vadd.f32 0.0, %v915
        %917 = vdwg.mxu0
        %918 = vmatprep.subr.mxu0 0.0
        %919 = vmatpush1.msra.mxu0 %v845
        %920 = vmatprep.subr.mxu0 0.0
        %921 = vmatpush1.msra.mxu0 0.0
        %922 = vmatprep.subr.mxu0 0.0
        %923 = vmatpush1.msra.mxu0 0.0
        %924 = vmatprep.subr.mxu0 0.0
        %925 = vmatpush1.msra.mxu0 0.0
        %926 = vmatprep.subr.mxu0 0.0
        %927 = vmatpush1.msra.mxu0 0.0
        %928 = vmatprep.subr.mxu0 0.0
        %929 = vmatpush1.msra.mxu0 0.0
        %930 = vmatprep.subr.mxu0 0.0
        %931 = vmatpush1.msra.mxu0 0.0
        %932 = vmatprep.subr.mxu0 0.0
        %933 = vmatpush1.msra.mxu0 0.0
        %934 = vmatprep.subr.mxu0 0.0
        %935 = vmatpush1.msra.mxu0 0.0
        %936 = vmatprep.subr.mxu0 0.0
        %937 = vmatpush1.msra.mxu0 0.0
        %938 = vmatprep.subr.mxu0 0.0
        %939 = vmatpush1.msra.mxu0 0.0
        %940 = vmatprep.subr.mxu0 0.0
        %941 = vmatpush1.msra.mxu0 0.0
        %942 = vmatprep.subr.mxu0 0.0
        %943 = vmatpush1.msra.mxu0 0.0
        %944 = vmatprep.subr.mxu0 0.0
        %945 = vmatpush1.msra.mxu0 0.0
        %946 = vmatprep.subr.mxu0 0.0
        %947 = vmatpush1.msra.mxu0 0.0
        %948 = vmatprep.subr.mxu0 0.0
        %949 = vmatpush1.msra.mxu0 0.0
        %950 = vmatprep.subr.mxu0 0.0
        %951 = vmatpush1.msra.mxu0 0.0
        %952 = vmatprep.subr.mxu0 0.0
        %953 = vmatpush1.msra.mxu0 0.0
        %954 = vmatprep.subr.mxu0 0.0
        %955 = vmatpush1.msra.mxu0 0.0
        %956 = vmatprep.subr.mxu0 0.0
        %957 = vmatpush1.msra.mxu0 0.0
        %958 = vmatprep.subr.mxu0 0.0
        %959 = vmatpush1.msra.mxu0 0.0
        %960 = vmatprep.subr.mxu0 0.0
        %961 = vmatpush1.msra.mxu0 0.0
        %962 = vmatprep.subr.mxu0 0.0
        %963 = vmatpush1.msra.mxu0 0.0
        %964 = vmatprep.subr.mxu0 0.0
        %965 = vmatpush1.msra.mxu0 0.0
        %966 = vmatprep.subr.mxu0 0.0
        %967 = vmatpush1.msra.mxu0 0.0
        %968 = vmatprep.subr.mxu0 0.0
        %969 = vmatpush1.msra.mxu0 0.0
        %970 = vmatprep.subr.mxu0 0.0
        %971 = vmatpush1.msra.mxu0 0.0
        %972 = vmatprep.subr.mxu0 0.0
        %973 = vmatpush1.msra.mxu0 0.0
        %974 = vmatprep.subr.mxu0 0.0
        %975 = vmatpush1.msra.mxu0 0.0
        %976 = vmatprep.subr.mxu0 0.0
        %977 = vmatpush1.msra.mxu0 0.0
        %978 = vmatprep.subr.mxu0 0.0
        %979 = vmatpush1.msra.mxu0 0.0
        %980 = vmatprep.subr.mxu0 0.0
        %981 = vmatpush1.msra.mxu0 0.0
        %982 = vmatprep.mubr.f32.mxu0 0.0
        %983 = vmatmul.mubr.f32.gmra.mrb[0].mxu0 %v839
        %v984 = vpop.f32.mrb[0].mxu0
        %v985 = vadd.f32 0.0, %v984
        %v986 = vpop.f32.mrb[0].mxu0
        %987 = vdwg.mxu0
        %v988 = vadd.f32 %v824, %v914
        %v989 = vadd.f32 %v825, %v916
        %v990 = vadd.f32 %v826, %v985
        %s991 = scalar_lea.vmem %s2, 16
        %v992 = vld [vmem:[%s991] sm:$0xf]
        %993 = vrot.lane.b32.xlu0 %v343, 109
        %v994 = vpop.permute.xlu0 %993
        %995 = vrot.lane.b32.xlu0 %v344, 109
        %v996 = vpop.permute.xlu0 %995
        %997 = vrot.lane.b32.xlu0 %v345, 109
        %v998 = vpop.permute.xlu0 %997
        %vm999 = vcmask 891904
        %v1000 = vsel %vm999, %v994, %v996
        %v1001 = vsel %vm999, %v996, %v998
        %v1003 = vsel %vm361, %v992, 0
        %v1005 = vsel %vm365, %v1000, 0
        %v1007 = vsel %vm365, %v1001, 0
        %v1009 = vsel %vm365, %v998, 0
        %1011 = vmatprep.subr.mxu0 %v1007
        %1012 = vmatpush1.msra.mxu0 %v1005
        %1013 = vmatprep.subr.mxu0 0.0
        %1014 = vmatpush1.msra.mxu0 0.0
        %1015 = vmatprep.subr.mxu0 0.0
        %1016 = vmatpush1.msra.mxu0 0.0
        %1017 = vmatprep.subr.mxu0 0.0
        %1018 = vmatpush1.msra.mxu0 0.0
        %1019 = vmatprep.subr.mxu0 0.0
        %1020 = vmatpush1.msra.mxu0 0.0
        %1021 = vmatprep.subr.mxu0 0.0
        %1022 = vmatpush1.msra.mxu0 0.0
        %1023 = vmatprep.subr.mxu0 0.0
        %1024 = vmatpush1.msra.mxu0 0.0
        %1025 = vmatprep.subr.mxu0 0.0
        %1026 = vmatpush1.msra.mxu0 0.0
        %1027 = vmatprep.subr.mxu0 0.0
        %1028 = vmatpush1.msra.mxu0 0.0
        %1029 = vmatprep.subr.mxu0 0.0
        %1030 = vmatpush1.msra.mxu0 0.0
        %1031 = vmatprep.subr.mxu0 0.0
        %1032 = vmatpush1.msra.mxu0 0.0
        %1033 = vmatprep.subr.mxu0 0.0
        %1034 = vmatpush1.msra.mxu0 0.0
        %1035 = vmatprep.subr.mxu0 0.0
        %1036 = vmatpush1.msra.mxu0 0.0
        %1037 = vmatprep.subr.mxu0 0.0
        %1038 = vmatpush1.msra.mxu0 0.0
        %1039 = vmatprep.subr.mxu0 0.0
        %1040 = vmatpush1.msra.mxu0 0.0
        %1041 = vmatprep.subr.mxu0 0.0
        %1042 = vmatpush1.msra.mxu0 0.0
        %1043 = vmatprep.subr.mxu0 0.0
        %1044 = vmatpush1.msra.mxu0 0.0
        %1045 = vmatprep.subr.mxu0 0.0
        %1046 = vmatpush1.msra.mxu0 0.0
        %1047 = vmatprep.subr.mxu0 0.0
        %1048 = vmatpush1.msra.mxu0 0.0
        %1049 = vmatprep.subr.mxu0 0.0
        %1050 = vmatpush1.msra.mxu0 0.0
        %1051 = vmatprep.subr.mxu0 0.0
        %1052 = vmatpush1.msra.mxu0 0.0
        %1053 = vmatprep.subr.mxu0 0.0
        %1054 = vmatpush1.msra.mxu0 0.0
        %1055 = vmatprep.subr.mxu0 0.0
        %1056 = vmatpush1.msra.mxu0 0.0
        %1057 = vmatprep.subr.mxu0 0.0
        %1058 = vmatpush1.msra.mxu0 0.0
        %1059 = vmatprep.subr.mxu0 0.0
        %1060 = vmatpush1.msra.mxu0 0.0
        %1061 = vmatprep.subr.mxu0 0.0
        %1062 = vmatpush1.msra.mxu0 0.0
        %1063 = vmatprep.subr.mxu0 0.0
        %1064 = vmatpush1.msra.mxu0 0.0
        %1065 = vmatprep.subr.mxu0 0.0
        %1066 = vmatpush1.msra.mxu0 0.0
        %1067 = vmatprep.subr.mxu0 0.0
        %1068 = vmatpush1.msra.mxu0 0.0
        %1069 = vmatprep.subr.mxu0 0.0
        %1070 = vmatpush1.msra.mxu0 0.0
        %1071 = vmatprep.subr.mxu0 0.0
        %1072 = vmatpush1.msra.mxu0 0.0
        %1073 = vmatprep.subr.mxu0 0.0
        %1074 = vmatpush1.msra.mxu0 0.0
        %1075 = vmatprep.mubr.f32.mxu0 0.0
        %1076 = vmatmul.mubr.f32.gmra.mrb[0].mxu0 %v1003
        %v1077 = vpop.f32.mrb[0].mxu0
        %v1078 = vadd.f32 0.0, %v1077
        %v1079 = vpop.f32.mrb[0].mxu0
        %v1080 = vadd.f32 0.0, %v1079
        %1081 = vdwg.mxu0
        %1082 = vmatprep.subr.mxu0 0.0
        %1083 = vmatpush1.msra.mxu0 %v1009
        %1084 = vmatprep.subr.mxu0 0.0
        %1085 = vmatpush1.msra.mxu0 0.0
        %1086 = vmatprep.subr.mxu0 0.0
        %1087 = vmatpush1.msra.mxu0 0.0
        %1088 = vmatprep.subr.mxu0 0.0
        %1089 = vmatpush1.msra.mxu0 0.0
        %1090 = vmatprep.subr.mxu0 0.0
        %1091 = vmatpush1.msra.mxu0 0.0
        %1092 = vmatprep.subr.mxu0 0.0
        %1093 = vmatpush1.msra.mxu0 0.0
        %1094 = vmatprep.subr.mxu0 0.0
        %1095 = vmatpush1.msra.mxu0 0.0
        %1096 = vmatprep.subr.mxu0 0.0
        %1097 = vmatpush1.msra.mxu0 0.0
        %1098 = vmatprep.subr.mxu0 0.0
        %1099 = vmatpush1.msra.mxu0 0.0
        %1100 = vmatprep.subr.mxu0 0.0
        %1101 = vmatpush1.msra.mxu0 0.0
        %1102 = vmatprep.subr.mxu0 0.0
        %1103 = vmatpush1.msra.mxu0 0.0
        %1104 = vmatprep.subr.mxu0 0.0
        %1105 = vmatpush1.msra.mxu0 0.0
        %1106 = vmatprep.subr.mxu0 0.0
        %1107 = vmatpush1.msra.mxu0 0.0
        %1108 = vmatprep.subr.mxu0 0.0
        %1109 = vmatpush1.msra.mxu0 0.0
        %1110 = vmatprep.subr.mxu0 0.0
        %1111 = vmatpush1.msra.mxu0 0.0
        %1112 = vmatprep.subr.mxu0 0.0
        %1113 = vmatpush1.msra.mxu0 0.0
        %1114 = vmatprep.subr.mxu0 0.0
        %1115 = vmatpush1.msra.mxu0 0.0
        %1116 = vmatprep.subr.mxu0 0.0
        %1117 = vmatpush1.msra.mxu0 0.0
        %1118 = vmatprep.subr.mxu0 0.0
        %1119 = vmatpush1.msra.mxu0 0.0
        %1120 = vmatprep.subr.mxu0 0.0
        %1121 = vmatpush1.msra.mxu0 0.0
        %1122 = vmatprep.subr.mxu0 0.0
        %1123 = vmatpush1.msra.mxu0 0.0
        %1124 = vmatprep.subr.mxu0 0.0
        %1125 = vmatpush1.msra.mxu0 0.0
        %1126 = vmatprep.subr.mxu0 0.0
        %1127 = vmatpush1.msra.mxu0 0.0
        %1128 = vmatprep.subr.mxu0 0.0
        %1129 = vmatpush1.msra.mxu0 0.0
        %1130 = vmatprep.subr.mxu0 0.0
        %1131 = vmatpush1.msra.mxu0 0.0
        %1132 = vmatprep.subr.mxu0 0.0
        %1133 = vmatpush1.msra.mxu0 0.0
        %1134 = vmatprep.subr.mxu0 0.0
        %1135 = vmatpush1.msra.mxu0 0.0
        %1136 = vmatprep.subr.mxu0 0.0
        %1137 = vmatpush1.msra.mxu0 0.0
        %1138 = vmatprep.subr.mxu0 0.0
        %1139 = vmatpush1.msra.mxu0 0.0
        %1140 = vmatprep.subr.mxu0 0.0
        %1141 = vmatpush1.msra.mxu0 0.0
        %1142 = vmatprep.subr.mxu0 0.0
        %1143 = vmatpush1.msra.mxu0 0.0
        %1144 = vmatprep.subr.mxu0 0.0
        %1145 = vmatpush1.msra.mxu0 0.0
        %1146 = vmatprep.mubr.f32.mxu0 0.0
        %1147 = vmatmul.mubr.f32.gmra.mrb[0].mxu0 %v1003
        %v1148 = vpop.f32.mrb[0].mxu0
        %v1149 = vadd.f32 0.0, %v1148
        %v1150 = vpop.f32.mrb[0].mxu0
        %1151 = vdwg.mxu0
        %v1152 = vadd.f32 %v988, %v1078
        %v1153 = vadd.f32 %v989, %v1080
        %v1154 = vadd.f32 %v990, %v1149
        %s1155 = scalar_lea.vmem %s2, 20
        %v1156 = vld [vmem:[%s1155] sm:$0xf]
        %1157 = vrot.lane.b32.xlu0 %v343, 108
        %v1158 = vpop.permute.xlu0 %1157
        %1159 = vrot.lane.b32.xlu0 %v344, 108
        %v1160 = vpop.permute.xlu0 %1159
        %1161 = vrot.lane.b32.xlu0 %v345, 108
        %v1162 = vpop.permute.xlu0 %1161
        %vm1163 = vcmask 883712
        %v1164 = vsel %vm1163, %v1158, %v1160
        %v1165 = vsel %vm1163, %v1160, %v1162
        %v1167 = vsel %vm361, %v1156, 0
        %v1169 = vsel %vm365, %v1164, 0
        %v1171 = vsel %vm365, %v1165, 0
        %v1173 = vsel %vm365, %v1162, 0
        %1175 = vmatprep.subr.mxu0 %v1171
        %1176 = vmatpush1.msra.mxu0 %v1169
        %1177 = vmatprep.subr.mxu0 0.0
        %1178 = vmatpush1.msra.mxu0 0.0
        %1179 = vmatprep.subr.mxu0 0.0
        %1180 = vmatpush1.msra.mxu0 0.0
        %1181 = vmatprep.subr.mxu0 0.0
        %1182 = vmatpush1.msra.mxu0 0.0
        %1183 = vmatprep.subr.mxu0 0.0
        %1184 = vmatpush1.msra.mxu0 0.0
        %1185 = vmatprep.subr.mxu0 0.0
        %1186 = vmatpush1.msra.mxu0 0.0
        %1187 = vmatprep.subr.mxu0 0.0
        %1188 = vmatpush1.msra.mxu0 0.0
        %1189 = vmatprep.subr.mxu0 0.0
        %1190 = vmatpush1.msra.mxu0 0.0
        %1191 = vmatprep.subr.mxu0 0.0
        %1192 = vmatpush1.msra.mxu0 0.0
        %1193 = vmatprep.subr.mxu0 0.0
        %1194 = vmatpush1.msra.mxu0 0.0
        %1195 = vmatprep.subr.mxu0 0.0
        %1196 = vmatpush1.msra.mxu0 0.0
        %1197 = vmatprep.subr.mxu0 0.0
        %1198 = vmatpush1.msra.mxu0 0.0
        %1199 = vmatprep.subr.mxu0 0.0
        %1200 = vmatpush1.msra.mxu0 0.0
        %1201 = vmatprep.subr.mxu0 0.0
        %1202 = vmatpush1.msra.mxu0 0.0
        %1203 = vmatprep.subr.mxu0 0.0
        %1204 = vmatpush1.msra.mxu0 0.0
        %1205 = vmatprep.subr.mxu0 0.0
        %1206 = vmatpush1.msra.mxu0 0.0
        %1207 = vmatprep.subr.mxu0 0.0
        %1208 = vmatpush1.msra.mxu0 0.0
        %1209 = vmatprep.subr.mxu0 0.0
        %1210 = vmatpush1.msra.mxu0 0.0
        %1211 = vmatprep.subr.mxu0 0.0
        %1212 = vmatpush1.msra.mxu0 0.0
        %1213 = vmatprep.subr.mxu0 0.0
        %1214 = vmatpush1.msra.mxu0 0.0
        %1215 = vmatprep.subr.mxu0 0.0
        %1216 = vmatpush1.msra.mxu0 0.0
        %1217 = vmatprep.subr.mxu0 0.0
        %1218 = vmatpush1.msra.mxu0 0.0
        %1219 = vmatprep.subr.mxu0 0.0
        %1220 = vmatpush1.msra.mxu0 0.0
        %1221 = vmatprep.subr.mxu0 0.0
        %1222 = vmatpush1.msra.mxu0 0.0
        %1223 = vmatprep.subr.mxu0 0.0
        %1224 = vmatpush1.msra.mxu0 0.0
        %1225 = vmatprep.subr.mxu0 0.0
        %1226 = vmatpush1.msra.mxu0 0.0
        %1227 = vmatprep.subr.mxu0 0.0
        %1228 = vmatpush1.msra.mxu0 0.0
        %1229 = vmatprep.subr.mxu0 0.0
        %1230 = vmatpush1.msra.mxu0 0.0
        %1231 = vmatprep.subr.mxu0 0.0
        %1232 = vmatpush1.msra.mxu0 0.0
        %1233 = vmatprep.subr.mxu0 0.0
        %1234 = vmatpush1.msra.mxu0 0.0
        %1235 = vmatprep.subr.mxu0 0.0
        %1236 = vmatpush1.msra.mxu0 0.0
        %1237 = vmatprep.subr.mxu0 0.0
        %1238 = vmatpush1.msra.mxu0 0.0
        %1239 = vmatprep.mubr.f32.mxu0 0.0
        %1240 = vmatmul.mubr.f32.gmra.mrb[0].mxu0 %v1167
        %v1241 = vpop.f32.mrb[0].mxu0
        %v1242 = vadd.f32 0.0, %v1241
        %v1243 = vpop.f32.mrb[0].mxu0
        %v1244 = vadd.f32 0.0, %v1243
        %1245 = vdwg.mxu0
        %1246 = vmatprep.subr.mxu0 0.0
        %1247 = vmatpush1.msra.mxu0 %v1173
        %1248 = vmatprep.subr.mxu0 0.0
        %1249 = vmatpush1.msra.mxu0 0.0
        %1250 = vmatprep.subr.mxu0 0.0
        %1251 = vmatpush1.msra.mxu0 0.0
        %1252 = vmatprep.subr.mxu0 0.0
        %1253 = vmatpush1.msra.mxu0 0.0
        %1254 = vmatprep.subr.mxu0 0.0
        %1255 = vmatpush1.msra.mxu0 0.0
        %1256 = vmatprep.subr.mxu0 0.0
        %1257 = vmatpush1.msra.mxu0 0.0
        %1258 = vmatprep.subr.mxu0 0.0
        %1259 = vmatpush1.msra.mxu0 0.0
        %1260 = vmatprep.subr.mxu0 0.0
        %1261 = vmatpush1.msra.mxu0 0.0
        %1262 = vmatprep.subr.mxu0 0.0
        %1263 = vmatpush1.msra.mxu0 0.0
        %1264 = vmatprep.subr.mxu0 0.0
        %1265 = vmatpush1.msra.mxu0 0.0
        %1266 = vmatprep.subr.mxu0 0.0
        %1267 = vmatpush1.msra.mxu0 0.0
        %1268 = vmatprep.subr.mxu0 0.0
        %1269 = vmatpush1.msra.mxu0 0.0
        %1270 = vmatprep.subr.mxu0 0.0
        %1271 = vmatpush1.msra.mxu0 0.0
        %1272 = vmatprep.subr.mxu0 0.0
        %1273 = vmatpush1.msra.mxu0 0.0
        %1274 = vmatprep.subr.mxu0 0.0
        %1275 = vmatpush1.msra.mxu0 0.0
        %1276 = vmatprep.subr.mxu0 0.0
        %1277 = vmatpush1.msra.mxu0 0.0
        %1278 = vmatprep.subr.mxu0 0.0
        %1279 = vmatpush1.msra.mxu0 0.0
        %1280 = vmatprep.subr.mxu0 0.0
        %1281 = vmatpush1.msra.mxu0 0.0
        %1282 = vmatprep.subr.mxu0 0.0
        %1283 = vmatpush1.msra.mxu0 0.0
        %1284 = vmatprep.subr.mxu0 0.0
        %1285 = vmatpush1.msra.mxu0 0.0
        %1286 = vmatprep.subr.mxu0 0.0
        %1287 = vmatpush1.msra.mxu0 0.0
        %1288 = vmatprep.subr.mxu0 0.0
        %1289 = vmatpush1.msra.mxu0 0.0
        %1290 = vmatprep.subr.mxu0 0.0
        %1291 = vmatpush1.msra.mxu0 0.0
        %1292 = vmatprep.subr.mxu0 0.0
        %1293 = vmatpush1.msra.mxu0 0.0
        %1294 = vmatprep.subr.mxu0 0.0
        %1295 = vmatpush1.msra.mxu0 0.0
        %1296 = vmatprep.subr.mxu0 0.0
        %1297 = vmatpush1.msra.mxu0 0.0
        %1298 = vmatprep.subr.mxu0 0.0
        %1299 = vmatpush1.msra.mxu0 0.0
        %1300 = vmatprep.subr.mxu0 0.0
        %1301 = vmatpush1.msra.mxu0 0.0
        %1302 = vmatprep.subr.mxu0 0.0
        %1303 = vmatpush1.msra.mxu0 0.0
        %1304 = vmatprep.subr.mxu0 0.0
        %1305 = vmatpush1.msra.mxu0 0.0
        %1306 = vmatprep.subr.mxu0 0.0
        %1307 = vmatpush1.msra.mxu0 0.0
        %1308 = vmatprep.subr.mxu0 0.0
        %1309 = vmatpush1.msra.mxu0 0.0
        %1310 = vmatprep.mubr.f32.mxu0 0.0
        %1311 = vmatmul.mubr.f32.gmra.mrb[0].mxu0 %v1167
        %v1312 = vpop.f32.mrb[0].mxu0
        %v1313 = vadd.f32 0.0, %v1312
        %v1314 = vpop.f32.mrb[0].mxu0
        %1315 = vdwg.mxu0
        %v1316 = vadd.f32 %v1152, %v1242
        %v1317 = vadd.f32 %v1153, %v1244
        %v1318 = vadd.f32 %v1154, %v1313
        %s1319 = scalar_lea.vmem %s2, 24
        %v1320 = vld [vmem:[%s1319] sm:$0xf]
        %1321 = vrot.lane.b32.xlu0 %v343, 92
        %v1322 = vpop.permute.xlu0 %1321
        %1323 = vrot.lane.b32.xlu0 %v344, 92
        %v1324 = vpop.permute.xlu0 %1323
        %1325 = vrot.lane.b32.xlu0 %v345, 92
        %v1326 = vpop.permute.xlu0 %1325
        %vm1327 = vcmask 752640
        %v1328 = vsel %vm1327, %v1322, %v1324
        %v1329 = vsel %vm1327, %v1324, %v1326
        %v1331 = vsel %vm361, %v1320, 0
        %v1333 = vsel %vm365, %v1328, 0
        %v1335 = vsel %vm365, %v1329, 0
        %v1337 = vsel %vm365, %v1326, 0
        %1339 = vmatprep.subr.mxu0 %v1335
        %1340 = vmatpush1.msra.mxu0 %v1333
        %1341 = vmatprep.subr.mxu0 0.0
        %1342 = vmatpush1.msra.mxu0 0.0
        %1343 = vmatprep.subr.mxu0 0.0
        %1344 = vmatpush1.msra.mxu0 0.0
        %1345 = vmatprep.subr.mxu0 0.0
        %1346 = vmatpush1.msra.mxu0 0.0
        %1347 = vmatprep.subr.mxu0 0.0
        %1348 = vmatpush1.msra.mxu0 0.0
        %1349 = vmatprep.subr.mxu0 0.0
        %1350 = vmatpush1.msra.mxu0 0.0
        %1351 = vmatprep.subr.mxu0 0.0
        %1352 = vmatpush1.msra.mxu0 0.0
        %1353 = vmatprep.subr.mxu0 0.0
        %1354 = vmatpush1.msra.mxu0 0.0
        %1355 = vmatprep.subr.mxu0 0.0
        %1356 = vmatpush1.msra.mxu0 0.0
        %1357 = vmatprep.subr.mxu0 0.0
        %1358 = vmatpush1.msra.mxu0 0.0
        %1359 = vmatprep.subr.mxu0 0.0
        %1360 = vmatpush1.msra.mxu0 0.0
        %1361 = vmatprep.subr.mxu0 0.0
        %1362 = vmatpush1.msra.mxu0 0.0
        %1363 = vmatprep.subr.mxu0 0.0
        %1364 = vmatpush1.msra.mxu0 0.0
        %1365 = vmatprep.subr.mxu0 0.0
        %1366 = vmatpush1.msra.mxu0 0.0
        %1367 = vmatprep.subr.mxu0 0.0
        %1368 = vmatpush1.msra.mxu0 0.0
        %1369 = vmatprep.subr.mxu0 0.0
        %1370 = vmatpush1.msra.mxu0 0.0
        %1371 = vmatprep.subr.mxu0 0.0
        %1372 = vmatpush1.msra.mxu0 0.0
        %1373 = vmatprep.subr.mxu0 0.0
        %1374 = vmatpush1.msra.mxu0 0.0
        %1375 = vmatprep.subr.mxu0 0.0
        %1376 = vmatpush1.msra.mxu0 0.0
        %1377 = vmatprep.subr.mxu0 0.0
        %1378 = vmatpush1.msra.mxu0 0.0
        %1379 = vmatprep.subr.mxu0 0.0
        %1380 = vmatpush1.msra.mxu0 0.0
        %1381 = vmatprep.subr.mxu0 0.0
        %1382 = vmatpush1.msra.mxu0 0.0
        %1383 = vmatprep.subr.mxu0 0.0
        %1384 = vmatpush1.msra.mxu0 0.0
        %1385 = vmatprep.subr.mxu0 0.0
        %1386 = vmatpush1.msra.mxu0 0.0
        %1387 = vmatprep.subr.mxu0 0.0
        %1388 = vmatpush1.msra.mxu0 0.0
        %1389 = vmatprep.subr.mxu0 0.0
        %1390 = vmatpush1.msra.mxu0 0.0
        %1391 = vmatprep.subr.mxu0 0.0
        %1392 = vmatpush1.msra.mxu0 0.0
        %1393 = vmatprep.subr.mxu0 0.0
        %1394 = vmatpush1.msra.mxu0 0.0
        %1395 = vmatprep.subr.mxu0 0.0
        %1396 = vmatpush1.msra.mxu0 0.0
        %1397 = vmatprep.subr.mxu0 0.0
        %1398 = vmatpush1.msra.mxu0 0.0
        %1399 = vmatprep.subr.mxu0 0.0
        %1400 = vmatpush1.msra.mxu0 0.0
        %1401 = vmatprep.subr.mxu0 0.0
        %1402 = vmatpush1.msra.mxu0 0.0
        %1403 = vmatprep.mubr.f32.mxu0 0.0
        %1404 = vmatmul.mubr.f32.gmra.mrb[0].mxu0 %v1331
        %v1405 = vpop.f32.mrb[0].mxu0
        %v1406 = vadd.f32 0.0, %v1405
        %v1407 = vpop.f32.mrb[0].mxu0
        %v1408 = vadd.f32 0.0, %v1407
        %1409 = vdwg.mxu0
        %1410 = vmatprep.subr.mxu0 0.0
        %1411 = vmatpush1.msra.mxu0 %v1337
        %1412 = vmatprep.subr.mxu0 0.0
        %1413 = vmatpush1.msra.mxu0 0.0
        %1414 = vmatprep.subr.mxu0 0.0
        %1415 = vmatpush1.msra.mxu0 0.0
        %1416 = vmatprep.subr.mxu0 0.0
        %1417 = vmatpush1.msra.mxu0 0.0
        %1418 = vmatprep.subr.mxu0 0.0
        %1419 = vmatpush1.msra.mxu0 0.0
        %1420 = vmatprep.subr.mxu0 0.0
        %1421 = vmatpush1.msra.mxu0 0.0
        %1422 = vmatprep.subr.mxu0 0.0
        %1423 = vmatpush1.msra.mxu0 0.0
        %1424 = vmatprep.subr.mxu0 0.0
        %1425 = vmatpush1.msra.mxu0 0.0
        %1426 = vmatprep.subr.mxu0 0.0
        %1427 = vmatpush1.msra.mxu0 0.0
        %1428 = vmatprep.subr.mxu0 0.0
        %1429 = vmatpush1.msra.mxu0 0.0
        %1430 = vmatprep.subr.mxu0 0.0
        %1431 = vmatpush1.msra.mxu0 0.0
        %1432 = vmatprep.subr.mxu0 0.0
        %1433 = vmatpush1.msra.mxu0 0.0
        %1434 = vmatprep.subr.mxu0 0.0
        %1435 = vmatpush1.msra.mxu0 0.0
        %1436 = vmatprep.subr.mxu0 0.0
        %1437 = vmatpush1.msra.mxu0 0.0
        %1438 = vmatprep.subr.mxu0 0.0
        %1439 = vmatpush1.msra.mxu0 0.0
        %1440 = vmatprep.subr.mxu0 0.0
        %1441 = vmatpush1.msra.mxu0 0.0
        %1442 = vmatprep.subr.mxu0 0.0
        %1443 = vmatpush1.msra.mxu0 0.0
        %1444 = vmatprep.subr.mxu0 0.0
        %1445 = vmatpush1.msra.mxu0 0.0
        %1446 = vmatprep.subr.mxu0 0.0
        %1447 = vmatpush1.msra.mxu0 0.0
        %1448 = vmatprep.subr.mxu0 0.0
        %1449 = vmatpush1.msra.mxu0 0.0
        %1450 = vmatprep.subr.mxu0 0.0
        %1451 = vmatpush1.msra.mxu0 0.0
        %1452 = vmatprep.subr.mxu0 0.0
        %1453 = vmatpush1.msra.mxu0 0.0
        %1454 = vmatprep.subr.mxu0 0.0
        %1455 = vmatpush1.msra.mxu0 0.0
        %1456 = vmatprep.subr.mxu0 0.0
        %1457 = vmatpush1.msra.mxu0 0.0
        %1458 = vmatprep.subr.mxu0 0.0
        %1459 = vmatpush1.msra.mxu0 0.0
        %1460 = vmatprep.subr.mxu0 0.0
        %1461 = vmatpush1.msra.mxu0 0.0
        %1462 = vmatprep.subr.mxu0 0.0
        %1463 = vmatpush1.msra.mxu0 0.0
        %1464 = vmatprep.subr.mxu0 0.0
        %1465 = vmatpush1.msra.mxu0 0.0
        %1466 = vmatprep.subr.mxu0 0.0
        %1467 = vmatpush1.msra.mxu0 0.0
        %1468 = vmatprep.subr.mxu0 0.0
        %1469 = vmatpush1.msra.mxu0 0.0
        %1470 = vmatprep.subr.mxu0 0.0
        %1471 = vmatpush1.msra.mxu0 0.0
        %1472 = vmatprep.subr.mxu0 0.0
        %1473 = vmatpush1.msra.mxu0 0.0
        %1474 = vmatprep.mubr.f32.mxu0 0.0
        %1475 = vmatmul.mubr.f32.gmra.mrb[0].mxu0 %v1331
        %v1476 = vpop.f32.mrb[0].mxu0
        %v1477 = vadd.f32 0.0, %v1476
        %v1478 = vpop.f32.mrb[0].mxu0
        %1479 = vdwg.mxu0
        %v1480 = vadd.f32 %v1316, %v1406
        %v1481 = vadd.f32 %v1317, %v1408
        %v1482 = vadd.f32 %v1318, %v1477
        %s1483 = scalar_lea.vmem %s2, 28
        %v1484 = vld [vmem:[%s1483] sm:$0xf]
        %1485 = vrot.lane.b32.xlu0 %v343, 91
        %v1486 = vpop.permute.xlu0 %1485
        %1487 = vrot.lane.b32.xlu0 %v344, 91
        %v1488 = vpop.permute.xlu0 %1487
        %1489 = vrot.lane.b32.xlu0 %v345, 91
        %v1490 = vpop.permute.xlu0 %1489
        %vm1491 = vcmask 744448
        %v1492 = vsel %vm1491, %v1486, %v1488
        %v1493 = vsel %vm1491, %v1488, %v1490
        %v1495 = vsel %vm361, %v1484, 0
        %v1497 = vsel %vm365, %v1492, 0
        %v1499 = vsel %vm365, %v1493, 0
        %v1501 = vsel %vm365, %v1490, 0
        %1503 = vmatprep.subr.mxu0 %v1499
        %1504 = vmatpush1.msra.mxu0 %v1497
        %1505 = vmatprep.subr.mxu0 0.0
        %1506 = vmatpush1.msra.mxu0 0.0
        %1507 = vmatprep.subr.mxu0 0.0
        %1508 = vmatpush1.msra.mxu0 0.0
        %1509 = vmatprep.subr.mxu0 0.0
        %1510 = vmatpush1.msra.mxu0 0.0
        %1511 = vmatprep.subr.mxu0 0.0
        %1512 = vmatpush1.msra.mxu0 0.0
        %1513 = vmatprep.subr.mxu0 0.0
        %1514 = vmatpush1.msra.mxu0 0.0
        %1515 = vmatprep.subr.mxu0 0.0
        %1516 = vmatpush1.msra.mxu0 0.0
        %1517 = vmatprep.subr.mxu0 0.0
        %1518 = vmatpush1.msra.mxu0 0.0
        %1519 = vmatprep.subr.mxu0 0.0
        %1520 = vmatpush1.msra.mxu0 0.0
        %1521 = vmatprep.subr.mxu0 0.0
        %1522 = vmatpush1.msra.mxu0 0.0
        %1523 = vmatprep.subr.mxu0 0.0
        %1524 = vmatpush1.msra.mxu0 0.0
        %1525 = vmatprep.subr.mxu0 0.0
        %1526 = vmatpush1.msra.mxu0 0.0
        %1527 = vmatprep.subr.mxu0 0.0
        %1528 = vmatpush1.msra.mxu0 0.0
        %1529 = vmatprep.subr.mxu0 0.0
        %1530 = vmatpush1.msra.mxu0 0.0
        %1531 = vmatprep.subr.mxu0 0.0
        %1532 = vmatpush1.msra.mxu0 0.0
        %1533 = vmatprep.subr.mxu0 0.0
        %1534 = vmatpush1.msra.mxu0 0.0
        %1535 = vmatprep.subr.mxu0 0.0
        %1536 = vmatpush1.msra.mxu0 0.0
        %1537 = vmatprep.subr.mxu0 0.0
        %1538 = vmatpush1.msra.mxu0 0.0
        %1539 = vmatprep.subr.mxu0 0.0
        %1540 = vmatpush1.msra.mxu0 0.0
        %1541 = vmatprep.subr.mxu0 0.0
        %1542 = vmatpush1.msra.mxu0 0.0
        %1543 = vmatprep.subr.mxu0 0.0
        %1544 = vmatpush1.msra.mxu0 0.0
        %1545 = vmatprep.subr.mxu0 0.0
        %1546 = vmatpush1.msra.mxu0 0.0
        %1547 = vmatprep.subr.mxu0 0.0
        %1548 = vmatpush1.msra.mxu0 0.0
        %1549 = vmatprep.subr.mxu0 0.0
        %1550 = vmatpush1.msra.mxu0 0.0
        %1551 = vmatprep.subr.mxu0 0.0
        %1552 = vmatpush1.msra.mxu0 0.0
        %1553 = vmatprep.subr.mxu0 0.0
        %1554 = vmatpush1.msra.mxu0 0.0
        %1555 = vmatprep.subr.mxu0 0.0
        %1556 = vmatpush1.msra.mxu0 0.0
        %1557 = vmatprep.subr.mxu0 0.0
        %1558 = vmatpush1.msra.mxu0 0.0
        %1559 = vmatprep.subr.mxu0 0.0
        %1560 = vmatpush1.msra.mxu0 0.0
        %1561 = vmatprep.subr.mxu0 0.0
        %1562 = vmatpush1.msra.mxu0 0.0
        %1563 = vmatprep.subr.mxu0 0.0
        %1564 = vmatpush1.msra.mxu0 0.0
        %1565 = vmatprep.subr.mxu0 0.0
        %1566 = vmatpush1.msra.mxu0 0.0
        %1567 = vmatprep.mubr.f32.mxu0 0.0
        %1568 = vmatmul.mubr.f32.gmra.mrb[0].mxu0 %v1495
        %v1569 = vpop.f32.mrb[0].mxu0
        %v1570 = vadd.f32 0.0, %v1569
        %v1571 = vpop.f32.mrb[0].mxu0
        %v1572 = vadd.f32 0.0, %v1571
        %1573 = vdwg.mxu0
        %1574 = vmatprep.subr.mxu0 0.0
        %1575 = vmatpush1.msra.mxu0 %v1501
        %1576 = vmatprep.subr.mxu0 0.0
        %1577 = vmatpush1.msra.mxu0 0.0
        %1578 = vmatprep.subr.mxu0 0.0
        %1579 = vmatpush1.msra.mxu0 0.0
        %1580 = vmatprep.subr.mxu0 0.0
        %1581 = vmatpush1.msra.mxu0 0.0
        %1582 = vmatprep.subr.mxu0 0.0
        %1583 = vmatpush1.msra.mxu0 0.0
        %1584 = vmatprep.subr.mxu0 0.0
        %1585 = vmatpush1.msra.mxu0 0.0
        %1586 = vmatprep.subr.mxu0 0.0
        %1587 = vmatpush1.msra.mxu0 0.0
        %1588 = vmatprep.subr.mxu0 0.0
        %1589 = vmatpush1.msra.mxu0 0.0
        %1590 = vmatprep.subr.mxu0 0.0
        %1591 = vmatpush1.msra.mxu0 0.0
        %1592 = vmatprep.subr.mxu0 0.0
        %1593 = vmatpush1.msra.mxu0 0.0
        %1594 = vmatprep.subr.mxu0 0.0
        %1595 = vmatpush1.msra.mxu0 0.0
        %1596 = vmatprep.subr.mxu0 0.0
        %1597 = vmatpush1.msra.mxu0 0.0
        %1598 = vmatprep.subr.mxu0 0.0
        %1599 = vmatpush1.msra.mxu0 0.0
        %1600 = vmatprep.subr.mxu0 0.0
        %1601 = vmatpush1.msra.mxu0 0.0
        %1602 = vmatprep.subr.mxu0 0.0
        %1603 = vmatpush1.msra.mxu0 0.0
        %1604 = vmatprep.subr.mxu0 0.0
        %1605 = vmatpush1.msra.mxu0 0.0
        %1606 = vmatprep.subr.mxu0 0.0
        %1607 = vmatpush1.msra.mxu0 0.0
        %1608 = vmatprep.subr.mxu0 0.0
        %1609 = vmatpush1.msra.mxu0 0.0
        %1610 = vmatprep.subr.mxu0 0.0
        %1611 = vmatpush1.msra.mxu0 0.0
        %1612 = vmatprep.subr.mxu0 0.0
        %1613 = vmatpush1.msra.mxu0 0.0
        %1614 = vmatprep.subr.mxu0 0.0
        %1615 = vmatpush1.msra.mxu0 0.0
        %1616 = vmatprep.subr.mxu0 0.0
        %1617 = vmatpush1.msra.mxu0 0.0
        %1618 = vmatprep.subr.mxu0 0.0
        %1619 = vmatpush1.msra.mxu0 0.0
        %1620 = vmatprep.subr.mxu0 0.0
        %1621 = vmatpush1.msra.mxu0 0.0
        %1622 = vmatprep.subr.mxu0 0.0
        %1623 = vmatpush1.msra.mxu0 0.0
        %1624 = vmatprep.subr.mxu0 0.0
        %1625 = vmatpush1.msra.mxu0 0.0
        %1626 = vmatprep.subr.mxu0 0.0
        %1627 = vmatpush1.msra.mxu0 0.0
        %1628 = vmatprep.subr.mxu0 0.0
        %1629 = vmatpush1.msra.mxu0 0.0
        %1630 = vmatprep.subr.mxu0 0.0
        %1631 = vmatpush1.msra.mxu0 0.0
        %1632 = vmatprep.subr.mxu0 0.0
        %1633 = vmatpush1.msra.mxu0 0.0
        %1634 = vmatprep.subr.mxu0 0.0
        %1635 = vmatpush1.msra.mxu0 0.0
        %1636 = vmatprep.subr.mxu0 0.0
        %1637 = vmatpush1.msra.mxu0 0.0
        %1638 = vmatprep.mubr.f32.mxu0 0.0
        %1639 = vmatmul.mubr.f32.gmra.mrb[0].mxu0 %v1495
        %v1640 = vpop.f32.mrb[0].mxu0
        %v1641 = vadd.f32 0.0, %v1640
        %v1642 = vpop.f32.mrb[0].mxu0
        %1643 = vdwg.mxu0
        %v1644 = vadd.f32 %v1480, %v1570
        %v1645 = vadd.f32 %v1481, %v1572
        %v1646 = vadd.f32 %v1482, %v1641
        %s1647 = scalar_lea.vmem %s2, 32
        %v1648 = vld [vmem:[%s1647] sm:$0xf]
        %1649 = vrot.lane.b32.xlu0 %v343, 90
        %v1650 = vpop.permute.xlu0 %1649
        %1651 = vrot.lane.b32.xlu0 %v344, 90
        %v1652 = vpop.permute.xlu0 %1651
        %1653 = vrot.lane.b32.xlu0 %v345, 90
        %v1654 = vpop.permute.xlu0 %1653
        %vm1655 = vcmask 736256
        %v1656 = vsel %vm1655, %v1650, %v1652
        %v1657 = vsel %vm1655, %v1652, %v1654
        %v1659 = vsel %vm361, %v1648, 0
        %v1661 = vsel %vm365, %v1656, 0
        %v1663 = vsel %vm365, %v1657, 0
        %v1665 = vsel %vm365, %v1654, 0
        %1667 = vmatprep.subr.mxu0 %v1663
        %1668 = vmatpush1.msra.mxu0 %v1661
        %1669 = vmatprep.subr.mxu0 0.0
        %1670 = vmatpush1.msra.mxu0 0.0
        %1671 = vmatprep.subr.mxu0 0.0
        %1672 = vmatpush1.msra.mxu0 0.0
        %1673 = vmatprep.subr.mxu0 0.0
        %1674 = vmatpush1.msra.mxu0 0.0
        %1675 = vmatprep.subr.mxu0 0.0
        %1676 = vmatpush1.msra.mxu0 0.0
        %1677 = vmatprep.subr.mxu0 0.0
        %1678 = vmatpush1.msra.mxu0 0.0
        %1679 = vmatprep.subr.mxu0 0.0
        %1680 = vmatpush1.msra.mxu0 0.0
        %1681 = vmatprep.subr.mxu0 0.0
        %1682 = vmatpush1.msra.mxu0 0.0
        %1683 = vmatprep.subr.mxu0 0.0
        %1684 = vmatpush1.msra.mxu0 0.0
        %1685 = vmatprep.subr.mxu0 0.0
        %1686 = vmatpush1.msra.mxu0 0.0
        %1687 = vmatprep.subr.mxu0 0.0
        %1688 = vmatpush1.msra.mxu0 0.0
        %1689 = vmatprep.subr.mxu0 0.0
        %1690 = vmatpush1.msra.mxu0 0.0
        %1691 = vmatprep.subr.mxu0 0.0
        %1692 = vmatpush1.msra.mxu0 0.0
        %1693 = vmatprep.subr.mxu0 0.0
        %1694 = vmatpush1.msra.mxu0 0.0
        %1695 = vmatprep.subr.mxu0 0.0
        %1696 = vmatpush1.msra.mxu0 0.0
        %1697 = vmatprep.subr.mxu0 0.0
        %1698 = vmatpush1.msra.mxu0 0.0
        %1699 = vmatprep.subr.mxu0 0.0
        %1700 = vmatpush1.msra.mxu0 0.0
        %1701 = vmatprep.subr.mxu0 0.0
        %1702 = vmatpush1.msra.mxu0 0.0
        %1703 = vmatprep.subr.mxu0 0.0
        %1704 = vmatpush1.msra.mxu0 0.0
        %1705 = vmatprep.subr.mxu0 0.0
        %1706 = vmatpush1.msra.mxu0 0.0
        %1707 = vmatprep.subr.mxu0 0.0
        %1708 = vmatpush1.msra.mxu0 0.0
        %1709 = vmatprep.subr.mxu0 0.0
        %1710 = vmatpush1.msra.mxu0 0.0
        %1711 = vmatprep.subr.mxu0 0.0
        %1712 = vmatpush1.msra.mxu0 0.0
        %1713 = vmatprep.subr.mxu0 0.0
        %1714 = vmatpush1.msra.mxu0 0.0
        %1715 = vmatprep.subr.mxu0 0.0
        %1716 = vmatpush1.msra.mxu0 0.0
        %1717 = vmatprep.subr.mxu0 0.0
        %1718 = vmatpush1.msra.mxu0 0.0
        %1719 = vmatprep.subr.mxu0 0.0
        %1720 = vmatpush1.msra.mxu0 0.0
        %1721 = vmatprep.subr.mxu0 0.0
        %1722 = vmatpush1.msra.mxu0 0.0
        %1723 = vmatprep.subr.mxu0 0.0
        %1724 = vmatpush1.msra.mxu0 0.0
        %1725 = vmatprep.subr.mxu0 0.0
        %1726 = vmatpush1.msra.mxu0 0.0
        %1727 = vmatprep.subr.mxu0 0.0
        %1728 = vmatpush1.msra.mxu0 0.0
        %1729 = vmatprep.subr.mxu0 0.0
        %1730 = vmatpush1.msra.mxu0 0.0
        %1731 = vmatprep.mubr.f32.mxu0 0.0
        %1732 = vmatmul.mubr.f32.gmra.mrb[0].mxu0 %v1659
        %v1733 = vpop.f32.mrb[0].mxu0
        %v1734 = vadd.f32 0.0, %v1733
        %v1735 = vpop.f32.mrb[0].mxu0
        %v1736 = vadd.f32 0.0, %v1735
        %1737 = vdwg.mxu0
        %1738 = vmatprep.subr.mxu0 0.0
        %1739 = vmatpush1.msra.mxu0 %v1665
        %1740 = vmatprep.subr.mxu0 0.0
        %1741 = vmatpush1.msra.mxu0 0.0
        %1742 = vmatprep.subr.mxu0 0.0
        %1743 = vmatpush1.msra.mxu0 0.0
        %1744 = vmatprep.subr.mxu0 0.0
        %1745 = vmatpush1.msra.mxu0 0.0
        %1746 = vmatprep.subr.mxu0 0.0
        %1747 = vmatpush1.msra.mxu0 0.0
        %1748 = vmatprep.subr.mxu0 0.0
        %1749 = vmatpush1.msra.mxu0 0.0
        %1750 = vmatprep.subr.mxu0 0.0
        %1751 = vmatpush1.msra.mxu0 0.0
        %1752 = vmatprep.subr.mxu0 0.0
        %1753 = vmatpush1.msra.mxu0 0.0
        %1754 = vmatprep.subr.mxu0 0.0
        %1755 = vmatpush1.msra.mxu0 0.0
        %1756 = vmatprep.subr.mxu0 0.0
        %1757 = vmatpush1.msra.mxu0 0.0
        %1758 = vmatprep.subr.mxu0 0.0
        %1759 = vmatpush1.msra.mxu0 0.0
        %1760 = vmatprep.subr.mxu0 0.0
        %1761 = vmatpush1.msra.mxu0 0.0
        %1762 = vmatprep.subr.mxu0 0.0
        %1763 = vmatpush1.msra.mxu0 0.0
        %1764 = vmatprep.subr.mxu0 0.0
        %1765 = vmatpush1.msra.mxu0 0.0
        %1766 = vmatprep.subr.mxu0 0.0
        %1767 = vmatpush1.msra.mxu0 0.0
        %1768 = vmatprep.subr.mxu0 0.0
        %1769 = vmatpush1.msra.mxu0 0.0
        %1770 = vmatprep.subr.mxu0 0.0
        %1771 = vmatpush1.msra.mxu0 0.0
        %1772 = vmatprep.subr.mxu0 0.0
        %1773 = vmatpush1.msra.mxu0 0.0
        %1774 = vmatprep.subr.mxu0 0.0
        %1775 = vmatpush1.msra.mxu0 0.0
        %1776 = vmatprep.subr.mxu0 0.0
        %1777 = vmatpush1.msra.mxu0 0.0
        %1778 = vmatprep.subr.mxu0 0.0
        %1779 = vmatpush1.msra.mxu0 0.0
        %1780 = vmatprep.subr.mxu0 0.0
        %1781 = vmatpush1.msra.mxu0 0.0
        %1782 = vmatprep.subr.mxu0 0.0
        %1783 = vmatpush1.msra.mxu0 0.0
        %1784 = vmatprep.subr.mxu0 0.0
        %1785 = vmatpush1.msra.mxu0 0.0
        %1786 = vmatprep.subr.mxu0 0.0
        %1787 = vmatpush1.msra.mxu0 0.0
        %1788 = vmatprep.subr.mxu0 0.0
        %1789 = vmatpush1.msra.mxu0 0.0
        %1790 = vmatprep.subr.mxu0 0.0
        %1791 = vmatpush1.msra.mxu0 0.0
        %1792 = vmatprep.subr.mxu0 0.0
        %1793 = vmatpush1.msra.mxu0 0.0
        %1794 = vmatprep.subr.mxu0 0.0
        %1795 = vmatpush1.msra.mxu0 0.0
        %1796 = vmatprep.subr.mxu0 0.0
        %1797 = vmatpush1.msra.mxu0 0.0
        %1798 = vmatprep.subr.mxu0 0.0
        %1799 = vmatpush1.msra.mxu0 0.0
        %1800 = vmatprep.subr.mxu0 0.0
        %1801 = vmatpush1.msra.mxu0 0.0
        %1802 = vmatprep.mubr.f32.mxu0 0.0
        %1803 = vmatmul.mubr.f32.gmra.mrb[0].mxu0 %v1659
        %v1804 = vpop.f32.mrb[0].mxu0
        %v1805 = vadd.f32 0.0, %v1804
        %v1806 = vpop.f32.mrb[0].mxu0
        %1807 = vdwg.mxu0
        %v1808 = vadd.f32 %v1644, %v1734
        %v1809 = vadd.f32 %v1645, %v1736
        %v1810 = vadd.f32 %v1646, %v1805
        %v1811 = vld [vmem:[%s7] sm:$0xf]
        %1813 = vset.pattern.permute.xlu0 0
        %1814 = vperm.xlu0 %1813, %v1811
        %v1815 = vpop.permute.xlu0 %1814
        %v1817 = vadd.f32 %v1808, %v1815
        %v1818 = vadd.f32 %v1809, %v1815
        %v1819 = vadd.f32 %v1810, %v1815
        %vm1820 = vcmp.gt.f32.partialorder %v1817, 0.0
        %vm1821 = vcmp.gt.f32.partialorder %v1818, 0.0
        %vm1822 = vcmp.gt.f32.partialorder %v1819, 0.0
        %v1823 = vmul.f32 %v1817, 0.01
        %v1824 = vmul.f32 %v1818, 0.01
        %v1825 = vmul.f32 %v1819, 0.01
        %v1826 = vsel %vm1820, %v1817, %v1823
        %v1827 = vsel %vm1821, %v1818, %v1824
        %v1828 = vsel %vm1822, %v1819, %v1825
        %v1829 = vsel %vm342, 1, 0
        %v1830 = vlaneseq
        %v1831 = vshrl.u32 %v1830, 7
        %v1832 = vsub.s32 0, %v1831
        %v1833 = vrot.slane %v1829, %v1832
        %v1834 = vlaneseq
        %v1835 = vshrl.u32 %v1834, 7
        %v1836 = vsub.s32 1, %v1835
        %v1837 = vrot.slane %v1829, %v1836
        %v1838 = vlaneseq
        %v1839 = vshrl.u32 %v1838, 7
        %v1840 = vsub.s32 2, %v1839
        %v1841 = vrot.slane %v1829, %v1840
        %vm1842 = vcmp.eq.s32.totalorder %v1833, 1
        %vm1843 = vcmp.eq.s32.totalorder %v1837, 1
        %vm1844 = vcmp.eq.s32.totalorder %v1841, 1
        %v1845 = vsel %vm1842, %v1826, 0.0
        %v1846 = vsel %vm1843, %v1827, 0.0
        %v1847 = vsel %vm1844, %v1828, 0.0
        %v1851 = vrot.slane %v1845, 4
        %v1852 = vrot.slane %v1846, 4
        %v1853 = vrot.slane %v1847, 4
        %1854 = vrot.lane.b32.xlu0 %v1851, 19
        %v1855 = vpop.permute.xlu0 %1854
        %1856 = vrot.lane.b32.xlu0 %v1852, 19
        %v1857 = vpop.permute.xlu0 %1856
        %1858 = vrot.lane.b32.xlu0 %v1853, 19
        %v1859 = vpop.permute.xlu0 %1858
        %v1860 = vsel %vm322, %v1855, %v1857
        %v1861 = vsel %vm322, %v1857, %v1859
        %vm1865 = vcmask 1047708
        %1866 = vst.msk [vmem:[#allocation2] sm:$0xf0] %vm1865, %v1855
        %1867 = vst [vmem:[#allocation2 + $0x8] sm:$0xf0] %v1860
        %vm1868 = vcmask 416772
        %1869 = vst.msk [vmem:[#allocation2 + $0x10] sm:$0xf0] %vm1868, %v1861
        %v1870 = vld [vmem:[#allocation2] sm:$0xff]
        %v1871 = vld [vmem:[#allocation2 + $0x8] sm:$0xff]
        %v1872 = vld [vmem:[#allocation2 + $0x10] sm:$0xff]
        %v1873 = vld [vmem:[%s3] sm:$0xf]
        %s1874 = scalar_lea.vmem %s3, 4
        %v1875 = vld [vmem:[%s1874] sm:$0xf]
        %1879 = vrot.lane.b32.xlu0 %v1870, 127
        %v1880 = vpop.permute.xlu0 %1879
        %1881 = vrot.lane.b32.xlu0 %v1871, 127
        %v1882 = vpop.permute.xlu0 %1881
        %1883 = vrot.lane.b32.xlu0 %v1872, 127
        %v1884 = vpop.permute.xlu0 %1883
        %v1885 = vsel %vm358, %v1880, %v1882
        %v1886 = vsel %vm358, %v1882, %v1884
        %vm1890 = vcmask 64512
        %v1892 = vsel %vm1890, %v1875, 0
        %1894 = vmatprep.subr.mxu0 %v1886
        %1895 = vmatpush1.msra.mxu0 %v1885
        %1896 = vmatprep.subr.mxu0 0.0
        %1897 = vmatpush1.msra.mxu0 0.0
        %1898 = vmatprep.subr.mxu0 0.0
        %1899 = vmatpush1.msra.mxu0 0.0
        %1900 = vmatprep.subr.mxu0 0.0
        %1901 = vmatpush1.msra.mxu0 0.0
        %1902 = vmatprep.subr.mxu0 0.0
        %1903 = vmatpush1.msra.mxu0 0.0
        %1904 = vmatprep.subr.mxu0 0.0
        %1905 = vmatpush1.msra.mxu0 0.0
        %1906 = vmatprep.subr.mxu0 0.0
        %1907 = vmatpush1.msra.mxu0 0.0
        %1908 = vmatprep.subr.mxu0 0.0
        %1909 = vmatpush1.msra.mxu0 0.0
        %1910 = vmatprep.subr.mxu0 0.0
        %1911 = vmatpush1.msra.mxu0 0.0
        %1912 = vmatprep.subr.mxu0 0.0
        %1913 = vmatpush1.msra.mxu0 0.0
        %1914 = vmatprep.subr.mxu0 0.0
        %1915 = vmatpush1.msra.mxu0 0.0
        %1916 = vmatprep.subr.mxu0 0.0
        %1917 = vmatpush1.msra.mxu0 0.0
        %1918 = vmatprep.subr.mxu0 0.0
        %1919 = vmatpush1.msra.mxu0 0.0
        %1920 = vmatprep.subr.mxu0 0.0
        %1921 = vmatpush1.msra.mxu0 0.0
        %1922 = vmatprep.subr.mxu0 0.0
        %1923 = vmatpush1.msra.mxu0 0.0
        %1924 = vmatprep.subr.mxu0 0.0
        %1925 = vmatpush1.msra.mxu0 0.0
        %1926 = vmatprep.subr.mxu0 0.0
        %1927 = vmatpush1.msra.mxu0 0.0
        %1928 = vmatprep.subr.mxu0 0.0
        %1929 = vmatpush1.msra.mxu0 0.0
        %1930 = vmatprep.subr.mxu0 0.0
        %1931 = vmatpush1.msra.mxu0 0.0
        %1932 = vmatprep.subr.mxu0 0.0
        %1933 = vmatpush1.msra.mxu0 0.0
        %1934 = vmatprep.subr.mxu0 0.0
        %1935 = vmatpush1.msra.mxu0 0.0
        %1936 = vmatprep.subr.mxu0 0.0
        %1937 = vmatpush1.msra.mxu0 0.0
        %1938 = vmatprep.subr.mxu0 0.0
        %1939 = vmatpush1.msra.mxu0 0.0
        %1940 = vmatprep.subr.mxu0 0.0
        %1941 = vmatpush1.msra.mxu0 0.0
        %1942 = vmatprep.subr.mxu0 0.0
        %1943 = vmatpush1.msra.mxu0 0.0
        %1944 = vmatprep.subr.mxu0 0.0
        %1945 = vmatpush1.msra.mxu0 0.0
        %1946 = vmatprep.subr.mxu0 0.0
        %1947 = vmatpush1.msra.mxu0 0.0
        %1948 = vmatprep.subr.mxu0 0.0
        %1949 = vmatpush1.msra.mxu0 0.0
        %1950 = vmatprep.subr.mxu0 0.0
        %1951 = vmatpush1.msra.mxu0 0.0
        %1952 = vmatprep.subr.mxu0 0.0
        %1953 = vmatpush1.msra.mxu0 0.0
        %1954 = vmatprep.subr.mxu0 0.0
        %1955 = vmatpush1.msra.mxu0 0.0
        %1956 = vmatprep.subr.mxu0 0.0
        %1957 = vmatpush1.msra.mxu0 0.0
        %1958 = vmatprep.mubr.f32.mxu0 0.0
        %1959 = vmatmul.mubr.f32.gmra.mrb[0].mxu0 %v1892
        %v1960 = vpop.f32.mrb[0].mxu0
        %v1961 = vadd.f32 0.0, %v1960
        %v1962 = vpop.f32.mrb[0].mxu0
        %v1963 = vadd.f32 0.0, %v1962
        %1964 = vdwg.mxu0
        %1965 = vmatprep.subr.mxu0 0.0
        %1966 = vmatpush1.msra.mxu0 %v1884
        %1967 = vmatprep.subr.mxu0 0.0
        %1968 = vmatpush1.msra.mxu0 0.0
        %1969 = vmatprep.subr.mxu0 0.0
        %1970 = vmatpush1.msra.mxu0 0.0
        %1971 = vmatprep.subr.mxu0 0.0
        %1972 = vmatpush1.msra.mxu0 0.0
        %1973 = vmatprep.subr.mxu0 0.0
        %1974 = vmatpush1.msra.mxu0 0.0
        %1975 = vmatprep.subr.mxu0 0.0
        %1976 = vmatpush1.msra.mxu0 0.0
        %1977 = vmatprep.subr.mxu0 0.0
        %1978 = vmatpush1.msra.mxu0 0.0
        %1979 = vmatprep.subr.mxu0 0.0
        %1980 = vmatpush1.msra.mxu0 0.0
        %1981 = vmatprep.subr.mxu0 0.0
        %1982 = vmatpush1.msra.mxu0 0.0
        %1983 = vmatprep.subr.mxu0 0.0
        %1984 = vmatpush1.msra.mxu0 0.0
        %1985 = vmatprep.subr.mxu0 0.0
        %1986 = vmatpush1.msra.mxu0 0.0
        %1987 = vmatprep.subr.mxu0 0.0
        %1988 = vmatpush1.msra.mxu0 0.0
        %1989 = vmatprep.subr.mxu0 0.0
        %1990 = vmatpush1.msra.mxu0 0.0
        %1991 = vmatprep.subr.mxu0 0.0
        %1992 = vmatpush1.msra.mxu0 0.0
        %1993 = vmatprep.subr.mxu0 0.0
        %1994 = vmatpush1.msra.mxu0 0.0
        %1995 = vmatprep.subr.mxu0 0.0
        %1996 = vmatpush1.msra.mxu0 0.0
        %1997 = vmatprep.subr.mxu0 0.0
        %1998 = vmatpush1.msra.mxu0 0.0
        %1999 = vmatprep.subr.mxu0 0.0
        %2000 = vmatpush1.msra.mxu0 0.0
        %2001 = vmatprep.subr.mxu0 0.0
        %2002 = vmatpush1.msra.mxu0 0.0
        %2003 = vmatprep.subr.mxu0 0.0
        %2004 = vmatpush1.msra.mxu0 0.0
        %2005 = vmatprep.subr.mxu0 0.0
        %2006 = vmatpush1.msra.mxu0 0.0
        %2007 = vmatprep.subr.mxu0 0.0
        %2008 = vmatpush1.msra.mxu0 0.0
        %2009 = vmatprep.subr.mxu0 0.0
        %2010 = vmatpush1.msra.mxu0 0.0
        %2011 = vmatprep.subr.mxu0 0.0
        %2012 = vmatpush1.msra.mxu0 0.0
        %2013 = vmatprep.subr.mxu0 0.0
        %2014 = vmatpush1.msra.mxu0 0.0
        %2015 = vmatprep.subr.mxu0 0.0
        %2016 = vmatpush1.msra.mxu0 0.0
        %2017 = vmatprep.subr.mxu0 0.0
        %2018 = vmatpush1.msra.mxu0 0.0
        %2019 = vmatprep.subr.mxu0 0.0
        %2020 = vmatpush1.msra.mxu0 0.0
        %2021 = vmatprep.subr.mxu0 0.0
        %2022 = vmatpush1.msra.mxu0 0.0
        %2023 = vmatprep.subr.mxu0 0.0
        %2024 = vmatpush1.msra.mxu0 0.0
        %2025 = vmatprep.subr.mxu0 0.0
        %2026 = vmatpush1.msra.mxu0 0.0
        %2027 = vmatprep.subr.mxu0 0.0
        %2028 = vmatpush1.msra.mxu0 0.0
        %2029 = vmatprep.mubr.f32.mxu0 0.0
        %2030 = vmatmul.mubr.f32.gmra.mrb[0].mxu0 %v1892
        %v2031 = vpop.f32.mrb[0].mxu0
        %v2032 = vadd.f32 0.0, %v2031
        %v2033 = vpop.f32.mrb[0].mxu0
        %2034 = vdwg.mxu0
        %v2036 = vsel %vm1890, %v1873, 0
        %2038 = vmatprep.subr.mxu0 %v1871
        %2039 = vmatpush1.msra.mxu0 %v1870
        %2040 = vmatprep.subr.mxu0 0.0
        %2041 = vmatpush1.msra.mxu0 0.0
        %2042 = vmatprep.subr.mxu0 0.0
        %2043 = vmatpush1.msra.mxu0 0.0
        %2044 = vmatprep.subr.mxu0 0.0
        %2045 = vmatpush1.msra.mxu0 0.0
        %2046 = vmatprep.subr.mxu0 0.0
        %2047 = vmatpush1.msra.mxu0 0.0
        %2048 = vmatprep.subr.mxu0 0.0
        %2049 = vmatpush1.msra.mxu0 0.0
        %2050 = vmatprep.subr.mxu0 0.0
        %2051 = vmatpush1.msra.mxu0 0.0
        %2052 = vmatprep.subr.mxu0 0.0
        %2053 = vmatpush1.msra.mxu0 0.0
        %2054 = vmatprep.subr.mxu0 0.0
        %2055 = vmatpush1.msra.mxu0 0.0
        %2056 = vmatprep.subr.mxu0 0.0
        %2057 = vmatpush1.msra.mxu0 0.0
        %2058 = vmatprep.subr.mxu0 0.0
        %2059 = vmatpush1.msra.mxu0 0.0
        %2060 = vmatprep.subr.mxu0 0.0
        %2061 = vmatpush1.msra.mxu0 0.0
        %2062 = vmatprep.subr.mxu0 0.0
        %2063 = vmatpush1.msra.mxu0 0.0
        %2064 = vmatprep.subr.mxu0 0.0
        %2065 = vmatpush1.msra.mxu0 0.0
        %2066 = vmatprep.subr.mxu0 0.0
        %2067 = vmatpush1.msra.mxu0 0.0
        %2068 = vmatprep.subr.mxu0 0.0
        %2069 = vmatpush1.msra.mxu0 0.0
        %2070 = vmatprep.subr.mxu0 0.0
        %2071 = vmatpush1.msra.mxu0 0.0
        %2072 = vmatprep.subr.mxu0 0.0
        %2073 = vmatpush1.msra.mxu0 0.0
        %2074 = vmatprep.subr.mxu0 0.0
        %2075 = vmatpush1.msra.mxu0 0.0
        %2076 = vmatprep.subr.mxu0 0.0
        %2077 = vmatpush1.msra.mxu0 0.0
        %2078 = vmatprep.subr.mxu0 0.0
        %2079 = vmatpush1.msra.mxu0 0.0
        %2080 = vmatprep.subr.mxu0 0.0
        %2081 = vmatpush1.msra.mxu0 0.0
        %2082 = vmatprep.subr.mxu0 0.0
        %2083 = vmatpush1.msra.mxu0 0.0
        %2084 = vmatprep.subr.mxu0 0.0
        %2085 = vmatpush1.msra.mxu0 0.0
        %2086 = vmatprep.subr.mxu0 0.0
        %2087 = vmatpush1.msra.mxu0 0.0
        %2088 = vmatprep.subr.mxu0 0.0
        %2089 = vmatpush1.msra.mxu0 0.0
        %2090 = vmatprep.subr.mxu0 0.0
        %2091 = vmatpush1.msra.mxu0 0.0
        %2092 = vmatprep.subr.mxu0 0.0
        %2093 = vmatpush1.msra.mxu0 0.0
        %2094 = vmatprep.subr.mxu0 0.0
        %2095 = vmatpush1.msra.mxu0 0.0
        %2096 = vmatprep.subr.mxu0 0.0
        %2097 = vmatpush1.msra.mxu0 0.0
        %2098 = vmatprep.subr.mxu0 0.0
        %2099 = vmatpush1.msra.mxu0 0.0
        %2100 = vmatprep.subr.mxu0 0.0
        %2101 = vmatpush1.msra.mxu0 0.0
        %2102 = vmatprep.mubr.f32.mxu0 0.0
        %2103 = vmatmul.mubr.f32.gmra.mrb[0].mxu0 %v2036
        %v2104 = vpop.f32.mrb[0].mxu0
        %v2105 = vadd.f32 %v1961, %v2104
        %v2106 = vpop.f32.mrb[0].mxu0
        %v2107 = vadd.f32 %v1963, %v2106
        %2108 = vdwg.mxu0
        %2109 = vmatprep.subr.mxu0 0.0
        %2110 = vmatpush1.msra.mxu0 %v1872
        %2111 = vmatprep.subr.mxu0 0.0
        %2112 = vmatpush1.msra.mxu0 0.0
        %2113 = vmatprep.subr.mxu0 0.0
        %2114 = vmatpush1.msra.mxu0 0.0
        %2115 = vmatprep.subr.mxu0 0.0
        %2116 = vmatpush1.msra.mxu0 0.0
        %2117 = vmatprep.subr.mxu0 0.0
        %2118 = vmatpush1.msra.mxu0 0.0
        %2119 = vmatprep.subr.mxu0 0.0
        %2120 = vmatpush1.msra.mxu0 0.0
        %2121 = vmatprep.subr.mxu0 0.0
        %2122 = vmatpush1.msra.mxu0 0.0
        %2123 = vmatprep.subr.mxu0 0.0
        %2124 = vmatpush1.msra.mxu0 0.0
        %2125 = vmatprep.subr.mxu0 0.0
        %2126 = vmatpush1.msra.mxu0 0.0
        %2127 = vmatprep.subr.mxu0 0.0
        %2128 = vmatpush1.msra.mxu0 0.0
        %2129 = vmatprep.subr.mxu0 0.0
        %2130 = vmatpush1.msra.mxu0 0.0
        %2131 = vmatprep.subr.mxu0 0.0
        %2132 = vmatpush1.msra.mxu0 0.0
        %2133 = vmatprep.subr.mxu0 0.0
        %2134 = vmatpush1.msra.mxu0 0.0
        %2135 = vmatprep.subr.mxu0 0.0
        %2136 = vmatpush1.msra.mxu0 0.0
        %2137 = vmatprep.subr.mxu0 0.0
        %2138 = vmatpush1.msra.mxu0 0.0
        %2139 = vmatprep.subr.mxu0 0.0
        %2140 = vmatpush1.msra.mxu0 0.0
        %2141 = vmatprep.subr.mxu0 0.0
        %2142 = vmatpush1.msra.mxu0 0.0
        %2143 = vmatprep.subr.mxu0 0.0
        %2144 = vmatpush1.msra.mxu0 0.0
        %2145 = vmatprep.subr.mxu0 0.0
        %2146 = vmatpush1.msra.mxu0 0.0
        %2147 = vmatprep.subr.mxu0 0.0
        %2148 = vmatpush1.msra.mxu0 0.0
        %2149 = vmatprep.subr.mxu0 0.0
        %2150 = vmatpush1.msra.mxu0 0.0
        %2151 = vmatprep.subr.mxu0 0.0
        %2152 = vmatpush1.msra.mxu0 0.0
        %2153 = vmatprep.subr.mxu0 0.0
        %2154 = vmatpush1.msra.mxu0 0.0
        %2155 = vmatprep.subr.mxu0 0.0
        %2156 = vmatpush1.msra.mxu0 0.0
        %2157 = vmatprep.subr.mxu0 0.0
        %2158 = vmatpush1.msra.mxu0 0.0
        %2159 = vmatprep.subr.mxu0 0.0
        %2160 = vmatpush1.msra.mxu0 0.0
        %2161 = vmatprep.subr.mxu0 0.0
        %2162 = vmatpush1.msra.mxu0 0.0
        %2163 = vmatprep.subr.mxu0 0.0
        %2164 = vmatpush1.msra.mxu0 0.0
        %2165 = vmatprep.subr.mxu0 0.0
        %2166 = vmatpush1.msra.mxu0 0.0
        %2167 = vmatprep.subr.mxu0 0.0
        %2168 = vmatpush1.msra.mxu0 0.0
        %2169 = vmatprep.subr.mxu0 0.0
        %2170 = vmatpush1.msra.mxu0 0.0
        %2171 = vmatprep.subr.mxu0 0.0
        %2172 = vmatpush1.msra.mxu0 0.0
        %2173 = vmatprep.mubr.f32.mxu0 0.0
        %2174 = vmatmul.mubr.f32.gmra.mrb[0].mxu0 %v2036
        %v2175 = vpop.f32.mrb[0].mxu0
        %v2176 = vadd.f32 %v2032, %v2175
        %v2177 = vpop.f32.mrb[0].mxu0
        %2178 = vdwg.mxu0
        %s2179 = scalar_lea.vmem %s3, 8
        %v2180 = vld [vmem:[%s2179] sm:$0xf]
        %2181 = vrot.lane.b32.xlu0 %v1870, 126
        %v2182 = vpop.permute.xlu0 %2181
        %2183 = vrot.lane.b32.xlu0 %v1871, 126
        %v2184 = vpop.permute.xlu0 %2183
        %2185 = vrot.lane.b32.xlu0 %v1872, 126
        %v2186 = vpop.permute.xlu0 %2185
        %v2187 = vsel %vm671, %v2182, %v2184
        %v2188 = vsel %vm671, %v2184, %v2186
        %v2193 = vsel %vm1890, %v2180, 0
        %2195 = vmatprep.subr.mxu0 %v2188
        %2196 = vmatpush1.msra.mxu0 %v2187
        %2197 = vmatprep.subr.mxu0 0.0
        %2198 = vmatpush1.msra.mxu0 0.0
        %2199 = vmatprep.subr.mxu0 0.0
        %2200 = vmatpush1.msra.mxu0 0.0
        %2201 = vmatprep.subr.mxu0 0.0
        %2202 = vmatpush1.msra.mxu0 0.0
        %2203 = vmatprep.subr.mxu0 0.0
        %2204 = vmatpush1.msra.mxu0 0.0
        %2205 = vmatprep.subr.mxu0 0.0
        %2206 = vmatpush1.msra.mxu0 0.0
        %2207 = vmatprep.subr.mxu0 0.0
        %2208 = vmatpush1.msra.mxu0 0.0
        %2209 = vmatprep.subr.mxu0 0.0
        %2210 = vmatpush1.msra.mxu0 0.0
        %2211 = vmatprep.subr.mxu0 0.0
        %2212 = vmatpush1.msra.mxu0 0.0
        %2213 = vmatprep.subr.mxu0 0.0
        %2214 = vmatpush1.msra.mxu0 0.0
        %2215 = vmatprep.subr.mxu0 0.0
        %2216 = vmatpush1.msra.mxu0 0.0
        %2217 = vmatprep.subr.mxu0 0.0
        %2218 = vmatpush1.msra.mxu0 0.0
        %2219 = vmatprep.subr.mxu0 0.0
        %2220 = vmatpush1.msra.mxu0 0.0
        %2221 = vmatprep.subr.mxu0 0.0
        %2222 = vmatpush1.msra.mxu0 0.0
        %2223 = vmatprep.subr.mxu0 0.0
        %2224 = vmatpush1.msra.mxu0 0.0
        %2225 = vmatprep.subr.mxu0 0.0
        %2226 = vmatpush1.msra.mxu0 0.0
        %2227 = vmatprep.subr.mxu0 0.0
        %2228 = vmatpush1.msra.mxu0 0.0
        %2229 = vmatprep.subr.mxu0 0.0
        %2230 = vmatpush1.msra.mxu0 0.0
        %2231 = vmatprep.subr.mxu0 0.0
        %2232 = vmatpush1.msra.mxu0 0.0
        %2233 = vmatprep.subr.mxu0 0.0
        %2234 = vmatpush1.msra.mxu0 0.0
        %2235 = vmatprep.subr.mxu0 0.0
        %2236 = vmatpush1.msra.mxu0 0.0
        %2237 = vmatprep.subr.mxu0 0.0
        %2238 = vmatpush1.msra.mxu0 0.0
        %2239 = vmatprep.subr.mxu0 0.0
        %2240 = vmatpush1.msra.mxu0 0.0
        %2241 = vmatprep.subr.mxu0 0.0
        %2242 = vmatpush1.msra.mxu0 0.0
        %2243 = vmatprep.subr.mxu0 0.0
        %2244 = vmatpush1.msra.mxu0 0.0
        %2245 = vmatprep.subr.mxu0 0.0
        %2246 = vmatpush1.msra.mxu0 0.0
        %2247 = vmatprep.subr.mxu0 0.0
        %2248 = vmatpush1.msra.mxu0 0.0
        %2249 = vmatprep.subr.mxu0 0.0
        %2250 = vmatpush1.msra.mxu0 0.0
        %2251 = vmatprep.subr.mxu0 0.0
        %2252 = vmatpush1.msra.mxu0 0.0
        %2253 = vmatprep.subr.mxu0 0.0
        %2254 = vmatpush1.msra.mxu0 0.0
        %2255 = vmatprep.subr.mxu0 0.0
        %2256 = vmatpush1.msra.mxu0 0.0
        %2257 = vmatprep.subr.mxu0 0.0
        %2258 = vmatpush1.msra.mxu0 0.0
        %2259 = vmatprep.mubr.f32.mxu0 0.0
        %2260 = vmatmul.mubr.f32.gmra.mrb[0].mxu0 %v2193
        %v2261 = vpop.f32.mrb[0].mxu0
        %v2262 = vadd.f32 0.0, %v2261
        %v2263 = vpop.f32.mrb[0].mxu0
        %v2264 = vadd.f32 0.0, %v2263
        %2265 = vdwg.mxu0
        %2266 = vmatprep.subr.mxu0 0.0
        %2267 = vmatpush1.msra.mxu0 %v2186
        %2268 = vmatprep.subr.mxu0 0.0
        %2269 = vmatpush1.msra.mxu0 0.0
        %2270 = vmatprep.subr.mxu0 0.0
        %2271 = vmatpush1.msra.mxu0 0.0
        %2272 = vmatprep.subr.mxu0 0.0
        %2273 = vmatpush1.msra.mxu0 0.0
        %2274 = vmatprep.subr.mxu0 0.0
        %2275 = vmatpush1.msra.mxu0 0.0
        %2276 = vmatprep.subr.mxu0 0.0
        %2277 = vmatpush1.msra.mxu0 0.0
        %2278 = vmatprep.subr.mxu0 0.0
        %2279 = vmatpush1.msra.mxu0 0.0
        %2280 = vmatprep.subr.mxu0 0.0
        %2281 = vmatpush1.msra.mxu0 0.0
        %2282 = vmatprep.subr.mxu0 0.0
        %2283 = vmatpush1.msra.mxu0 0.0
        %2284 = vmatprep.subr.mxu0 0.0
        %2285 = vmatpush1.msra.mxu0 0.0
        %2286 = vmatprep.subr.mxu0 0.0
        %2287 = vmatpush1.msra.mxu0 0.0
        %2288 = vmatprep.subr.mxu0 0.0
        %2289 = vmatpush1.msra.mxu0 0.0
        %2290 = vmatprep.subr.mxu0 0.0
        %2291 = vmatpush1.msra.mxu0 0.0
        %2292 = vmatprep.subr.mxu0 0.0
        %2293 = vmatpush1.msra.mxu0 0.0
        %2294 = vmatprep.subr.mxu0 0.0
        %2295 = vmatpush1.msra.mxu0 0.0
        %2296 = vmatprep.subr.mxu0 0.0
        %2297 = vmatpush1.msra.mxu0 0.0
        %2298 = vmatprep.subr.mxu0 0.0
        %2299 = vmatpush1.msra.mxu0 0.0
        %2300 = vmatprep.subr.mxu0 0.0
        %2301 = vmatpush1.msra.mxu0 0.0
        %2302 = vmatprep.subr.mxu0 0.0
        %2303 = vmatpush1.msra.mxu0 0.0
        %2304 = vmatprep.subr.mxu0 0.0
        %2305 = vmatpush1.msra.mxu0 0.0
        %2306 = vmatprep.subr.mxu0 0.0
        %2307 = vmatpush1.msra.mxu0 0.0
        %2308 = vmatprep.subr.mxu0 0.0
        %2309 = vmatpush1.msra.mxu0 0.0
        %2310 = vmatprep.subr.mxu0 0.0
        %2311 = vmatpush1.msra.mxu0 0.0
        %2312 = vmatprep.subr.mxu0 0.0
        %2313 = vmatpush1.msra.mxu0 0.0
        %2314 = vmatprep.subr.mxu0 0.0
        %2315 = vmatpush1.msra.mxu0 0.0
        %2316 = vmatprep.subr.mxu0 0.0
        %2317 = vmatpush1.msra.mxu0 0.0
        %2318 = vmatprep.subr.mxu0 0.0
        %2319 = vmatpush1.msra.mxu0 0.0
        %2320 = vmatprep.subr.mxu0 0.0
        %2321 = vmatpush1.msra.mxu0 0.0
        %2322 = vmatprep.subr.mxu0 0.0
        %2323 = vmatpush1.msra.mxu0 0.0
        %2324 = vmatprep.subr.mxu0 0.0
        %2325 = vmatpush1.msra.mxu0 0.0
        %2326 = vmatprep.subr.mxu0 0.0
        %2327 = vmatpush1.msra.mxu0 0.0
        %2328 = vmatprep.subr.mxu0 0.0
        %2329 = vmatpush1.msra.mxu0 0.0
        %2330 = vmatprep.mubr.f32.mxu0 0.0
        %2331 = vmatmul.mubr.f32.gmra.mrb[0].mxu0 %v2193
        %v2332 = vpop.f32.mrb[0].mxu0
        %v2333 = vadd.f32 0.0, %v2332
        %v2334 = vpop.f32.mrb[0].mxu0
        %2335 = vdwg.mxu0
        %v2336 = vadd.f32 %v2105, %v2262
        %v2337 = vadd.f32 %v2107, %v2264
        %v2338 = vadd.f32 %v2176, %v2333
        %s2339 = scalar_lea.vmem %s3, 12
        %v2340 = vld [vmem:[%s2339] sm:$0xf]
        %2341 = vrot.lane.b32.xlu0 %v1870, 110
        %v2342 = vpop.permute.xlu0 %2341
        %2343 = vrot.lane.b32.xlu0 %v1871, 110
        %v2344 = vpop.permute.xlu0 %2343
        %2345 = vrot.lane.b32.xlu0 %v1872, 110
        %v2346 = vpop.permute.xlu0 %2345
        %v2347 = vsel %vm835, %v2342, %v2344
        %v2348 = vsel %vm835, %v2344, %v2346
        %v2353 = vsel %vm1890, %v2340, 0
        %2355 = vmatprep.subr.mxu0 %v2348
        %2356 = vmatpush1.msra.mxu0 %v2347
        %2357 = vmatprep.subr.mxu0 0.0
        %2358 = vmatpush1.msra.mxu0 0.0
        %2359 = vmatprep.subr.mxu0 0.0
        %2360 = vmatpush1.msra.mxu0 0.0
        %2361 = vmatprep.subr.mxu0 0.0
        %2362 = vmatpush1.msra.mxu0 0.0
        %2363 = vmatprep.subr.mxu0 0.0
        %2364 = vmatpush1.msra.mxu0 0.0
        %2365 = vmatprep.subr.mxu0 0.0
        %2366 = vmatpush1.msra.mxu0 0.0
        %2367 = vmatprep.subr.mxu0 0.0
        %2368 = vmatpush1.msra.mxu0 0.0
        %2369 = vmatprep.subr.mxu0 0.0
        %2370 = vmatpush1.msra.mxu0 0.0
        %2371 = vmatprep.subr.mxu0 0.0
        %2372 = vmatpush1.msra.mxu0 0.0
        %2373 = vmatprep.subr.mxu0 0.0
        %2374 = vmatpush1.msra.mxu0 0.0
        %2375 = vmatprep.subr.mxu0 0.0
        %2376 = vmatpush1.msra.mxu0 0.0
        %2377 = vmatprep.subr.mxu0 0.0
        %2378 = vmatpush1.msra.mxu0 0.0
        %2379 = vmatprep.subr.mxu0 0.0
        %2380 = vmatpush1.msra.mxu0 0.0
        %2381 = vmatprep.subr.mxu0 0.0
        %2382 = vmatpush1.msra.mxu0 0.0
        %2383 = vmatprep.subr.mxu0 0.0
        %2384 = vmatpush1.msra.mxu0 0.0
        %2385 = vmatprep.subr.mxu0 0.0
        %2386 = vmatpush1.msra.mxu0 0.0
        %2387 = vmatprep.subr.mxu0 0.0
        %2388 = vmatpush1.msra.mxu0 0.0
        %2389 = vmatprep.subr.mxu0 0.0
        %2390 = vmatpush1.msra.mxu0 0.0
        %2391 = vmatprep.subr.mxu0 0.0
        %2392 = vmatpush1.msra.mxu0 0.0
        %2393 = vmatprep.subr.mxu0 0.0
        %2394 = vmatpush1.msra.mxu0 0.0
        %2395 = vmatprep.subr.mxu0 0.0
        %2396 = vmatpush1.msra.mxu0 0.0
        %2397 = vmatprep.subr.mxu0 0.0
        %2398 = vmatpush1.msra.mxu0 0.0
        %2399 = vmatprep.subr.mxu0 0.0
        %2400 = vmatpush1.msra.mxu0 0.0
        %2401 = vmatprep.subr.mxu0 0.0
        %2402 = vmatpush1.msra.mxu0 0.0
        %2403 = vmatprep.subr.mxu0 0.0
        %2404 = vmatpush1.msra.mxu0 0.0
        %2405 = vmatprep.subr.mxu0 0.0
        %2406 = vmatpush1.msra.mxu0 0.0
        %2407 = vmatprep.subr.mxu0 0.0
        %2408 = vmatpush1.msra.mxu0 0.0
        %2409 = vmatprep.subr.mxu0 0.0
        %2410 = vmatpush1.msra.mxu0 0.0
        %2411 = vmatprep.subr.mxu0 0.0
        %2412 = vmatpush1.msra.mxu0 0.0
        %2413 = vmatprep.subr.mxu0 0.0
        %2414 = vmatpush1.msra.mxu0 0.0
        %2415 = vmatprep.subr.mxu0 0.0
        %2416 = vmatpush1.msra.mxu0 0.0
        %2417 = vmatprep.subr.mxu0 0.0
        %2418 = vmatpush1.msra.mxu0 0.0
        %2419 = vmatprep.mubr.f32.mxu0 0.0
        %2420 = vmatmul.mubr.f32.gmra.mrb[0].mxu0 %v2353
        %v2421 = vpop.f32.mrb[0].mxu0
        %v2422 = vadd.f32 0.0, %v2421
        %v2423 = vpop.f32.mrb[0].mxu0
        %v2424 = vadd.f32 0.0, %v2423
        %2425 = vdwg.mxu0
        %2426 = vmatprep.subr.mxu0 0.0
        %2427 = vmatpush1.msra.mxu0 %v2346
        %2428 = vmatprep.subr.mxu0 0.0
        %2429 = vmatpush1.msra.mxu0 0.0
        %2430 = vmatprep.subr.mxu0 0.0
        %2431 = vmatpush1.msra.mxu0 0.0
        %2432 = vmatprep.subr.mxu0 0.0
        %2433 = vmatpush1.msra.mxu0 0.0
        %2434 = vmatprep.subr.mxu0 0.0
        %2435 = vmatpush1.msra.mxu0 0.0
        %2436 = vmatprep.subr.mxu0 0.0
        %2437 = vmatpush1.msra.mxu0 0.0
        %2438 = vmatprep.subr.mxu0 0.0
        %2439 = vmatpush1.msra.mxu0 0.0
        %2440 = vmatprep.subr.mxu0 0.0
        %2441 = vmatpush1.msra.mxu0 0.0
        %2442 = vmatprep.subr.mxu0 0.0
        %2443 = vmatpush1.msra.mxu0 0.0
        %2444 = vmatprep.subr.mxu0 0.0
        %2445 = vmatpush1.msra.mxu0 0.0
        %2446 = vmatprep.subr.mxu0 0.0
        %2447 = vmatpush1.msra.mxu0 0.0
        %2448 = vmatprep.subr.mxu0 0.0
        %2449 = vmatpush1.msra.mxu0 0.0
        %2450 = vmatprep.subr.mxu0 0.0
        %2451 = vmatpush1.msra.mxu0 0.0
        %2452 = vmatprep.subr.mxu0 0.0
        %2453 = vmatpush1.msra.mxu0 0.0
        %2454 = vmatprep.subr.mxu0 0.0
        %2455 = vmatpush1.msra.mxu0 0.0
        %2456 = vmatprep.subr.mxu0 0.0
        %2457 = vmatpush1.msra.mxu0 0.0
        %2458 = vmatprep.subr.mxu0 0.0
        %2459 = vmatpush1.msra.mxu0 0.0
        %2460 = vmatprep.subr.mxu0 0.0
        %2461 = vmatpush1.msra.mxu0 0.0
        %2462 = vmatprep.subr.mxu0 0.0
        %2463 = vmatpush1.msra.mxu0 0.0
        %2464 = vmatprep.subr.mxu0 0.0
        %2465 = vmatpush1.msra.mxu0 0.0
        %2466 = vmatprep.subr.mxu0 0.0
        %2467 = vmatpush1.msra.mxu0 0.0
        %2468 = vmatprep.subr.mxu0 0.0
        %2469 = vmatpush1.msra.mxu0 0.0
        %2470 = vmatprep.subr.mxu0 0.0
        %2471 = vmatpush1.msra.mxu0 0.0
        %2472 = vmatprep.subr.mxu0 0.0
        %2473 = vmatpush1.msra.mxu0 0.0
        %2474 = vmatprep.subr.mxu0 0.0
        %2475 = vmatpush1.msra.mxu0 0.0
        %2476 = vmatprep.subr.mxu0 0.0
        %2477 = vmatpush1.msra.mxu0 0.0
        %2478 = vmatprep.subr.mxu0 0.0
        %2479 = vmatpush1.msra.mxu0 0.0
        %2480 = vmatprep.subr.mxu0 0.0
        %2481 = vmatpush1.msra.mxu0 0.0
        %2482 = vmatprep.subr.mxu0 0.0
        %2483 = vmatpush1.msra.mxu0 0.0
        %2484 = vmatprep.subr.mxu0 0.0
        %2485 = vmatpush1.msra.mxu0 0.0
        %2486 = vmatprep.subr.mxu0 0.0
        %2487 = vmatpush1.msra.mxu0 0.0
        %2488 = vmatprep.subr.mxu0 0.0
        %2489 = vmatpush1.msra.mxu0 0.0
        %2490 = vmatprep.mubr.f32.mxu0 0.0
        %2491 = vmatmul.mubr.f32.gmra.mrb[0].mxu0 %v2353
        %v2492 = vpop.f32.mrb[0].mxu0
        %v2493 = vadd.f32 0.0, %v2492
        %v2494 = vpop.f32.mrb[0].mxu0
        %2495 = vdwg.mxu0
        %v2496 = vadd.f32 %v2336, %v2422
        %v2497 = vadd.f32 %v2337, %v2424
        %v2498 = vadd.f32 %v2338, %v2493
        %s2499 = scalar_lea.vmem %s3, 16
        %v2500 = vld [vmem:[%s2499] sm:$0xf]
        %2501 = vrot.lane.b32.xlu0 %v1870, 109
        %v2502 = vpop.permute.xlu0 %2501
        %2503 = vrot.lane.b32.xlu0 %v1871, 109
        %v2504 = vpop.permute.xlu0 %2503
        %2505 = vrot.lane.b32.xlu0 %v1872, 109
        %v2506 = vpop.permute.xlu0 %2505
        %v2507 = vsel %vm999, %v2502, %v2504
        %v2508 = vsel %vm999, %v2504, %v2506
        %v2513 = vsel %vm1890, %v2500, 0
        %2515 = vmatprep.subr.mxu0 %v2508
        %2516 = vmatpush1.msra.mxu0 %v2507
        %2517 = vmatprep.subr.mxu0 0.0
        %2518 = vmatpush1.msra.mxu0 0.0
        %2519 = vmatprep.subr.mxu0 0.0
        %2520 = vmatpush1.msra.mxu0 0.0
        %2521 = vmatprep.subr.mxu0 0.0
        %2522 = vmatpush1.msra.mxu0 0.0
        %2523 = vmatprep.subr.mxu0 0.0
        %2524 = vmatpush1.msra.mxu0 0.0
        %2525 = vmatprep.subr.mxu0 0.0
        %2526 = vmatpush1.msra.mxu0 0.0
        %2527 = vmatprep.subr.mxu0 0.0
        %2528 = vmatpush1.msra.mxu0 0.0
        %2529 = vmatprep.subr.mxu0 0.0
        %2530 = vmatpush1.msra.mxu0 0.0
        %2531 = vmatprep.subr.mxu0 0.0
        %2532 = vmatpush1.msra.mxu0 0.0
        %2533 = vmatprep.subr.mxu0 0.0
        %2534 = vmatpush1.msra.mxu0 0.0
        %2535 = vmatprep.subr.mxu0 0.0
        %2536 = vmatpush1.msra.mxu0 0.0
        %2537 = vmatprep.subr.mxu0 0.0
        %2538 = vmatpush1.msra.mxu0 0.0
        %2539 = vmatprep.subr.mxu0 0.0
        %2540 = vmatpush1.msra.mxu0 0.0
        %2541 = vmatprep.subr.mxu0 0.0
        %2542 = vmatpush1.msra.mxu0 0.0
        %2543 = vmatprep.subr.mxu0 0.0
        %2544 = vmatpush1.msra.mxu0 0.0
        %2545 = vmatprep.subr.mxu0 0.0
        %2546 = vmatpush1.msra.mxu0 0.0
        %2547 = vmatprep.subr.mxu0 0.0
        %2548 = vmatpush1.msra.mxu0 0.0
        %2549 = vmatprep.subr.mxu0 0.0
        %2550 = vmatpush1.msra.mxu0 0.0
        %2551 = vmatprep.subr.mxu0 0.0
        %2552 = vmatpush1.msra.mxu0 0.0
        %2553 = vmatprep.subr.mxu0 0.0
        %2554 = vmatpush1.msra.mxu0 0.0
        %2555 = vmatprep.subr.mxu0 0.0
        %2556 = vmatpush1.msra.mxu0 0.0
        %2557 = vmatprep.subr.mxu0 0.0
        %2558 = vmatpush1.msra.mxu0 0.0
        %2559 = vmatprep.subr.mxu0 0.0
        %2560 = vmatpush1.msra.mxu0 0.0
        %2561 = vmatprep.subr.mxu0 0.0
        %2562 = vmatpush1.msra.mxu0 0.0
        %2563 = vmatprep.subr.mxu0 0.0
        %2564 = vmatpush1.msra.mxu0 0.0
        %2565 = vmatprep.subr.mxu0 0.0
        %2566 = vmatpush1.msra.mxu0 0.0
        %2567 = vmatprep.subr.mxu0 0.0
        %2568 = vmatpush1.msra.mxu0 0.0
        %2569 = vmatprep.subr.mxu0 0.0
        %2570 = vmatpush1.msra.mxu0 0.0
        %2571 = vmatprep.subr.mxu0 0.0
        %2572 = vmatpush1.msra.mxu0 0.0
        %2573 = vmatprep.subr.mxu0 0.0
        %2574 = vmatpush1.msra.mxu0 0.0
        %2575 = vmatprep.subr.mxu0 0.0
        %2576 = vmatpush1.msra.mxu0 0.0
        %2577 = vmatprep.subr.mxu0 0.0
        %2578 = vmatpush1.msra.mxu0 0.0
        %2579 = vmatprep.mubr.f32.mxu0 0.0
        %2580 = vmatmul.mubr.f32.gmra.mrb[0].mxu0 %v2513
        %v2581 = vpop.f32.mrb[0].mxu0
        %v2582 = vadd.f32 0.0, %v2581
        %v2583 = vpop.f32.mrb[0].mxu0
        %v2584 = vadd.f32 0.0, %v2583
        %2585 = vdwg.mxu0
        %2586 = vmatprep.subr.mxu0 0.0
        %2587 = vmatpush1.msra.mxu0 %v2506
        %2588 = vmatprep.subr.mxu0 0.0
        %2589 = vmatpush1.msra.mxu0 0.0
        %2590 = vmatprep.subr.mxu0 0.0
        %2591 = vmatpush1.msra.mxu0 0.0
        %2592 = vmatprep.subr.mxu0 0.0
        %2593 = vmatpush1.msra.mxu0 0.0
        %2594 = vmatprep.subr.mxu0 0.0
        %2595 = vmatpush1.msra.mxu0 0.0
        %2596 = vmatprep.subr.mxu0 0.0
        %2597 = vmatpush1.msra.mxu0 0.0
        %2598 = vmatprep.subr.mxu0 0.0
        %2599 = vmatpush1.msra.mxu0 0.0
        %2600 = vmatprep.subr.mxu0 0.0
        %2601 = vmatpush1.msra.mxu0 0.0
        %2602 = vmatprep.subr.mxu0 0.0
        %2603 = vmatpush1.msra.mxu0 0.0
        %2604 = vmatprep.subr.mxu0 0.0
        %2605 = vmatpush1.msra.mxu0 0.0
        %2606 = vmatprep.subr.mxu0 0.0
        %2607 = vmatpush1.msra.mxu0 0.0
        %2608 = vmatprep.subr.mxu0 0.0
        %2609 = vmatpush1.msra.mxu0 0.0
        %2610 = vmatprep.subr.mxu0 0.0
        %2611 = vmatpush1.msra.mxu0 0.0
        %2612 = vmatprep.subr.mxu0 0.0
        %2613 = vmatpush1.msra.mxu0 0.0
        %2614 = vmatprep.subr.mxu0 0.0
        %2615 = vmatpush1.msra.mxu0 0.0
        %2616 = vmatprep.subr.mxu0 0.0
        %2617 = vmatpush1.msra.mxu0 0.0
        %2618 = vmatprep.subr.mxu0 0.0
        %2619 = vmatpush1.msra.mxu0 0.0
        %2620 = vmatprep.subr.mxu0 0.0
        %2621 = vmatpush1.msra.mxu0 0.0
        %2622 = vmatprep.subr.mxu0 0.0
        %2623 = vmatpush1.msra.mxu0 0.0
        %2624 = vmatprep.subr.mxu0 0.0
        %2625 = vmatpush1.msra.mxu0 0.0
        %2626 = vmatprep.subr.mxu0 0.0
        %2627 = vmatpush1.msra.mxu0 0.0
        %2628 = vmatprep.subr.mxu0 0.0
        %2629 = vmatpush1.msra.mxu0 0.0
        %2630 = vmatprep.subr.mxu0 0.0
        %2631 = vmatpush1.msra.mxu0 0.0
        %2632 = vmatprep.subr.mxu0 0.0
        %2633 = vmatpush1.msra.mxu0 0.0
        %2634 = vmatprep.subr.mxu0 0.0
        %2635 = vmatpush1.msra.mxu0 0.0
        %2636 = vmatprep.subr.mxu0 0.0
        %2637 = vmatpush1.msra.mxu0 0.0
        %2638 = vmatprep.subr.mxu0 0.0
        %2639 = vmatpush1.msra.mxu0 0.0
        %2640 = vmatprep.subr.mxu0 0.0
        %2641 = vmatpush1.msra.mxu0 0.0
        %2642 = vmatprep.subr.mxu0 0.0
        %2643 = vmatpush1.msra.mxu0 0.0
        %2644 = vmatprep.subr.mxu0 0.0
        %2645 = vmatpush1.msra.mxu0 0.0
        %2646 = vmatprep.subr.mxu0 0.0
        %2647 = vmatpush1.msra.mxu0 0.0
        %2648 = vmatprep.subr.mxu0 0.0
        %2649 = vmatpush1.msra.mxu0 0.0
        %2650 = vmatprep.mubr.f32.mxu0 0.0
        %2651 = vmatmul.mubr.f32.gmra.mrb[0].mxu0 %v2513
        %v2652 = vpop.f32.mrb[0].mxu0
        %v2653 = vadd.f32 0.0, %v2652
        %v2654 = vpop.f32.mrb[0].mxu0
        %2655 = vdwg.mxu0
        %v2656 = vadd.f32 %v2496, %v2582
        %v2657 = vadd.f32 %v2497, %v2584
        %v2658 = vadd.f32 %v2498, %v2653
        %s2659 = scalar_lea.vmem %s3, 20
        %v2660 = vld [vmem:[%s2659] sm:$0xf]
        %2661 = vrot.lane.b32.xlu0 %v1870, 108
        %v2662 = vpop.permute.xlu0 %2661
        %2663 = vrot.lane.b32.xlu0 %v1871, 108
        %v2664 = vpop.permute.xlu0 %2663
        %2665 = vrot.lane.b32.xlu0 %v1872, 108
        %v2666 = vpop.permute.xlu0 %2665
        %v2667 = vsel %vm1163, %v2662, %v2664
        %v2668 = vsel %vm1163, %v2664, %v2666
        %v2673 = vsel %vm1890, %v2660, 0
        %2675 = vmatprep.subr.mxu0 %v2668
        %2676 = vmatpush1.msra.mxu0 %v2667
        %2677 = vmatprep.subr.mxu0 0.0
        %2678 = vmatpush1.msra.mxu0 0.0
        %2679 = vmatprep.subr.mxu0 0.0
        %2680 = vmatpush1.msra.mxu0 0.0
        %2681 = vmatprep.subr.mxu0 0.0
        %2682 = vmatpush1.msra.mxu0 0.0
        %2683 = vmatprep.subr.mxu0 0.0
        %2684 = vmatpush1.msra.mxu0 0.0
        %2685 = vmatprep.subr.mxu0 0.0
        %2686 = vmatpush1.msra.mxu0 0.0
        %2687 = vmatprep.subr.mxu0 0.0
        %2688 = vmatpush1.msra.mxu0 0.0
        %2689 = vmatprep.subr.mxu0 0.0
        %2690 = vmatpush1.msra.mxu0 0.0
        %2691 = vmatprep.subr.mxu0 0.0
        %2692 = vmatpush1.msra.mxu0 0.0
        %2693 = vmatprep.subr.mxu0 0.0
        %2694 = vmatpush1.msra.mxu0 0.0
        %2695 = vmatprep.subr.mxu0 0.0
        %2696 = vmatpush1.msra.mxu0 0.0
        %2697 = vmatprep.subr.mxu0 0.0
        %2698 = vmatpush1.msra.mxu0 0.0
        %2699 = vmatprep.subr.mxu0 0.0
        %2700 = vmatpush1.msra.mxu0 0.0
        %2701 = vmatprep.subr.mxu0 0.0
        %2702 = vmatpush1.msra.mxu0 0.0
        %2703 = vmatprep.subr.mxu0 0.0
        %2704 = vmatpush1.msra.mxu0 0.0
        %2705 = vmatprep.subr.mxu0 0.0
        %2706 = vmatpush1.msra.mxu0 0.0
        %2707 = vmatprep.subr.mxu0 0.0
        %2708 = vmatpush1.msra.mxu0 0.0
        %2709 = vmatprep.subr.mxu0 0.0
        %2710 = vmatpush1.msra.mxu0 0.0
        %2711 = vmatprep.subr.mxu0 0.0
        %2712 = vmatpush1.msra.mxu0 0.0
        %2713 = vmatprep.subr.mxu0 0.0
        %2714 = vmatpush1.msra.mxu0 0.0
        %2715 = vmatprep.subr.mxu0 0.0
        %2716 = vmatpush1.msra.mxu0 0.0
        %2717 = vmatprep.subr.mxu0 0.0
        %2718 = vmatpush1.msra.mxu0 0.0
        %2719 = vmatprep.subr.mxu0 0.0
        %2720 = vmatpush1.msra.mxu0 0.0
        %2721 = vmatprep.subr.mxu0 0.0
        %2722 = vmatpush1.msra.mxu0 0.0
        %2723 = vmatprep.subr.mxu0 0.0
        %2724 = vmatpush1.msra.mxu0 0.0
        %2725 = vmatprep.subr.mxu0 0.0
        %2726 = vmatpush1.msra.mxu0 0.0
        %2727 = vmatprep.subr.mxu0 0.0
        %2728 = vmatpush1.msra.mxu0 0.0
        %2729 = vmatprep.subr.mxu0 0.0
        %2730 = vmatpush1.msra.mxu0 0.0
        %2731 = vmatprep.subr.mxu0 0.0
        %2732 = vmatpush1.msra.mxu0 0.0
        %2733 = vmatprep.subr.mxu0 0.0
        %2734 = vmatpush1.msra.mxu0 0.0
        %2735 = vmatprep.subr.mxu0 0.0
        %2736 = vmatpush1.msra.mxu0 0.0
        %2737 = vmatprep.subr.mxu0 0.0
        %2738 = vmatpush1.msra.mxu0 0.0
        %2739 = vmatprep.mubr.f32.mxu0 0.0
        %2740 = vmatmul.mubr.f32.gmra.mrb[0].mxu0 %v2673
        %v2741 = vpop.f32.mrb[0].mxu0
        %v2742 = vadd.f32 0.0, %v2741
        %v2743 = vpop.f32.mrb[0].mxu0
        %v2744 = vadd.f32 0.0, %v2743
        %2745 = vdwg.mxu0
        %2746 = vmatprep.subr.mxu0 0.0
        %2747 = vmatpush1.msra.mxu0 %v2666
        %2748 = vmatprep.subr.mxu0 0.0
        %2749 = vmatpush1.msra.mxu0 0.0
        %2750 = vmatprep.subr.mxu0 0.0
        %2751 = vmatpush1.msra.mxu0 0.0
        %2752 = vmatprep.subr.mxu0 0.0
        %2753 = vmatpush1.msra.mxu0 0.0
        %2754 = vmatprep.subr.mxu0 0.0
        %2755 = vmatpush1.msra.mxu0 0.0
        %2756 = vmatprep.subr.mxu0 0.0
        %2757 = vmatpush1.msra.mxu0 0.0
        %2758 = vmatprep.subr.mxu0 0.0
        %2759 = vmatpush1.msra.mxu0 0.0
        %2760 = vmatprep.subr.mxu0 0.0
        %2761 = vmatpush1.msra.mxu0 0.0
        %2762 = vmatprep.subr.mxu0 0.0
        %2763 = vmatpush1.msra.mxu0 0.0
        %2764 = vmatprep.subr.mxu0 0.0
        %2765 = vmatpush1.msra.mxu0 0.0
        %2766 = vmatprep.subr.mxu0 0.0
        %2767 = vmatpush1.msra.mxu0 0.0
        %2768 = vmatprep.subr.mxu0 0.0
        %2769 = vmatpush1.msra.mxu0 0.0
        %2770 = vmatprep.subr.mxu0 0.0
        %2771 = vmatpush1.msra.mxu0 0.0
        %2772 = vmatprep.subr.mxu0 0.0
        %2773 = vmatpush1.msra.mxu0 0.0
        %2774 = vmatprep.subr.mxu0 0.0
        %2775 = vmatpush1.msra.mxu0 0.0
        %2776 = vmatprep.subr.mxu0 0.0
        %2777 = vmatpush1.msra.mxu0 0.0
        %2778 = vmatprep.subr.mxu0 0.0
        %2779 = vmatpush1.msra.mxu0 0.0
        %2780 = vmatprep.subr.mxu0 0.0
        %2781 = vmatpush1.msra.mxu0 0.0
        %2782 = vmatprep.subr.mxu0 0.0
        %2783 = vmatpush1.msra.mxu0 0.0
        %2784 = vmatprep.subr.mxu0 0.0
        %2785 = vmatpush1.msra.mxu0 0.0
        %2786 = vmatprep.subr.mxu0 0.0
        %2787 = vmatpush1.msra.mxu0 0.0
        %2788 = vmatprep.subr.mxu0 0.0
        %2789 = vmatpush1.msra.mxu0 0.0
        %2790 = vmatprep.subr.mxu0 0.0
        %2791 = vmatpush1.msra.mxu0 0.0
        %2792 = vmatprep.subr.mxu0 0.0
        %2793 = vmatpush1.msra.mxu0 0.0
        %2794 = vmatprep.subr.mxu0 0.0
        %2795 = vmatpush1.msra.mxu0 0.0
        %2796 = vmatprep.subr.mxu0 0.0
        %2797 = vmatpush1.msra.mxu0 0.0
        %2798 = vmatprep.subr.mxu0 0.0
        %2799 = vmatpush1.msra.mxu0 0.0
        %2800 = vmatprep.subr.mxu0 0.0
        %2801 = vmatpush1.msra.mxu0 0.0
        %2802 = vmatprep.subr.mxu0 0.0
        %2803 = vmatpush1.msra.mxu0 0.0
        %2804 = vmatprep.subr.mxu0 0.0
        %2805 = vmatpush1.msra.mxu0 0.0
        %2806 = vmatprep.subr.mxu0 0.0
        %2807 = vmatpush1.msra.mxu0 0.0
        %2808 = vmatprep.subr.mxu0 0.0
        %2809 = vmatpush1.msra.mxu0 0.0
        %2810 = vmatprep.mubr.f32.mxu0 0.0
        %2811 = vmatmul.mubr.f32.gmra.mrb[0].mxu0 %v2673
        %v2812 = vpop.f32.mrb[0].mxu0
        %v2813 = vadd.f32 0.0, %v2812
        %v2814 = vpop.f32.mrb[0].mxu0
        %2815 = vdwg.mxu0
        %v2816 = vadd.f32 %v2656, %v2742
        %v2817 = vadd.f32 %v2657, %v2744
        %v2818 = vadd.f32 %v2658, %v2813
        %s2819 = scalar_lea.vmem %s3, 24
        %v2820 = vld [vmem:[%s2819] sm:$0xf]
        %2821 = vrot.lane.b32.xlu0 %v1870, 92
        %v2822 = vpop.permute.xlu0 %2821
        %2823 = vrot.lane.b32.xlu0 %v1871, 92
        %v2824 = vpop.permute.xlu0 %2823
        %2825 = vrot.lane.b32.xlu0 %v1872, 92
        %v2826 = vpop.permute.xlu0 %2825
        %v2827 = vsel %vm1327, %v2822, %v2824
        %v2828 = vsel %vm1327, %v2824, %v2826
        %v2833 = vsel %vm1890, %v2820, 0
        %2835 = vmatprep.subr.mxu0 %v2828
        %2836 = vmatpush1.msra.mxu0 %v2827
        %2837 = vmatprep.subr.mxu0 0.0
        %2838 = vmatpush1.msra.mxu0 0.0
        %2839 = vmatprep.subr.mxu0 0.0
        %2840 = vmatpush1.msra.mxu0 0.0
        %2841 = vmatprep.subr.mxu0 0.0
        %2842 = vmatpush1.msra.mxu0 0.0
        %2843 = vmatprep.subr.mxu0 0.0
        %2844 = vmatpush1.msra.mxu0 0.0
        %2845 = vmatprep.subr.mxu0 0.0
        %2846 = vmatpush1.msra.mxu0 0.0
        %2847 = vmatprep.subr.mxu0 0.0
        %2848 = vmatpush1.msra.mxu0 0.0
        %2849 = vmatprep.subr.mxu0 0.0
        %2850 = vmatpush1.msra.mxu0 0.0
        %2851 = vmatprep.subr.mxu0 0.0
        %2852 = vmatpush1.msra.mxu0 0.0
        %2853 = vmatprep.subr.mxu0 0.0
        %2854 = vmatpush1.msra.mxu0 0.0
        %2855 = vmatprep.subr.mxu0 0.0
        %2856 = vmatpush1.msra.mxu0 0.0
        %2857 = vmatprep.subr.mxu0 0.0
        %2858 = vmatpush1.msra.mxu0 0.0
        %2859 = vmatprep.subr.mxu0 0.0
        %2860 = vmatpush1.msra.mxu0 0.0
        %2861 = vmatprep.subr.mxu0 0.0
        %2862 = vmatpush1.msra.mxu0 0.0
        %2863 = vmatprep.subr.mxu0 0.0
        %2864 = vmatpush1.msra.mxu0 0.0
        %2865 = vmatprep.subr.mxu0 0.0
        %2866 = vmatpush1.msra.mxu0 0.0
        %2867 = vmatprep.subr.mxu0 0.0
        %2868 = vmatpush1.msra.mxu0 0.0
        %2869 = vmatprep.subr.mxu0 0.0
        %2870 = vmatpush1.msra.mxu0 0.0
        %2871 = vmatprep.subr.mxu0 0.0
        %2872 = vmatpush1.msra.mxu0 0.0
        %2873 = vmatprep.subr.mxu0 0.0
        %2874 = vmatpush1.msra.mxu0 0.0
        %2875 = vmatprep.subr.mxu0 0.0
        %2876 = vmatpush1.msra.mxu0 0.0
        %2877 = vmatprep.subr.mxu0 0.0
        %2878 = vmatpush1.msra.mxu0 0.0
        %2879 = vmatprep.subr.mxu0 0.0
        %2880 = vmatpush1.msra.mxu0 0.0
        %2881 = vmatprep.subr.mxu0 0.0
        %2882 = vmatpush1.msra.mxu0 0.0
        %2883 = vmatprep.subr.mxu0 0.0
        %2884 = vmatpush1.msra.mxu0 0.0
        %2885 = vmatprep.subr.mxu0 0.0
        %2886 = vmatpush1.msra.mxu0 0.0
        %2887 = vmatprep.subr.mxu0 0.0
        %2888 = vmatpush1.msra.mxu0 0.0
        %2889 = vmatprep.subr.mxu0 0.0
        %2890 = vmatpush1.msra.mxu0 0.0
        %2891 = vmatprep.subr.mxu0 0.0
        %2892 = vmatpush1.msra.mxu0 0.0
        %2893 = vmatprep.subr.mxu0 0.0
        %2894 = vmatpush1.msra.mxu0 0.0
        %2895 = vmatprep.subr.mxu0 0.0
        %2896 = vmatpush1.msra.mxu0 0.0
        %2897 = vmatprep.subr.mxu0 0.0
        %2898 = vmatpush1.msra.mxu0 0.0
        %2899 = vmatprep.mubr.f32.mxu0 0.0
        %2900 = vmatmul.mubr.f32.gmra.mrb[0].mxu0 %v2833
        %v2901 = vpop.f32.mrb[0].mxu0
        %v2902 = vadd.f32 0.0, %v2901
        %v2903 = vpop.f32.mrb[0].mxu0
        %v2904 = vadd.f32 0.0, %v2903
        %2905 = vdwg.mxu0
        %2906 = vmatprep.subr.mxu0 0.0
        %2907 = vmatpush1.msra.mxu0 %v2826
        %2908 = vmatprep.subr.mxu0 0.0
        %2909 = vmatpush1.msra.mxu0 0.0
        %2910 = vmatprep.subr.mxu0 0.0
        %2911 = vmatpush1.msra.mxu0 0.0
        %2912 = vmatprep.subr.mxu0 0.0
        %2913 = vmatpush1.msra.mxu0 0.0
        %2914 = vmatprep.subr.mxu0 0.0
        %2915 = vmatpush1.msra.mxu0 0.0
        %2916 = vmatprep.subr.mxu0 0.0
        %2917 = vmatpush1.msra.mxu0 0.0
        %2918 = vmatprep.subr.mxu0 0.0
        %2919 = vmatpush1.msra.mxu0 0.0
        %2920 = vmatprep.subr.mxu0 0.0
        %2921 = vmatpush1.msra.mxu0 0.0
        %2922 = vmatprep.subr.mxu0 0.0
        %2923 = vmatpush1.msra.mxu0 0.0
        %2924 = vmatprep.subr.mxu0 0.0
        %2925 = vmatpush1.msra.mxu0 0.0
        %2926 = vmatprep.subr.mxu0 0.0
        %2927 = vmatpush1.msra.mxu0 0.0
        %2928 = vmatprep.subr.mxu0 0.0
        %2929 = vmatpush1.msra.mxu0 0.0
        %2930 = vmatprep.subr.mxu0 0.0
        %2931 = vmatpush1.msra.mxu0 0.0
        %2932 = vmatprep.subr.mxu0 0.0
        %2933 = vmatpush1.msra.mxu0 0.0
        %2934 = vmatprep.subr.mxu0 0.0
        %2935 = vmatpush1.msra.mxu0 0.0
        %2936 = vmatprep.subr.mxu0 0.0
        %2937 = vmatpush1.msra.mxu0 0.0
        %2938 = vmatprep.subr.mxu0 0.0
        %2939 = vmatpush1.msra.mxu0 0.0
        %2940 = vmatprep.subr.mxu0 0.0
        %2941 = vmatpush1.msra.mxu0 0.0
        %2942 = vmatprep.subr.mxu0 0.0
        %2943 = vmatpush1.msra.mxu0 0.0
        %2944 = vmatprep.subr.mxu0 0.0
        %2945 = vmatpush1.msra.mxu0 0.0
        %2946 = vmatprep.subr.mxu0 0.0
        %2947 = vmatpush1.msra.mxu0 0.0
        %2948 = vmatprep.subr.mxu0 0.0
        %2949 = vmatpush1.msra.mxu0 0.0
        %2950 = vmatprep.subr.mxu0 0.0
        %2951 = vmatpush1.msra.mxu0 0.0
        %2952 = vmatprep.subr.mxu0 0.0
        %2953 = vmatpush1.msra.mxu0 0.0
        %2954 = vmatprep.subr.mxu0 0.0
        %2955 = vmatpush1.msra.mxu0 0.0
        %2956 = vmatprep.subr.mxu0 0.0
        %2957 = vmatpush1.msra.mxu0 0.0
        %2958 = vmatprep.subr.mxu0 0.0
        %2959 = vmatpush1.msra.mxu0 0.0
        %2960 = vmatprep.subr.mxu0 0.0
        %2961 = vmatpush1.msra.mxu0 0.0
        %2962 = vmatprep.subr.mxu0 0.0
        %2963 = vmatpush1.msra.mxu0 0.0
        %2964 = vmatprep.subr.mxu0 0.0
        %2965 = vmatpush1.msra.mxu0 0.0
        %2966 = vmatprep.subr.mxu0 0.0
        %2967 = vmatpush1.msra.mxu0 0.0
        %2968 = vmatprep.subr.mxu0 0.0
        %2969 = vmatpush1.msra.mxu0 0.0
        %2970 = vmatprep.mubr.f32.mxu0 0.0
        %2971 = vmatmul.mubr.f32.gmra.mrb[0].mxu0 %v2833
        %v2972 = vpop.f32.mrb[0].mxu0
        %v2973 = vadd.f32 0.0, %v2972
        %v2974 = vpop.f32.mrb[0].mxu0
        %2975 = vdwg.mxu0
        %v2976 = vadd.f32 %v2816, %v2902
        %v2977 = vadd.f32 %v2817, %v2904
        %v2978 = vadd.f32 %v2818, %v2973
        %s2979 = scalar_lea.vmem %s3, 28
        %v2980 = vld [vmem:[%s2979] sm:$0xf]
        %2981 = vrot.lane.b32.xlu0 %v1870, 91
        %v2982 = vpop.permute.xlu0 %2981
        %2983 = vrot.lane.b32.xlu0 %v1871, 91
        %v2984 = vpop.permute.xlu0 %2983
        %2985 = vrot.lane.b32.xlu0 %v1872, 91
        %v2986 = vpop.permute.xlu0 %2985
        %v2987 = vsel %vm1491, %v2982, %v2984
        %v2988 = vsel %vm1491, %v2984, %v2986
        %v2993 = vsel %vm1890, %v2980, 0
        %2995 = vmatprep.subr.mxu0 %v2988
        %2996 = vmatpush1.msra.mxu0 %v2987
        %2997 = vmatprep.subr.mxu0 0.0
        %2998 = vmatpush1.msra.mxu0 0.0
        %2999 = vmatprep.subr.mxu0 0.0
        %3000 = vmatpush1.msra.mxu0 0.0
        %3001 = vmatprep.subr.mxu0 0.0
        %3002 = vmatpush1.msra.mxu0 0.0
        %3003 = vmatprep.subr.mxu0 0.0
        %3004 = vmatpush1.msra.mxu0 0.0
        %3005 = vmatprep.subr.mxu0 0.0
        %3006 = vmatpush1.msra.mxu0 0.0
        %3007 = vmatprep.subr.mxu0 0.0
        %3008 = vmatpush1.msra.mxu0 0.0
        %3009 = vmatprep.subr.mxu0 0.0
        %3010 = vmatpush1.msra.mxu0 0.0
        %3011 = vmatprep.subr.mxu0 0.0
        %3012 = vmatpush1.msra.mxu0 0.0
        %3013 = vmatprep.subr.mxu0 0.0
        %3014 = vmatpush1.msra.mxu0 0.0
        %3015 = vmatprep.subr.mxu0 0.0
        %3016 = vmatpush1.msra.mxu0 0.0
        %3017 = vmatprep.subr.mxu0 0.0
        %3018 = vmatpush1.msra.mxu0 0.0
        %3019 = vmatprep.subr.mxu0 0.0
        %3020 = vmatpush1.msra.mxu0 0.0
        %3021 = vmatprep.subr.mxu0 0.0
        %3022 = vmatpush1.msra.mxu0 0.0
        %3023 = vmatprep.subr.mxu0 0.0
        %3024 = vmatpush1.msra.mxu0 0.0
        %3025 = vmatprep.subr.mxu0 0.0
        %3026 = vmatpush1.msra.mxu0 0.0
        %3027 = vmatprep.subr.mxu0 0.0
        %3028 = vmatpush1.msra.mxu0 0.0
        %3029 = vmatprep.subr.mxu0 0.0
        %3030 = vmatpush1.msra.mxu0 0.0
        %3031 = vmatprep.subr.mxu0 0.0
        %3032 = vmatpush1.msra.mxu0 0.0
        %3033 = vmatprep.subr.mxu0 0.0
        %3034 = vmatpush1.msra.mxu0 0.0
        %3035 = vmatprep.subr.mxu0 0.0
        %3036 = vmatpush1.msra.mxu0 0.0
        %3037 = vmatprep.subr.mxu0 0.0
        %3038 = vmatpush1.msra.mxu0 0.0
        %3039 = vmatprep.subr.mxu0 0.0
        %3040 = vmatpush1.msra.mxu0 0.0
        %3041 = vmatprep.subr.mxu0 0.0
        %3042 = vmatpush1.msra.mxu0 0.0
        %3043 = vmatprep.subr.mxu0 0.0
        %3044 = vmatpush1.msra.mxu0 0.0
        %3045 = vmatprep.subr.mxu0 0.0
        %3046 = vmatpush1.msra.mxu0 0.0
        %3047 = vmatprep.subr.mxu0 0.0
        %3048 = vmatpush1.msra.mxu0 0.0
        %3049 = vmatprep.subr.mxu0 0.0
        %3050 = vmatpush1.msra.mxu0 0.0
        %3051 = vmatprep.subr.mxu0 0.0
        %3052 = vmatpush1.msra.mxu0 0.0
        %3053 = vmatprep.subr.mxu0 0.0
        %3054 = vmatpush1.msra.mxu0 0.0
        %3055 = vmatprep.subr.mxu0 0.0
        %3056 = vmatpush1.msra.mxu0 0.0
        %3057 = vmatprep.subr.mxu0 0.0
        %3058 = vmatpush1.msra.mxu0 0.0
        %3059 = vmatprep.mubr.f32.mxu0 0.0
        %3060 = vmatmul.mubr.f32.gmra.mrb[0].mxu0 %v2993
        %v3061 = vpop.f32.mrb[0].mxu0
        %v3062 = vadd.f32 0.0, %v3061
        %v3063 = vpop.f32.mrb[0].mxu0
        %v3064 = vadd.f32 0.0, %v3063
        %3065 = vdwg.mxu0
        %3066 = vmatprep.subr.mxu0 0.0
        %3067 = vmatpush1.msra.mxu0 %v2986
        %3068 = vmatprep.subr.mxu0 0.0
        %3069 = vmatpush1.msra.mxu0 0.0
        %3070 = vmatprep.subr.mxu0 0.0
        %3071 = vmatpush1.msra.mxu0 0.0
        %3072 = vmatprep.subr.mxu0 0.0
        %3073 = vmatpush1.msra.mxu0 0.0
        %3074 = vmatprep.subr.mxu0 0.0
        %3075 = vmatpush1.msra.mxu0 0.0
        %3076 = vmatprep.subr.mxu0 0.0
        %3077 = vmatpush1.msra.mxu0 0.0
        %3078 = vmatprep.subr.mxu0 0.0
        %3079 = vmatpush1.msra.mxu0 0.0
        %3080 = vmatprep.subr.mxu0 0.0
        %3081 = vmatpush1.msra.mxu0 0.0
        %3082 = vmatprep.subr.mxu0 0.0
        %3083 = vmatpush1.msra.mxu0 0.0
        %3084 = vmatprep.subr.mxu0 0.0
        %3085 = vmatpush1.msra.mxu0 0.0
        %3086 = vmatprep.subr.mxu0 0.0
        %3087 = vmatpush1.msra.mxu0 0.0
        %3088 = vmatprep.subr.mxu0 0.0
        %3089 = vmatpush1.msra.mxu0 0.0
        %3090 = vmatprep.subr.mxu0 0.0
        %3091 = vmatpush1.msra.mxu0 0.0
        %3092 = vmatprep.subr.mxu0 0.0
        %3093 = vmatpush1.msra.mxu0 0.0
        %3094 = vmatprep.subr.mxu0 0.0
        %3095 = vmatpush1.msra.mxu0 0.0
        %3096 = vmatprep.subr.mxu0 0.0
        %3097 = vmatpush1.msra.mxu0 0.0
        %3098 = vmatprep.subr.mxu0 0.0
        %3099 = vmatpush1.msra.mxu0 0.0
        %3100 = vmatprep.subr.mxu0 0.0
        %3101 = vmatpush1.msra.mxu0 0.0
        %3102 = vmatprep.subr.mxu0 0.0
        %3103 = vmatpush1.msra.mxu0 0.0
        %3104 = vmatprep.subr.mxu0 0.0
        %3105 = vmatpush1.msra.mxu0 0.0
        %3106 = vmatprep.subr.mxu0 0.0
        %3107 = vmatpush1.msra.mxu0 0.0
        %3108 = vmatprep.subr.mxu0 0.0
        %3109 = vmatpush1.msra.mxu0 0.0
        %3110 = vmatprep.subr.mxu0 0.0
        %3111 = vmatpush1.msra.mxu0 0.0
        %3112 = vmatprep.subr.mxu0 0.0
        %3113 = vmatpush1.msra.mxu0 0.0
        %3114 = vmatprep.subr.mxu0 0.0
        %3115 = vmatpush1.msra.mxu0 0.0
        %3116 = vmatprep.subr.mxu0 0.0
        %3117 = vmatpush1.msra.mxu0 0.0
        %3118 = vmatprep.subr.mxu0 0.0
        %3119 = vmatpush1.msra.mxu0 0.0
        %3120 = vmatprep.subr.mxu0 0.0
        %3121 = vmatpush1.msra.mxu0 0.0
        %3122 = vmatprep.subr.mxu0 0.0
        %3123 = vmatpush1.msra.mxu0 0.0
        %3124 = vmatprep.subr.mxu0 0.0
        %3125 = vmatpush1.msra.mxu0 0.0
        %3126 = vmatprep.subr.mxu0 0.0
        %3127 = vmatpush1.msra.mxu0 0.0
        %3128 = vmatprep.subr.mxu0 0.0
        %3129 = vmatpush1.msra.mxu0 0.0
        %3130 = vmatprep.mubr.f32.mxu0 0.0
        %3131 = vmatmul.mubr.f32.gmra.mrb[0].mxu0 %v2993
        %v3132 = vpop.f32.mrb[0].mxu0
        %v3133 = vadd.f32 0.0, %v3132
        %v3134 = vpop.f32.mrb[0].mxu0
        %3135 = vdwg.mxu0
        %v3136 = vadd.f32 %v2976, %v3062
        %v3137 = vadd.f32 %v2977, %v3064
        %v3138 = vadd.f32 %v2978, %v3133
        %s3139 = scalar_lea.vmem %s3, 32
        %v3140 = vld [vmem:[%s3139] sm:$0xf]
        %3141 = vrot.lane.b32.xlu0 %v1870, 90
        %v3142 = vpop.permute.xlu0 %3141
        %3143 = vrot.lane.b32.xlu0 %v1871, 90
        %v3144 = vpop.permute.xlu0 %3143
        %3145 = vrot.lane.b32.xlu0 %v1872, 90
        %v3146 = vpop.permute.xlu0 %3145
        %v3147 = vsel %vm1655, %v3142, %v3144
        %v3148 = vsel %vm1655, %v3144, %v3146
        %v3153 = vsel %vm1890, %v3140, 0
        %3155 = vmatprep.subr.mxu0 %v3148
        %3156 = vmatpush1.msra.mxu0 %v3147
        %3157 = vmatprep.subr.mxu0 0.0
        %3158 = vmatpush1.msra.mxu0 0.0
        %3159 = vmatprep.subr.mxu0 0.0
        %3160 = vmatpush1.msra.mxu0 0.0
        %3161 = vmatprep.subr.mxu0 0.0
        %3162 = vmatpush1.msra.mxu0 0.0
        %3163 = vmatprep.subr.mxu0 0.0
        %3164 = vmatpush1.msra.mxu0 0.0
        %3165 = vmatprep.subr.mxu0 0.0
        %3166 = vmatpush1.msra.mxu0 0.0
        %3167 = vmatprep.subr.mxu0 0.0
        %3168 = vmatpush1.msra.mxu0 0.0
        %3169 = vmatprep.subr.mxu0 0.0
        %3170 = vmatpush1.msra.mxu0 0.0
        %3171 = vmatprep.subr.mxu0 0.0
        %3172 = vmatpush1.msra.mxu0 0.0
        %3173 = vmatprep.subr.mxu0 0.0
        %3174 = vmatpush1.msra.mxu0 0.0
        %3175 = vmatprep.subr.mxu0 0.0
        %3176 = vmatpush1.msra.mxu0 0.0
        %3177 = vmatprep.subr.mxu0 0.0
        %3178 = vmatpush1.msra.mxu0 0.0
        %3179 = vmatprep.subr.mxu0 0.0
        %3180 = vmatpush1.msra.mxu0 0.0
        %3181 = vmatprep.subr.mxu0 0.0
        %3182 = vmatpush1.msra.mxu0 0.0
        %3183 = vmatprep.subr.mxu0 0.0
        %3184 = vmatpush1.msra.mxu0 0.0
        %3185 = vmatprep.subr.mxu0 0.0
        %3186 = vmatpush1.msra.mxu0 0.0
        %3187 = vmatprep.subr.mxu0 0.0
        %3188 = vmatpush1.msra.mxu0 0.0
        %3189 = vmatprep.subr.mxu0 0.0
        %3190 = vmatpush1.msra.mxu0 0.0
        %3191 = vmatprep.subr.mxu0 0.0
        %3192 = vmatpush1.msra.mxu0 0.0
        %3193 = vmatprep.subr.mxu0 0.0
        %3194 = vmatpush1.msra.mxu0 0.0
        %3195 = vmatprep.subr.mxu0 0.0
        %3196 = vmatpush1.msra.mxu0 0.0
        %3197 = vmatprep.subr.mxu0 0.0
        %3198 = vmatpush1.msra.mxu0 0.0
        %3199 = vmatprep.subr.mxu0 0.0
        %3200 = vmatpush1.msra.mxu0 0.0
        %3201 = vmatprep.subr.mxu0 0.0
        %3202 = vmatpush1.msra.mxu0 0.0
        %3203 = vmatprep.subr.mxu0 0.0
        %3204 = vmatpush1.msra.mxu0 0.0
        %3205 = vmatprep.subr.mxu0 0.0
        %3206 = vmatpush1.msra.mxu0 0.0
        %3207 = vmatprep.subr.mxu0 0.0
        %3208 = vmatpush1.msra.mxu0 0.0
        %3209 = vmatprep.subr.mxu0 0.0
        %3210 = vmatpush1.msra.mxu0 0.0
        %3211 = vmatprep.subr.mxu0 0.0
        %3212 = vmatpush1.msra.mxu0 0.0
        %3213 = vmatprep.subr.mxu0 0.0
        %3214 = vmatpush1.msra.mxu0 0.0
        %3215 = vmatprep.subr.mxu0 0.0
        %3216 = vmatpush1.msra.mxu0 0.0
        %3217 = vmatprep.subr.mxu0 0.0
        %3218 = vmatpush1.msra.mxu0 0.0
        %3219 = vmatprep.mubr.f32.mxu0 0.0
        %3220 = vmatmul.mubr.f32.gmra.mrb[0].mxu0 %v3153
        %v3221 = vpop.f32.mrb[0].mxu0
        %v3222 = vadd.f32 0.0, %v3221
        %v3223 = vpop.f32.mrb[0].mxu0
        %v3224 = vadd.f32 0.0, %v3223
        %3225 = vdwg.mxu0
        %3226 = vmatprep.subr.mxu0 0.0
        %3227 = vmatpush1.msra.mxu0 %v3146
        %3228 = vmatprep.subr.mxu0 0.0
        %3229 = vmatpush1.msra.mxu0 0.0
        %3230 = vmatprep.subr.mxu0 0.0
        %3231 = vmatpush1.msra.mxu0 0.0
        %3232 = vmatprep.subr.mxu0 0.0
        %3233 = vmatpush1.msra.mxu0 0.0
        %3234 = vmatprep.subr.mxu0 0.0
        %3235 = vmatpush1.msra.mxu0 0.0
        %3236 = vmatprep.subr.mxu0 0.0
        %3237 = vmatpush1.msra.mxu0 0.0
        %3238 = vmatprep.subr.mxu0 0.0
        %3239 = vmatpush1.msra.mxu0 0.0
        %3240 = vmatprep.subr.mxu0 0.0
        %3241 = vmatpush1.msra.mxu0 0.0
        %3242 = vmatprep.subr.mxu0 0.0
        %3243 = vmatpush1.msra.mxu0 0.0
        %3244 = vmatprep.subr.mxu0 0.0
        %3245 = vmatpush1.msra.mxu0 0.0
        %3246 = vmatprep.subr.mxu0 0.0
        %3247 = vmatpush1.msra.mxu0 0.0
        %3248 = vmatprep.subr.mxu0 0.0
        %3249 = vmatpush1.msra.mxu0 0.0
        %3250 = vmatprep.subr.mxu0 0.0
        %3251 = vmatpush1.msra.mxu0 0.0
        %3252 = vmatprep.subr.mxu0 0.0
        %3253 = vmatpush1.msra.mxu0 0.0
        %3254 = vmatprep.subr.mxu0 0.0
        %3255 = vmatpush1.msra.mxu0 0.0
        %3256 = vmatprep.subr.mxu0 0.0
        %3257 = vmatpush1.msra.mxu0 0.0
        %3258 = vmatprep.subr.mxu0 0.0
        %3259 = vmatpush1.msra.mxu0 0.0
        %3260 = vmatprep.subr.mxu0 0.0
        %3261 = vmatpush1.msra.mxu0 0.0
        %3262 = vmatprep.subr.mxu0 0.0
        %3263 = vmatpush1.msra.mxu0 0.0
        %3264 = vmatprep.subr.mxu0 0.0
        %3265 = vmatpush1.msra.mxu0 0.0
        %3266 = vmatprep.subr.mxu0 0.0
        %3267 = vmatpush1.msra.mxu0 0.0
        %3268 = vmatprep.subr.mxu0 0.0
        %3269 = vmatpush1.msra.mxu0 0.0
        %3270 = vmatprep.subr.mxu0 0.0
        %3271 = vmatpush1.msra.mxu0 0.0
        %3272 = vmatprep.subr.mxu0 0.0
        %3273 = vmatpush1.msra.mxu0 0.0
        %3274 = vmatprep.subr.mxu0 0.0
        %3275 = vmatpush1.msra.mxu0 0.0
        %3276 = vmatprep.subr.mxu0 0.0
        %3277 = vmatpush1.msra.mxu0 0.0
        %3278 = vmatprep.subr.mxu0 0.0
        %3279 = vmatpush1.msra.mxu0 0.0
        %3280 = vmatprep.subr.mxu0 0.0
        %3281 = vmatpush1.msra.mxu0 0.0
        %3282 = vmatprep.subr.mxu0 0.0
        %3283 = vmatpush1.msra.mxu0 0.0
        %3284 = vmatprep.subr.mxu0 0.0
        %3285 = vmatpush1.msra.mxu0 0.0
        %3286 = vmatprep.subr.mxu0 0.0
        %3287 = vmatpush1.msra.mxu0 0.0
        %3288 = vmatprep.subr.mxu0 0.0
        %3289 = vmatpush1.msra.mxu0 0.0
        %3290 = vmatprep.mubr.f32.mxu0 0.0
        %3291 = vmatmul.mubr.f32.gmra.mrb[0].mxu0 %v3153
        %v3292 = vpop.f32.mrb[0].mxu0
        %v3293 = vadd.f32 0.0, %v3292
        %v3294 = vpop.f32.mrb[0].mxu0
        %3295 = vdwg.mxu0
        %v3296 = vadd.f32 %v3136, %v3222
        %v3297 = vadd.f32 %v3137, %v3224
        %v3298 = vadd.f32 %v3138, %v3293
        %s3299 = scalar_lea.vmem %s7, 4
        %v3300 = vld [vmem:[%s3299] sm:$0xf]
        %3302 = vset.pattern.permute.xlu0 0
        %3303 = vperm.xlu0 %3302, %v3300
        %v3304 = vpop.permute.xlu0 %3303
        %v3306 = vadd.f32 %v3296, %v3304
        %v3307 = vadd.f32 %v3297, %v3304
        %v3308 = vadd.f32 %v3298, %v3304
        %vm3309 = vcmp.gt.f32.partialorder %v3306, 0.0
        %vm3310 = vcmp.gt.f32.partialorder %v3307, 0.0
        %vm3311 = vcmp.gt.f32.partialorder %v3308, 0.0
        %v3312 = vmul.f32 %v3306, 0.01
        %v3313 = vmul.f32 %v3307, 0.01
        %v3314 = vmul.f32 %v3308, 0.01
        %v3315 = vsel %vm3309, %v3306, %v3312
        %v3316 = vsel %vm3310, %v3307, %v3313
        %v3317 = vsel %vm3311, %v3308, %v3314
        %v3318 = vsel %vm1842, %v3315, 0.0
        %v3319 = vsel %vm1843, %v3316, 0.0
        %v3320 = vsel %vm1844, %v3317, 0.0
        %3324 = vrot.lane.b32.xlu0 %v3318, 19
        %v3325 = vpop.permute.xlu0 %3324
        %3326 = vrot.lane.b32.xlu0 %v3319, 19
        %v3327 = vpop.permute.xlu0 %3326
        %3328 = vrot.lane.b32.xlu0 %v3320, 19
        %v3329 = vpop.permute.xlu0 %3328
        %v3330 = vsel %vm322, %v3325, %v3327
        %v3331 = vsel %vm322, %v3327, %v3329
        %vm3335 = vcmask 1043608
        %3336 = vst.msk [vmem:[#allocation2 + $0x18] sm:$0xf] %vm3335, %v3325
        %3337 = vst [vmem:[#allocation2 + $0x20] sm:$0xf] %v3330
        %vm3338 = vcmask 412672
        %3339 = vst.msk [vmem:[#allocation2 + $0x28] sm:$0xf] %vm3338, %v3331
        %v3340 = vld [vmem:[#allocation2] sm:$0xff]
        %v3341 = vld [vmem:[#allocation2 + $0x8] sm:$0xff]
        %v3342 = vld [vmem:[#allocation2 + $0x10] sm:$0xff]
        %v3343 = vld [vmem:[#allocation2 + $0x18] sm:$0xf]
        %v3344 = vld [vmem:[#allocation2 + $0x20] sm:$0xf]
        %v3345 = vld [vmem:[#allocation2 + $0x28] sm:$0xf]
        %v3346 = vld [vmem:[%s4] sm:$0xf]
        %s3347 = scalar_lea.vmem %s4, 4
        %v3348 = vld [vmem:[%s3347] sm:$0xf]
        %3355 = vrot.lane.b32.xlu0 %v3340, 127
        %v3356 = vpop.permute.xlu0 %3355
        %3357 = vrot.lane.b32.xlu0 %v3341, 127
        %v3358 = vpop.permute.xlu0 %3357
        %3359 = vrot.lane.b32.xlu0 %v3342, 127
        %v3360 = vpop.permute.xlu0 %3359
        %3361 = vrot.lane.b32.xlu0 %v3343, 127
        %v3362 = vpop.permute.xlu0 %3361
        %3363 = vrot.lane.b32.xlu0 %v3344, 127
        %v3364 = vpop.permute.xlu0 %3363
        %3365 = vrot.lane.b32.xlu0 %v3345, 127
        %v3366 = vpop.permute.xlu0 %3365
        %v3367 = vsel %vm358, %v3356, %v3358
        %v3368 = vsel %vm358, %v3358, %v3360
        %v3369 = vsel %vm358, %v3362, %v3364
        %v3370 = vsel %vm358, %v3364, %v3366
        %vm3374 = vcmask 97280
        %v3376 = vsel %vm3374, %v3348, 0
        %v3378 = vsel %vm365, %v3369, 0
        %v3380 = vsel %vm365, %v3370, 0
        %v3382 = vsel %vm365, %v3366, 0
        %3384 = vmatprep.subr.mxu0 %v3368
        %3385 = vmatpush1.msra.mxu0 %v3367
        %3386 = vmatprep.subr.mxu0 %v3380
        %3387 = vmatpush1.msra.mxu0 %v3378
        %3388 = vmatprep.subr.mxu0 0.0
        %3389 = vmatpush1.msra.mxu0 0.0
        %3390 = vmatprep.subr.mxu0 0.0
        %3391 = vmatpush1.msra.mxu0 0.0
        %3392 = vmatprep.subr.mxu0 0.0
        %3393 = vmatpush1.msra.mxu0 0.0
        %3394 = vmatprep.subr.mxu0 0.0
        %3395 = vmatpush1.msra.mxu0 0.0
        %3396 = vmatprep.subr.mxu0 0.0
        %3397 = vmatpush1.msra.mxu0 0.0
        %3398 = vmatprep.subr.mxu0 0.0
        %3399 = vmatpush1.msra.mxu0 0.0
        %3400 = vmatprep.subr.mxu0 0.0
        %3401 = vmatpush1.msra.mxu0 0.0
        %3402 = vmatprep.subr.mxu0 0.0
        %3403 = vmatpush1.msra.mxu0 0.0
        %3404 = vmatprep.subr.mxu0 0.0
        %3405 = vmatpush1.msra.mxu0 0.0
        %3406 = vmatprep.subr.mxu0 0.0
        %3407 = vmatpush1.msra.mxu0 0.0
        %3408 = vmatprep.subr.mxu0 0.0
        %3409 = vmatpush1.msra.mxu0 0.0
        %3410 = vmatprep.subr.mxu0 0.0
        %3411 = vmatpush1.msra.mxu0 0.0
        %3412 = vmatprep.subr.mxu0 0.0
        %3413 = vmatpush1.msra.mxu0 0.0
        %3414 = vmatprep.subr.mxu0 0.0
        %3415 = vmatpush1.msra.mxu0 0.0
        %3416 = vmatprep.subr.mxu0 0.0
        %3417 = vmatpush1.msra.mxu0 0.0
        %3418 = vmatprep.subr.mxu0 0.0
        %3419 = vmatpush1.msra.mxu0 0.0
        %3420 = vmatprep.subr.mxu0 0.0
        %3421 = vmatpush1.msra.mxu0 0.0
        %3422 = vmatprep.subr.mxu0 0.0
        %3423 = vmatpush1.msra.mxu0 0.0
        %3424 = vmatprep.subr.mxu0 0.0
        %3425 = vmatpush1.msra.mxu0 0.0
        %3426 = vmatprep.subr.mxu0 0.0
        %3427 = vmatpush1.msra.mxu0 0.0
        %3428 = vmatprep.subr.mxu0 0.0
        %3429 = vmatpush1.msra.mxu0 0.0
        %3430 = vmatprep.subr.mxu0 0.0
        %3431 = vmatpush1.msra.mxu0 0.0
        %3432 = vmatprep.subr.mxu0 0.0
        %3433 = vmatpush1.msra.mxu0 0.0
        %3434 = vmatprep.subr.mxu0 0.0
        %3435 = vmatpush1.msra.mxu0 0.0
        %3436 = vmatprep.subr.mxu0 0.0
        %3437 = vmatpush1.msra.mxu0 0.0
        %3438 = vmatprep.subr.mxu0 0.0
        %3439 = vmatpush1.msra.mxu0 0.0
        %3440 = vmatprep.subr.mxu0 0.0
        %3441 = vmatpush1.msra.mxu0 0.0
        %3442 = vmatprep.subr.mxu0 0.0
        %3443 = vmatpush1.msra.mxu0 0.0
        %3444 = vmatprep.subr.mxu0 0.0
        %3445 = vmatpush1.msra.mxu0 0.0
        %3446 = vmatprep.subr.mxu0 0.0
        %3447 = vmatpush1.msra.mxu0 0.0
        %3448 = vmatprep.mubr.f32.mxu0 0.0
        %3449 = vmatmul.mubr.f32.gmra.mrb[0].mxu0 %v3376
        %v3450 = vpop.f32.mrb[0].mxu0
        %v3451 = vadd.f32 0.0, %v3450
        %v3452 = vpop.f32.mrb[0].mxu0
        %v3453 = vadd.f32 0.0, %v3452
        %3454 = vdwg.mxu0
        %3455 = vmatprep.subr.mxu0 0.0
        %3456 = vmatpush1.msra.mxu0 %v3360
        %3457 = vmatprep.subr.mxu0 0.0
        %3458 = vmatpush1.msra.mxu0 %v3382
        %3459 = vmatprep.subr.mxu0 0.0
        %3460 = vmatpush1.msra.mxu0 0.0
        %3461 = vmatprep.subr.mxu0 0.0
        %3462 = vmatpush1.msra.mxu0 0.0
        %3463 = vmatprep.subr.mxu0 0.0
        %3464 = vmatpush1.msra.mxu0 0.0
        %3465 = vmatprep.subr.mxu0 0.0
        %3466 = vmatpush1.msra.mxu0 0.0
        %3467 = vmatprep.subr.mxu0 0.0
        %3468 = vmatpush1.msra.mxu0 0.0
        %3469 = vmatprep.subr.mxu0 0.0
        %3470 = vmatpush1.msra.mxu0 0.0
        %3471 = vmatprep.subr.mxu0 0.0
        %3472 = vmatpush1.msra.mxu0 0.0
        %3473 = vmatprep.subr.mxu0 0.0
        %3474 = vmatpush1.msra.mxu0 0.0
        %3475 = vmatprep.subr.mxu0 0.0
        %3476 = vmatpush1.msra.mxu0 0.0
        %3477 = vmatprep.subr.mxu0 0.0
        %3478 = vmatpush1.msra.mxu0 0.0
        %3479 = vmatprep.subr.mxu0 0.0
        %3480 = vmatpush1.msra.mxu0 0.0
        %3481 = vmatprep.subr.mxu0 0.0
        %3482 = vmatpush1.msra.mxu0 0.0
        %3483 = vmatprep.subr.mxu0 0.0
        %3484 = vmatpush1.msra.mxu0 0.0
        %3485 = vmatprep.subr.mxu0 0.0
        %3486 = vmatpush1.msra.mxu0 0.0
        %3487 = vmatprep.subr.mxu0 0.0
        %3488 = vmatpush1.msra.mxu0 0.0
        %3489 = vmatprep.subr.mxu0 0.0
        %3490 = vmatpush1.msra.mxu0 0.0
        %3491 = vmatprep.subr.mxu0 0.0
        %3492 = vmatpush1.msra.mxu0 0.0
        %3493 = vmatprep.subr.mxu0 0.0
        %3494 = vmatpush1.msra.mxu0 0.0
        %3495 = vmatprep.subr.mxu0 0.0
        %3496 = vmatpush1.msra.mxu0 0.0
        %3497 = vmatprep.subr.mxu0 0.0
        %3498 = vmatpush1.msra.mxu0 0.0
        %3499 = vmatprep.subr.mxu0 0.0
        %3500 = vmatpush1.msra.mxu0 0.0
        %3501 = vmatprep.subr.mxu0 0.0
        %3502 = vmatpush1.msra.mxu0 0.0
        %3503 = vmatprep.subr.mxu0 0.0
        %3504 = vmatpush1.msra.mxu0 0.0
        %3505 = vmatprep.subr.mxu0 0.0
        %3506 = vmatpush1.msra.mxu0 0.0
        %3507 = vmatprep.subr.mxu0 0.0
        %3508 = vmatpush1.msra.mxu0 0.0
        %3509 = vmatprep.subr.mxu0 0.0
        %3510 = vmatpush1.msra.mxu0 0.0
        %3511 = vmatprep.subr.mxu0 0.0
        %3512 = vmatpush1.msra.mxu0 0.0
        %3513 = vmatprep.subr.mxu0 0.0
        %3514 = vmatpush1.msra.mxu0 0.0
        %3515 = vmatprep.subr.mxu0 0.0
        %3516 = vmatpush1.msra.mxu0 0.0
        %3517 = vmatprep.subr.mxu0 0.0
        %3518 = vmatpush1.msra.mxu0 0.0
        %3519 = vmatprep.mubr.f32.mxu0 0.0
        %3520 = vmatmul.mubr.f32.gmra.mrb[0].mxu0 %v3376
        %v3521 = vpop.f32.mrb[0].mxu0
        %v3522 = vadd.f32 0.0, %v3521
        %v3523 = vpop.f32.mrb[0].mxu0
        %3524 = vdwg.mxu0
        %v3526 = vsel %vm3374, %v3346, 0
        %v3528 = vsel %vm365, %v3343, 0
        %v3530 = vsel %vm365, %v3344, 0
        %v3532 = vsel %vm365, %v3345, 0
        %3534 = vmatprep.subr.mxu0 %v3341
        %3535 = vmatpush1.msra.mxu0 %v3340
        %3536 = vmatprep.subr.mxu0 %v3530
        %3537 = vmatpush1.msra.mxu0 %v3528
        %3538 = vmatprep.subr.mxu0 0.0
        %3539 = vmatpush1.msra.mxu0 0.0
        %3540 = vmatprep.subr.mxu0 0.0
        %3541 = vmatpush1.msra.mxu0 0.0
        %3542 = vmatprep.subr.mxu0 0.0
        %3543 = vmatpush1.msra.mxu0 0.0
        %3544 = vmatprep.subr.mxu0 0.0
        %3545 = vmatpush1.msra.mxu0 0.0
        %3546 = vmatprep.subr.mxu0 0.0
        %3547 = vmatpush1.msra.mxu0 0.0
        %3548 = vmatprep.subr.mxu0 0.0
        %3549 = vmatpush1.msra.mxu0 0.0
        %3550 = vmatprep.subr.mxu0 0.0
        %3551 = vmatpush1.msra.mxu0 0.0
        %3552 = vmatprep.subr.mxu0 0.0
        %3553 = vmatpush1.msra.mxu0 0.0
        %3554 = vmatprep.subr.mxu0 0.0
        %3555 = vmatpush1.msra.mxu0 0.0
        %3556 = vmatprep.subr.mxu0 0.0
        %3557 = vmatpush1.msra.mxu0 0.0
        %3558 = vmatprep.subr.mxu0 0.0
        %3559 = vmatpush1.msra.mxu0 0.0
        %3560 = vmatprep.subr.mxu0 0.0
        %3561 = vmatpush1.msra.mxu0 0.0
        %3562 = vmatprep.subr.mxu0 0.0
        %3563 = vmatpush1.msra.mxu0 0.0
        %3564 = vmatprep.subr.mxu0 0.0
        %3565 = vmatpush1.msra.mxu0 0.0
        %3566 = vmatprep.subr.mxu0 0.0
        %3567 = vmatpush1.msra.mxu0 0.0
        %3568 = vmatprep.subr.mxu0 0.0
        %3569 = vmatpush1.msra.mxu0 0.0
        %3570 = vmatprep.subr.mxu0 0.0
        %3571 = vmatpush1.msra.mxu0 0.0
        %3572 = vmatprep.subr.mxu0 0.0
        %3573 = vmatpush1.msra.mxu0 0.0
        %3574 = vmatprep.subr.mxu0 0.0
        %3575 = vmatpush1.msra.mxu0 0.0
        %3576 = vmatprep.subr.mxu0 0.0
        %3577 = vmatpush1.msra.mxu0 0.0
        %3578 = vmatprep.subr.mxu0 0.0
        %3579 = vmatpush1.msra.mxu0 0.0
        %3580 = vmatprep.subr.mxu0 0.0
        %3581 = vmatpush1.msra.mxu0 0.0
        %3582 = vmatprep.subr.mxu0 0.0
        %3583 = vmatpush1.msra.mxu0 0.0
        %3584 = vmatprep.subr.mxu0 0.0
        %3585 = vmatpush1.msra.mxu0 0.0
        %3586 = vmatprep.subr.mxu0 0.0
        %3587 = vmatpush1.msra.mxu0 0.0
        %3588 = vmatprep.subr.mxu0 0.0
        %3589 = vmatpush1.msra.mxu0 0.0
        %3590 = vmatprep.subr.mxu0 0.0
        %3591 = vmatpush1.msra.mxu0 0.0
        %3592 = vmatprep.subr.mxu0 0.0
        %3593 = vmatpush1.msra.mxu0 0.0
        %3594 = vmatprep.subr.mxu0 0.0
        %3595 = vmatpush1.msra.mxu0 0.0
        %3596 = vmatprep.subr.mxu0 0.0
        %3597 = vmatpush1.msra.mxu0 0.0
        %3598 = vmatprep.mubr.f32.mxu0 0.0
        %3599 = vmatmul.mubr.f32.gmra.mrb[0].mxu0 %v3526
        %v3600 = vpop.f32.mrb[0].mxu0
        %v3601 = vadd.f32 %v3451, %v3600
        %v3602 = vpop.f32.mrb[0].mxu0
        %v3603 = vadd.f32 %v3453, %v3602
        %3604 = vdwg.mxu0
        %3605 = vmatprep.subr.mxu0 0.0
        %3606 = vmatpush1.msra.mxu0 %v3342
        %3607 = vmatprep.subr.mxu0 0.0
        %3608 = vmatpush1.msra.mxu0 %v3532
        %3609 = vmatprep.subr.mxu0 0.0
        %3610 = vmatpush1.msra.mxu0 0.0
        %3611 = vmatprep.subr.mxu0 0.0
        %3612 = vmatpush1.msra.mxu0 0.0
        %3613 = vmatprep.subr.mxu0 0.0
        %3614 = vmatpush1.msra.mxu0 0.0
        %3615 = vmatprep.subr.mxu0 0.0
        %3616 = vmatpush1.msra.mxu0 0.0
        %3617 = vmatprep.subr.mxu0 0.0
        %3618 = vmatpush1.msra.mxu0 0.0
        %3619 = vmatprep.subr.mxu0 0.0
        %3620 = vmatpush1.msra.mxu0 0.0
        %3621 = vmatprep.subr.mxu0 0.0
        %3622 = vmatpush1.msra.mxu0 0.0
        %3623 = vmatprep.subr.mxu0 0.0
        %3624 = vmatpush1.msra.mxu0 0.0
        %3625 = vmatprep.subr.mxu0 0.0
        %3626 = vmatpush1.msra.mxu0 0.0
        %3627 = vmatprep.subr.mxu0 0.0
        %3628 = vmatpush1.msra.mxu0 0.0
        %3629 = vmatprep.subr.mxu0 0.0
        %3630 = vmatpush1.msra.mxu0 0.0
        %3631 = vmatprep.subr.mxu0 0.0
        %3632 = vmatpush1.msra.mxu0 0.0
        %3633 = vmatprep.subr.mxu0 0.0
        %3634 = vmatpush1.msra.mxu0 0.0
        %3635 = vmatprep.subr.mxu0 0.0
        %3636 = vmatpush1.msra.mxu0 0.0
        %3637 = vmatprep.subr.mxu0 0.0
        %3638 = vmatpush1.msra.mxu0 0.0
        %3639 = vmatprep.subr.mxu0 0.0
        %3640 = vmatpush1.msra.mxu0 0.0
        %3641 = vmatprep.subr.mxu0 0.0
        %3642 = vmatpush1.msra.mxu0 0.0
        %3643 = vmatprep.subr.mxu0 0.0
        %3644 = vmatpush1.msra.mxu0 0.0
        %3645 = vmatprep.subr.mxu0 0.0
        %3646 = vmatpush1.msra.mxu0 0.0
        %3647 = vmatprep.subr.mxu0 0.0
        %3648 = vmatpush1.msra.mxu0 0.0
        %3649 = vmatprep.subr.mxu0 0.0
        %3650 = vmatpush1.msra.mxu0 0.0
        %3651 = vmatprep.subr.mxu0 0.0
        %3652 = vmatpush1.msra.mxu0 0.0
        %3653 = vmatprep.subr.mxu0 0.0
        %3654 = vmatpush1.msra.mxu0 0.0
        %3655 = vmatprep.subr.mxu0 0.0
        %3656 = vmatpush1.msra.mxu0 0.0
        %3657 = vmatprep.subr.mxu0 0.0
        %3658 = vmatpush1.msra.mxu0 0.0
        %3659 = vmatprep.subr.mxu0 0.0
        %3660 = vmatpush1.msra.mxu0 0.0
        %3661 = vmatprep.subr.mxu0 0.0
        %3662 = vmatpush1.msra.mxu0 0.0
        %3663 = vmatprep.subr.mxu0 0.0
        %3664 = vmatpush1.msra.mxu0 0.0
        %3665 = vmatprep.subr.mxu0 0.0
        %3666 = vmatpush1.msra.mxu0 0.0
        %3667 = vmatprep.subr.mxu0 0.0
        %3668 = vmatpush1.msra.mxu0 0.0
        %3669 = vmatprep.mubr.f32.mxu0 0.0
        %3670 = vmatmul.mubr.f32.gmra.mrb[0].mxu0 %v3526
        %v3671 = vpop.f32.mrb[0].mxu0
        %v3672 = vadd.f32 %v3522, %v3671
        %v3673 = vpop.f32.mrb[0].mxu0
        %3674 = vdwg.mxu0
        %s3675 = scalar_lea.vmem %s4, 8
        %v3676 = vld [vmem:[%s3675] sm:$0xf]
        %3677 = vrot.lane.b32.xlu0 %v3340, 126
        %v3678 = vpop.permute.xlu0 %3677
        %3679 = vrot.lane.b32.xlu0 %v3341, 126
        %v3680 = vpop.permute.xlu0 %3679
        %3681 = vrot.lane.b32.xlu0 %v3342, 126
        %v3682 = vpop.permute.xlu0 %3681
        %3683 = vrot.lane.b32.xlu0 %v3343, 126
        %v3684 = vpop.permute.xlu0 %3683
        %3685 = vrot.lane.b32.xlu0 %v3344, 126
        %v3686 = vpop.permute.xlu0 %3685
        %3687 = vrot.lane.b32.xlu0 %v3345, 126
        %v3688 = vpop.permute.xlu0 %3687
        %v3689 = vsel %vm671, %v3678, %v3680
        %v3690 = vsel %vm671, %v3680, %v3682
        %v3691 = vsel %vm671, %v3684, %v3686
        %v3692 = vsel %vm671, %v3686, %v3688
        %v3697 = vsel %vm3374, %v3676, 0
        %v3699 = vsel %vm365, %v3691, 0
        %v3701 = vsel %vm365, %v3692, 0
        %v3703 = vsel %vm365, %v3688, 0
        %3705 = vmatprep.subr.mxu0 %v3690
        %3706 = vmatpush1.msra.mxu0 %v3689
        %3707 = vmatprep.subr.mxu0 %v3701
        %3708 = vmatpush1.msra.mxu0 %v3699
        %3709 = vmatprep.subr.mxu0 0.0
        %3710 = vmatpush1.msra.mxu0 0.0
        %3711 = vmatprep.subr.mxu0 0.0
        %3712 = vmatpush1.msra.mxu0 0.0
        %3713 = vmatprep.subr.mxu0 0.0
        %3714 = vmatpush1.msra.mxu0 0.0
        %3715 = vmatprep.subr.mxu0 0.0
        %3716 = vmatpush1.msra.mxu0 0.0
        %3717 = vmatprep.subr.mxu0 0.0
        %3718 = vmatpush1.msra.mxu0 0.0
        %3719 = vmatprep.subr.mxu0 0.0
        %3720 = vmatpush1.msra.mxu0 0.0
        %3721 = vmatprep.subr.mxu0 0.0
        %3722 = vmatpush1.msra.mxu0 0.0
        %3723 = vmatprep.subr.mxu0 0.0
        %3724 = vmatpush1.msra.mxu0 0.0
        %3725 = vmatprep.subr.mxu0 0.0
        %3726 = vmatpush1.msra.mxu0 0.0
        %3727 = vmatprep.subr.mxu0 0.0
        %3728 = vmatpush1.msra.mxu0 0.0
        %3729 = vmatprep.subr.mxu0 0.0
        %3730 = vmatpush1.msra.mxu0 0.0
        %3731 = vmatprep.subr.mxu0 0.0
        %3732 = vmatpush1.msra.mxu0 0.0
        %3733 = vmatprep.subr.mxu0 0.0
        %3734 = vmatpush1.msra.mxu0 0.0
        %3735 = vmatprep.subr.mxu0 0.0
        %3736 = vmatpush1.msra.mxu0 0.0
        %3737 = vmatprep.subr.mxu0 0.0
        %3738 = vmatpush1.msra.mxu0 0.0
        %3739 = vmatprep.subr.mxu0 0.0
        %3740 = vmatpush1.msra.mxu0 0.0
        %3741 = vmatprep.subr.mxu0 0.0
        %3742 = vmatpush1.msra.mxu0 0.0
        %3743 = vmatprep.subr.mxu0 0.0
        %3744 = vmatpush1.msra.mxu0 0.0
        %3745 = vmatprep.subr.mxu0 0.0
        %3746 = vmatpush1.msra.mxu0 0.0
        %3747 = vmatprep.subr.mxu0 0.0
        %3748 = vmatpush1.msra.mxu0 0.0
        %3749 = vmatprep.subr.mxu0 0.0
        %3750 = vmatpush1.msra.mxu0 0.0
        %3751 = vmatprep.subr.mxu0 0.0
        %3752 = vmatpush1.msra.mxu0 0.0
        %3753 = vmatprep.subr.mxu0 0.0
        %3754 = vmatpush1.msra.mxu0 0.0
        %3755 = vmatprep.subr.mxu0 0.0
        %3756 = vmatpush1.msra.mxu0 0.0
        %3757 = vmatprep.subr.mxu0 0.0
        %3758 = vmatpush1.msra.mxu0 0.0
        %3759 = vmatprep.subr.mxu0 0.0
        %3760 = vmatpush1.msra.mxu0 0.0
        %3761 = vmatprep.subr.mxu0 0.0
        %3762 = vmatpush1.msra.mxu0 0.0
        %3763 = vmatprep.subr.mxu0 0.0
        %3764 = vmatpush1.msra.mxu0 0.0
        %3765 = vmatprep.subr.mxu0 0.0
        %3766 = vmatpush1.msra.mxu0 0.0
        %3767 = vmatprep.subr.mxu0 0.0
        %3768 = vmatpush1.msra.mxu0 0.0
        %3769 = vmatprep.mubr.f32.mxu0 0.0
        %3770 = vmatmul.mubr.f32.gmra.mrb[0].mxu0 %v3697
        %v3771 = vpop.f32.mrb[0].mxu0
        %v3772 = vadd.f32 0.0, %v3771
        %v3773 = vpop.f32.mrb[0].mxu0
        %v3774 = vadd.f32 0.0, %v3773
        %3775 = vdwg.mxu0
        %3776 = vmatprep.subr.mxu0 0.0
        %3777 = vmatpush1.msra.mxu0 %v3682
        %3778 = vmatprep.subr.mxu0 0.0
        %3779 = vmatpush1.msra.mxu0 %v3703
        %3780 = vmatprep.subr.mxu0 0.0
        %3781 = vmatpush1.msra.mxu0 0.0
        %3782 = vmatprep.subr.mxu0 0.0
        %3783 = vmatpush1.msra.mxu0 0.0
        %3784 = vmatprep.subr.mxu0 0.0
        %3785 = vmatpush1.msra.mxu0 0.0
        %3786 = vmatprep.subr.mxu0 0.0
        %3787 = vmatpush1.msra.mxu0 0.0
        %3788 = vmatprep.subr.mxu0 0.0
        %3789 = vmatpush1.msra.mxu0 0.0
        %3790 = vmatprep.subr.mxu0 0.0
        %3791 = vmatpush1.msra.mxu0 0.0
        %3792 = vmatprep.subr.mxu0 0.0
        %3793 = vmatpush1.msra.mxu0 0.0
        %3794 = vmatprep.subr.mxu0 0.0
        %3795 = vmatpush1.msra.mxu0 0.0
        %3796 = vmatprep.subr.mxu0 0.0
        %3797 = vmatpush1.msra.mxu0 0.0
        %3798 = vmatprep.subr.mxu0 0.0
        %3799 = vmatpush1.msra.mxu0 0.0
        %3800 = vmatprep.subr.mxu0 0.0
        %3801 = vmatpush1.msra.mxu0 0.0
        %3802 = vmatprep.subr.mxu0 0.0
        %3803 = vmatpush1.msra.mxu0 0.0
        %3804 = vmatprep.subr.mxu0 0.0
        %3805 = vmatpush1.msra.mxu0 0.0
        %3806 = vmatprep.subr.mxu0 0.0
        %3807 = vmatpush1.msra.mxu0 0.0
        %3808 = vmatprep.subr.mxu0 0.0
        %3809 = vmatpush1.msra.mxu0 0.0
        %3810 = vmatprep.subr.mxu0 0.0
        %3811 = vmatpush1.msra.mxu0 0.0
        %3812 = vmatprep.subr.mxu0 0.0
        %3813 = vmatpush1.msra.mxu0 0.0
        %3814 = vmatprep.subr.mxu0 0.0
        %3815 = vmatpush1.msra.mxu0 0.0
        %3816 = vmatprep.subr.mxu0 0.0
        %3817 = vmatpush1.msra.mxu0 0.0
        %3818 = vmatprep.subr.mxu0 0.0
        %3819 = vmatpush1.msra.mxu0 0.0
        %3820 = vmatprep.subr.mxu0 0.0
        %3821 = vmatpush1.msra.mxu0 0.0
        %3822 = vmatprep.subr.mxu0 0.0
        %3823 = vmatpush1.msra.mxu0 0.0
        %3824 = vmatprep.subr.mxu0 0.0
        %3825 = vmatpush1.msra.mxu0 0.0
        %3826 = vmatprep.subr.mxu0 0.0
        %3827 = vmatpush1.msra.mxu0 0.0
        %3828 = vmatprep.subr.mxu0 0.0
        %3829 = vmatpush1.msra.mxu0 0.0
        %3830 = vmatprep.subr.mxu0 0.0
        %3831 = vmatpush1.msra.mxu0 0.0
        %3832 = vmatprep.subr.mxu0 0.0
        %3833 = vmatpush1.msra.mxu0 0.0
        %3834 = vmatprep.subr.mxu0 0.0
        %3835 = vmatpush1.msra.mxu0 0.0
        %3836 = vmatprep.subr.mxu0 0.0
        %3837 = vmatpush1.msra.mxu0 0.0
        %3838 = vmatprep.subr.mxu0 0.0
        %3839 = vmatpush1.msra.mxu0 0.0
        %3840 = vmatprep.mubr.f32.mxu0 0.0
        %3841 = vmatmul.mubr.f32.gmra.mrb[0].mxu0 %v3697
        %v3842 = vpop.f32.mrb[0].mxu0
        %v3843 = vadd.f32 0.0, %v3842
        %v3844 = vpop.f32.mrb[0].mxu0
        %3845 = vdwg.mxu0
        %v3846 = vadd.f32 %v3601, %v3772
        %v3847 = vadd.f32 %v3603, %v3774
        %v3848 = vadd.f32 %v3672, %v3843
        %s3849 = scalar_lea.vmem %s4, 12
        %v3850 = vld [vmem:[%s3849] sm:$0xf]
        %3851 = vrot.lane.b32.xlu0 %v3340, 110
        %v3852 = vpop.permute.xlu0 %3851
        %3853 = vrot.lane.b32.xlu0 %v3341, 110
        %v3854 = vpop.permute.xlu0 %3853
        %3855 = vrot.lane.b32.xlu0 %v3342, 110
        %v3856 = vpop.permute.xlu0 %3855
        %3857 = vrot.lane.b32.xlu0 %v3343, 110
        %v3858 = vpop.permute.xlu0 %3857
        %3859 = vrot.lane.b32.xlu0 %v3344, 110
        %v3860 = vpop.permute.xlu0 %3859
        %3861 = vrot.lane.b32.xlu0 %v3345, 110
        %v3862 = vpop.permute.xlu0 %3861
        %v3863 = vsel %vm835, %v3852, %v3854
        %v3864 = vsel %vm835, %v3854, %v3856
        %v3865 = vsel %vm835, %v3858, %v3860
        %v3866 = vsel %vm835, %v3860, %v3862
        %v3871 = vsel %vm3374, %v3850, 0
        %v3873 = vsel %vm365, %v3865, 0
        %v3875 = vsel %vm365, %v3866, 0
        %v3877 = vsel %vm365, %v3862, 0
        %3879 = vmatprep.subr.mxu0 %v3864
        %3880 = vmatpush1.msra.mxu0 %v3863
        %3881 = vmatprep.subr.mxu0 %v3875
        %3882 = vmatpush1.msra.mxu0 %v3873
        %3883 = vmatprep.subr.mxu0 0.0
        %3884 = vmatpush1.msra.mxu0 0.0
        %3885 = vmatprep.subr.mxu0 0.0
        %3886 = vmatpush1.msra.mxu0 0.0
        %3887 = vmatprep.subr.mxu0 0.0
        %3888 = vmatpush1.msra.mxu0 0.0
        %3889 = vmatprep.subr.mxu0 0.0
        %3890 = vmatpush1.msra.mxu0 0.0
        %3891 = vmatprep.subr.mxu0 0.0
        %3892 = vmatpush1.msra.mxu0 0.0
        %3893 = vmatprep.subr.mxu0 0.0
        %3894 = vmatpush1.msra.mxu0 0.0
        %3895 = vmatprep.subr.mxu0 0.0
        %3896 = vmatpush1.msra.mxu0 0.0
        %3897 = vmatprep.subr.mxu0 0.0
        %3898 = vmatpush1.msra.mxu0 0.0
        %3899 = vmatprep.subr.mxu0 0.0
        %3900 = vmatpush1.msra.mxu0 0.0
        %3901 = vmatprep.subr.mxu0 0.0
        %3902 = vmatpush1.msra.mxu0 0.0
        %3903 = vmatprep.subr.mxu0 0.0
        %3904 = vmatpush1.msra.mxu0 0.0
        %3905 = vmatprep.subr.mxu0 0.0
        %3906 = vmatpush1.msra.mxu0 0.0
        %3907 = vmatprep.subr.mxu0 0.0
        %3908 = vmatpush1.msra.mxu0 0.0
        %3909 = vmatprep.subr.mxu0 0.0
        %3910 = vmatpush1.msra.mxu0 0.0
        %3911 = vmatprep.subr.mxu0 0.0
        %3912 = vmatpush1.msra.mxu0 0.0
        %3913 = vmatprep.subr.mxu0 0.0
        %3914 = vmatpush1.msra.mxu0 0.0
        %3915 = vmatprep.subr.mxu0 0.0
        %3916 = vmatpush1.msra.mxu0 0.0
        %3917 = vmatprep.subr.mxu0 0.0
        %3918 = vmatpush1.msra.mxu0 0.0
        %3919 = vmatprep.subr.mxu0 0.0
        %3920 = vmatpush1.msra.mxu0 0.0
        %3921 = vmatprep.subr.mxu0 0.0
        %3922 = vmatpush1.msra.mxu0 0.0
        %3923 = vmatprep.subr.mxu0 0.0
        %3924 = vmatpush1.msra.mxu0 0.0
        %3925 = vmatprep.subr.mxu0 0.0
        %3926 = vmatpush1.msra.mxu0 0.0
        %3927 = vmatprep.subr.mxu0 0.0
        %3928 = vmatpush1.msra.mxu0 0.0
        %3929 = vmatprep.subr.mxu0 0.0
        %3930 = vmatpush1.msra.mxu0 0.0
        %3931 = vmatprep.subr.mxu0 0.0
        %3932 = vmatpush1.msra.mxu0 0.0
        %3933 = vmatprep.subr.mxu0 0.0
        %3934 = vmatpush1.msra.mxu0 0.0
        %3935 = vmatprep.subr.mxu0 0.0
        %3936 = vmatpush1.msra.mxu0 0.0
        %3937 = vmatprep.subr.mxu0 0.0
        %3938 = vmatpush1.msra.mxu0 0.0
        %3939 = vmatprep.subr.mxu0 0.0
        %3940 = vmatpush1.msra.mxu0 0.0
        %3941 = vmatprep.subr.mxu0 0.0
        %3942 = vmatpush1.msra.mxu0 0.0
        %3943 = vmatprep.mubr.f32.mxu0 0.0
        %3944 = vmatmul.mubr.f32.gmra.mrb[0].mxu0 %v3871
        %v3945 = vpop.f32.mrb[0].mxu0
        %v3946 = vadd.f32 0.0, %v3945
        %v3947 = vpop.f32.mrb[0].mxu0
        %v3948 = vadd.f32 0.0, %v3947
        %3949 = vdwg.mxu0
        %3950 = vmatprep.subr.mxu0 0.0
        %3951 = vmatpush1.msra.mxu0 %v3856
        %3952 = vmatprep.subr.mxu0 0.0
        %3953 = vmatpush1.msra.mxu0 %v3877
        %3954 = vmatprep.subr.mxu0 0.0
        %3955 = vmatpush1.msra.mxu0 0.0
        %3956 = vmatprep.subr.mxu0 0.0
        %3957 = vmatpush1.msra.mxu0 0.0
        %3958 = vmatprep.subr.mxu0 0.0
        %3959 = vmatpush1.msra.mxu0 0.0
        %3960 = vmatprep.subr.mxu0 0.0
        %3961 = vmatpush1.msra.mxu0 0.0
        %3962 = vmatprep.subr.mxu0 0.0
        %3963 = vmatpush1.msra.mxu0 0.0
        %3964 = vmatprep.subr.mxu0 0.0
        %3965 = vmatpush1.msra.mxu0 0.0
        %3966 = vmatprep.subr.mxu0 0.0
        %3967 = vmatpush1.msra.mxu0 0.0
        %3968 = vmatprep.subr.mxu0 0.0
        %3969 = vmatpush1.msra.mxu0 0.0
        %3970 = vmatprep.subr.mxu0 0.0
        %3971 = vmatpush1.msra.mxu0 0.0
        %3972 = vmatprep.subr.mxu0 0.0
        %3973 = vmatpush1.msra.mxu0 0.0
        %3974 = vmatprep.subr.mxu0 0.0
        %3975 = vmatpush1.msra.mxu0 0.0
        %3976 = vmatprep.subr.mxu0 0.0
        %3977 = vmatpush1.msra.mxu0 0.0
        %3978 = vmatprep.subr.mxu0 0.0
        %3979 = vmatpush1.msra.mxu0 0.0
        %3980 = vmatprep.subr.mxu0 0.0
        %3981 = vmatpush1.msra.mxu0 0.0
        %3982 = vmatprep.subr.mxu0 0.0
        %3983 = vmatpush1.msra.mxu0 0.0
        %3984 = vmatprep.subr.mxu0 0.0
        %3985 = vmatpush1.msra.mxu0 0.0
        %3986 = vmatprep.subr.mxu0 0.0
        %3987 = vmatpush1.msra.mxu0 0.0
        %3988 = vmatprep.subr.mxu0 0.0
        %3989 = vmatpush1.msra.mxu0 0.0
        %3990 = vmatprep.subr.mxu0 0.0
        %3991 = vmatpush1.msra.mxu0 0.0
        %3992 = vmatprep.subr.mxu0 0.0
        %3993 = vmatpush1.msra.mxu0 0.0
        %3994 = vmatprep.subr.mxu0 0.0
        %3995 = vmatpush1.msra.mxu0 0.0
        %3996 = vmatprep.subr.mxu0 0.0
        %3997 = vmatpush1.msra.mxu0 0.0
        %3998 = vmatprep.subr.mxu0 0.0
        %3999 = vmatpush1.msra.mxu0 0.0
        %4000 = vmatprep.subr.mxu0 0.0
        %4001 = vmatpush1.msra.mxu0 0.0
        %4002 = vmatprep.subr.mxu0 0.0
        %4003 = vmatpush1.msra.mxu0 0.0
        %4004 = vmatprep.subr.mxu0 0.0
        %4005 = vmatpush1.msra.mxu0 0.0
        %4006 = vmatprep.subr.mxu0 0.0
        %4007 = vmatpush1.msra.mxu0 0.0
        %4008 = vmatprep.subr.mxu0 0.0
        %4009 = vmatpush1.msra.mxu0 0.0
        %4010 = vmatprep.subr.mxu0 0.0
        %4011 = vmatpush1.msra.mxu0 0.0
        %4012 = vmatprep.subr.mxu0 0.0
        %4013 = vmatpush1.msra.mxu0 0.0
        %4014 = vmatprep.mubr.f32.mxu0 0.0
        %4015 = vmatmul.mubr.f32.gmra.mrb[0].mxu0 %v3871
        %v4016 = vpop.f32.mrb[0].mxu0
        %v4017 = vadd.f32 0.0, %v4016
        %v4018 = vpop.f32.mrb[0].mxu0
        %4019 = vdwg.mxu0
        %v4020 = vadd.f32 %v3846, %v3946
        %v4021 = vadd.f32 %v3847, %v3948
        %v4022 = vadd.f32 %v3848, %v4017
        %s4023 = scalar_lea.vmem %s4, 16
        %v4024 = vld [vmem:[%s4023] sm:$0xf]
        %4025 = vrot.lane.b32.xlu0 %v3340, 109
        %v4026 = vpop.permute.xlu0 %4025
        %4027 = vrot.lane.b32.xlu0 %v3341, 109
        %v4028 = vpop.permute.xlu0 %4027
        %4029 = vrot.lane.b32.xlu0 %v3342, 109
        %v4030 = vpop.permute.xlu0 %4029
        %4031 = vrot.lane.b32.xlu0 %v3343, 109
        %v4032 = vpop.permute.xlu0 %4031
        %4033 = vrot.lane.b32.xlu0 %v3344, 109
        %v4034 = vpop.permute.xlu0 %4033
        %4035 = vrot.lane.b32.xlu0 %v3345, 109
        %v4036 = vpop.permute.xlu0 %4035
        %v4037 = vsel %vm999, %v4026, %v4028
        %v4038 = vsel %vm999, %v4028, %v4030
        %v4039 = vsel %vm999, %v4032, %v4034
        %v4040 = vsel %vm999, %v4034, %v4036
        %v4045 = vsel %vm3374, %v4024, 0
        %v4047 = vsel %vm365, %v4039, 0
        %v4049 = vsel %vm365, %v4040, 0
        %v4051 = vsel %vm365, %v4036, 0
        %4053 = vmatprep.subr.mxu0 %v4038
        %4054 = vmatpush1.msra.mxu0 %v4037
        %4055 = vmatprep.subr.mxu0 %v4049
        %4056 = vmatpush1.msra.mxu0 %v4047
        %4057 = vmatprep.subr.mxu0 0.0
        %4058 = vmatpush1.msra.mxu0 0.0
        %4059 = vmatprep.subr.mxu0 0.0
        %4060 = vmatpush1.msra.mxu0 0.0
        %4061 = vmatprep.subr.mxu0 0.0
        %4062 = vmatpush1.msra.mxu0 0.0
        %4063 = vmatprep.subr.mxu0 0.0
        %4064 = vmatpush1.msra.mxu0 0.0
        %4065 = vmatprep.subr.mxu0 0.0
        %4066 = vmatpush1.msra.mxu0 0.0
        %4067 = vmatprep.subr.mxu0 0.0
        %4068 = vmatpush1.msra.mxu0 0.0
        %4069 = vmatprep.subr.mxu0 0.0
        %4070 = vmatpush1.msra.mxu0 0.0
        %4071 = vmatprep.subr.mxu0 0.0
        %4072 = vmatpush1.msra.mxu0 0.0
        %4073 = vmatprep.subr.mxu0 0.0
        %4074 = vmatpush1.msra.mxu0 0.0
        %4075 = vmatprep.subr.mxu0 0.0
        %4076 = vmatpush1.msra.mxu0 0.0
        %4077 = vmatprep.subr.mxu0 0.0
        %4078 = vmatpush1.msra.mxu0 0.0
        %4079 = vmatprep.subr.mxu0 0.0
        %4080 = vmatpush1.msra.mxu0 0.0
        %4081 = vmatprep.subr.mxu0 0.0
        %4082 = vmatpush1.msra.mxu0 0.0
        %4083 = vmatprep.subr.mxu0 0.0
        %4084 = vmatpush1.msra.mxu0 0.0
        %4085 = vmatprep.subr.mxu0 0.0
        %4086 = vmatpush1.msra.mxu0 0.0
        %4087 = vmatprep.subr.mxu0 0.0
        %4088 = vmatpush1.msra.mxu0 0.0
        %4089 = vmatprep.subr.mxu0 0.0
        %4090 = vmatpush1.msra.mxu0 0.0
        %4091 = vmatprep.subr.mxu0 0.0
        %4092 = vmatpush1.msra.mxu0 0.0
        %4093 = vmatprep.subr.mxu0 0.0
        %4094 = vmatpush1.msra.mxu0 0.0
        %4095 = vmatprep.subr.mxu0 0.0
        %4096 = vmatpush1.msra.mxu0 0.0
        %4097 = vmatprep.subr.mxu0 0.0
        %4098 = vmatpush1.msra.mxu0 0.0
        %4099 = vmatprep.subr.mxu0 0.0
        %4100 = vmatpush1.msra.mxu0 0.0
        %4101 = vmatprep.subr.mxu0 0.0
        %4102 = vmatpush1.msra.mxu0 0.0
        %4103 = vmatprep.subr.mxu0 0.0
        %4104 = vmatpush1.msra.mxu0 0.0
        %4105 = vmatprep.subr.mxu0 0.0
        %4106 = vmatpush1.msra.mxu0 0.0
        %4107 = vmatprep.subr.mxu0 0.0
        %4108 = vmatpush1.msra.mxu0 0.0
        %4109 = vmatprep.subr.mxu0 0.0
        %4110 = vmatpush1.msra.mxu0 0.0
        %4111 = vmatprep.subr.mxu0 0.0
        %4112 = vmatpush1.msra.mxu0 0.0
        %4113 = vmatprep.subr.mxu0 0.0
        %4114 = vmatpush1.msra.mxu0 0.0
        %4115 = vmatprep.subr.mxu0 0.0
        %4116 = vmatpush1.msra.mxu0 0.0
        %4117 = vmatprep.mubr.f32.mxu0 0.0
        %4118 = vmatmul.mubr.f32.gmra.mrb[0].mxu0 %v4045
        %v4119 = vpop.f32.mrb[0].mxu0
        %v4120 = vadd.f32 0.0, %v4119
        %v4121 = vpop.f32.mrb[0].mxu0
        %v4122 = vadd.f32 0.0, %v4121
        %4123 = vdwg.mxu0
        %4124 = vmatprep.subr.mxu0 0.0
        %4125 = vmatpush1.msra.mxu0 %v4030
        %4126 = vmatprep.subr.mxu0 0.0
        %4127 = vmatpush1.msra.mxu0 %v4051
        %4128 = vmatprep.subr.mxu0 0.0
        %4129 = vmatpush1.msra.mxu0 0.0
        %4130 = vmatprep.subr.mxu0 0.0
        %4131 = vmatpush1.msra.mxu0 0.0
        %4132 = vmatprep.subr.mxu0 0.0
        %4133 = vmatpush1.msra.mxu0 0.0
        %4134 = vmatprep.subr.mxu0 0.0
        %4135 = vmatpush1.msra.mxu0 0.0
        %4136 = vmatprep.subr.mxu0 0.0
        %4137 = vmatpush1.msra.mxu0 0.0
        %4138 = vmatprep.subr.mxu0 0.0
        %4139 = vmatpush1.msra.mxu0 0.0
        %4140 = vmatprep.subr.mxu0 0.0
        %4141 = vmatpush1.msra.mxu0 0.0
        %4142 = vmatprep.subr.mxu0 0.0
        %4143 = vmatpush1.msra.mxu0 0.0
        %4144 = vmatprep.subr.mxu0 0.0
        %4145 = vmatpush1.msra.mxu0 0.0
        %4146 = vmatprep.subr.mxu0 0.0
        %4147 = vmatpush1.msra.mxu0 0.0
        %4148 = vmatprep.subr.mxu0 0.0
        %4149 = vmatpush1.msra.mxu0 0.0
        %4150 = vmatprep.subr.mxu0 0.0
        %4151 = vmatpush1.msra.mxu0 0.0
        %4152 = vmatprep.subr.mxu0 0.0
        %4153 = vmatpush1.msra.mxu0 0.0
        %4154 = vmatprep.subr.mxu0 0.0
        %4155 = vmatpush1.msra.mxu0 0.0
        %4156 = vmatprep.subr.mxu0 0.0
        %4157 = vmatpush1.msra.mxu0 0.0
        %4158 = vmatprep.subr.mxu0 0.0
        %4159 = vmatpush1.msra.mxu0 0.0
        %4160 = vmatprep.subr.mxu0 0.0
        %4161 = vmatpush1.msra.mxu0 0.0
        %4162 = vmatprep.subr.mxu0 0.0
        %4163 = vmatpush1.msra.mxu0 0.0
        %4164 = vmatprep.subr.mxu0 0.0
        %4165 = vmatpush1.msra.mxu0 0.0
        %4166 = vmatprep.subr.mxu0 0.0
        %4167 = vmatpush1.msra.mxu0 0.0
        %4168 = vmatprep.subr.mxu0 0.0
        %4169 = vmatpush1.msra.mxu0 0.0
        %4170 = vmatprep.subr.mxu0 0.0
        %4171 = vmatpush1.msra.mxu0 0.0
        %4172 = vmatprep.subr.mxu0 0.0
        %4173 = vmatpush1.msra.mxu0 0.0
        %4174 = vmatprep.subr.mxu0 0.0
        %4175 = vmatpush1.msra.mxu0 0.0
        %4176 = vmatprep.subr.mxu0 0.0
        %4177 = vmatpush1.msra.mxu0 0.0
        %4178 = vmatprep.subr.mxu0 0.0
        %4179 = vmatpush1.msra.mxu0 0.0
        %4180 = vmatprep.subr.mxu0 0.0
        %4181 = vmatpush1.msra.mxu0 0.0
        %4182 = vmatprep.subr.mxu0 0.0
        %4183 = vmatpush1.msra.mxu0 0.0
        %4184 = vmatprep.subr.mxu0 0.0
        %4185 = vmatpush1.msra.mxu0 0.0
        %4186 = vmatprep.subr.mxu0 0.0
        %4187 = vmatpush1.msra.mxu0 0.0
        %4188 = vmatprep.mubr.f32.mxu0 0.0
        %4189 = vmatmul.mubr.f32.gmra.mrb[0].mxu0 %v4045
        %v4190 = vpop.f32.mrb[0].mxu0
        %v4191 = vadd.f32 0.0, %v4190
        %v4192 = vpop.f32.mrb[0].mxu0
        %4193 = vdwg.mxu0
        %v4194 = vadd.f32 %v4020, %v4120
        %v4195 = vadd.f32 %v4021, %v4122
        %v4196 = vadd.f32 %v4022, %v4191
        %s4197 = scalar_lea.vmem %s4, 20
        %v4198 = vld [vmem:[%s4197] sm:$0xf]
        %4199 = vrot.lane.b32.xlu0 %v3340, 108
        %v4200 = vpop.permute.xlu0 %4199
        %4201 = vrot.lane.b32.xlu0 %v3341, 108
        %v4202 = vpop.permute.xlu0 %4201
        %4203 = vrot.lane.b32.xlu0 %v3342, 108
        %v4204 = vpop.permute.xlu0 %4203
        %4205 = vrot.lane.b32.xlu0 %v3343, 108
        %v4206 = vpop.permute.xlu0 %4205
        %4207 = vrot.lane.b32.xlu0 %v3344, 108
        %v4208 = vpop.permute.xlu0 %4207
        %4209 = vrot.lane.b32.xlu0 %v3345, 108
        %v4210 = vpop.permute.xlu0 %4209
        %v4211 = vsel %vm1163, %v4200, %v4202
        %v4212 = vsel %vm1163, %v4202, %v4204
        %v4213 = vsel %vm1163, %v4206, %v4208
        %v4214 = vsel %vm1163, %v4208, %v4210
        %v4219 = vsel %vm3374, %v4198, 0
        %v4221 = vsel %vm365, %v4213, 0
        %v4223 = vsel %vm365, %v4214, 0
        %v4225 = vsel %vm365, %v4210, 0
        %4227 = vmatprep.subr.mxu0 %v4212
        %4228 = vmatpush1.msra.mxu0 %v4211
        %4229 = vmatprep.subr.mxu0 %v4223
        %4230 = vmatpush1.msra.mxu0 %v4221
        %4231 = vmatprep.subr.mxu0 0.0
        %4232 = vmatpush1.msra.mxu0 0.0
        %4233 = vmatprep.subr.mxu0 0.0
        %4234 = vmatpush1.msra.mxu0 0.0
        %4235 = vmatprep.subr.mxu0 0.0
        %4236 = vmatpush1.msra.mxu0 0.0
        %4237 = vmatprep.subr.mxu0 0.0
        %4238 = vmatpush1.msra.mxu0 0.0
        %4239 = vmatprep.subr.mxu0 0.0
        %4240 = vmatpush1.msra.mxu0 0.0
        %4241 = vmatprep.subr.mxu0 0.0
        %4242 = vmatpush1.msra.mxu0 0.0
        %4243 = vmatprep.subr.mxu0 0.0
        %4244 = vmatpush1.msra.mxu0 0.0
        %4245 = vmatprep.subr.mxu0 0.0
        %4246 = vmatpush1.msra.mxu0 0.0
        %4247 = vmatprep.subr.mxu0 0.0
        %4248 = vmatpush1.msra.mxu0 0.0
        %4249 = vmatprep.subr.mxu0 0.0
        %4250 = vmatpush1.msra.mxu0 0.0
        %4251 = vmatprep.subr.mxu0 0.0
        %4252 = vmatpush1.msra.mxu0 0.0
        %4253 = vmatprep.subr.mxu0 0.0
        %4254 = vmatpush1.msra.mxu0 0.0
        %4255 = vmatprep.subr.mxu0 0.0
        %4256 = vmatpush1.msra.mxu0 0.0
        %4257 = vmatprep.subr.mxu0 0.0
        %4258 = vmatpush1.msra.mxu0 0.0
        %4259 = vmatprep.subr.mxu0 0.0
        %4260 = vmatpush1.msra.mxu0 0.0
        %4261 = vmatprep.subr.mxu0 0.0
        %4262 = vmatpush1.msra.mxu0 0.0
        %4263 = vmatprep.subr.mxu0 0.0
        %4264 = vmatpush1.msra.mxu0 0.0
        %4265 = vmatprep.subr.mxu0 0.0
        %4266 = vmatpush1.msra.mxu0 0.0
        %4267 = vmatprep.subr.mxu0 0.0
        %4268 = vmatpush1.msra.mxu0 0.0
        %4269 = vmatprep.subr.mxu0 0.0
        %4270 = vmatpush1.msra.mxu0 0.0
        %4271 = vmatprep.subr.mxu0 0.0
        %4272 = vmatpush1.msra.mxu0 0.0
        %4273 = vmatprep.subr.mxu0 0.0
        %4274 = vmatpush1.msra.mxu0 0.0
        %4275 = vmatprep.subr.mxu0 0.0
        %4276 = vmatpush1.msra.mxu0 0.0
        %4277 = vmatprep.subr.mxu0 0.0
        %4278 = vmatpush1.msra.mxu0 0.0
        %4279 = vmatprep.subr.mxu0 0.0
        %4280 = vmatpush1.msra.mxu0 0.0
        %4281 = vmatprep.subr.mxu0 0.0
        %4282 = vmatpush1.msra.mxu0 0.0
        %4283 = vmatprep.subr.mxu0 0.0
        %4284 = vmatpush1.msra.mxu0 0.0
        %4285 = vmatprep.subr.mxu0 0.0
        %4286 = vmatpush1.msra.mxu0 0.0
        %4287 = vmatprep.subr.mxu0 0.0
        %4288 = vmatpush1.msra.mxu0 0.0
        %4289 = vmatprep.subr.mxu0 0.0
        %4290 = vmatpush1.msra.mxu0 0.0
        %4291 = vmatprep.mubr.f32.mxu0 0.0
        %4292 = vmatmul.mubr.f32.gmra.mrb[0].mxu0 %v4219
        %v4293 = vpop.f32.mrb[0].mxu0
        %v4294 = vadd.f32 0.0, %v4293
        %v4295 = vpop.f32.mrb[0].mxu0
        %v4296 = vadd.f32 0.0, %v4295
        %4297 = vdwg.mxu0
        %4298 = vmatprep.subr.mxu0 0.0
        %4299 = vmatpush1.msra.mxu0 %v4204
        %4300 = vmatprep.subr.mxu0 0.0
        %4301 = vmatpush1.msra.mxu0 %v4225
        %4302 = vmatprep.subr.mxu0 0.0
        %4303 = vmatpush1.msra.mxu0 0.0
        %4304 = vmatprep.subr.mxu0 0.0
        %4305 = vmatpush1.msra.mxu0 0.0
        %4306 = vmatprep.subr.mxu0 0.0
        %4307 = vmatpush1.msra.mxu0 0.0
        %4308 = vmatprep.subr.mxu0 0.0
        %4309 = vmatpush1.msra.mxu0 0.0
        %4310 = vmatprep.subr.mxu0 0.0
        %4311 = vmatpush1.msra.mxu0 0.0
        %4312 = vmatprep.subr.mxu0 0.0
        %4313 = vmatpush1.msra.mxu0 0.0
        %4314 = vmatprep.subr.mxu0 0.0
        %4315 = vmatpush1.msra.mxu0 0.0
        %4316 = vmatprep.subr.mxu0 0.0
        %4317 = vmatpush1.msra.mxu0 0.0
        %4318 = vmatprep.subr.mxu0 0.0
        %4319 = vmatpush1.msra.mxu0 0.0
        %4320 = vmatprep.subr.mxu0 0.0
        %4321 = vmatpush1.msra.mxu0 0.0
        %4322 = vmatprep.subr.mxu0 0.0
        %4323 = vmatpush1.msra.mxu0 0.0
        %4324 = vmatprep.subr.mxu0 0.0
        %4325 = vmatpush1.msra.mxu0 0.0
        %4326 = vmatprep.subr.mxu0 0.0
        %4327 = vmatpush1.msra.mxu0 0.0
        %4328 = vmatprep.subr.mxu0 0.0
        %4329 = vmatpush1.msra.mxu0 0.0
        %4330 = vmatprep.subr.mxu0 0.0
        %4331 = vmatpush1.msra.mxu0 0.0
        %4332 = vmatprep.subr.mxu0 0.0
        %4333 = vmatpush1.msra.mxu0 0.0
        %4334 = vmatprep.subr.mxu0 0.0
        %4335 = vmatpush1.msra.mxu0 0.0
        %4336 = vmatprep.subr.mxu0 0.0
        %4337 = vmatpush1.msra.mxu0 0.0
        %4338 = vmatprep.subr.mxu0 0.0
        %4339 = vmatpush1.msra.mxu0 0.0
        %4340 = vmatprep.subr.mxu0 0.0
        %4341 = vmatpush1.msra.mxu0 0.0
        %4342 = vmatprep.subr.mxu0 0.0
        %4343 = vmatpush1.msra.mxu0 0.0
        %4344 = vmatprep.subr.mxu0 0.0
        %4345 = vmatpush1.msra.mxu0 0.0
        %4346 = vmatprep.subr.mxu0 0.0
        %4347 = vmatpush1.msra.mxu0 0.0
        %4348 = vmatprep.subr.mxu0 0.0
        %4349 = vmatpush1.msra.mxu0 0.0
        %4350 = vmatprep.subr.mxu0 0.0
        %4351 = vmatpush1.msra.mxu0 0.0
        %4352 = vmatprep.subr.mxu0 0.0
        %4353 = vmatpush1.msra.mxu0 0.0
        %4354 = vmatprep.subr.mxu0 0.0
        %4355 = vmatpush1.msra.mxu0 0.0
        %4356 = vmatprep.subr.mxu0 0.0
        %4357 = vmatpush1.msra.mxu0 0.0
        %4358 = vmatprep.subr.mxu0 0.0
        %4359 = vmatpush1.msra.mxu0 0.0
        %4360 = vmatprep.subr.mxu0 0.0
        %4361 = vmatpush1.msra.mxu0 0.0
        %4362 = vmatprep.mubr.f32.mxu0 0.0
        %4363 = vmatmul.mubr.f32.gmra.mrb[0].mxu0 %v4219
        %v4364 = vpop.f32.mrb[0].mxu0
        %v4365 = vadd.f32 0.0, %v4364
        %v4366 = vpop.f32.mrb[0].mxu0
        %4367 = vdwg.mxu0
        %v4368 = vadd.f32 %v4194, %v4294
        %v4369 = vadd.f32 %v4195, %v4296
        %v4370 = vadd.f32 %v4196, %v4365
        %s4371 = scalar_lea.vmem %s4, 24
        %v4372 = vld [vmem:[%s4371] sm:$0xf]
        %4373 = vrot.lane.b32.xlu0 %v3340, 92
        %v4374 = vpop.permute.xlu0 %4373
        %4375 = vrot.lane.b32.xlu0 %v3341, 92
        %v4376 = vpop.permute.xlu0 %4375
        %4377 = vrot.lane.b32.xlu0 %v3342, 92
        %v4378 = vpop.permute.xlu0 %4377
        %4379 = vrot.lane.b32.xlu0 %v3343, 92
        %v4380 = vpop.permute.xlu0 %4379
        %4381 = vrot.lane.b32.xlu0 %v3344, 92
        %v4382 = vpop.permute.xlu0 %4381
        %4383 = vrot.lane.b32.xlu0 %v3345, 92
        %v4384 = vpop.permute.xlu0 %4383
        %v4385 = vsel %vm1327, %v4374, %v4376
        %v4386 = vsel %vm1327, %v4376, %v4378
        %v4387 = vsel %vm1327, %v4380, %v4382
        %v4388 = vsel %vm1327, %v4382, %v4384
        %v4393 = vsel %vm3374, %v4372, 0
        %v4395 = vsel %vm365, %v4387, 0
        %v4397 = vsel %vm365, %v4388, 0
        %v4399 = vsel %vm365, %v4384, 0
        %4401 = vmatprep.subr.mxu0 %v4386
        %4402 = vmatpush1.msra.mxu0 %v4385
        %4403 = vmatprep.subr.mxu0 %v4397
        %4404 = vmatpush1.msra.mxu0 %v4395
        %4405 = vmatprep.subr.mxu0 0.0
        %4406 = vmatpush1.msra.mxu0 0.0
        %4407 = vmatprep.subr.mxu0 0.0
        %4408 = vmatpush1.msra.mxu0 0.0
        %4409 = vmatprep.subr.mxu0 0.0
        %4410 = vmatpush1.msra.mxu0 0.0
        %4411 = vmatprep.subr.mxu0 0.0
        %4412 = vmatpush1.msra.mxu0 0.0
        %4413 = vmatprep.subr.mxu0 0.0
        %4414 = vmatpush1.msra.mxu0 0.0
        %4415 = vmatprep.subr.mxu0 0.0
        %4416 = vmatpush1.msra.mxu0 0.0
        %4417 = vmatprep.subr.mxu0 0.0
        %4418 = vmatpush1.msra.mxu0 0.0
        %4419 = vmatprep.subr.mxu0 0.0
        %4420 = vmatpush1.msra.mxu0 0.0
        %4421 = vmatprep.subr.mxu0 0.0
        %4422 = vmatpush1.msra.mxu0 0.0
        %4423 = vmatprep.subr.mxu0 0.0
        %4424 = vmatpush1.msra.mxu0 0.0
        %4425 = vmatprep.subr.mxu0 0.0
        %4426 = vmatpush1.msra.mxu0 0.0
        %4427 = vmatprep.subr.mxu0 0.0
        %4428 = vmatpush1.msra.mxu0 0.0
        %4429 = vmatprep.subr.mxu0 0.0
        %4430 = vmatpush1.msra.mxu0 0.0
        %4431 = vmatprep.subr.mxu0 0.0
        %4432 = vmatpush1.msra.mxu0 0.0
        %4433 = vmatprep.subr.mxu0 0.0
        %4434 = vmatpush1.msra.mxu0 0.0
        %4435 = vmatprep.subr.mxu0 0.0
        %4436 = vmatpush1.msra.mxu0 0.0
        %4437 = vmatprep.subr.mxu0 0.0
        %4438 = vmatpush1.msra.mxu0 0.0
        %4439 = vmatprep.subr.mxu0 0.0
        %4440 = vmatpush1.msra.mxu0 0.0
        %4441 = vmatprep.subr.mxu0 0.0
        %4442 = vmatpush1.msra.mxu0 0.0
        %4443 = vmatprep.subr.mxu0 0.0
        %4444 = vmatpush1.msra.mxu0 0.0
        %4445 = vmatprep.subr.mxu0 0.0
        %4446 = vmatpush1.msra.mxu0 0.0
        %4447 = vmatprep.subr.mxu0 0.0
        %4448 = vmatpush1.msra.mxu0 0.0
        %4449 = vmatprep.subr.mxu0 0.0
        %4450 = vmatpush1.msra.mxu0 0.0
        %4451 = vmatprep.subr.mxu0 0.0
        %4452 = vmatpush1.msra.mxu0 0.0
        %4453 = vmatprep.subr.mxu0 0.0
        %4454 = vmatpush1.msra.mxu0 0.0
        %4455 = vmatprep.subr.mxu0 0.0
        %4456 = vmatpush1.msra.mxu0 0.0
        %4457 = vmatprep.subr.mxu0 0.0
        %4458 = vmatpush1.msra.mxu0 0.0
        %4459 = vmatprep.subr.mxu0 0.0
        %4460 = vmatpush1.msra.mxu0 0.0
        %4461 = vmatprep.subr.mxu0 0.0
        %4462 = vmatpush1.msra.mxu0 0.0
        %4463 = vmatprep.subr.mxu0 0.0
        %4464 = vmatpush1.msra.mxu0 0.0
        %4465 = vmatprep.mubr.f32.mxu0 0.0
        %4466 = vmatmul.mubr.f32.gmra.mrb[0].mxu0 %v4393
        %v4467 = vpop.f32.mrb[0].mxu0
        %v4468 = vadd.f32 0.0, %v4467
        %v4469 = vpop.f32.mrb[0].mxu0
        %v4470 = vadd.f32 0.0, %v4469
        %4471 = vdwg.mxu0
        %4472 = vmatprep.subr.mxu0 0.0
        %4473 = vmatpush1.msra.mxu0 %v4378
        %4474 = vmatprep.subr.mxu0 0.0
        %4475 = vmatpush1.msra.mxu0 %v4399
        %4476 = vmatprep.subr.mxu0 0.0
        %4477 = vmatpush1.msra.mxu0 0.0
        %4478 = vmatprep.subr.mxu0 0.0
        %4479 = vmatpush1.msra.mxu0 0.0
        %4480 = vmatprep.subr.mxu0 0.0
        %4481 = vmatpush1.msra.mxu0 0.0
        %4482 = vmatprep.subr.mxu0 0.0
        %4483 = vmatpush1.msra.mxu0 0.0
        %4484 = vmatprep.subr.mxu0 0.0
        %4485 = vmatpush1.msra.mxu0 0.0
        %4486 = vmatprep.subr.mxu0 0.0
        %4487 = vmatpush1.msra.mxu0 0.0
        %4488 = vmatprep.subr.mxu0 0.0
        %4489 = vmatpush1.msra.mxu0 0.0
        %4490 = vmatprep.subr.mxu0 0.0
        %4491 = vmatpush1.msra.mxu0 0.0
        %4492 = vmatprep.subr.mxu0 0.0
        %4493 = vmatpush1.msra.mxu0 0.0
        %4494 = vmatprep.subr.mxu0 0.0
        %4495 = vmatpush1.msra.mxu0 0.0
        %4496 = vmatprep.subr.mxu0 0.0
        %4497 = vmatpush1.msra.mxu0 0.0
        %4498 = vmatprep.subr.mxu0 0.0
        %4499 = vmatpush1.msra.mxu0 0.0
        %4500 = vmatprep.subr.mxu0 0.0
        %4501 = vmatpush1.msra.mxu0 0.0
        %4502 = vmatprep.subr.mxu0 0.0
        %4503 = vmatpush1.msra.mxu0 0.0
        %4504 = vmatprep.subr.mxu0 0.0
        %4505 = vmatpush1.msra.mxu0 0.0
        %4506 = vmatprep.subr.mxu0 0.0
        %4507 = vmatpush1.msra.mxu0 0.0
        %4508 = vmatprep.subr.mxu0 0.0
        %4509 = vmatpush1.msra.mxu0 0.0
        %4510 = vmatprep.subr.mxu0 0.0
        %4511 = vmatpush1.msra.mxu0 0.0
        %4512 = vmatprep.subr.mxu0 0.0
        %4513 = vmatpush1.msra.mxu0 0.0
        %4514 = vmatprep.subr.mxu0 0.0
        %4515 = vmatpush1.msra.mxu0 0.0
        %4516 = vmatprep.subr.mxu0 0.0
        %4517 = vmatpush1.msra.mxu0 0.0
        %4518 = vmatprep.subr.mxu0 0.0
        %4519 = vmatpush1.msra.mxu0 0.0
        %4520 = vmatprep.subr.mxu0 0.0
        %4521 = vmatpush1.msra.mxu0 0.0
        %4522 = vmatprep.subr.mxu0 0.0
        %4523 = vmatpush1.msra.mxu0 0.0
        %4524 = vmatprep.subr.mxu0 0.0
        %4525 = vmatpush1.msra.mxu0 0.0
        %4526 = vmatprep.subr.mxu0 0.0
        %4527 = vmatpush1.msra.mxu0 0.0
        %4528 = vmatprep.subr.mxu0 0.0
        %4529 = vmatpush1.msra.mxu0 0.0
        %4530 = vmatprep.subr.mxu0 0.0
        %4531 = vmatpush1.msra.mxu0 0.0
        %4532 = vmatprep.subr.mxu0 0.0
        %4533 = vmatpush1.msra.mxu0 0.0
        %4534 = vmatprep.subr.mxu0 0.0
        %4535 = vmatpush1.msra.mxu0 0.0
        %4536 = vmatprep.mubr.f32.mxu0 0.0
        %4537 = vmatmul.mubr.f32.gmra.mrb[0].mxu0 %v4393
        %v4538 = vpop.f32.mrb[0].mxu0
        %v4539 = vadd.f32 0.0, %v4538
        %v4540 = vpop.f32.mrb[0].mxu0
        %4541 = vdwg.mxu0
        %v4542 = vadd.f32 %v4368, %v4468
        %v4543 = vadd.f32 %v4369, %v4470
        %v4544 = vadd.f32 %v4370, %v4539
        %s4545 = scalar_lea.vmem %s4, 28
        %v4546 = vld [vmem:[%s4545] sm:$0xf]
        %4547 = vrot.lane.b32.xlu0 %v3340, 91
        %v4548 = vpop.permute.xlu0 %4547
        %4549 = vrot.lane.b32.xlu0 %v3341, 91
        %v4550 = vpop.permute.xlu0 %4549
        %4551 = vrot.lane.b32.xlu0 %v3342, 91
        %v4552 = vpop.permute.xlu0 %4551
        %4553 = vrot.lane.b32.xlu0 %v3343, 91
        %v4554 = vpop.permute.xlu0 %4553
        %4555 = vrot.lane.b32.xlu0 %v3344, 91
        %v4556 = vpop.permute.xlu0 %4555
        %4557 = vrot.lane.b32.xlu0 %v3345, 91
        %v4558 = vpop.permute.xlu0 %4557
        %v4559 = vsel %vm1491, %v4548, %v4550
        %v4560 = vsel %vm1491, %v4550, %v4552
        %v4561 = vsel %vm1491, %v4554, %v4556
        %v4562 = vsel %vm1491, %v4556, %v4558
        %v4567 = vsel %vm3374, %v4546, 0
        %v4569 = vsel %vm365, %v4561, 0
        %v4571 = vsel %vm365, %v4562, 0
        %v4573 = vsel %vm365, %v4558, 0
        %4575 = vmatprep.subr.mxu0 %v4560
        %4576 = vmatpush1.msra.mxu0 %v4559
        %4577 = vmatprep.subr.mxu0 %v4571
        %4578 = vmatpush1.msra.mxu0 %v4569
        %4579 = vmatprep.subr.mxu0 0.0
        %4580 = vmatpush1.msra.mxu0 0.0
        %4581 = vmatprep.subr.mxu0 0.0
        %4582 = vmatpush1.msra.mxu0 0.0
        %4583 = vmatprep.subr.mxu0 0.0
        %4584 = vmatpush1.msra.mxu0 0.0
        %4585 = vmatprep.subr.mxu0 0.0
        %4586 = vmatpush1.msra.mxu0 0.0
        %4587 = vmatprep.subr.mxu0 0.0
        %4588 = vmatpush1.msra.mxu0 0.0
        %4589 = vmatprep.subr.mxu0 0.0
        %4590 = vmatpush1.msra.mxu0 0.0
        %4591 = vmatprep.subr.mxu0 0.0
        %4592 = vmatpush1.msra.mxu0 0.0
        %4593 = vmatprep.subr.mxu0 0.0
        %4594 = vmatpush1.msra.mxu0 0.0
        %4595 = vmatprep.subr.mxu0 0.0
        %4596 = vmatpush1.msra.mxu0 0.0
        %4597 = vmatprep.subr.mxu0 0.0
        %4598 = vmatpush1.msra.mxu0 0.0
        %4599 = vmatprep.subr.mxu0 0.0
        %4600 = vmatpush1.msra.mxu0 0.0
        %4601 = vmatprep.subr.mxu0 0.0
        %4602 = vmatpush1.msra.mxu0 0.0
        %4603 = vmatprep.subr.mxu0 0.0
        %4604 = vmatpush1.msra.mxu0 0.0
        %4605 = vmatprep.subr.mxu0 0.0
        %4606 = vmatpush1.msra.mxu0 0.0
        %4607 = vmatprep.subr.mxu0 0.0
        %4608 = vmatpush1.msra.mxu0 0.0
        %4609 = vmatprep.subr.mxu0 0.0
        %4610 = vmatpush1.msra.mxu0 0.0
        %4611 = vmatprep.subr.mxu0 0.0
        %4612 = vmatpush1.msra.mxu0 0.0
        %4613 = vmatprep.subr.mxu0 0.0
        %4614 = vmatpush1.msra.mxu0 0.0
        %4615 = vmatprep.subr.mxu0 0.0
        %4616 = vmatpush1.msra.mxu0 0.0
        %4617 = vmatprep.subr.mxu0 0.0
        %4618 = vmatpush1.msra.mxu0 0.0
        %4619 = vmatprep.subr.mxu0 0.0
        %4620 = vmatpush1.msra.mxu0 0.0
        %4621 = vmatprep.subr.mxu0 0.0
        %4622 = vmatpush1.msra.mxu0 0.0
        %4623 = vmatprep.subr.mxu0 0.0
        %4624 = vmatpush1.msra.mxu0 0.0
        %4625 = vmatprep.subr.mxu0 0.0
        %4626 = vmatpush1.msra.mxu0 0.0
        %4627 = vmatprep.subr.mxu0 0.0
        %4628 = vmatpush1.msra.mxu0 0.0
        %4629 = vmatprep.subr.mxu0 0.0
        %4630 = vmatpush1.msra.mxu0 0.0
        %4631 = vmatprep.subr.mxu0 0.0
        %4632 = vmatpush1.msra.mxu0 0.0
        %4633 = vmatprep.subr.mxu0 0.0
        %4634 = vmatpush1.msra.mxu0 0.0
        %4635 = vmatprep.subr.mxu0 0.0
        %4636 = vmatpush1.msra.mxu0 0.0
        %4637 = vmatprep.subr.mxu0 0.0
        %4638 = vmatpush1.msra.mxu0 0.0
        %4639 = vmatprep.mubr.f32.mxu0 0.0
        %4640 = vmatmul.mubr.f32.gmra.mrb[0].mxu0 %v4567
        %v4641 = vpop.f32.mrb[0].mxu0
        %v4642 = vadd.f32 0.0, %v4641
        %v4643 = vpop.f32.mrb[0].mxu0
        %v4644 = vadd.f32 0.0, %v4643
        %4645 = vdwg.mxu0
        %4646 = vmatprep.subr.mxu0 0.0
        %4647 = vmatpush1.msra.mxu0 %v4552
        %4648 = vmatprep.subr.mxu0 0.0
        %4649 = vmatpush1.msra.mxu0 %v4573
        %4650 = vmatprep.subr.mxu0 0.0
        %4651 = vmatpush1.msra.mxu0 0.0
        %4652 = vmatprep.subr.mxu0 0.0
        %4653 = vmatpush1.msra.mxu0 0.0
        %4654 = vmatprep.subr.mxu0 0.0
        %4655 = vmatpush1.msra.mxu0 0.0
        %4656 = vmatprep.subr.mxu0 0.0
        %4657 = vmatpush1.msra.mxu0 0.0
        %4658 = vmatprep.subr.mxu0 0.0
        %4659 = vmatpush1.msra.mxu0 0.0
        %4660 = vmatprep.subr.mxu0 0.0
        %4661 = vmatpush1.msra.mxu0 0.0
        %4662 = vmatprep.subr.mxu0 0.0
        %4663 = vmatpush1.msra.mxu0 0.0
        %4664 = vmatprep.subr.mxu0 0.0
        %4665 = vmatpush1.msra.mxu0 0.0
        %4666 = vmatprep.subr.mxu0 0.0
        %4667 = vmatpush1.msra.mxu0 0.0
        %4668 = vmatprep.subr.mxu0 0.0
        %4669 = vmatpush1.msra.mxu0 0.0
        %4670 = vmatprep.subr.mxu0 0.0
        %4671 = vmatpush1.msra.mxu0 0.0
        %4672 = vmatprep.subr.mxu0 0.0
        %4673 = vmatpush1.msra.mxu0 0.0
        %4674 = vmatprep.subr.mxu0 0.0
        %4675 = vmatpush1.msra.mxu0 0.0
        %4676 = vmatprep.subr.mxu0 0.0
        %4677 = vmatpush1.msra.mxu0 0.0
        %4678 = vmatprep.subr.mxu0 0.0
        %4679 = vmatpush1.msra.mxu0 0.0
        %4680 = vmatprep.subr.mxu0 0.0
        %4681 = vmatpush1.msra.mxu0 0.0
        %4682 = vmatprep.subr.mxu0 0.0
        %4683 = vmatpush1.msra.mxu0 0.0
        %4684 = vmatprep.subr.mxu0 0.0
        %4685 = vmatpush1.msra.mxu0 0.0
        %4686 = vmatprep.subr.mxu0 0.0
        %4687 = vmatpush1.msra.mxu0 0.0
        %4688 = vmatprep.subr.mxu0 0.0
        %4689 = vmatpush1.msra.mxu0 0.0
        %4690 = vmatprep.subr.mxu0 0.0
        %4691 = vmatpush1.msra.mxu0 0.0
        %4692 = vmatprep.subr.mxu0 0.0
        %4693 = vmatpush1.msra.mxu0 0.0
        %4694 = vmatprep.subr.mxu0 0.0
        %4695 = vmatpush1.msra.mxu0 0.0
        %4696 = vmatprep.subr.mxu0 0.0
        %4697 = vmatpush1.msra.mxu0 0.0
        %4698 = vmatprep.subr.mxu0 0.0
        %4699 = vmatpush1.msra.mxu0 0.0
        %4700 = vmatprep.subr.mxu0 0.0
        %4701 = vmatpush1.msra.mxu0 0.0
        %4702 = vmatprep.subr.mxu0 0.0
        %4703 = vmatpush1.msra.mxu0 0.0
        %4704 = vmatprep.subr.mxu0 0.0
        %4705 = vmatpush1.msra.mxu0 0.0
        %4706 = vmatprep.subr.mxu0 0.0
        %4707 = vmatpush1.msra.mxu0 0.0
        %4708 = vmatprep.subr.mxu0 0.0
        %4709 = vmatpush1.msra.mxu0 0.0
        %4710 = vmatprep.mubr.f32.mxu0 0.0
        %4711 = vmatmul.mubr.f32.gmra.mrb[0].mxu0 %v4567
        %v4712 = vpop.f32.mrb[0].mxu0
        %v4713 = vadd.f32 0.0, %v4712
        %v4714 = vpop.f32.mrb[0].mxu0
        %4715 = vdwg.mxu0
        %v4716 = vadd.f32 %v4542, %v4642
        %v4717 = vadd.f32 %v4543, %v4644
        %v4718 = vadd.f32 %v4544, %v4713
        %s4719 = scalar_lea.vmem %s4, 32
        %v4720 = vld [vmem:[%s4719] sm:$0xf]
        %4721 = vrot.lane.b32.xlu0 %v3340, 90
        %v4722 = vpop.permute.xlu0 %4721
        %4723 = vrot.lane.b32.xlu0 %v3341, 90
        %v4724 = vpop.permute.xlu0 %4723
        %4725 = vrot.lane.b32.xlu0 %v3342, 90
        %v4726 = vpop.permute.xlu0 %4725
        %4727 = vrot.lane.b32.xlu0 %v3343, 90
        %v4728 = vpop.permute.xlu0 %4727
        %4729 = vrot.lane.b32.xlu0 %v3344, 90
        %v4730 = vpop.permute.xlu0 %4729
        %4731 = vrot.lane.b32.xlu0 %v3345, 90
        %v4732 = vpop.permute.xlu0 %4731
        %v4733 = vsel %vm1655, %v4722, %v4724
        %v4734 = vsel %vm1655, %v4724, %v4726
        %v4735 = vsel %vm1655, %v4728, %v4730
        %v4736 = vsel %vm1655, %v4730, %v4732
        %v4741 = vsel %vm3374, %v4720, 0
        %v4743 = vsel %vm365, %v4735, 0
        %v4745 = vsel %vm365, %v4736, 0
        %v4747 = vsel %vm365, %v4732, 0
        %4749 = vmatprep.subr.mxu0 %v4734
        %4750 = vmatpush1.msra.mxu0 %v4733
        %4751 = vmatprep.subr.mxu0 %v4745
        %4752 = vmatpush1.msra.mxu0 %v4743
        %4753 = vmatprep.subr.mxu0 0.0
        %4754 = vmatpush1.msra.mxu0 0.0
        %4755 = vmatprep.subr.mxu0 0.0
        %4756 = vmatpush1.msra.mxu0 0.0
        %4757 = vmatprep.subr.mxu0 0.0
        %4758 = vmatpush1.msra.mxu0 0.0
        %4759 = vmatprep.subr.mxu0 0.0
        %4760 = vmatpush1.msra.mxu0 0.0
        %4761 = vmatprep.subr.mxu0 0.0
        %4762 = vmatpush1.msra.mxu0 0.0
        %4763 = vmatprep.subr.mxu0 0.0
        %4764 = vmatpush1.msra.mxu0 0.0
        %4765 = vmatprep.subr.mxu0 0.0
        %4766 = vmatpush1.msra.mxu0 0.0
        %4767 = vmatprep.subr.mxu0 0.0
        %4768 = vmatpush1.msra.mxu0 0.0
        %4769 = vmatprep.subr.mxu0 0.0
        %4770 = vmatpush1.msra.mxu0 0.0
        %4771 = vmatprep.subr.mxu0 0.0
        %4772 = vmatpush1.msra.mxu0 0.0
        %4773 = vmatprep.subr.mxu0 0.0
        %4774 = vmatpush1.msra.mxu0 0.0
        %4775 = vmatprep.subr.mxu0 0.0
        %4776 = vmatpush1.msra.mxu0 0.0
        %4777 = vmatprep.subr.mxu0 0.0
        %4778 = vmatpush1.msra.mxu0 0.0
        %4779 = vmatprep.subr.mxu0 0.0
        %4780 = vmatpush1.msra.mxu0 0.0
        %4781 = vmatprep.subr.mxu0 0.0
        %4782 = vmatpush1.msra.mxu0 0.0
        %4783 = vmatprep.subr.mxu0 0.0
        %4784 = vmatpush1.msra.mxu0 0.0
        %4785 = vmatprep.subr.mxu0 0.0
        %4786 = vmatpush1.msra.mxu0 0.0
        %4787 = vmatprep.subr.mxu0 0.0
        %4788 = vmatpush1.msra.mxu0 0.0
        %4789 = vmatprep.subr.mxu0 0.0
        %4790 = vmatpush1.msra.mxu0 0.0
        %4791 = vmatprep.subr.mxu0 0.0
        %4792 = vmatpush1.msra.mxu0 0.0
        %4793 = vmatprep.subr.mxu0 0.0
        %4794 = vmatpush1.msra.mxu0 0.0
        %4795 = vmatprep.subr.mxu0 0.0
        %4796 = vmatpush1.msra.mxu0 0.0
        %4797 = vmatprep.subr.mxu0 0.0
        %4798 = vmatpush1.msra.mxu0 0.0
        %4799 = vmatprep.subr.mxu0 0.0
        %4800 = vmatpush1.msra.mxu0 0.0
        %4801 = vmatprep.subr.mxu0 0.0
        %4802 = vmatpush1.msra.mxu0 0.0
        %4803 = vmatprep.subr.mxu0 0.0
        %4804 = vmatpush1.msra.mxu0 0.0
        %4805 = vmatprep.subr.mxu0 0.0
        %4806 = vmatpush1.msra.mxu0 0.0
        %4807 = vmatprep.subr.mxu0 0.0
        %4808 = vmatpush1.msra.mxu0 0.0
        %4809 = vmatprep.subr.mxu0 0.0
        %4810 = vmatpush1.msra.mxu0 0.0
        %4811 = vmatprep.subr.mxu0 0.0
        %4812 = vmatpush1.msra.mxu0 0.0
        %4813 = vmatprep.mubr.f32.mxu0 0.0
        %4814 = vmatmul.mubr.f32.gmra.mrb[0].mxu0 %v4741
        %v4815 = vpop.f32.mrb[0].mxu0
        %v4816 = vadd.f32 0.0, %v4815
        %v4817 = vpop.f32.mrb[0].mxu0
        %v4818 = vadd.f32 0.0, %v4817
        %4819 = vdwg.mxu0
        %4820 = vmatprep.subr.mxu0 0.0
        %4821 = vmatpush1.msra.mxu0 %v4726
        %4822 = vmatprep.subr.mxu0 0.0
        %4823 = vmatpush1.msra.mxu0 %v4747
        %4824 = vmatprep.subr.mxu0 0.0
        %4825 = vmatpush1.msra.mxu0 0.0
        %4826 = vmatprep.subr.mxu0 0.0
        %4827 = vmatpush1.msra.mxu0 0.0
        %4828 = vmatprep.subr.mxu0 0.0
        %4829 = vmatpush1.msra.mxu0 0.0
        %4830 = vmatprep.subr.mxu0 0.0
        %4831 = vmatpush1.msra.mxu0 0.0
        %4832 = vmatprep.subr.mxu0 0.0
        %4833 = vmatpush1.msra.mxu0 0.0
        %4834 = vmatprep.subr.mxu0 0.0
        %4835 = vmatpush1.msra.mxu0 0.0
        %4836 = vmatprep.subr.mxu0 0.0
        %4837 = vmatpush1.msra.mxu0 0.0
        %4838 = vmatprep.subr.mxu0 0.0
        %4839 = vmatpush1.msra.mxu0 0.0
        %4840 = vmatprep.subr.mxu0 0.0
        %4841 = vmatpush1.msra.mxu0 0.0
        %4842 = vmatprep.subr.mxu0 0.0
        %4843 = vmatpush1.msra.mxu0 0.0
        %4844 = vmatprep.subr.mxu0 0.0
        %4845 = vmatpush1.msra.mxu0 0.0
        %4846 = vmatprep.subr.mxu0 0.0
        %4847 = vmatpush1.msra.mxu0 0.0
        %4848 = vmatprep.subr.mxu0 0.0
        %4849 = vmatpush1.msra.mxu0 0.0
        %4850 = vmatprep.subr.mxu0 0.0
        %4851 = vmatpush1.msra.mxu0 0.0
        %4852 = vmatprep.subr.mxu0 0.0
        %4853 = vmatpush1.msra.mxu0 0.0
        %4854 = vmatprep.subr.mxu0 0.0
        %4855 = vmatpush1.msra.mxu0 0.0
        %4856 = vmatprep.subr.mxu0 0.0
        %4857 = vmatpush1.msra.mxu0 0.0
        %4858 = vmatprep.subr.mxu0 0.0
        %4859 = vmatpush1.msra.mxu0 0.0
        %4860 = vmatprep.subr.mxu0 0.0
        %4861 = vmatpush1.msra.mxu0 0.0
        %4862 = vmatprep.subr.mxu0 0.0
        %4863 = vmatpush1.msra.mxu0 0.0
        %4864 = vmatprep.subr.mxu0 0.0
        %4865 = vmatpush1.msra.mxu0 0.0
        %4866 = vmatprep.subr.mxu0 0.0
        %4867 = vmatpush1.msra.mxu0 0.0
        %4868 = vmatprep.subr.mxu0 0.0
        %4869 = vmatpush1.msra.mxu0 0.0
        %4870 = vmatprep.subr.mxu0 0.0
        %4871 = vmatpush1.msra.mxu0 0.0
        %4872 = vmatprep.subr.mxu0 0.0
        %4873 = vmatpush1.msra.mxu0 0.0
        %4874 = vmatprep.subr.mxu0 0.0
        %4875 = vmatpush1.msra.mxu0 0.0
        %4876 = vmatprep.subr.mxu0 0.0
        %4877 = vmatpush1.msra.mxu0 0.0
        %4878 = vmatprep.subr.mxu0 0.0
        %4879 = vmatpush1.msra.mxu0 0.0
        %4880 = vmatprep.subr.mxu0 0.0
        %4881 = vmatpush1.msra.mxu0 0.0
        %4882 = vmatprep.subr.mxu0 0.0
        %4883 = vmatpush1.msra.mxu0 0.0
        %4884 = vmatprep.mubr.f32.mxu0 0.0
        %4885 = vmatmul.mubr.f32.gmra.mrb[0].mxu0 %v4741
        %v4886 = vpop.f32.mrb[0].mxu0
        %v4887 = vadd.f32 0.0, %v4886
        %v4888 = vpop.f32.mrb[0].mxu0
        %4889 = vdwg.mxu0
        %v4890 = vadd.f32 %v4716, %v4816
        %v4891 = vadd.f32 %v4717, %v4818
        %v4892 = vadd.f32 %v4718, %v4887
        %s4893 = scalar_lea.vmem %s7, 8
        %v4894 = vld [vmem:[%s4893] sm:$0xf]
        %4896 = vset.pattern.permute.xlu0 0
        %4897 = vperm.xlu0 %4896, %v4894
        %v4898 = vpop.permute.xlu0 %4897
        %v4900 = vadd.f32 %v4890, %v4898
        %v4901 = vadd.f32 %v4891, %v4898
        %v4902 = vadd.f32 %v4892, %v4898
        %vm4903 = vcmp.gt.f32.partialorder %v4900, 0.0
        %vm4904 = vcmp.gt.f32.partialorder %v4901, 0.0
        %vm4905 = vcmp.gt.f32.partialorder %v4902, 0.0
        %v4906 = vmul.f32 %v4900, 0.01
        %v4907 = vmul.f32 %v4901, 0.01
        %v4908 = vmul.f32 %v4902, 0.01
        %v4909 = vsel %vm4903, %v4900, %v4906
        %v4910 = vsel %vm4904, %v4901, %v4907
        %v4911 = vsel %vm4905, %v4902, %v4908
        %v4912 = vsel %vm1842, %v4909, 0.0
        %v4913 = vsel %vm1843, %v4910, 0.0
        %v4914 = vsel %vm1844, %v4911, 0.0
        %v4918 = vrot.slane %v4912, 4
        %v4919 = vrot.slane %v4913, 4
        %v4920 = vrot.slane %v4914, 4
        %4921 = vrot.lane.b32.xlu0 %v4918, 19
        %v4922 = vpop.permute.xlu0 %4921
        %4923 = vrot.lane.b32.xlu0 %v4919, 19
        %v4924 = vpop.permute.xlu0 %4923
        %4925 = vrot.lane.b32.xlu0 %v4920, 19
        %v4926 = vpop.permute.xlu0 %4925
        %v4927 = vsel %vm322, %v4922, %v4924
        %v4928 = vsel %vm322, %v4924, %v4926
        %4932 = vst.msk [vmem:[#allocation2 + $0x18] sm:$0xf0] %vm1865, %v4922
        %4933 = vst [vmem:[#allocation2 + $0x20] sm:$0xf0] %v4927
        %4934 = vst.msk [vmem:[#allocation2 + $0x28] sm:$0xf0] %vm1868, %v4928
        %v4935 = vld [vmem:[#allocation2] sm:$0xff]
        %v4936 = vld [vmem:[#allocation2 + $0x8] sm:$0xff]
        %v4937 = vld [vmem:[#allocation2 + $0x10] sm:$0xff]
        %v4938 = vld [vmem:[#allocation2 + $0x18] sm:$0xff]
        %v4939 = vld [vmem:[#allocation2 + $0x20] sm:$0xff]
        %v4940 = vld [vmem:[#allocation2 + $0x28] sm:$0xff]
        %v4941 = vld [vmem:[%s5] sm:$0xf]
        %s4942 = scalar_lea.vmem %s5, 4
        %v4943 = vld [vmem:[%s4942] sm:$0xf]
        %4950 = vrot.lane.b32.xlu0 %v4935, 127
        %v4951 = vpop.permute.xlu0 %4950
        %4952 = vrot.lane.b32.xlu0 %v4936, 127
        %v4953 = vpop.permute.xlu0 %4952
        %4954 = vrot.lane.b32.xlu0 %v4937, 127
        %v4955 = vpop.permute.xlu0 %4954
        %4956 = vrot.lane.b32.xlu0 %v4938, 127
        %v4957 = vpop.permute.xlu0 %4956
        %4958 = vrot.lane.b32.xlu0 %v4939, 127
        %v4959 = vpop.permute.xlu0 %4958
        %4960 = vrot.lane.b32.xlu0 %v4940, 127
        %v4961 = vpop.permute.xlu0 %4960
        %v4962 = vsel %vm358, %v4951, %v4953
        %v4963 = vsel %vm358, %v4953, %v4955
        %v4964 = vsel %vm358, %v4957, %v4959
        %v4965 = vsel %vm358, %v4959, %v4961
        %vm4972 = vcmask 130048
        %v4974 = vsel %vm4972, %v4943, 0
        %4976 = vmatprep.subr.mxu0 %v4963
        %4977 = vmatpush1.msra.mxu0 %v4962
        %4978 = vmatprep.subr.mxu0 %v4965
        %4979 = vmatpush1.msra.mxu0 %v4964
        %4980 = vmatprep.subr.mxu0 0.0
        %4981 = vmatpush1.msra.mxu0 0.0
        %4982 = vmatprep.subr.mxu0 0.0
        %4983 = vmatpush1.msra.mxu0 0.0
        %4984 = vmatprep.subr.mxu0 0.0
        %4985 = vmatpush1.msra.mxu0 0.0
        %4986 = vmatprep.subr.mxu0 0.0
        %4987 = vmatpush1.msra.mxu0 0.0
        %4988 = vmatprep.subr.mxu0 0.0
        %4989 = vmatpush1.msra.mxu0 0.0
        %4990 = vmatprep.subr.mxu0 0.0
        %4991 = vmatpush1.msra.mxu0 0.0
        %4992 = vmatprep.subr.mxu0 0.0
        %4993 = vmatpush1.msra.mxu0 0.0
        %4994 = vmatprep.subr.mxu0 0.0
        %4995 = vmatpush1.msra.mxu0 0.0
        %4996 = vmatprep.subr.mxu0 0.0
        %4997 = vmatpush1.msra.mxu0 0.0
        %4998 = vmatprep.subr.mxu0 0.0
        %4999 = vmatpush1.msra.mxu0 0.0
        %5000 = vmatprep.subr.mxu0 0.0
        %5001 = vmatpush1.msra.mxu0 0.0
        %5002 = vmatprep.subr.mxu0 0.0
        %5003 = vmatpush1.msra.mxu0 0.0
        %5004 = vmatprep.subr.mxu0 0.0
        %5005 = vmatpush1.msra.mxu0 0.0
        %5006 = vmatprep.subr.mxu0 0.0
        %5007 = vmatpush1.msra.mxu0 0.0
        %5008 = vmatprep.subr.mxu0 0.0
        %5009 = vmatpush1.msra.mxu0 0.0
        %5010 = vmatprep.subr.mxu0 0.0
        %5011 = vmatpush1.msra.mxu0 0.0
        %5012 = vmatprep.subr.mxu0 0.0
        %5013 = vmatpush1.msra.mxu0 0.0
        %5014 = vmatprep.subr.mxu0 0.0
        %5015 = vmatpush1.msra.mxu0 0.0
        %5016 = vmatprep.subr.mxu0 0.0
        %5017 = vmatpush1.msra.mxu0 0.0
        %5018 = vmatprep.subr.mxu0 0.0
        %5019 = vmatpush1.msra.mxu0 0.0
        %5020 = vmatprep.subr.mxu0 0.0
        %5021 = vmatpush1.msra.mxu0 0.0
        %5022 = vmatprep.subr.mxu0 0.0
        %5023 = vmatpush1.msra.mxu0 0.0
        %5024 = vmatprep.subr.mxu0 0.0
        %5025 = vmatpush1.msra.mxu0 0.0
        %5026 = vmatprep.subr.mxu0 0.0
        %5027 = vmatpush1.msra.mxu0 0.0
        %5028 = vmatprep.subr.mxu0 0.0
        %5029 = vmatpush1.msra.mxu0 0.0
        %5030 = vmatprep.subr.mxu0 0.0
        %5031 = vmatpush1.msra.mxu0 0.0
        %5032 = vmatprep.subr.mxu0 0.0
        %5033 = vmatpush1.msra.mxu0 0.0
        %5034 = vmatprep.subr.mxu0 0.0
        %5035 = vmatpush1.msra.mxu0 0.0
        %5036 = vmatprep.subr.mxu0 0.0
        %5037 = vmatpush1.msra.mxu0 0.0
        %5038 = vmatprep.subr.mxu0 0.0
        %5039 = vmatpush1.msra.mxu0 0.0
        %5040 = vmatprep.mubr.f32.mxu0 0.0
        %5041 = vmatmul.mubr.f32.gmra.mrb[0].mxu0 %v4974
        %v5042 = vpop.f32.mrb[0].mxu0
        %v5043 = vadd.f32 0.0, %v5042
        %v5044 = vpop.f32.mrb[0].mxu0
        %v5045 = vadd.f32 0.0, %v5044
        %5046 = vdwg.mxu0
        %5047 = vmatprep.subr.mxu0 0.0
        %5048 = vmatpush1.msra.mxu0 %v4955
        %5049 = vmatprep.subr.mxu0 0.0
        %5050 = vmatpush1.msra.mxu0 %v4961
        %5051 = vmatprep.subr.mxu0 0.0
        %5052 = vmatpush1.msra.mxu0 0.0
        %5053 = vmatprep.subr.mxu0 0.0
        %5054 = vmatpush1.msra.mxu0 0.0
        %5055 = vmatprep.subr.mxu0 0.0
        %5056 = vmatpush1.msra.mxu0 0.0
        %5057 = vmatprep.subr.mxu0 0.0
        %5058 = vmatpush1.msra.mxu0 0.0
        %5059 = vmatprep.subr.mxu0 0.0
        %5060 = vmatpush1.msra.mxu0 0.0
        %5061 = vmatprep.subr.mxu0 0.0
        %5062 = vmatpush1.msra.mxu0 0.0
        %5063 = vmatprep.subr.mxu0 0.0
        %5064 = vmatpush1.msra.mxu0 0.0
        %5065 = vmatprep.subr.mxu0 0.0
        %5066 = vmatpush1.msra.mxu0 0.0
        %5067 = vmatprep.subr.mxu0 0.0
        %5068 = vmatpush1.msra.mxu0 0.0
        %5069 = vmatprep.subr.mxu0 0.0
        %5070 = vmatpush1.msra.mxu0 0.0
        %5071 = vmatprep.subr.mxu0 0.0
        %5072 = vmatpush1.msra.mxu0 0.0
        %5073 = vmatprep.subr.mxu0 0.0
        %5074 = vmatpush1.msra.mxu0 0.0
        %5075 = vmatprep.subr.mxu0 0.0
        %5076 = vmatpush1.msra.mxu0 0.0
        %5077 = vmatprep.subr.mxu0 0.0
        %5078 = vmatpush1.msra.mxu0 0.0
        %5079 = vmatprep.subr.mxu0 0.0
        %5080 = vmatpush1.msra.mxu0 0.0
        %5081 = vmatprep.subr.mxu0 0.0
        %5082 = vmatpush1.msra.mxu0 0.0
        %5083 = vmatprep.subr.mxu0 0.0
        %5084 = vmatpush1.msra.mxu0 0.0
        %5085 = vmatprep.subr.mxu0 0.0
        %5086 = vmatpush1.msra.mxu0 0.0
        %5087 = vmatprep.subr.mxu0 0.0
        %5088 = vmatpush1.msra.mxu0 0.0
        %5089 = vmatprep.subr.mxu0 0.0
        %5090 = vmatpush1.msra.mxu0 0.0
        %5091 = vmatprep.subr.mxu0 0.0
        %5092 = vmatpush1.msra.mxu0 0.0
        %5093 = vmatprep.subr.mxu0 0.0
        %5094 = vmatpush1.msra.mxu0 0.0
        %5095 = vmatprep.subr.mxu0 0.0
        %5096 = vmatpush1.msra.mxu0 0.0
        %5097 = vmatprep.subr.mxu0 0.0
        %5098 = vmatpush1.msra.mxu0 0.0
        %5099 = vmatprep.subr.mxu0 0.0
        %5100 = vmatpush1.msra.mxu0 0.0
        %5101 = vmatprep.subr.mxu0 0.0
        %5102 = vmatpush1.msra.mxu0 0.0
        %5103 = vmatprep.subr.mxu0 0.0
        %5104 = vmatpush1.msra.mxu0 0.0
        %5105 = vmatprep.subr.mxu0 0.0
        %5106 = vmatpush1.msra.mxu0 0.0
        %5107 = vmatprep.subr.mxu0 0.0
        %5108 = vmatpush1.msra.mxu0 0.0
        %5109 = vmatprep.subr.mxu0 0.0
        %5110 = vmatpush1.msra.mxu0 0.0
        %5111 = vmatprep.mubr.f32.mxu0 0.0
        %5112 = vmatmul.mubr.f32.gmra.mrb[0].mxu0 %v4974
        %v5113 = vpop.f32.mrb[0].mxu0
        %v5114 = vadd.f32 0.0, %v5113
        %v5115 = vpop.f32.mrb[0].mxu0
        %5116 = vdwg.mxu0
        %v5118 = vsel %vm4972, %v4941, 0
        %5120 = vmatprep.subr.mxu0 %v4936
        %5121 = vmatpush1.msra.mxu0 %v4935
        %5122 = vmatprep.subr.mxu0 %v4939
        %5123 = vmatpush1.msra.mxu0 %v4938
        %5124 = vmatprep.subr.mxu0 0.0
        %5125 = vmatpush1.msra.mxu0 0.0
        %5126 = vmatprep.subr.mxu0 0.0
        %5127 = vmatpush1.msra.mxu0 0.0
        %5128 = vmatprep.subr.mxu0 0.0
        %5129 = vmatpush1.msra.mxu0 0.0
        %5130 = vmatprep.subr.mxu0 0.0
        %5131 = vmatpush1.msra.mxu0 0.0
        %5132 = vmatprep.subr.mxu0 0.0
        %5133 = vmatpush1.msra.mxu0 0.0
        %5134 = vmatprep.subr.mxu0 0.0
        %5135 = vmatpush1.msra.mxu0 0.0
        %5136 = vmatprep.subr.mxu0 0.0
        %5137 = vmatpush1.msra.mxu0 0.0
        %5138 = vmatprep.subr.mxu0 0.0
        %5139 = vmatpush1.msra.mxu0 0.0
        %5140 = vmatprep.subr.mxu0 0.0
        %5141 = vmatpush1.msra.mxu0 0.0
        %5142 = vmatprep.subr.mxu0 0.0
        %5143 = vmatpush1.msra.mxu0 0.0
        %5144 = vmatprep.subr.mxu0 0.0
        %5145 = vmatpush1.msra.mxu0 0.0
        %5146 = vmatprep.subr.mxu0 0.0
        %5147 = vmatpush1.msra.mxu0 0.0
        %5148 = vmatprep.subr.mxu0 0.0
        %5149 = vmatpush1.msra.mxu0 0.0
        %5150 = vmatprep.subr.mxu0 0.0
        %5151 = vmatpush1.msra.mxu0 0.0
        %5152 = vmatprep.subr.mxu0 0.0
        %5153 = vmatpush1.msra.mxu0 0.0
        %5154 = vmatprep.subr.mxu0 0.0
        %5155 = vmatpush1.msra.mxu0 0.0
        %5156 = vmatprep.subr.mxu0 0.0
        %5157 = vmatpush1.msra.mxu0 0.0
        %5158 = vmatprep.subr.mxu0 0.0
        %5159 = vmatpush1.msra.mxu0 0.0
        %5160 = vmatprep.subr.mxu0 0.0
        %5161 = vmatpush1.msra.mxu0 0.0
        %5162 = vmatprep.subr.mxu0 0.0
        %5163 = vmatpush1.msra.mxu0 0.0
        %5164 = vmatprep.subr.mxu0 0.0
        %5165 = vmatpush1.msra.mxu0 0.0
        %5166 = vmatprep.subr.mxu0 0.0
        %5167 = vmatpush1.msra.mxu0 0.0
        %5168 = vmatprep.subr.mxu0 0.0
        %5169 = vmatpush1.msra.mxu0 0.0
        %5170 = vmatprep.subr.mxu0 0.0
        %5171 = vmatpush1.msra.mxu0 0.0
        %5172 = vmatprep.subr.mxu0 0.0
        %5173 = vmatpush1.msra.mxu0 0.0
        %5174 = vmatprep.subr.mxu0 0.0
        %5175 = vmatpush1.msra.mxu0 0.0
        %5176 = vmatprep.subr.mxu0 0.0
        %5177 = vmatpush1.msra.mxu0 0.0
        %5178 = vmatprep.subr.mxu0 0.0
        %5179 = vmatpush1.msra.mxu0 0.0
        %5180 = vmatprep.subr.mxu0 0.0
        %5181 = vmatpush1.msra.mxu0 0.0
        %5182 = vmatprep.subr.mxu0 0.0
        %5183 = vmatpush1.msra.mxu0 0.0
        %5184 = vmatprep.mubr.f32.mxu0 0.0
        %5185 = vmatmul.mubr.f32.gmra.mrb[0].mxu0 %v5118
        %v5186 = vpop.f32.mrb[0].mxu0
        %v5187 = vadd.f32 %v5043, %v5186
        %v5188 = vpop.f32.mrb[0].mxu0
        %v5189 = vadd.f32 %v5045, %v5188
        %5190 = vdwg.mxu0
        %5191 = vmatprep.subr.mxu0 0.0
        %5192 = vmatpush1.msra.mxu0 %v4937
        %5193 = vmatprep.subr.mxu0 0.0
        %5194 = vmatpush1.msra.mxu0 %v4940
        %5195 = vmatprep.subr.mxu0 0.0
        %5196 = vmatpush1.msra.mxu0 0.0
        %5197 = vmatprep.subr.mxu0 0.0
        %5198 = vmatpush1.msra.mxu0 0.0
        %5199 = vmatprep.subr.mxu0 0.0
        %5200 = vmatpush1.msra.mxu0 0.0
        %5201 = vmatprep.subr.mxu0 0.0
        %5202 = vmatpush1.msra.mxu0 0.0
        %5203 = vmatprep.subr.mxu0 0.0
        %5204 = vmatpush1.msra.mxu0 0.0
        %5205 = vmatprep.subr.mxu0 0.0
        %5206 = vmatpush1.msra.mxu0 0.0
        %5207 = vmatprep.subr.mxu0 0.0
        %5208 = vmatpush1.msra.mxu0 0.0
        %5209 = vmatprep.subr.mxu0 0.0
        %5210 = vmatpush1.msra.mxu0 0.0
        %5211 = vmatprep.subr.mxu0 0.0
        %5212 = vmatpush1.msra.mxu0 0.0
        %5213 = vmatprep.subr.mxu0 0.0
        %5214 = vmatpush1.msra.mxu0 0.0
        %5215 = vmatprep.subr.mxu0 0.0
        %5216 = vmatpush1.msra.mxu0 0.0
        %5217 = vmatprep.subr.mxu0 0.0
        %5218 = vmatpush1.msra.mxu0 0.0
        %5219 = vmatprep.subr.mxu0 0.0
        %5220 = vmatpush1.msra.mxu0 0.0
        %5221 = vmatprep.subr.mxu0 0.0
        %5222 = vmatpush1.msra.mxu0 0.0
        %5223 = vmatprep.subr.mxu0 0.0
        %5224 = vmatpush1.msra.mxu0 0.0
        %5225 = vmatprep.subr.mxu0 0.0
        %5226 = vmatpush1.msra.mxu0 0.0
        %5227 = vmatprep.subr.mxu0 0.0
        %5228 = vmatpush1.msra.mxu0 0.0
        %5229 = vmatprep.subr.mxu0 0.0
        %5230 = vmatpush1.msra.mxu0 0.0
        %5231 = vmatprep.subr.mxu0 0.0
        %5232 = vmatpush1.msra.mxu0 0.0
        %5233 = vmatprep.subr.mxu0 0.0
        %5234 = vmatpush1.msra.mxu0 0.0
        %5235 = vmatprep.subr.mxu0 0.0
        %5236 = vmatpush1.msra.mxu0 0.0
        %5237 = vmatprep.subr.mxu0 0.0
        %5238 = vmatpush1.msra.mxu0 0.0
        %5239 = vmatprep.subr.mxu0 0.0
        %5240 = vmatpush1.msra.mxu0 0.0
        %5241 = vmatprep.subr.mxu0 0.0
        %5242 = vmatpush1.msra.mxu0 0.0
        %5243 = vmatprep.subr.mxu0 0.0
        %5244 = vmatpush1.msra.mxu0 0.0
        %5245 = vmatprep.subr.mxu0 0.0
        %5246 = vmatpush1.msra.mxu0 0.0
        %5247 = vmatprep.subr.mxu0 0.0
        %5248 = vmatpush1.msra.mxu0 0.0
        %5249 = vmatprep.subr.mxu0 0.0
        %5250 = vmatpush1.msra.mxu0 0.0
        %5251 = vmatprep.subr.mxu0 0.0
        %5252 = vmatpush1.msra.mxu0 0.0
        %5253 = vmatprep.subr.mxu0 0.0
        %5254 = vmatpush1.msra.mxu0 0.0
        %5255 = vmatprep.mubr.f32.mxu0 0.0
        %5256 = vmatmul.mubr.f32.gmra.mrb[0].mxu0 %v5118
        %v5257 = vpop.f32.mrb[0].mxu0
        %v5258 = vadd.f32 %v5114, %v5257
        %v5259 = vpop.f32.mrb[0].mxu0
        %5260 = vdwg.mxu0
        %s5261 = scalar_lea.vmem %s5, 8
        %v5262 = vld [vmem:[%s5261] sm:$0xf]
        %5263 = vrot.lane.b32.xlu0 %v4935, 126
        %v5264 = vpop.permute.xlu0 %5263
        %5265 = vrot.lane.b32.xlu0 %v4936, 126
        %v5266 = vpop.permute.xlu0 %5265
        %5267 = vrot.lane.b32.xlu0 %v4937, 126
        %v5268 = vpop.permute.xlu0 %5267
        %5269 = vrot.lane.b32.xlu0 %v4938, 126
        %v5270 = vpop.permute.xlu0 %5269
        %5271 = vrot.lane.b32.xlu0 %v4939, 126
        %v5272 = vpop.permute.xlu0 %5271
        %5273 = vrot.lane.b32.xlu0 %v4940, 126
        %v5274 = vpop.permute.xlu0 %5273
        %v5275 = vsel %vm671, %v5264, %v5266
        %v5276 = vsel %vm671, %v5266, %v5268
        %v5277 = vsel %vm671, %v5270, %v5272
        %v5278 = vsel %vm671, %v5272, %v5274
        %v5286 = vsel %vm4972, %v5262, 0
        %5288 = vmatprep.subr.mxu0 %v5276
        %5289 = vmatpush1.msra.mxu0 %v5275
        %5290 = vmatprep.subr.mxu0 %v5278
        %5291 = vmatpush1.msra.mxu0 %v5277
        %5292 = vmatprep.subr.mxu0 0.0
        %5293 = vmatpush1.msra.mxu0 0.0
        %5294 = vmatprep.subr.mxu0 0.0
        %5295 = vmatpush1.msra.mxu0 0.0
        %5296 = vmatprep.subr.mxu0 0.0
        %5297 = vmatpush1.msra.mxu0 0.0
        %5298 = vmatprep.subr.mxu0 0.0
        %5299 = vmatpush1.msra.mxu0 0.0
        %5300 = vmatprep.subr.mxu0 0.0
        %5301 = vmatpush1.msra.mxu0 0.0
        %5302 = vmatprep.subr.mxu0 0.0
        %5303 = vmatpush1.msra.mxu0 0.0
        %5304 = vmatprep.subr.mxu0 0.0
        %5305 = vmatpush1.msra.mxu0 0.0
        %5306 = vmatprep.subr.mxu0 0.0
        %5307 = vmatpush1.msra.mxu0 0.0
        %5308 = vmatprep.subr.mxu0 0.0
        %5309 = vmatpush1.msra.mxu0 0.0
        %5310 = vmatprep.subr.mxu0 0.0
        %5311 = vmatpush1.msra.mxu0 0.0
        %5312 = vmatprep.subr.mxu0 0.0
        %5313 = vmatpush1.msra.mxu0 0.0
        %5314 = vmatprep.subr.mxu0 0.0
        %5315 = vmatpush1.msra.mxu0 0.0
        %5316 = vmatprep.subr.mxu0 0.0
        %5317 = vmatpush1.msra.mxu0 0.0
        %5318 = vmatprep.subr.mxu0 0.0
        %5319 = vmatpush1.msra.mxu0 0.0
        %5320 = vmatprep.subr.mxu0 0.0
        %5321 = vmatpush1.msra.mxu0 0.0
        %5322 = vmatprep.subr.mxu0 0.0
        %5323 = vmatpush1.msra.mxu0 0.0
        %5324 = vmatprep.subr.mxu0 0.0
        %5325 = vmatpush1.msra.mxu0 0.0
        %5326 = vmatprep.subr.mxu0 0.0
        %5327 = vmatpush1.msra.mxu0 0.0
        %5328 = vmatprep.subr.mxu0 0.0
        %5329 = vmatpush1.msra.mxu0 0.0
        %5330 = vmatprep.subr.mxu0 0.0
        %5331 = vmatpush1.msra.mxu0 0.0
        %5332 = vmatprep.subr.mxu0 0.0
        %5333 = vmatpush1.msra.mxu0 0.0
        %5334 = vmatprep.subr.mxu0 0.0
        %5335 = vmatpush1.msra.mxu0 0.0
        %5336 = vmatprep.subr.mxu0 0.0
        %5337 = vmatpush1.msra.mxu0 0.0
        %5338 = vmatprep.subr.mxu0 0.0
        %5339 = vmatpush1.msra.mxu0 0.0
        %5340 = vmatprep.subr.mxu0 0.0
        %5341 = vmatpush1.msra.mxu0 0.0
        %5342 = vmatprep.subr.mxu0 0.0
        %5343 = vmatpush1.msra.mxu0 0.0
        %5344 = vmatprep.subr.mxu0 0.0
        %5345 = vmatpush1.msra.mxu0 0.0
        %5346 = vmatprep.subr.mxu0 0.0
        %5347 = vmatpush1.msra.mxu0 0.0
        %5348 = vmatprep.subr.mxu0 0.0
        %5349 = vmatpush1.msra.mxu0 0.0
        %5350 = vmatprep.subr.mxu0 0.0
        %5351 = vmatpush1.msra.mxu0 0.0
        %5352 = vmatprep.mubr.f32.mxu0 0.0
        %5353 = vmatmul.mubr.f32.gmra.mrb[0].mxu0 %v5286
        %v5354 = vpop.f32.mrb[0].mxu0
        %v5355 = vadd.f32 0.0, %v5354
        %v5356 = vpop.f32.mrb[0].mxu0
        %v5357 = vadd.f32 0.0, %v5356
        %5358 = vdwg.mxu0
        %5359 = vmatprep.subr.mxu0 0.0
        %5360 = vmatpush1.msra.mxu0 %v5268
        %5361 = vmatprep.subr.mxu0 0.0
        %5362 = vmatpush1.msra.mxu0 %v5274
        %5363 = vmatprep.subr.mxu0 0.0
        %5364 = vmatpush1.msra.mxu0 0.0
        %5365 = vmatprep.subr.mxu0 0.0
        %5366 = vmatpush1.msra.mxu0 0.0
        %5367 = vmatprep.subr.mxu0 0.0
        %5368 = vmatpush1.msra.mxu0 0.0
        %5369 = vmatprep.subr.mxu0 0.0
        %5370 = vmatpush1.msra.mxu0 0.0
        %5371 = vmatprep.subr.mxu0 0.0
        %5372 = vmatpush1.msra.mxu0 0.0
        %5373 = vmatprep.subr.mxu0 0.0
        %5374 = vmatpush1.msra.mxu0 0.0
        %5375 = vmatprep.subr.mxu0 0.0
        %5376 = vmatpush1.msra.mxu0 0.0
        %5377 = vmatprep.subr.mxu0 0.0
        %5378 = vmatpush1.msra.mxu0 0.0
        %5379 = vmatprep.subr.mxu0 0.0
        %5380 = vmatpush1.msra.mxu0 0.0
        %5381 = vmatprep.subr.mxu0 0.0
        %5382 = vmatpush1.msra.mxu0 0.0
        %5383 = vmatprep.subr.mxu0 0.0
        %5384 = vmatpush1.msra.mxu0 0.0
        %5385 = vmatprep.subr.mxu0 0.0
        %5386 = vmatpush1.msra.mxu0 0.0
        %5387 = vmatprep.subr.mxu0 0.0
        %5388 = vmatpush1.msra.mxu0 0.0
        %5389 = vmatprep.subr.mxu0 0.0
        %5390 = vmatpush1.msra.mxu0 0.0
        %5391 = vmatprep.subr.mxu0 0.0
        %5392 = vmatpush1.msra.mxu0 0.0
        %5393 = vmatprep.subr.mxu0 0.0
        %5394 = vmatpush1.msra.mxu0 0.0
        %5395 = vmatprep.subr.mxu0 0.0
        %5396 = vmatpush1.msra.mxu0 0.0
        %5397 = vmatprep.subr.mxu0 0.0
        %5398 = vmatpush1.msra.mxu0 0.0
        %5399 = vmatprep.subr.mxu0 0.0
        %5400 = vmatpush1.msra.mxu0 0.0
        %5401 = vmatprep.subr.mxu0 0.0
        %5402 = vmatpush1.msra.mxu0 0.0
        %5403 = vmatprep.subr.mxu0 0.0
        %5404 = vmatpush1.msra.mxu0 0.0
        %5405 = vmatprep.subr.mxu0 0.0
        %5406 = vmatpush1.msra.mxu0 0.0
        %5407 = vmatprep.subr.mxu0 0.0
        %5408 = vmatpush1.msra.mxu0 0.0
        %5409 = vmatprep.subr.mxu0 0.0
        %5410 = vmatpush1.msra.mxu0 0.0
        %5411 = vmatprep.subr.mxu0 0.0
        %5412 = vmatpush1.msra.mxu0 0.0
        %5413 = vmatprep.subr.mxu0 0.0
        %5414 = vmatpush1.msra.mxu0 0.0
        %5415 = vmatprep.subr.mxu0 0.0
        %5416 = vmatpush1.msra.mxu0 0.0
        %5417 = vmatprep.subr.mxu0 0.0
        %5418 = vmatpush1.msra.mxu0 0.0
        %5419 = vmatprep.subr.mxu0 0.0
        %5420 = vmatpush1.msra.mxu0 0.0
        %5421 = vmatprep.subr.mxu0 0.0
        %5422 = vmatpush1.msra.mxu0 0.0
        %5423 = vmatprep.mubr.f32.mxu0 0.0
        %5424 = vmatmul.mubr.f32.gmra.mrb[0].mxu0 %v5286
        %v5425 = vpop.f32.mrb[0].mxu0
        %v5426 = vadd.f32 0.0, %v5425
        %v5427 = vpop.f32.mrb[0].mxu0
        %5428 = vdwg.mxu0
        %v5429 = vadd.f32 %v5187, %v5355
        %v5430 = vadd.f32 %v5189, %v5357
        %v5431 = vadd.f32 %v5258, %v5426
        %s5432 = scalar_lea.vmem %s5, 12
        %v5433 = vld [vmem:[%s5432] sm:$0xf]
        %5434 = vrot.lane.b32.xlu0 %v4935, 110
        %v5435 = vpop.permute.xlu0 %5434
        %5436 = vrot.lane.b32.xlu0 %v4936, 110
        %v5437 = vpop.permute.xlu0 %5436
        %5438 = vrot.lane.b32.xlu0 %v4937, 110
        %v5439 = vpop.permute.xlu0 %5438
        %5440 = vrot.lane.b32.xlu0 %v4938, 110
        %v5441 = vpop.permute.xlu0 %5440
        %5442 = vrot.lane.b32.xlu0 %v4939, 110
        %v5443 = vpop.permute.xlu0 %5442
        %5444 = vrot.lane.b32.xlu0 %v4940, 110
        %v5445 = vpop.permute.xlu0 %5444
        %v5446 = vsel %vm835, %v5435, %v5437
        %v5447 = vsel %vm835, %v5437, %v5439
        %v5448 = vsel %vm835, %v5441, %v5443
        %v5449 = vsel %vm835, %v5443, %v5445
        %v5457 = vsel %vm4972, %v5433, 0
        %5459 = vmatprep.subr.mxu0 %v5447
        %5460 = vmatpush1.msra.mxu0 %v5446
        %5461 = vmatprep.subr.mxu0 %v5449
        %5462 = vmatpush1.msra.mxu0 %v5448
        %5463 = vmatprep.subr.mxu0 0.0
        %5464 = vmatpush1.msra.mxu0 0.0
        %5465 = vmatprep.subr.mxu0 0.0
        %5466 = vmatpush1.msra.mxu0 0.0
        %5467 = vmatprep.subr.mxu0 0.0
        %5468 = vmatpush1.msra.mxu0 0.0
        %5469 = vmatprep.subr.mxu0 0.0
        %5470 = vmatpush1.msra.mxu0 0.0
        %5471 = vmatprep.subr.mxu0 0.0
        %5472 = vmatpush1.msra.mxu0 0.0
        %5473 = vmatprep.subr.mxu0 0.0
        %5474 = vmatpush1.msra.mxu0 0.0
        %5475 = vmatprep.subr.mxu0 0.0
        %5476 = vmatpush1.msra.mxu0 0.0
        %5477 = vmatprep.subr.mxu0 0.0
        %5478 = vmatpush1.msra.mxu0 0.0
        %5479 = vmatprep.subr.mxu0 0.0
        %5480 = vmatpush1.msra.mxu0 0.0
        %5481 = vmatprep.subr.mxu0 0.0
        %5482 = vmatpush1.msra.mxu0 0.0
        %5483 = vmatprep.subr.mxu0 0.0
        %5484 = vmatpush1.msra.mxu0 0.0
        %5485 = vmatprep.subr.mxu0 0.0
        %5486 = vmatpush1.msra.mxu0 0.0
        %5487 = vmatprep.subr.mxu0 0.0
        %5488 = vmatpush1.msra.mxu0 0.0
        %5489 = vmatprep.subr.mxu0 0.0
        %5490 = vmatpush1.msra.mxu0 0.0
        %5491 = vmatprep.subr.mxu0 0.0
        %5492 = vmatpush1.msra.mxu0 0.0
        %5493 = vmatprep.subr.mxu0 0.0
        %5494 = vmatpush1.msra.mxu0 0.0
        %5495 = vmatprep.subr.mxu0 0.0
        %5496 = vmatpush1.msra.mxu0 0.0
        %5497 = vmatprep.subr.mxu0 0.0
        %5498 = vmatpush1.msra.mxu0 0.0
        %5499 = vmatprep.subr.mxu0 0.0
        %5500 = vmatpush1.msra.mxu0 0.0
        %5501 = vmatprep.subr.mxu0 0.0
        %5502 = vmatpush1.msra.mxu0 0.0
        %5503 = vmatprep.subr.mxu0 0.0
        %5504 = vmatpush1.msra.mxu0 0.0
        %5505 = vmatprep.subr.mxu0 0.0
        %5506 = vmatpush1.msra.mxu0 0.0
        %5507 = vmatprep.subr.mxu0 0.0
        %5508 = vmatpush1.msra.mxu0 0.0
        %5509 = vmatprep.subr.mxu0 0.0
        %5510 = vmatpush1.msra.mxu0 0.0
        %5511 = vmatprep.subr.mxu0 0.0
        %5512 = vmatpush1.msra.mxu0 0.0
        %5513 = vmatprep.subr.mxu0 0.0
        %5514 = vmatpush1.msra.mxu0 0.0
        %5515 = vmatprep.subr.mxu0 0.0
        %5516 = vmatpush1.msra.mxu0 0.0
        %5517 = vmatprep.subr.mxu0 0.0
        %5518 = vmatpush1.msra.mxu0 0.0
        %5519 = vmatprep.subr.mxu0 0.0
        %5520 = vmatpush1.msra.mxu0 0.0
        %5521 = vmatprep.subr.mxu0 0.0
        %5522 = vmatpush1.msra.mxu0 0.0
        %5523 = vmatprep.mubr.f32.mxu0 0.0
        %5524 = vmatmul.mubr.f32.gmra.mrb[0].mxu0 %v5457
        %v5525 = vpop.f32.mrb[0].mxu0
        %v5526 = vadd.f32 0.0, %v5525
        %v5527 = vpop.f32.mrb[0].mxu0
        %v5528 = vadd.f32 0.0, %v5527
        %5529 = vdwg.mxu0
        %5530 = vmatprep.subr.mxu0 0.0
        %5531 = vmatpush1.msra.mxu0 %v5439
        %5532 = vmatprep.subr.mxu0 0.0
        %5533 = vmatpush1.msra.mxu0 %v5445
        %5534 = vmatprep.subr.mxu0 0.0
        %5535 = vmatpush1.msra.mxu0 0.0
        %5536 = vmatprep.subr.mxu0 0.0
        %5537 = vmatpush1.msra.mxu0 0.0
        %5538 = vmatprep.subr.mxu0 0.0
        %5539 = vmatpush1.msra.mxu0 0.0
        %5540 = vmatprep.subr.mxu0 0.0
        %5541 = vmatpush1.msra.mxu0 0.0
        %5542 = vmatprep.subr.mxu0 0.0
        %5543 = vmatpush1.msra.mxu0 0.0
        %5544 = vmatprep.subr.mxu0 0.0
        %5545 = vmatpush1.msra.mxu0 0.0
        %5546 = vmatprep.subr.mxu0 0.0
        %5547 = vmatpush1.msra.mxu0 0.0
        %5548 = vmatprep.subr.mxu0 0.0
        %5549 = vmatpush1.msra.mxu0 0.0
        %5550 = vmatprep.subr.mxu0 0.0
        %5551 = vmatpush1.msra.mxu0 0.0
        %5552 = vmatprep.subr.mxu0 0.0
        %5553 = vmatpush1.msra.mxu0 0.0
        %5554 = vmatprep.subr.mxu0 0.0
        %5555 = vmatpush1.msra.mxu0 0.0
        %5556 = vmatprep.subr.mxu0 0.0
        %5557 = vmatpush1.msra.mxu0 0.0
        %5558 = vmatprep.subr.mxu0 0.0
        %5559 = vmatpush1.msra.mxu0 0.0
        %5560 = vmatprep.subr.mxu0 0.0
        %5561 = vmatpush1.msra.mxu0 0.0
        %5562 = vmatprep.subr.mxu0 0.0
        %5563 = vmatpush1.msra.mxu0 0.0
        %5564 = vmatprep.subr.mxu0 0.0
        %5565 = vmatpush1.msra.mxu0 0.0
        %5566 = vmatprep.subr.mxu0 0.0
        %5567 = vmatpush1.msra.mxu0 0.0
        %5568 = vmatprep.subr.mxu0 0.0
        %5569 = vmatpush1.msra.mxu0 0.0
        %5570 = vmatprep.subr.mxu0 0.0
        %5571 = vmatpush1.msra.mxu0 0.0
        %5572 = vmatprep.subr.mxu0 0.0
        %5573 = vmatpush1.msra.mxu0 0.0
        %5574 = vmatprep.subr.mxu0 0.0
        %5575 = vmatpush1.msra.mxu0 0.0
        %5576 = vmatprep.subr.mxu0 0.0
        %5577 = vmatpush1.msra.mxu0 0.0
        %5578 = vmatprep.subr.mxu0 0.0
        %5579 = vmatpush1.msra.mxu0 0.0
        %5580 = vmatprep.subr.mxu0 0.0
        %5581 = vmatpush1.msra.mxu0 0.0
        %5582 = vmatprep.subr.mxu0 0.0
        %5583 = vmatpush1.msra.mxu0 0.0
        %5584 = vmatprep.subr.mxu0 0.0
        %5585 = vmatpush1.msra.mxu0 0.0
        %5586 = vmatprep.subr.mxu0 0.0
        %5587 = vmatpush1.msra.mxu0 0.0
        %5588 = vmatprep.subr.mxu0 0.0
        %5589 = vmatpush1.msra.mxu0 0.0
        %5590 = vmatprep.subr.mxu0 0.0
        %5591 = vmatpush1.msra.mxu0 0.0
        %5592 = vmatprep.subr.mxu0 0.0
        %5593 = vmatpush1.msra.mxu0 0.0
        %5594 = vmatprep.mubr.f32.mxu0 0.0
        %5595 = vmatmul.mubr.f32.gmra.mrb[0].mxu0 %v5457
        %v5596 = vpop.f32.mrb[0].mxu0
        %v5597 = vadd.f32 0.0, %v5596
        %v5598 = vpop.f32.mrb[0].mxu0
        %5599 = vdwg.mxu0
        %v5600 = vadd.f32 %v5429, %v5526
        %v5601 = vadd.f32 %v5430, %v5528
        %v5602 = vadd.f32 %v5431, %v5597
        %s5603 = scalar_lea.vmem %s5, 16
        %v5604 = vld [vmem:[%s5603] sm:$0xf]
        %5605 = vrot.lane.b32.xlu0 %v4935, 109
        %v5606 = vpop.permute.xlu0 %5605
        %5607 = vrot.lane.b32.xlu0 %v4936, 109
        %v5608 = vpop.permute.xlu0 %5607
        %5609 = vrot.lane.b32.xlu0 %v4937, 109
        %v5610 = vpop.permute.xlu0 %5609
        %5611 = vrot.lane.b32.xlu0 %v4938, 109
        %v5612 = vpop.permute.xlu0 %5611
        %5613 = vrot.lane.b32.xlu0 %v4939, 109
        %v5614 = vpop.permute.xlu0 %5613
        %5615 = vrot.lane.b32.xlu0 %v4940, 109
        %v5616 = vpop.permute.xlu0 %5615
        %v5617 = vsel %vm999, %v5606, %v5608
        %v5618 = vsel %vm999, %v5608, %v5610
        %v5619 = vsel %vm999, %v5612, %v5614
        %v5620 = vsel %vm999, %v5614, %v5616
        %v5628 = vsel %vm4972, %v5604, 0
        %5630 = vmatprep.subr.mxu0 %v5618
        %5631 = vmatpush1.msra.mxu0 %v5617
        %5632 = vmatprep.subr.mxu0 %v5620
        %5633 = vmatpush1.msra.mxu0 %v5619
        %5634 = vmatprep.subr.mxu0 0.0
        %5635 = vmatpush1.msra.mxu0 0.0
        %5636 = vmatprep.subr.mxu0 0.0
        %5637 = vmatpush1.msra.mxu0 0.0
        %5638 = vmatprep.subr.mxu0 0.0
        %5639 = vmatpush1.msra.mxu0 0.0
        %5640 = vmatprep.subr.mxu0 0.0
        %5641 = vmatpush1.msra.mxu0 0.0
        %5642 = vmatprep.subr.mxu0 0.0
        %5643 = vmatpush1.msra.mxu0 0.0
        %5644 = vmatprep.subr.mxu0 0.0
        %5645 = vmatpush1.msra.mxu0 0.0
        %5646 = vmatprep.subr.mxu0 0.0
        %5647 = vmatpush1.msra.mxu0 0.0
        %5648 = vmatprep.subr.mxu0 0.0
        %5649 = vmatpush1.msra.mxu0 0.0
        %5650 = vmatprep.subr.mxu0 0.0
        %5651 = vmatpush1.msra.mxu0 0.0
        %5652 = vmatprep.subr.mxu0 0.0
        %5653 = vmatpush1.msra.mxu0 0.0
        %5654 = vmatprep.subr.mxu0 0.0
        %5655 = vmatpush1.msra.mxu0 0.0
        %5656 = vmatprep.subr.mxu0 0.0
        %5657 = vmatpush1.msra.mxu0 0.0
        %5658 = vmatprep.subr.mxu0 0.0
        %5659 = vmatpush1.msra.mxu0 0.0
        %5660 = vmatprep.subr.mxu0 0.0
        %5661 = vmatpush1.msra.mxu0 0.0
        %5662 = vmatprep.subr.mxu0 0.0
        %5663 = vmatpush1.msra.mxu0 0.0
        %5664 = vmatprep.subr.mxu0 0.0
        %5665 = vmatpush1.msra.mxu0 0.0
        %5666 = vmatprep.subr.mxu0 0.0
        %5667 = vmatpush1.msra.mxu0 0.0
        %5668 = vmatprep.subr.mxu0 0.0
        %5669 = vmatpush1.msra.mxu0 0.0
        %5670 = vmatprep.subr.mxu0 0.0
        %5671 = vmatpush1.msra.mxu0 0.0
        %5672 = vmatprep.subr.mxu0 0.0
        %5673 = vmatpush1.msra.mxu0 0.0
        %5674 = vmatprep.subr.mxu0 0.0
        %5675 = vmatpush1.msra.mxu0 0.0
        %5676 = vmatprep.subr.mxu0 0.0
        %5677 = vmatpush1.msra.mxu0 0.0
        %5678 = vmatprep.subr.mxu0 0.0
        %5679 = vmatpush1.msra.mxu0 0.0
        %5680 = vmatprep.subr.mxu0 0.0
        %5681 = vmatpush1.msra.mxu0 0.0
        %5682 = vmatprep.subr.mxu0 0.0
        %5683 = vmatpush1.msra.mxu0 0.0
        %5684 = vmatprep.subr.mxu0 0.0
        %5685 = vmatpush1.msra.mxu0 0.0
        %5686 = vmatprep.subr.mxu0 0.0
        %5687 = vmatpush1.msra.mxu0 0.0
        %5688 = vmatprep.subr.mxu0 0.0
        %5689 = vmatpush1.msra.mxu0 0.0
        %5690 = vmatprep.subr.mxu0 0.0
        %5691 = vmatpush1.msra.mxu0 0.0
        %5692 = vmatprep.subr.mxu0 0.0
        %5693 = vmatpush1.msra.mxu0 0.0
        %5694 = vmatprep.mubr.f32.mxu0 0.0
        %5695 = vmatmul.mubr.f32.gmra.mrb[0].mxu0 %v5628
        %v5696 = vpop.f32.mrb[0].mxu0
        %v5697 = vadd.f32 0.0, %v5696
        %v5698 = vpop.f32.mrb[0].mxu0
        %v5699 = vadd.f32 0.0, %v5698
        %5700 = vdwg.mxu0
        %5701 = vmatprep.subr.mxu0 0.0
        %5702 = vmatpush1.msra.mxu0 %v5610
        %5703 = vmatprep.subr.mxu0 0.0
        %5704 = vmatpush1.msra.mxu0 %v5616
        %5705 = vmatprep.subr.mxu0 0.0
        %5706 = vmatpush1.msra.mxu0 0.0
        %5707 = vmatprep.subr.mxu0 0.0
        %5708 = vmatpush1.msra.mxu0 0.0
        %5709 = vmatprep.subr.mxu0 0.0
        %5710 = vmatpush1.msra.mxu0 0.0
        %5711 = vmatprep.subr.mxu0 0.0
        %5712 = vmatpush1.msra.mxu0 0.0
        %5713 = vmatprep.subr.mxu0 0.0
        %5714 = vmatpush1.msra.mxu0 0.0
        %5715 = vmatprep.subr.mxu0 0.0
        %5716 = vmatpush1.msra.mxu0 0.0
        %5717 = vmatprep.subr.mxu0 0.0
        %5718 = vmatpush1.msra.mxu0 0.0
        %5719 = vmatprep.subr.mxu0 0.0
        %5720 = vmatpush1.msra.mxu0 0.0
        %5721 = vmatprep.subr.mxu0 0.0
        %5722 = vmatpush1.msra.mxu0 0.0
        %5723 = vmatprep.subr.mxu0 0.0
        %5724 = vmatpush1.msra.mxu0 0.0
        %5725 = vmatprep.subr.mxu0 0.0
        %5726 = vmatpush1.msra.mxu0 0.0
        %5727 = vmatprep.subr.mxu0 0.0
        %5728 = vmatpush1.msra.mxu0 0.0
        %5729 = vmatprep.subr.mxu0 0.0
        %5730 = vmatpush1.msra.mxu0 0.0
        %5731 = vmatprep.subr.mxu0 0.0
        %5732 = vmatpush1.msra.mxu0 0.0
        %5733 = vmatprep.subr.mxu0 0.0
        %5734 = vmatpush1.msra.mxu0 0.0
        %5735 = vmatprep.subr.mxu0 0.0
        %5736 = vmatpush1.msra.mxu0 0.0
        %5737 = vmatprep.subr.mxu0 0.0
        %5738 = vmatpush1.msra.mxu0 0.0
        %5739 = vmatprep.subr.mxu0 0.0
        %5740 = vmatpush1.msra.mxu0 0.0
        %5741 = vmatprep.subr.mxu0 0.0
        %5742 = vmatpush1.msra.mxu0 0.0
        %5743 = vmatprep.subr.mxu0 0.0
        %5744 = vmatpush1.msra.mxu0 0.0
        %5745 = vmatprep.subr.mxu0 0.0
        %5746 = vmatpush1.msra.mxu0 0.0
        %5747 = vmatprep.subr.mxu0 0.0
        %5748 = vmatpush1.msra.mxu0 0.0
        %5749 = vmatprep.subr.mxu0 0.0
        %5750 = vmatpush1.msra.mxu0 0.0
        %5751 = vmatprep.subr.mxu0 0.0
        %5752 = vmatpush1.msra.mxu0 0.0
        %5753 = vmatprep.subr.mxu0 0.0
        %5754 = vmatpush1.msra.mxu0 0.0
        %5755 = vmatprep.subr.mxu0 0.0
        %5756 = vmatpush1.msra.mxu0 0.0
        %5757 = vmatprep.subr.mxu0 0.0
        %5758 = vmatpush1.msra.mxu0 0.0
        %5759 = vmatprep.subr.mxu0 0.0
        %5760 = vmatpush1.msra.mxu0 0.0
        %5761 = vmatprep.subr.mxu0 0.0
        %5762 = vmatpush1.msra.mxu0 0.0
        %5763 = vmatprep.subr.mxu0 0.0
        %5764 = vmatpush1.msra.mxu0 0.0
        %5765 = vmatprep.mubr.f32.mxu0 0.0
        %5766 = vmatmul.mubr.f32.gmra.mrb[0].mxu0 %v5628
        %v5767 = vpop.f32.mrb[0].mxu0
        %v5768 = vadd.f32 0.0, %v5767
        %v5769 = vpop.f32.mrb[0].mxu0
        %5770 = vdwg.mxu0
        %v5771 = vadd.f32 %v5600, %v5697
        %v5772 = vadd.f32 %v5601, %v5699
        %v5773 = vadd.f32 %v5602, %v5768
        %s5774 = scalar_lea.vmem %s5, 20
        %v5775 = vld [vmem:[%s5774] sm:$0xf]
        %5776 = vrot.lane.b32.xlu0 %v4935, 108
        %v5777 = vpop.permute.xlu0 %5776
        %5778 = vrot.lane.b32.xlu0 %v4936, 108
        %v5779 = vpop.permute.xlu0 %5778
        %5780 = vrot.lane.b32.xlu0 %v4937, 108
        %v5781 = vpop.permute.xlu0 %5780
        %5782 = vrot.lane.b32.xlu0 %v4938, 108
        %v5783 = vpop.permute.xlu0 %5782
        %5784 = vrot.lane.b32.xlu0 %v4939, 108
        %v5785 = vpop.permute.xlu0 %5784
        %5786 = vrot.lane.b32.xlu0 %v4940, 108
        %v5787 = vpop.permute.xlu0 %5786
        %v5788 = vsel %vm1163, %v5777, %v5779
        %v5789 = vsel %vm1163, %v5779, %v5781
        %v5790 = vsel %vm1163, %v5783, %v5785
        %v5791 = vsel %vm1163, %v5785, %v5787
        %v5799 = vsel %vm4972, %v5775, 0
        %5801 = vmatprep.subr.mxu0 %v5789
        %5802 = vmatpush1.msra.mxu0 %v5788
        %5803 = vmatprep.subr.mxu0 %v5791
        %5804 = vmatpush1.msra.mxu0 %v5790
        %5805 = vmatprep.subr.mxu0 0.0
        %5806 = vmatpush1.msra.mxu0 0.0
        %5807 = vmatprep.subr.mxu0 0.0
        %5808 = vmatpush1.msra.mxu0 0.0
        %5809 = vmatprep.subr.mxu0 0.0
        %5810 = vmatpush1.msra.mxu0 0.0
        %5811 = vmatprep.subr.mxu0 0.0
        %5812 = vmatpush1.msra.mxu0 0.0
        %5813 = vmatprep.subr.mxu0 0.0
        %5814 = vmatpush1.msra.mxu0 0.0
        %5815 = vmatprep.subr.mxu0 0.0
        %5816 = vmatpush1.msra.mxu0 0.0
        %5817 = vmatprep.subr.mxu0 0.0
        %5818 = vmatpush1.msra.mxu0 0.0
        %5819 = vmatprep.subr.mxu0 0.0
        %5820 = vmatpush1.msra.mxu0 0.0
        %5821 = vmatprep.subr.mxu0 0.0
        %5822 = vmatpush1.msra.mxu0 0.0
        %5823 = vmatprep.subr.mxu0 0.0
        %5824 = vmatpush1.msra.mxu0 0.0
        %5825 = vmatprep.subr.mxu0 0.0
        %5826 = vmatpush1.msra.mxu0 0.0
        %5827 = vmatprep.subr.mxu0 0.0
        %5828 = vmatpush1.msra.mxu0 0.0
        %5829 = vmatprep.subr.mxu0 0.0
        %5830 = vmatpush1.msra.mxu0 0.0
        %5831 = vmatprep.subr.mxu0 0.0
        %5832 = vmatpush1.msra.mxu0 0.0
        %5833 = vmatprep.subr.mxu0 0.0
        %5834 = vmatpush1.msra.mxu0 0.0
        %5835 = vmatprep.subr.mxu0 0.0
        %5836 = vmatpush1.msra.mxu0 0.0
        %5837 = vmatprep.subr.mxu0 0.0
        %5838 = vmatpush1.msra.mxu0 0.0
        %5839 = vmatprep.subr.mxu0 0.0
        %5840 = vmatpush1.msra.mxu0 0.0
        %5841 = vmatprep.subr.mxu0 0.0
        %5842 = vmatpush1.msra.mxu0 0.0
        %5843 = vmatprep.subr.mxu0 0.0
        %5844 = vmatpush1.msra.mxu0 0.0
        %5845 = vmatprep.subr.mxu0 0.0
        %5846 = vmatpush1.msra.mxu0 0.0
        %5847 = vmatprep.subr.mxu0 0.0
        %5848 = vmatpush1.msra.mxu0 0.0
        %5849 = vmatprep.subr.mxu0 0.0
        %5850 = vmatpush1.msra.mxu0 0.0
        %5851 = vmatprep.subr.mxu0 0.0
        %5852 = vmatpush1.msra.mxu0 0.0
        %5853 = vmatprep.subr.mxu0 0.0
        %5854 = vmatpush1.msra.mxu0 0.0
        %5855 = vmatprep.subr.mxu0 0.0
        %5856 = vmatpush1.msra.mxu0 0.0
        %5857 = vmatprep.subr.mxu0 0.0
        %5858 = vmatpush1.msra.mxu0 0.0
        %5859 = vmatprep.subr.mxu0 0.0
        %5860 = vmatpush1.msra.mxu0 0.0
        %5861 = vmatprep.subr.mxu0 0.0
        %5862 = vmatpush1.msra.mxu0 0.0
        %5863 = vmatprep.subr.mxu0 0.0
        %5864 = vmatpush1.msra.mxu0 0.0
        %5865 = vmatprep.mubr.f32.mxu0 0.0
        %5866 = vmatmul.mubr.f32.gmra.mrb[0].mxu0 %v5799
        %v5867 = vpop.f32.mrb[0].mxu0
        %v5868 = vadd.f32 0.0, %v5867
        %v5869 = vpop.f32.mrb[0].mxu0
        %v5870 = vadd.f32 0.0, %v5869
        %5871 = vdwg.mxu0
        %5872 = vmatprep.subr.mxu0 0.0
        %5873 = vmatpush1.msra.mxu0 %v5781
        %5874 = vmatprep.subr.mxu0 0.0
        %5875 = vmatpush1.msra.mxu0 %v5787
        %5876 = vmatprep.subr.mxu0 0.0
        %5877 = vmatpush1.msra.mxu0 0.0
        %5878 = vmatprep.subr.mxu0 0.0
        %5879 = vmatpush1.msra.mxu0 0.0
        %5880 = vmatprep.subr.mxu0 0.0
        %5881 = vmatpush1.msra.mxu0 0.0
        %5882 = vmatprep.subr.mxu0 0.0
        %5883 = vmatpush1.msra.mxu0 0.0
        %5884 = vmatprep.subr.mxu0 0.0
        %5885 = vmatpush1.msra.mxu0 0.0
        %5886 = vmatprep.subr.mxu0 0.0
        %5887 = vmatpush1.msra.mxu0 0.0
        %5888 = vmatprep.subr.mxu0 0.0
        %5889 = vmatpush1.msra.mxu0 0.0
        %5890 = vmatprep.subr.mxu0 0.0
        %5891 = vmatpush1.msra.mxu0 0.0
        %5892 = vmatprep.subr.mxu0 0.0
        %5893 = vmatpush1.msra.mxu0 0.0
        %5894 = vmatprep.subr.mxu0 0.0
        %5895 = vmatpush1.msra.mxu0 0.0
        %5896 = vmatprep.subr.mxu0 0.0
        %5897 = vmatpush1.msra.mxu0 0.0
        %5898 = vmatprep.subr.mxu0 0.0
        %5899 = vmatpush1.msra.mxu0 0.0
        %5900 = vmatprep.subr.mxu0 0.0
        %5901 = vmatpush1.msra.mxu0 0.0
        %5902 = vmatprep.subr.mxu0 0.0
        %5903 = vmatpush1.msra.mxu0 0.0
        %5904 = vmatprep.subr.mxu0 0.0
        %5905 = vmatpush1.msra.mxu0 0.0
        %5906 = vmatprep.subr.mxu0 0.0
        %5907 = vmatpush1.msra.mxu0 0.0
        %5908 = vmatprep.subr.mxu0 0.0
        %5909 = vmatpush1.msra.mxu0 0.0
        %5910 = vmatprep.subr.mxu0 0.0
        %5911 = vmatpush1.msra.mxu0 0.0
        %5912 = vmatprep.subr.mxu0 0.0
        %5913 = vmatpush1.msra.mxu0 0.0
        %5914 = vmatprep.subr.mxu0 0.0
        %5915 = vmatpush1.msra.mxu0 0.0
        %5916 = vmatprep.subr.mxu0 0.0
        %5917 = vmatpush1.msra.mxu0 0.0
        %5918 = vmatprep.subr.mxu0 0.0
        %5919 = vmatpush1.msra.mxu0 0.0
        %5920 = vmatprep.subr.mxu0 0.0
        %5921 = vmatpush1.msra.mxu0 0.0
        %5922 = vmatprep.subr.mxu0 0.0
        %5923 = vmatpush1.msra.mxu0 0.0
        %5924 = vmatprep.subr.mxu0 0.0
        %5925 = vmatpush1.msra.mxu0 0.0
        %5926 = vmatprep.subr.mxu0 0.0
        %5927 = vmatpush1.msra.mxu0 0.0
        %5928 = vmatprep.subr.mxu0 0.0
        %5929 = vmatpush1.msra.mxu0 0.0
        %5930 = vmatprep.subr.mxu0 0.0
        %5931 = vmatpush1.msra.mxu0 0.0
        %5932 = vmatprep.subr.mxu0 0.0
        %5933 = vmatpush1.msra.mxu0 0.0
        %5934 = vmatprep.subr.mxu0 0.0
        %5935 = vmatpush1.msra.mxu0 0.0
        %5936 = vmatprep.mubr.f32.mxu0 0.0
        %5937 = vmatmul.mubr.f32.gmra.mrb[0].mxu0 %v5799
        %v5938 = vpop.f32.mrb[0].mxu0
        %v5939 = vadd.f32 0.0, %v5938
        %v5940 = vpop.f32.mrb[0].mxu0
        %5941 = vdwg.mxu0
        %v5942 = vadd.f32 %v5771, %v5868
        %v5943 = vadd.f32 %v5772, %v5870
        %v5944 = vadd.f32 %v5773, %v5939
        %s5945 = scalar_lea.vmem %s5, 24
        %v5946 = vld [vmem:[%s5945] sm:$0xf]
        %5947 = vrot.lane.b32.xlu0 %v4935, 92
        %v5948 = vpop.permute.xlu0 %5947
        %5949 = vrot.lane.b32.xlu0 %v4936, 92
        %v5950 = vpop.permute.xlu0 %5949
        %5951 = vrot.lane.b32.xlu0 %v4937, 92
        %v5952 = vpop.permute.xlu0 %5951
        %5953 = vrot.lane.b32.xlu0 %v4938, 92
        %v5954 = vpop.permute.xlu0 %5953
        %5955 = vrot.lane.b32.xlu0 %v4939, 92
        %v5956 = vpop.permute.xlu0 %5955
        %5957 = vrot.lane.b32.xlu0 %v4940, 92
        %v5958 = vpop.permute.xlu0 %5957
        %v5959 = vsel %vm1327, %v5948, %v5950
        %v5960 = vsel %vm1327, %v5950, %v5952
        %v5961 = vsel %vm1327, %v5954, %v5956
        %v5962 = vsel %vm1327, %v5956, %v5958
        %v5970 = vsel %vm4972, %v5946, 0
        %5972 = vmatprep.subr.mxu0 %v5960
        %5973 = vmatpush1.msra.mxu0 %v5959
        %5974 = vmatprep.subr.mxu0 %v5962
        %5975 = vmatpush1.msra.mxu0 %v5961
        %5976 = vmatprep.subr.mxu0 0.0
        %5977 = vmatpush1.msra.mxu0 0.0
        %5978 = vmatprep.subr.mxu0 0.0
        %5979 = vmatpush1.msra.mxu0 0.0
        %5980 = vmatprep.subr.mxu0 0.0
        %5981 = vmatpush1.msra.mxu0 0.0
        %5982 = vmatprep.subr.mxu0 0.0
        %5983 = vmatpush1.msra.mxu0 0.0
        %5984 = vmatprep.subr.mxu0 0.0
        %5985 = vmatpush1.msra.mxu0 0.0
        %5986 = vmatprep.subr.mxu0 0.0
        %5987 = vmatpush1.msra.mxu0 0.0
        %5988 = vmatprep.subr.mxu0 0.0
        %5989 = vmatpush1.msra.mxu0 0.0
        %5990 = vmatprep.subr.mxu0 0.0
        %5991 = vmatpush1.msra.mxu0 0.0
        %5992 = vmatprep.subr.mxu0 0.0
        %5993 = vmatpush1.msra.mxu0 0.0
        %5994 = vmatprep.subr.mxu0 0.0
        %5995 = vmatpush1.msra.mxu0 0.0
        %5996 = vmatprep.subr.mxu0 0.0
        %5997 = vmatpush1.msra.mxu0 0.0
        %5998 = vmatprep.subr.mxu0 0.0
        %5999 = vmatpush1.msra.mxu0 0.0
        %6000 = vmatprep.subr.mxu0 0.0
        %6001 = vmatpush1.msra.mxu0 0.0
        %6002 = vmatprep.subr.mxu0 0.0
        %6003 = vmatpush1.msra.mxu0 0.0
        %6004 = vmatprep.subr.mxu0 0.0
        %6005 = vmatpush1.msra.mxu0 0.0
        %6006 = vmatprep.subr.mxu0 0.0
        %6007 = vmatpush1.msra.mxu0 0.0
        %6008 = vmatprep.subr.mxu0 0.0
        %6009 = vmatpush1.msra.mxu0 0.0
        %6010 = vmatprep.subr.mxu0 0.0
        %6011 = vmatpush1.msra.mxu0 0.0
        %6012 = vmatprep.subr.mxu0 0.0
        %6013 = vmatpush1.msra.mxu0 0.0
        %6014 = vmatprep.subr.mxu0 0.0
        %6015 = vmatpush1.msra.mxu0 0.0
        %6016 = vmatprep.subr.mxu0 0.0
        %6017 = vmatpush1.msra.mxu0 0.0
        %6018 = vmatprep.subr.mxu0 0.0
        %6019 = vmatpush1.msra.mxu0 0.0
        %6020 = vmatprep.subr.mxu0 0.0
        %6021 = vmatpush1.msra.mxu0 0.0
        %6022 = vmatprep.subr.mxu0 0.0
        %6023 = vmatpush1.msra.mxu0 0.0
        %6024 = vmatprep.subr.mxu0 0.0
        %6025 = vmatpush1.msra.mxu0 0.0
        %6026 = vmatprep.subr.mxu0 0.0
        %6027 = vmatpush1.msra.mxu0 0.0
        %6028 = vmatprep.subr.mxu0 0.0
        %6029 = vmatpush1.msra.mxu0 0.0
        %6030 = vmatprep.subr.mxu0 0.0
        %6031 = vmatpush1.msra.mxu0 0.0
        %6032 = vmatprep.subr.mxu0 0.0
        %6033 = vmatpush1.msra.mxu0 0.0
        %6034 = vmatprep.subr.mxu0 0.0
        %6035 = vmatpush1.msra.mxu0 0.0
        %6036 = vmatprep.mubr.f32.mxu0 0.0
        %6037 = vmatmul.mubr.f32.gmra.mrb[0].mxu0 %v5970
        %v6038 = vpop.f32.mrb[0].mxu0
        %v6039 = vadd.f32 0.0, %v6038
        %v6040 = vpop.f32.mrb[0].mxu0
        %v6041 = vadd.f32 0.0, %v6040
        %6042 = vdwg.mxu0
        %6043 = vmatprep.subr.mxu0 0.0
        %6044 = vmatpush1.msra.mxu0 %v5952
        %6045 = vmatprep.subr.mxu0 0.0
        %6046 = vmatpush1.msra.mxu0 %v5958
        %6047 = vmatprep.subr.mxu0 0.0
        %6048 = vmatpush1.msra.mxu0 0.0
        %6049 = vmatprep.subr.mxu0 0.0
        %6050 = vmatpush1.msra.mxu0 0.0
        %6051 = vmatprep.subr.mxu0 0.0
        %6052 = vmatpush1.msra.mxu0 0.0
        %6053 = vmatprep.subr.mxu0 0.0
        %6054 = vmatpush1.msra.mxu0 0.0
        %6055 = vmatprep.subr.mxu0 0.0
        %6056 = vmatpush1.msra.mxu0 0.0
        %6057 = vmatprep.subr.mxu0 0.0
        %6058 = vmatpush1.msra.mxu0 0.0
        %6059 = vmatprep.subr.mxu0 0.0
        %6060 = vmatpush1.msra.mxu0 0.0
        %6061 = vmatprep.subr.mxu0 0.0
        %6062 = vmatpush1.msra.mxu0 0.0
        %6063 = vmatprep.subr.mxu0 0.0
        %6064 = vmatpush1.msra.mxu0 0.0
        %6065 = vmatprep.subr.mxu0 0.0
        %6066 = vmatpush1.msra.mxu0 0.0
        %6067 = vmatprep.subr.mxu0 0.0
        %6068 = vmatpush1.msra.mxu0 0.0
        %6069 = vmatprep.subr.mxu0 0.0
        %6070 = vmatpush1.msra.mxu0 0.0
        %6071 = vmatprep.subr.mxu0 0.0
        %6072 = vmatpush1.msra.mxu0 0.0
        %6073 = vmatprep.subr.mxu0 0.0
        %6074 = vmatpush1.msra.mxu0 0.0
        %6075 = vmatprep.subr.mxu0 0.0
        %6076 = vmatpush1.msra.mxu0 0.0
        %6077 = vmatprep.subr.mxu0 0.0
        %6078 = vmatpush1.msra.mxu0 0.0
        %6079 = vmatprep.subr.mxu0 0.0
        %6080 = vmatpush1.msra.mxu0 0.0
        %6081 = vmatprep.subr.mxu0 0.0
        %6082 = vmatpush1.msra.mxu0 0.0
        %6083 = vmatprep.subr.mxu0 0.0
        %6084 = vmatpush1.msra.mxu0 0.0
        %6085 = vmatprep.subr.mxu0 0.0
        %6086 = vmatpush1.msra.mxu0 0.0
        %6087 = vmatprep.subr.mxu0 0.0
        %6088 = vmatpush1.msra.mxu0 0.0
        %6089 = vmatprep.subr.mxu0 0.0
        %6090 = vmatpush1.msra.mxu0 0.0
        %6091 = vmatprep.subr.mxu0 0.0
        %6092 = vmatpush1.msra.mxu0 0.0
        %6093 = vmatprep.subr.mxu0 0.0
        %6094 = vmatpush1.msra.mxu0 0.0
        %6095 = vmatprep.subr.mxu0 0.0
        %6096 = vmatpush1.msra.mxu0 0.0
        %6097 = vmatprep.subr.mxu0 0.0
        %6098 = vmatpush1.msra.mxu0 0.0
        %6099 = vmatprep.subr.mxu0 0.0
        %6100 = vmatpush1.msra.mxu0 0.0
        %6101 = vmatprep.subr.mxu0 0.0
        %6102 = vmatpush1.msra.mxu0 0.0
        %6103 = vmatprep.subr.mxu0 0.0
        %6104 = vmatpush1.msra.mxu0 0.0
        %6105 = vmatprep.subr.mxu0 0.0
        %6106 = vmatpush1.msra.mxu0 0.0
        %6107 = vmatprep.mubr.f32.mxu0 0.0
        %6108 = vmatmul.mubr.f32.gmra.mrb[0].mxu0 %v5970
        %v6109 = vpop.f32.mrb[0].mxu0
        %v6110 = vadd.f32 0.0, %v6109
        %v6111 = vpop.f32.mrb[0].mxu0
        %6112 = vdwg.mxu0
        %v6113 = vadd.f32 %v5942, %v6039
        %v6114 = vadd.f32 %v5943, %v6041
        %v6115 = vadd.f32 %v5944, %v6110
        %s6116 = scalar_lea.vmem %s5, 28
        %v6117 = vld [vmem:[%s6116] sm:$0xf]
        %6118 = vrot.lane.b32.xlu0 %v4935, 91
        %v6119 = vpop.permute.xlu0 %6118
        %6120 = vrot.lane.b32.xlu0 %v4936, 91
        %v6121 = vpop.permute.xlu0 %6120
        %6122 = vrot.lane.b32.xlu0 %v4937, 91
        %v6123 = vpop.permute.xlu0 %6122
        %6124 = vrot.lane.b32.xlu0 %v4938, 91
        %v6125 = vpop.permute.xlu0 %6124
        %6126 = vrot.lane.b32.xlu0 %v4939, 91
        %v6127 = vpop.permute.xlu0 %6126
        %6128 = vrot.lane.b32.xlu0 %v4940, 91
        %v6129 = vpop.permute.xlu0 %6128
        %v6130 = vsel %vm1491, %v6119, %v6121
        %v6131 = vsel %vm1491, %v6121, %v6123
        %v6132 = vsel %vm1491, %v6125, %v6127
        %v6133 = vsel %vm1491, %v6127, %v6129
        %v6141 = vsel %vm4972, %v6117, 0
        %6143 = vmatprep.subr.mxu0 %v6131
        %6144 = vmatpush1.msra.mxu0 %v6130
        %6145 = vmatprep.subr.mxu0 %v6133
        %6146 = vmatpush1.msra.mxu0 %v6132
        %6147 = vmatprep.subr.mxu0 0.0
        %6148 = vmatpush1.msra.mxu0 0.0
        %6149 = vmatprep.subr.mxu0 0.0
        %6150 = vmatpush1.msra.mxu0 0.0
        %6151 = vmatprep.subr.mxu0 0.0
        %6152 = vmatpush1.msra.mxu0 0.0
        %6153 = vmatprep.subr.mxu0 0.0
        %6154 = vmatpush1.msra.mxu0 0.0
        %6155 = vmatprep.subr.mxu0 0.0
        %6156 = vmatpush1.msra.mxu0 0.0
        %6157 = vmatprep.subr.mxu0 0.0
        %6158 = vmatpush1.msra.mxu0 0.0
        %6159 = vmatprep.subr.mxu0 0.0
        %6160 = vmatpush1.msra.mxu0 0.0
        %6161 = vmatprep.subr.mxu0 0.0
        %6162 = vmatpush1.msra.mxu0 0.0
        %6163 = vmatprep.subr.mxu0 0.0
        %6164 = vmatpush1.msra.mxu0 0.0
        %6165 = vmatprep.subr.mxu0 0.0
        %6166 = vmatpush1.msra.mxu0 0.0
        %6167 = vmatprep.subr.mxu0 0.0
        %6168 = vmatpush1.msra.mxu0 0.0
        %6169 = vmatprep.subr.mxu0 0.0
        %6170 = vmatpush1.msra.mxu0 0.0
        %6171 = vmatprep.subr.mxu0 0.0
        %6172 = vmatpush1.msra.mxu0 0.0
        %6173 = vmatprep.subr.mxu0 0.0
        %6174 = vmatpush1.msra.mxu0 0.0
        %6175 = vmatprep.subr.mxu0 0.0
        %6176 = vmatpush1.msra.mxu0 0.0
        %6177 = vmatprep.subr.mxu0 0.0
        %6178 = vmatpush1.msra.mxu0 0.0
        %6179 = vmatprep.subr.mxu0 0.0
        %6180 = vmatpush1.msra.mxu0 0.0
        %6181 = vmatprep.subr.mxu0 0.0
        %6182 = vmatpush1.msra.mxu0 0.0
        %6183 = vmatprep.subr.mxu0 0.0
        %6184 = vmatpush1.msra.mxu0 0.0
        %6185 = vmatprep.subr.mxu0 0.0
        %6186 = vmatpush1.msra.mxu0 0.0
        %6187 = vmatprep.subr.mxu0 0.0
        %6188 = vmatpush1.msra.mxu0 0.0
        %6189 = vmatprep.subr.mxu0 0.0
        %6190 = vmatpush1.msra.mxu0 0.0
        %6191 = vmatprep.subr.mxu0 0.0
        %6192 = vmatpush1.msra.mxu0 0.0
        %6193 = vmatprep.subr.mxu0 0.0
        %6194 = vmatpush1.msra.mxu0 0.0
        %6195 = vmatprep.subr.mxu0 0.0
        %6196 = vmatpush1.msra.mxu0 0.0
        %6197 = vmatprep.subr.mxu0 0.0
        %6198 = vmatpush1.msra.mxu0 0.0
        %6199 = vmatprep.subr.mxu0 0.0
        %6200 = vmatpush1.msra.mxu0 0.0
        %6201 = vmatprep.subr.mxu0 0.0
        %6202 = vmatpush1.msra.mxu0 0.0
        %6203 = vmatprep.subr.mxu0 0.0
        %6204 = vmatpush1.msra.mxu0 0.0
        %6205 = vmatprep.subr.mxu0 0.0
        %6206 = vmatpush1.msra.mxu0 0.0
        %6207 = vmatprep.mubr.f32.mxu0 0.0
        %6208 = vmatmul.mubr.f32.gmra.mrb[0].mxu0 %v6141
        %v6209 = vpop.f32.mrb[0].mxu0
        %v6210 = vadd.f32 0.0, %v6209
        %v6211 = vpop.f32.mrb[0].mxu0
        %v6212 = vadd.f32 0.0, %v6211
        %6213 = vdwg.mxu0
        %6214 = vmatprep.subr.mxu0 0.0
        %6215 = vmatpush1.msra.mxu0 %v6123
        %6216 = vmatprep.subr.mxu0 0.0
        %6217 = vmatpush1.msra.mxu0 %v6129
        %6218 = vmatprep.subr.mxu0 0.0
        %6219 = vmatpush1.msra.mxu0 0.0
        %6220 = vmatprep.subr.mxu0 0.0
        %6221 = vmatpush1.msra.mxu0 0.0
        %6222 = vmatprep.subr.mxu0 0.0
        %6223 = vmatpush1.msra.mxu0 0.0
        %6224 = vmatprep.subr.mxu0 0.0
        %6225 = vmatpush1.msra.mxu0 0.0
        %6226 = vmatprep.subr.mxu0 0.0
        %6227 = vmatpush1.msra.mxu0 0.0
        %6228 = vmatprep.subr.mxu0 0.0
        %6229 = vmatpush1.msra.mxu0 0.0
        %6230 = vmatprep.subr.mxu0 0.0
        %6231 = vmatpush1.msra.mxu0 0.0
        %6232 = vmatprep.subr.mxu0 0.0
        %6233 = vmatpush1.msra.mxu0 0.0
        %6234 = vmatprep.subr.mxu0 0.0
        %6235 = vmatpush1.msra.mxu0 0.0
        %6236 = vmatprep.subr.mxu0 0.0
        %6237 = vmatpush1.msra.mxu0 0.0
        %6238 = vmatprep.subr.mxu0 0.0
        %6239 = vmatpush1.msra.mxu0 0.0
        %6240 = vmatprep.subr.mxu0 0.0
        %6241 = vmatpush1.msra.mxu0 0.0
        %6242 = vmatprep.subr.mxu0 0.0
        %6243 = vmatpush1.msra.mxu0 0.0
        %6244 = vmatprep.subr.mxu0 0.0
        %6245 = vmatpush1.msra.mxu0 0.0
        %6246 = vmatprep.subr.mxu0 0.0
        %6247 = vmatpush1.msra.mxu0 0.0
        %6248 = vmatprep.subr.mxu0 0.0
        %6249 = vmatpush1.msra.mxu0 0.0
        %6250 = vmatprep.subr.mxu0 0.0
        %6251 = vmatpush1.msra.mxu0 0.0
        %6252 = vmatprep.subr.mxu0 0.0
        %6253 = vmatpush1.msra.mxu0 0.0
        %6254 = vmatprep.subr.mxu0 0.0
        %6255 = vmatpush1.msra.mxu0 0.0
        %6256 = vmatprep.subr.mxu0 0.0
        %6257 = vmatpush1.msra.mxu0 0.0
        %6258 = vmatprep.subr.mxu0 0.0
        %6259 = vmatpush1.msra.mxu0 0.0
        %6260 = vmatprep.subr.mxu0 0.0
        %6261 = vmatpush1.msra.mxu0 0.0
        %6262 = vmatprep.subr.mxu0 0.0
        %6263 = vmatpush1.msra.mxu0 0.0
        %6264 = vmatprep.subr.mxu0 0.0
        %6265 = vmatpush1.msra.mxu0 0.0
        %6266 = vmatprep.subr.mxu0 0.0
        %6267 = vmatpush1.msra.mxu0 0.0
        %6268 = vmatprep.subr.mxu0 0.0
        %6269 = vmatpush1.msra.mxu0 0.0
        %6270 = vmatprep.subr.mxu0 0.0
        %6271 = vmatpush1.msra.mxu0 0.0
        %6272 = vmatprep.subr.mxu0 0.0
        %6273 = vmatpush1.msra.mxu0 0.0
        %6274 = vmatprep.subr.mxu0 0.0
        %6275 = vmatpush1.msra.mxu0 0.0
        %6276 = vmatprep.subr.mxu0 0.0
        %6277 = vmatpush1.msra.mxu0 0.0
        %6278 = vmatprep.mubr.f32.mxu0 0.0
        %6279 = vmatmul.mubr.f32.gmra.mrb[0].mxu0 %v6141
        %v6280 = vpop.f32.mrb[0].mxu0
        %v6281 = vadd.f32 0.0, %v6280
        %v6282 = vpop.f32.mrb[0].mxu0
        %6283 = vdwg.mxu0
        %v6284 = vadd.f32 %v6113, %v6210
        %v6285 = vadd.f32 %v6114, %v6212
        %v6286 = vadd.f32 %v6115, %v6281
        %s6287 = scalar_lea.vmem %s5, 32
        %v6288 = vld [vmem:[%s6287] sm:$0xf]
        %6289 = vrot.lane.b32.xlu0 %v4935, 90
        %v6290 = vpop.permute.xlu0 %6289
        %6291 = vrot.lane.b32.xlu0 %v4936, 90
        %v6292 = vpop.permute.xlu0 %6291
        %6293 = vrot.lane.b32.xlu0 %v4937, 90
        %v6294 = vpop.permute.xlu0 %6293
        %6295 = vrot.lane.b32.xlu0 %v4938, 90
        %v6296 = vpop.permute.xlu0 %6295
        %6297 = vrot.lane.b32.xlu0 %v4939, 90
        %v6298 = vpop.permute.xlu0 %6297
        %6299 = vrot.lane.b32.xlu0 %v4940, 90
        %v6300 = vpop.permute.xlu0 %6299
        %v6301 = vsel %vm1655, %v6290, %v6292
        %v6302 = vsel %vm1655, %v6292, %v6294
        %v6303 = vsel %vm1655, %v6296, %v6298
        %v6304 = vsel %vm1655, %v6298, %v6300
        %v6312 = vsel %vm4972, %v6288, 0
        %6314 = vmatprep.subr.mxu0 %v6302
        %6315 = vmatpush1.msra.mxu0 %v6301
        %6316 = vmatprep.subr.mxu0 %v6304
        %6317 = vmatpush1.msra.mxu0 %v6303
        %6318 = vmatprep.subr.mxu0 0.0
        %6319 = vmatpush1.msra.mxu0 0.0
        %6320 = vmatprep.subr.mxu0 0.0
        %6321 = vmatpush1.msra.mxu0 0.0
        %6322 = vmatprep.subr.mxu0 0.0
        %6323 = vmatpush1.msra.mxu0 0.0
        %6324 = vmatprep.subr.mxu0 0.0
        %6325 = vmatpush1.msra.mxu0 0.0
        %6326 = vmatprep.subr.mxu0 0.0
        %6327 = vmatpush1.msra.mxu0 0.0
        %6328 = vmatprep.subr.mxu0 0.0
        %6329 = vmatpush1.msra.mxu0 0.0
        %6330 = vmatprep.subr.mxu0 0.0
        %6331 = vmatpush1.msra.mxu0 0.0
        %6332 = vmatprep.subr.mxu0 0.0
        %6333 = vmatpush1.msra.mxu0 0.0
        %6334 = vmatprep.subr.mxu0 0.0
        %6335 = vmatpush1.msra.mxu0 0.0
        %6336 = vmatprep.subr.mxu0 0.0
        %6337 = vmatpush1.msra.mxu0 0.0
        %6338 = vmatprep.subr.mxu0 0.0
        %6339 = vmatpush1.msra.mxu0 0.0
        %6340 = vmatprep.subr.mxu0 0.0
        %6341 = vmatpush1.msra.mxu0 0.0
        %6342 = vmatprep.subr.mxu0 0.0
        %6343 = vmatpush1.msra.mxu0 0.0
        %6344 = vmatprep.subr.mxu0 0.0
        %6345 = vmatpush1.msra.mxu0 0.0
        %6346 = vmatprep.subr.mxu0 0.0
        %6347 = vmatpush1.msra.mxu0 0.0
        %6348 = vmatprep.subr.mxu0 0.0
        %6349 = vmatpush1.msra.mxu0 0.0
        %6350 = vmatprep.subr.mxu0 0.0
        %6351 = vmatpush1.msra.mxu0 0.0
        %6352 = vmatprep.subr.mxu0 0.0
        %6353 = vmatpush1.msra.mxu0 0.0
        %6354 = vmatprep.subr.mxu0 0.0
        %6355 = vmatpush1.msra.mxu0 0.0
        %6356 = vmatprep.subr.mxu0 0.0
        %6357 = vmatpush1.msra.mxu0 0.0
        %6358 = vmatprep.subr.mxu0 0.0
        %6359 = vmatpush1.msra.mxu0 0.0
        %6360 = vmatprep.subr.mxu0 0.0
        %6361 = vmatpush1.msra.mxu0 0.0
        %6362 = vmatprep.subr.mxu0 0.0
        %6363 = vmatpush1.msra.mxu0 0.0
        %6364 = vmatprep.subr.mxu0 0.0
        %6365 = vmatpush1.msra.mxu0 0.0
        %6366 = vmatprep.subr.mxu0 0.0
        %6367 = vmatpush1.msra.mxu0 0.0
        %6368 = vmatprep.subr.mxu0 0.0
        %6369 = vmatpush1.msra.mxu0 0.0
        %6370 = vmatprep.subr.mxu0 0.0
        %6371 = vmatpush1.msra.mxu0 0.0
        %6372 = vmatprep.subr.mxu0 0.0
        %6373 = vmatpush1.msra.mxu0 0.0
        %6374 = vmatprep.subr.mxu0 0.0
        %6375 = vmatpush1.msra.mxu0 0.0
        %6376 = vmatprep.subr.mxu0 0.0
        %6377 = vmatpush1.msra.mxu0 0.0
        %6378 = vmatprep.mubr.f32.mxu0 0.0
        %6379 = vmatmul.mubr.f32.gmra.mrb[0].mxu0 %v6312
        %v6380 = vpop.f32.mrb[0].mxu0
        %v6381 = vadd.f32 0.0, %v6380
        %v6382 = vpop.f32.mrb[0].mxu0
        %v6383 = vadd.f32 0.0, %v6382
        %6384 = vdwg.mxu0
        %6385 = vmatprep.subr.mxu0 0.0
        %6386 = vmatpush1.msra.mxu0 %v6294
        %6387 = vmatprep.subr.mxu0 0.0
        %6388 = vmatpush1.msra.mxu0 %v6300
        %6389 = vmatprep.subr.mxu0 0.0
        %6390 = vmatpush1.msra.mxu0 0.0
        %6391 = vmatprep.subr.mxu0 0.0
        %6392 = vmatpush1.msra.mxu0 0.0
        %6393 = vmatprep.subr.mxu0 0.0
        %6394 = vmatpush1.msra.mxu0 0.0
        %6395 = vmatprep.subr.mxu0 0.0
        %6396 = vmatpush1.msra.mxu0 0.0
        %6397 = vmatprep.subr.mxu0 0.0
        %6398 = vmatpush1.msra.mxu0 0.0
        %6399 = vmatprep.subr.mxu0 0.0
        %6400 = vmatpush1.msra.mxu0 0.0
        %6401 = vmatprep.subr.mxu0 0.0
        %6402 = vmatpush1.msra.mxu0 0.0
        %6403 = vmatprep.subr.mxu0 0.0
        %6404 = vmatpush1.msra.mxu0 0.0
        %6405 = vmatprep.subr.mxu0 0.0
        %6406 = vmatpush1.msra.mxu0 0.0
        %6407 = vmatprep.subr.mxu0 0.0
        %6408 = vmatpush1.msra.mxu0 0.0
        %6409 = vmatprep.subr.mxu0 0.0
        %6410 = vmatpush1.msra.mxu0 0.0
        %6411 = vmatprep.subr.mxu0 0.0
        %6412 = vmatpush1.msra.mxu0 0.0
        %6413 = vmatprep.subr.mxu0 0.0
        %6414 = vmatpush1.msra.mxu0 0.0
        %6415 = vmatprep.subr.mxu0 0.0
        %6416 = vmatpush1.msra.mxu0 0.0
        %6417 = vmatprep.subr.mxu0 0.0
        %6418 = vmatpush1.msra.mxu0 0.0
        %6419 = vmatprep.subr.mxu0 0.0
        %6420 = vmatpush1.msra.mxu0 0.0
        %6421 = vmatprep.subr.mxu0 0.0
        %6422 = vmatpush1.msra.mxu0 0.0
        %6423 = vmatprep.subr.mxu0 0.0
        %6424 = vmatpush1.msra.mxu0 0.0
        %6425 = vmatprep.subr.mxu0 0.0
        %6426 = vmatpush1.msra.mxu0 0.0
        %6427 = vmatprep.subr.mxu0 0.0
        %6428 = vmatpush1.msra.mxu0 0.0
        %6429 = vmatprep.subr.mxu0 0.0
        %6430 = vmatpush1.msra.mxu0 0.0
        %6431 = vmatprep.subr.mxu0 0.0
        %6432 = vmatpush1.msra.mxu0 0.0
        %6433 = vmatprep.subr.mxu0 0.0
        %6434 = vmatpush1.msra.mxu0 0.0
        %6435 = vmatprep.subr.mxu0 0.0
        %6436 = vmatpush1.msra.mxu0 0.0
        %6437 = vmatprep.subr.mxu0 0.0
        %6438 = vmatpush1.msra.mxu0 0.0
        %6439 = vmatprep.subr.mxu0 0.0
        %6440 = vmatpush1.msra.mxu0 0.0
        %6441 = vmatprep.subr.mxu0 0.0
        %6442 = vmatpush1.msra.mxu0 0.0
        %6443 = vmatprep.subr.mxu0 0.0
        %6444 = vmatpush1.msra.mxu0 0.0
        %6445 = vmatprep.subr.mxu0 0.0
        %6446 = vmatpush1.msra.mxu0 0.0
        %6447 = vmatprep.subr.mxu0 0.0
        %6448 = vmatpush1.msra.mxu0 0.0
        %6449 = vmatprep.mubr.f32.mxu0 0.0
        %6450 = vmatmul.mubr.f32.gmra.mrb[0].mxu0 %v6312
        %v6451 = vpop.f32.mrb[0].mxu0
        %v6452 = vadd.f32 0.0, %v6451
        %v6453 = vpop.f32.mrb[0].mxu0
        %6454 = vdwg.mxu0
        %v6455 = vadd.f32 %v6284, %v6381
        %v6456 = vadd.f32 %v6285, %v6383
        %v6457 = vadd.f32 %v6286, %v6452
        %s6458 = scalar_lea.vmem %s7, 12
        %v6459 = vld [vmem:[%s6458] sm:$0xf]
        %6461 = vset.pattern.permute.xlu0 0
        %6462 = vperm.xlu0 %6461, %v6459
        %v6463 = vpop.permute.xlu0 %6462
        %v6465 = vadd.f32 %v6455, %v6463
        %v6466 = vadd.f32 %v6456, %v6463
        %v6467 = vadd.f32 %v6457, %v6463
        %vm6468 = vcmp.gt.f32.partialorder %v6465, 0.0
        %vm6469 = vcmp.gt.f32.partialorder %v6466, 0.0
        %vm6470 = vcmp.gt.f32.partialorder %v6467, 0.0
        %v6471 = vmul.f32 %v6465, 0.01
        %v6472 = vmul.f32 %v6466, 0.01
        %v6473 = vmul.f32 %v6467, 0.01
        %v6474 = vsel %vm6468, %v6465, %v6471
        %v6475 = vsel %vm6469, %v6466, %v6472
        %v6476 = vsel %vm6470, %v6467, %v6473
        %v6477 = vsel %vm1842, %v6474, 0.0
        %v6478 = vsel %vm1843, %v6475, 0.0
        %v6479 = vsel %vm1844, %v6476, 0.0
        %6483 = vrot.lane.b32.xlu0 %v6477, 19
        %v6484 = vpop.permute.xlu0 %6483
        %6485 = vrot.lane.b32.xlu0 %v6478, 19
        %v6486 = vpop.permute.xlu0 %6485
        %6487 = vrot.lane.b32.xlu0 %v6479, 19
        %v6488 = vpop.permute.xlu0 %6487
        %v6489 = vsel %vm322, %v6484, %v6486
        %v6490 = vsel %vm322, %v6486, %v6488
        %6494 = vst.msk [vmem:[#allocation2 + $0x30] sm:$0xf] %vm3335, %v6484
        %6495 = vst [vmem:[#allocation2 + $0x38] sm:$0xf] %v6489
        %6496 = vst.msk [vmem:[#allocation2 + $0x40] sm:$0xf] %vm3338, %v6490
        %v6497 = vld [vmem:[#allocation2] sm:$0xff]
        %v6498 = vld [vmem:[#allocation2 + $0x8] sm:$0xff]
        %v6499 = vld [vmem:[#allocation2 + $0x10] sm:$0xff]
        %v6500 = vld [vmem:[#allocation2 + $0x18] sm:$0xff]
        %v6501 = vld [vmem:[#allocation2 + $0x20] sm:$0xff]
        %v6502 = vld [vmem:[#allocation2 + $0x28] sm:$0xff]
        %v6503 = vld [vmem:[#allocation2 + $0x30] sm:$0xf]
        %v6504 = vld [vmem:[#allocation2 + $0x38] sm:$0xf]
        %v6505 = vld [vmem:[#allocation2 + $0x40] sm:$0xf]
        %v6506 = vld [vmem:[%s6] sm:$0xf]
        %s6507 = scalar_lea.vmem %s6, 4
        %v6508 = vld [vmem:[%s6507] sm:$0xf]
        %6518 = vrot.lane.b32.xlu0 %v6497, 127
        %v6519 = vpop.permute.xlu0 %6518
        %6520 = vrot.lane.b32.xlu0 %v6498, 127
        %v6521 = vpop.permute.xlu0 %6520
        %6522 = vrot.lane.b32.xlu0 %v6499, 127
        %v6523 = vpop.permute.xlu0 %6522
        %6524 = vrot.lane.b32.xlu0 %v6500, 127
        %v6525 = vpop.permute.xlu0 %6524
        %6526 = vrot.lane.b32.xlu0 %v6501, 127
        %v6527 = vpop.permute.xlu0 %6526
        %6528 = vrot.lane.b32.xlu0 %v6502, 127
        %v6529 = vpop.permute.xlu0 %6528
        %6530 = vrot.lane.b32.xlu0 %v6503, 127
        %v6531 = vpop.permute.xlu0 %6530
        %6532 = vrot.lane.b32.xlu0 %v6504, 127
        %v6533 = vpop.permute.xlu0 %6532
        %6534 = vrot.lane.b32.xlu0 %v6505, 127
        %v6535 = vpop.permute.xlu0 %6534
        %v6536 = vsel %vm358, %v6519, %v6521
        %v6537 = vsel %vm358, %v6521, %v6523
        %v6538 = vsel %vm358, %v6525, %v6527
        %v6539 = vsel %vm358, %v6527, %v6529
        %v6540 = vsel %vm358, %v6531, %v6533
        %v6541 = vsel %vm358, %v6533, %v6535
        %vm6548 = vcmask 162816
        %v6550 = vsel %vm6548, %v6508, 0
        %v6552 = vsel %vm365, %v6540, 0
        %v6554 = vsel %vm365, %v6541, 0
        %v6556 = vsel %vm365, %v6535, 0
        %6558 = vmatprep.subr.mxu0 %v6537
        %6559 = vmatpush1.msra.mxu0 %v6536
        %6560 = vmatprep.subr.mxu0 %v6539
        %6561 = vmatpush1.msra.mxu0 %v6538
        %6562 = vmatprep.subr.mxu0 %v6554
        %6563 = vmatpush1.msra.mxu0 %v6552
        %6564 = vmatprep.subr.mxu0 0.0
        %6565 = vmatpush1.msra.mxu0 0.0
        %6566 = vmatprep.subr.mxu0 0.0
        %6567 = vmatpush1.msra.mxu0 0.0
        %6568 = vmatprep.subr.mxu0 0.0
        %6569 = vmatpush1.msra.mxu0 0.0
        %6570 = vmatprep.subr.mxu0 0.0
        %6571 = vmatpush1.msra.mxu0 0.0
        %6572 = vmatprep.subr.mxu0 0.0
        %6573 = vmatpush1.msra.mxu0 0.0
        %6574 = vmatprep.subr.mxu0 0.0
        %6575 = vmatpush1.msra.mxu0 0.0
        %6576 = vmatprep.subr.mxu0 0.0
        %6577 = vmatpush1.msra.mxu0 0.0
        %6578 = vmatprep.subr.mxu0 0.0
        %6579 = vmatpush1.msra.mxu0 0.0
        %6580 = vmatprep.subr.mxu0 0.0
        %6581 = vmatpush1.msra.mxu0 0.0
        %6582 = vmatprep.subr.mxu0 0.0
        %6583 = vmatpush1.msra.mxu0 0.0
        %6584 = vmatprep.subr.mxu0 0.0
        %6585 = vmatpush1.msra.mxu0 0.0
        %6586 = vmatprep.subr.mxu0 0.0
        %6587 = vmatpush1.msra.mxu0 0.0
        %6588 = vmatprep.subr.mxu0 0.0
        %6589 = vmatpush1.msra.mxu0 0.0
        %6590 = vmatprep.subr.mxu0 0.0
        %6591 = vmatpush1.msra.mxu0 0.0
        %6592 = vmatprep.subr.mxu0 0.0
        %6593 = vmatpush1.msra.mxu0 0.0
        %6594 = vmatprep.subr.mxu0 0.0
        %6595 = vmatpush1.msra.mxu0 0.0
        %6596 = vmatprep.subr.mxu0 0.0
        %6597 = vmatpush1.msra.mxu0 0.0
        %6598 = vmatprep.subr.mxu0 0.0
        %6599 = vmatpush1.msra.mxu0 0.0
        %6600 = vmatprep.subr.mxu0 0.0
        %6601 = vmatpush1.msra.mxu0 0.0
        %6602 = vmatprep.subr.mxu0 0.0
        %6603 = vmatpush1.msra.mxu0 0.0
        %6604 = vmatprep.subr.mxu0 0.0
        %6605 = vmatpush1.msra.mxu0 0.0
        %6606 = vmatprep.subr.mxu0 0.0
        %6607 = vmatpush1.msra.mxu0 0.0
        %6608 = vmatprep.subr.mxu0 0.0
        %6609 = vmatpush1.msra.mxu0 0.0
        %6610 = vmatprep.subr.mxu0 0.0
        %6611 = vmatpush1.msra.mxu0 0.0
        %6612 = vmatprep.subr.mxu0 0.0
        %6613 = vmatpush1.msra.mxu0 0.0
        %6614 = vmatprep.subr.mxu0 0.0
        %6615 = vmatpush1.msra.mxu0 0.0
        %6616 = vmatprep.subr.mxu0 0.0
        %6617 = vmatpush1.msra.mxu0 0.0
        %6618 = vmatprep.subr.mxu0 0.0
        %6619 = vmatpush1.msra.mxu0 0.0
        %6620 = vmatprep.subr.mxu0 0.0
        %6621 = vmatpush1.msra.mxu0 0.0
        %6622 = vmatprep.mubr.f32.mxu0 0.0
        %6623 = vmatmul.mubr.f32.gmra.mrb[0].mxu0 %v6550
        %v6624 = vpop.f32.mrb[0].mxu0
        %v6625 = vadd.f32 0.0, %v6624
        %v6626 = vpop.f32.mrb[0].mxu0
        %v6627 = vadd.f32 0.0, %v6626
        %6628 = vdwg.mxu0
        %6629 = vmatprep.subr.mxu0 0.0
        %6630 = vmatpush1.msra.mxu0 %v6523
        %6631 = vmatprep.subr.mxu0 0.0
        %6632 = vmatpush1.msra.mxu0 %v6529
        %6633 = vmatprep.subr.mxu0 0.0
        %6634 = vmatpush1.msra.mxu0 %v6556
        %6635 = vmatprep.subr.mxu0 0.0
        %6636 = vmatpush1.msra.mxu0 0.0
        %6637 = vmatprep.subr.mxu0 0.0
        %6638 = vmatpush1.msra.mxu0 0.0
        %6639 = vmatprep.subr.mxu0 0.0
        %6640 = vmatpush1.msra.mxu0 0.0
        %6641 = vmatprep.subr.mxu0 0.0
        %6642 = vmatpush1.msra.mxu0 0.0
        %6643 = vmatprep.subr.mxu0 0.0
        %6644 = vmatpush1.msra.mxu0 0.0
        %6645 = vmatprep.subr.mxu0 0.0
        %6646 = vmatpush1.msra.mxu0 0.0
        %6647 = vmatprep.subr.mxu0 0.0
        %6648 = vmatpush1.msra.mxu0 0.0
        %6649 = vmatprep.subr.mxu0 0.0
        %6650 = vmatpush1.msra.mxu0 0.0
        %6651 = vmatprep.subr.mxu0 0.0
        %6652 = vmatpush1.msra.mxu0 0.0
        %6653 = vmatprep.subr.mxu0 0.0
        %6654 = vmatpush1.msra.mxu0 0.0
        %6655 = vmatprep.subr.mxu0 0.0
        %6656 = vmatpush1.msra.mxu0 0.0
        %6657 = vmatprep.subr.mxu0 0.0
        %6658 = vmatpush1.msra.mxu0 0.0
        %6659 = vmatprep.subr.mxu0 0.0
        %6660 = vmatpush1.msra.mxu0 0.0
        %6661 = vmatprep.subr.mxu0 0.0
        %6662 = vmatpush1.msra.mxu0 0.0
        %6663 = vmatprep.subr.mxu0 0.0
        %6664 = vmatpush1.msra.mxu0 0.0
        %6665 = vmatprep.subr.mxu0 0.0
        %6666 = vmatpush1.msra.mxu0 0.0
        %6667 = vmatprep.subr.mxu0 0.0
        %6668 = vmatpush1.msra.mxu0 0.0
        %6669 = vmatprep.subr.mxu0 0.0
        %6670 = vmatpush1.msra.mxu0 0.0
        %6671 = vmatprep.subr.mxu0 0.0
        %6672 = vmatpush1.msra.mxu0 0.0
        %6673 = vmatprep.subr.mxu0 0.0
        %6674 = vmatpush1.msra.mxu0 0.0
        %6675 = vmatprep.subr.mxu0 0.0
        %6676 = vmatpush1.msra.mxu0 0.0
        %6677 = vmatprep.subr.mxu0 0.0
        %6678 = vmatpush1.msra.mxu0 0.0
        %6679 = vmatprep.subr.mxu0 0.0
        %6680 = vmatpush1.msra.mxu0 0.0
        %6681 = vmatprep.subr.mxu0 0.0
        %6682 = vmatpush1.msra.mxu0 0.0
        %6683 = vmatprep.subr.mxu0 0.0
        %6684 = vmatpush1.msra.mxu0 0.0
        %6685 = vmatprep.subr.mxu0 0.0
        %6686 = vmatpush1.msra.mxu0 0.0
        %6687 = vmatprep.subr.mxu0 0.0
        %6688 = vmatpush1.msra.mxu0 0.0
        %6689 = vmatprep.subr.mxu0 0.0
        %6690 = vmatpush1.msra.mxu0 0.0
        %6691 = vmatprep.subr.mxu0 0.0
        %6692 = vmatpush1.msra.mxu0 0.0
        %6693 = vmatprep.mubr.f32.mxu0 0.0
        %6694 = vmatmul.mubr.f32.gmra.mrb[0].mxu0 %v6550
        %v6695 = vpop.f32.mrb[0].mxu0
        %v6696 = vadd.f32 0.0, %v6695
        %v6697 = vpop.f32.mrb[0].mxu0
        %6698 = vdwg.mxu0
        %v6700 = vsel %vm6548, %v6506, 0
        %v6702 = vsel %vm365, %v6503, 0
        %v6704 = vsel %vm365, %v6504, 0
        %v6706 = vsel %vm365, %v6505, 0
        %6708 = vmatprep.subr.mxu0 %v6498
        %6709 = vmatpush1.msra.mxu0 %v6497
        %6710 = vmatprep.subr.mxu0 %v6501
        %6711 = vmatpush1.msra.mxu0 %v6500
        %6712 = vmatprep.subr.mxu0 %v6704
        %6713 = vmatpush1.msra.mxu0 %v6702
        %6714 = vmatprep.subr.mxu0 0.0
        %6715 = vmatpush1.msra.mxu0 0.0
        %6716 = vmatprep.subr.mxu0 0.0
        %6717 = vmatpush1.msra.mxu0 0.0
        %6718 = vmatprep.subr.mxu0 0.0
        %6719 = vmatpush1.msra.mxu0 0.0
        %6720 = vmatprep.subr.mxu0 0.0
        %6721 = vmatpush1.msra.mxu0 0.0
        %6722 = vmatprep.subr.mxu0 0.0
        %6723 = vmatpush1.msra.mxu0 0.0
        %6724 = vmatprep.subr.mxu0 0.0
        %6725 = vmatpush1.msra.mxu0 0.0
        %6726 = vmatprep.subr.mxu0 0.0
        %6727 = vmatpush1.msra.mxu0 0.0
        %6728 = vmatprep.subr.mxu0 0.0
        %6729 = vmatpush1.msra.mxu0 0.0
        %6730 = vmatprep.subr.mxu0 0.0
        %6731 = vmatpush1.msra.mxu0 0.0
        %6732 = vmatprep.subr.mxu0 0.0
        %6733 = vmatpush1.msra.mxu0 0.0
        %6734 = vmatprep.subr.mxu0 0.0
        %6735 = vmatpush1.msra.mxu0 0.0
        %6736 = vmatprep.subr.mxu0 0.0
        %6737 = vmatpush1.msra.mxu0 0.0
        %6738 = vmatprep.subr.mxu0 0.0
        %6739 = vmatpush1.msra.mxu0 0.0
        %6740 = vmatprep.subr.mxu0 0.0
        %6741 = vmatpush1.msra.mxu0 0.0
        %6742 = vmatprep.subr.mxu0 0.0
        %6743 = vmatpush1.msra.mxu0 0.0
        %6744 = vmatprep.subr.mxu0 0.0
        %6745 = vmatpush1.msra.mxu0 0.0
        %6746 = vmatprep.subr.mxu0 0.0
        %6747 = vmatpush1.msra.mxu0 0.0
        %6748 = vmatprep.subr.mxu0 0.0
        %6749 = vmatpush1.msra.mxu0 0.0
        %6750 = vmatprep.subr.mxu0 0.0
        %6751 = vmatpush1.msra.mxu0 0.0
        %6752 = vmatprep.subr.mxu0 0.0
        %6753 = vmatpush1.msra.mxu0 0.0
        %6754 = vmatprep.subr.mxu0 0.0
        %6755 = vmatpush1.msra.mxu0 0.0
        %6756 = vmatprep.subr.mxu0 0.0
        %6757 = vmatpush1.msra.mxu0 0.0
        %6758 = vmatprep.subr.mxu0 0.0
        %6759 = vmatpush1.msra.mxu0 0.0
        %6760 = vmatprep.subr.mxu0 0.0
        %6761 = vmatpush1.msra.mxu0 0.0
        %6762 = vmatprep.subr.mxu0 0.0
        %6763 = vmatpush1.msra.mxu0 0.0
        %6764 = vmatprep.subr.mxu0 0.0
        %6765 = vmatpush1.msra.mxu0 0.0
        %6766 = vmatprep.subr.mxu0 0.0
        %6767 = vmatpush1.msra.mxu0 0.0
        %6768 = vmatprep.subr.mxu0 0.0
        %6769 = vmatpush1.msra.mxu0 0.0
        %6770 = vmatprep.subr.mxu0 0.0
        %6771 = vmatpush1.msra.mxu0 0.0
        %6772 = vmatprep.mubr.f32.mxu0 0.0
        %6773 = vmatmul.mubr.f32.gmra.mrb[0].mxu0 %v6700
        %v6774 = vpop.f32.mrb[0].mxu0
        %v6775 = vadd.f32 %v6625, %v6774
        %v6776 = vpop.f32.mrb[0].mxu0
        %v6777 = vadd.f32 %v6627, %v6776
        %6778 = vdwg.mxu0
        %6779 = vmatprep.subr.mxu0 0.0
        %6780 = vmatpush1.msra.mxu0 %v6499
        %6781 = vmatprep.subr.mxu0 0.0
        %6782 = vmatpush1.msra.mxu0 %v6502
        %6783 = vmatprep.subr.mxu0 0.0
        %6784 = vmatpush1.msra.mxu0 %v6706
        %6785 = vmatprep.subr.mxu0 0.0
        %6786 = vmatpush1.msra.mxu0 0.0
        %6787 = vmatprep.subr.mxu0 0.0
        %6788 = vmatpush1.msra.mxu0 0.0
        %6789 = vmatprep.subr.mxu0 0.0
        %6790 = vmatpush1.msra.mxu0 0.0
        %6791 = vmatprep.subr.mxu0 0.0
        %6792 = vmatpush1.msra.mxu0 0.0
        %6793 = vmatprep.subr.mxu0 0.0
        %6794 = vmatpush1.msra.mxu0 0.0
        %6795 = vmatprep.subr.mxu0 0.0
        %6796 = vmatpush1.msra.mxu0 0.0
        %6797 = vmatprep.subr.mxu0 0.0
        %6798 = vmatpush1.msra.mxu0 0.0
        %6799 = vmatprep.subr.mxu0 0.0
        %6800 = vmatpush1.msra.mxu0 0.0
        %6801 = vmatprep.subr.mxu0 0.0
        %6802 = vmatpush1.msra.mxu0 0.0
        %6803 = vmatprep.subr.mxu0 0.0
        %6804 = vmatpush1.msra.mxu0 0.0
        %6805 = vmatprep.subr.mxu0 0.0
        %6806 = vmatpush1.msra.mxu0 0.0
        %6807 = vmatprep.subr.mxu0 0.0
        %6808 = vmatpush1.msra.mxu0 0.0
        %6809 = vmatprep.subr.mxu0 0.0
        %6810 = vmatpush1.msra.mxu0 0.0
        %6811 = vmatprep.subr.mxu0 0.0
        %6812 = vmatpush1.msra.mxu0 0.0
        %6813 = vmatprep.subr.mxu0 0.0
        %6814 = vmatpush1.msra.mxu0 0.0
        %6815 = vmatprep.subr.mxu0 0.0
        %6816 = vmatpush1.msra.mxu0 0.0
        %6817 = vmatprep.subr.mxu0 0.0
        %6818 = vmatpush1.msra.mxu0 0.0
        %6819 = vmatprep.subr.mxu0 0.0
        %6820 = vmatpush1.msra.mxu0 0.0
        %6821 = vmatprep.subr.mxu0 0.0
        %6822 = vmatpush1.msra.mxu0 0.0
        %6823 = vmatprep.subr.mxu0 0.0
        %6824 = vmatpush1.msra.mxu0 0.0
        %6825 = vmatprep.subr.mxu0 0.0
        %6826 = vmatpush1.msra.mxu0 0.0
        %6827 = vmatprep.subr.mxu0 0.0
        %6828 = vmatpush1.msra.mxu0 0.0
        %6829 = vmatprep.subr.mxu0 0.0
        %6830 = vmatpush1.msra.mxu0 0.0
        %6831 = vmatprep.subr.mxu0 0.0
        %6832 = vmatpush1.msra.mxu0 0.0
        %6833 = vmatprep.subr.mxu0 0.0
        %6834 = vmatpush1.msra.mxu0 0.0
        %6835 = vmatprep.subr.mxu0 0.0
        %6836 = vmatpush1.msra.mxu0 0.0
        %6837 = vmatprep.subr.mxu0 0.0
        %6838 = vmatpush1.msra.mxu0 0.0
        %6839 = vmatprep.subr.mxu0 0.0
        %6840 = vmatpush1.msra.mxu0 0.0
        %6841 = vmatprep.subr.mxu0 0.0
        %6842 = vmatpush1.msra.mxu0 0.0
        %6843 = vmatprep.mubr.f32.mxu0 0.0
        %6844 = vmatmul.mubr.f32.gmra.mrb[0].mxu0 %v6700
        %v6845 = vpop.f32.mrb[0].mxu0
        %v6846 = vadd.f32 %v6696, %v6845
        %v6847 = vpop.f32.mrb[0].mxu0
        %6848 = vdwg.mxu0
        %s6849 = scalar_lea.vmem %s6, 8
        %v6850 = vld [vmem:[%s6849] sm:$0xf]
        %6851 = vrot.lane.b32.xlu0 %v6497, 126
        %v6852 = vpop.permute.xlu0 %6851
        %6853 = vrot.lane.b32.xlu0 %v6498, 126
        %v6854 = vpop.permute.xlu0 %6853
        %6855 = vrot.lane.b32.xlu0 %v6499, 126
        %v6856 = vpop.permute.xlu0 %6855
        %6857 = vrot.lane.b32.xlu0 %v6500, 126
        %v6858 = vpop.permute.xlu0 %6857
        %6859 = vrot.lane.b32.xlu0 %v6501, 126
        %v6860 = vpop.permute.xlu0 %6859
        %6861 = vrot.lane.b32.xlu0 %v6502, 126
        %v6862 = vpop.permute.xlu0 %6861
        %6863 = vrot.lane.b32.xlu0 %v6503, 126
        %v6864 = vpop.permute.xlu0 %6863
        %6865 = vrot.lane.b32.xlu0 %v6504, 126
        %v6866 = vpop.permute.xlu0 %6865
        %6867 = vrot.lane.b32.xlu0 %v6505, 126
        %v6868 = vpop.permute.xlu0 %6867
        %v6869 = vsel %vm671, %v6852, %v6854
        %v6870 = vsel %vm671, %v6854, %v6856
        %v6871 = vsel %vm671, %v6858, %v6860
        %v6872 = vsel %vm671, %v6860, %v6862
        %v6873 = vsel %vm671, %v6864, %v6866
        %v6874 = vsel %vm671, %v6866, %v6868
        %v6882 = vsel %vm6548, %v6850, 0
        %v6884 = vsel %vm365, %v6873, 0
        %v6886 = vsel %vm365, %v6874, 0
        %v6888 = vsel %vm365, %v6868, 0
        %6890 = vmatprep.subr.mxu0 %v6870
        %6891 = vmatpush1.msra.mxu0 %v6869
        %6892 = vmatprep.subr.mxu0 %v6872
        %6893 = vmatpush1.msra.mxu0 %v6871
        %6894 = vmatprep.subr.mxu0 %v6886
        %6895 = vmatpush1.msra.mxu0 %v6884
        %6896 = vmatprep.subr.mxu0 0.0
        %6897 = vmatpush1.msra.mxu0 0.0
        %6898 = vmatprep.subr.mxu0 0.0
        %6899 = vmatpush1.msra.mxu0 0.0
        %6900 = vmatprep.subr.mxu0 0.0
        %6901 = vmatpush1.msra.mxu0 0.0
        %6902 = vmatprep.subr.mxu0 0.0
        %6903 = vmatpush1.msra.mxu0 0.0
        %6904 = vmatprep.subr.mxu0 0.0
        %6905 = vmatpush1.msra.mxu0 0.0
        %6906 = vmatprep.subr.mxu0 0.0
        %6907 = vmatpush1.msra.mxu0 0.0
        %6908 = vmatprep.subr.mxu0 0.0
        %6909 = vmatpush1.msra.mxu0 0.0
        %6910 = vmatprep.subr.mxu0 0.0
        %6911 = vmatpush1.msra.mxu0 0.0
        %6912 = vmatprep.subr.mxu0 0.0
        %6913 = vmatpush1.msra.mxu0 0.0
        %6914 = vmatprep.subr.mxu0 0.0
        %6915 = vmatpush1.msra.mxu0 0.0
        %6916 = vmatprep.subr.mxu0 0.0
        %6917 = vmatpush1.msra.mxu0 0.0
        %6918 = vmatprep.subr.mxu0 0.0
        %6919 = vmatpush1.msra.mxu0 0.0
        %6920 = vmatprep.subr.mxu0 0.0
        %6921 = vmatpush1.msra.mxu0 0.0
        %6922 = vmatprep.subr.mxu0 0.0
        %6923 = vmatpush1.msra.mxu0 0.0
        %6924 = vmatprep.subr.mxu0 0.0
        %6925 = vmatpush1.msra.mxu0 0.0
        %6926 = vmatprep.subr.mxu0 0.0
        %6927 = vmatpush1.msra.mxu0 0.0
        %6928 = vmatprep.subr.mxu0 0.0
        %6929 = vmatpush1.msra.mxu0 0.0
        %6930 = vmatprep.subr.mxu0 0.0
        %6931 = vmatpush1.msra.mxu0 0.0
        %6932 = vmatprep.subr.mxu0 0.0
        %6933 = vmatpush1.msra.mxu0 0.0
        %6934 = vmatprep.subr.mxu0 0.0
        %6935 = vmatpush1.msra.mxu0 0.0
        %6936 = vmatprep.subr.mxu0 0.0
        %6937 = vmatpush1.msra.mxu0 0.0
        %6938 = vmatprep.subr.mxu0 0.0
        %6939 = vmatpush1.msra.mxu0 0.0
        %6940 = vmatprep.subr.mxu0 0.0
        %6941 = vmatpush1.msra.mxu0 0.0
        %6942 = vmatprep.subr.mxu0 0.0
        %6943 = vmatpush1.msra.mxu0 0.0
        %6944 = vmatprep.subr.mxu0 0.0
        %6945 = vmatpush1.msra.mxu0 0.0
        %6946 = vmatprep.subr.mxu0 0.0
        %6947 = vmatpush1.msra.mxu0 0.0
        %6948 = vmatprep.subr.mxu0 0.0
        %6949 = vmatpush1.msra.mxu0 0.0
        %6950 = vmatprep.subr.mxu0 0.0
        %6951 = vmatpush1.msra.mxu0 0.0
        %6952 = vmatprep.subr.mxu0 0.0
        %6953 = vmatpush1.msra.mxu0 0.0
        %6954 = vmatprep.mubr.f32.mxu0 0.0
        %6955 = vmatmul.mubr.f32.gmra.mrb[0].mxu0 %v6882
        %v6956 = vpop.f32.mrb[0].mxu0
        %v6957 = vadd.f32 0.0, %v6956
        %v6958 = vpop.f32.mrb[0].mxu0
        %v6959 = vadd.f32 0.0, %v6958
        %6960 = vdwg.mxu0
        %6961 = vmatprep.subr.mxu0 0.0
        %6962 = vmatpush1.msra.mxu0 %v6856
        %6963 = vmatprep.subr.mxu0 0.0
        %6964 = vmatpush1.msra.mxu0 %v6862
        %6965 = vmatprep.subr.mxu0 0.0
        %6966 = vmatpush1.msra.mxu0 %v6888
        %6967 = vmatprep.subr.mxu0 0.0
        %6968 = vmatpush1.msra.mxu0 0.0
        %6969 = vmatprep.subr.mxu0 0.0
        %6970 = vmatpush1.msra.mxu0 0.0
        %6971 = vmatprep.subr.mxu0 0.0
        %6972 = vmatpush1.msra.mxu0 0.0
        %6973 = vmatprep.subr.mxu0 0.0
        %6974 = vmatpush1.msra.mxu0 0.0
        %6975 = vmatprep.subr.mxu0 0.0
        %6976 = vmatpush1.msra.mxu0 0.0
        %6977 = vmatprep.subr.mxu0 0.0
        %6978 = vmatpush1.msra.mxu0 0.0
        %6979 = vmatprep.subr.mxu0 0.0
        %6980 = vmatpush1.msra.mxu0 0.0
        %6981 = vmatprep.subr.mxu0 0.0
        %6982 = vmatpush1.msra.mxu0 0.0
        %6983 = vmatprep.subr.mxu0 0.0
        %6984 = vmatpush1.msra.mxu0 0.0
        %6985 = vmatprep.subr.mxu0 0.0
        %6986 = vmatpush1.msra.mxu0 0.0
        %6987 = vmatprep.subr.mxu0 0.0
        %6988 = vmatpush1.msra.mxu0 0.0
        %6989 = vmatprep.subr.mxu0 0.0
        %6990 = vmatpush1.msra.mxu0 0.0
        %6991 = vmatprep.subr.mxu0 0.0
        %6992 = vmatpush1.msra.mxu0 0.0
        %6993 = vmatprep.subr.mxu0 0.0
        %6994 = vmatpush1.msra.mxu0 0.0
        %6995 = vmatprep.subr.mxu0 0.0
        %6996 = vmatpush1.msra.mxu0 0.0
        %6997 = vmatprep.subr.mxu0 0.0
        %6998 = vmatpush1.msra.mxu0 0.0
        %6999 = vmatprep.subr.mxu0 0.0
        %7000 = vmatpush1.msra.mxu0 0.0
        %7001 = vmatprep.subr.mxu0 0.0
        %7002 = vmatpush1.msra.mxu0 0.0
        %7003 = vmatprep.subr.mxu0 0.0
        %7004 = vmatpush1.msra.mxu0 0.0
        %7005 = vmatprep.subr.mxu0 0.0
        %7006 = vmatpush1.msra.mxu0 0.0
        %7007 = vmatprep.subr.mxu0 0.0
        %7008 = vmatpush1.msra.mxu0 0.0
        %7009 = vmatprep.subr.mxu0 0.0
        %7010 = vmatpush1.msra.mxu0 0.0
        %7011 = vmatprep.subr.mxu0 0.0
        %7012 = vmatpush1.msra.mxu0 0.0
        %7013 = vmatprep.subr.mxu0 0.0
        %7014 = vmatpush1.msra.mxu0 0.0
        %7015 = vmatprep.subr.mxu0 0.0
        %7016 = vmatpush1.msra.mxu0 0.0
        %7017 = vmatprep.subr.mxu0 0.0
        %7018 = vmatpush1.msra.mxu0 0.0
        %7019 = vmatprep.subr.mxu0 0.0
        %7020 = vmatpush1.msra.mxu0 0.0
        %7021 = vmatprep.subr.mxu0 0.0
        %7022 = vmatpush1.msra.mxu0 0.0
        %7023 = vmatprep.subr.mxu0 0.0
        %7024 = vmatpush1.msra.mxu0 0.0
        %7025 = vmatprep.mubr.f32.mxu0 0.0
        %7026 = vmatmul.mubr.f32.gmra.mrb[0].mxu0 %v6882
        %v7027 = vpop.f32.mrb[0].mxu0
        %v7028 = vadd.f32 0.0, %v7027
        %v7029 = vpop.f32.mrb[0].mxu0
        %7030 = vdwg.mxu0
        %v7031 = vadd.f32 %v6775, %v6957
        %v7032 = vadd.f32 %v6777, %v6959
        %v7033 = vadd.f32 %v6846, %v7028
        %s7034 = scalar_lea.vmem %s6, 12
        %v7035 = vld [vmem:[%s7034] sm:$0xf]
        %7036 = vrot.lane.b32.xlu0 %v6497, 110
        %v7037 = vpop.permute.xlu0 %7036
        %7038 = vrot.lane.b32.xlu0 %v6498, 110
        %v7039 = vpop.permute.xlu0 %7038
        %7040 = vrot.lane.b32.xlu0 %v6499, 110
        %v7041 = vpop.permute.xlu0 %7040
        %7042 = vrot.lane.b32.xlu0 %v6500, 110
        %v7043 = vpop.permute.xlu0 %7042
        %7044 = vrot.lane.b32.xlu0 %v6501, 110
        %v7045 = vpop.permute.xlu0 %7044
        %7046 = vrot.lane.b32.xlu0 %v6502, 110
        %v7047 = vpop.permute.xlu0 %7046
        %7048 = vrot.lane.b32.xlu0 %v6503, 110
        %v7049 = vpop.permute.xlu0 %7048
        %7050 = vrot.lane.b32.xlu0 %v6504, 110
        %v7051 = vpop.permute.xlu0 %7050
        %7052 = vrot.lane.b32.xlu0 %v6505, 110
        %v7053 = vpop.permute.xlu0 %7052
        %v7054 = vsel %vm835, %v7037, %v7039
        %v7055 = vsel %vm835, %v7039, %v7041
        %v7056 = vsel %vm835, %v7043, %v7045
        %v7057 = vsel %vm835, %v7045, %v7047
        %v7058 = vsel %vm835, %v7049, %v7051
        %v7059 = vsel %vm835, %v7051, %v7053
        %v7067 = vsel %vm6548, %v7035, 0
        %v7069 = vsel %vm365, %v7058, 0
        %v7071 = vsel %vm365, %v7059, 0
        %v7073 = vsel %vm365, %v7053, 0
        %7075 = vmatprep.subr.mxu0 %v7055
        %7076 = vmatpush1.msra.mxu0 %v7054
        %7077 = vmatprep.subr.mxu0 %v7057
        %7078 = vmatpush1.msra.mxu0 %v7056
        %7079 = vmatprep.subr.mxu0 %v7071
        %7080 = vmatpush1.msra.mxu0 %v7069
        %7081 = vmatprep.subr.mxu0 0.0
        %7082 = vmatpush1.msra.mxu0 0.0
        %7083 = vmatprep.subr.mxu0 0.0
        %7084 = vmatpush1.msra.mxu0 0.0
        %7085 = vmatprep.subr.mxu0 0.0
        %7086 = vmatpush1.msra.mxu0 0.0
        %7087 = vmatprep.subr.mxu0 0.0
        %7088 = vmatpush1.msra.mxu0 0.0
        %7089 = vmatprep.subr.mxu0 0.0
        %7090 = vmatpush1.msra.mxu0 0.0
        %7091 = vmatprep.subr.mxu0 0.0
        %7092 = vmatpush1.msra.mxu0 0.0
        %7093 = vmatprep.subr.mxu0 0.0
        %7094 = vmatpush1.msra.mxu0 0.0
        %7095 = vmatprep.subr.mxu0 0.0
        %7096 = vmatpush1.msra.mxu0 0.0
        %7097 = vmatprep.subr.mxu0 0.0
        %7098 = vmatpush1.msra.mxu0 0.0
        %7099 = vmatprep.subr.mxu0 0.0
        %7100 = vmatpush1.msra.mxu0 0.0
        %7101 = vmatprep.subr.mxu0 0.0
        %7102 = vmatpush1.msra.mxu0 0.0
        %7103 = vmatprep.subr.mxu0 0.0
        %7104 = vmatpush1.msra.mxu0 0.0
        %7105 = vmatprep.subr.mxu0 0.0
        %7106 = vmatpush1.msra.mxu0 0.0
        %7107 = vmatprep.subr.mxu0 0.0
        %7108 = vmatpush1.msra.mxu0 0.0
        %7109 = vmatprep.subr.mxu0 0.0
        %7110 = vmatpush1.msra.mxu0 0.0
        %7111 = vmatprep.subr.mxu0 0.0
        %7112 = vmatpush1.msra.mxu0 0.0
        %7113 = vmatprep.subr.mxu0 0.0
        %7114 = vmatpush1.msra.mxu0 0.0
        %7115 = vmatprep.subr.mxu0 0.0
        %7116 = vmatpush1.msra.mxu0 0.0
        %7117 = vmatprep.subr.mxu0 0.0
        %7118 = vmatpush1.msra.mxu0 0.0
        %7119 = vmatprep.subr.mxu0 0.0
        %7120 = vmatpush1.msra.mxu0 0.0
        %7121 = vmatprep.subr.mxu0 0.0
        %7122 = vmatpush1.msra.mxu0 0.0
        %7123 = vmatprep.subr.mxu0 0.0
        %7124 = vmatpush1.msra.mxu0 0.0
        %7125 = vmatprep.subr.mxu0 0.0
        %7126 = vmatpush1.msra.mxu0 0.0
        %7127 = vmatprep.subr.mxu0 0.0
        %7128 = vmatpush1.msra.mxu0 0.0
        %7129 = vmatprep.subr.mxu0 0.0
        %7130 = vmatpush1.msra.mxu0 0.0
        %7131 = vmatprep.subr.mxu0 0.0
        %7132 = vmatpush1.msra.mxu0 0.0
        %7133 = vmatprep.subr.mxu0 0.0
        %7134 = vmatpush1.msra.mxu0 0.0
        %7135 = vmatprep.subr.mxu0 0.0
        %7136 = vmatpush1.msra.mxu0 0.0
        %7137 = vmatprep.subr.mxu0 0.0
        %7138 = vmatpush1.msra.mxu0 0.0
        %7139 = vmatprep.mubr.f32.mxu0 0.0
        %7140 = vmatmul.mubr.f32.gmra.mrb[0].mxu0 %v7067
        %v7141 = vpop.f32.mrb[0].mxu0
        %v7142 = vadd.f32 0.0, %v7141
        %v7143 = vpop.f32.mrb[0].mxu0
        %v7144 = vadd.f32 0.0, %v7143
        %7145 = vdwg.mxu0
        %7146 = vmatprep.subr.mxu0 0.0
        %7147 = vmatpush1.msra.mxu0 %v7041
        %7148 = vmatprep.subr.mxu0 0.0
        %7149 = vmatpush1.msra.mxu0 %v7047
        %7150 = vmatprep.subr.mxu0 0.0
        %7151 = vmatpush1.msra.mxu0 %v7073
        %7152 = vmatprep.subr.mxu0 0.0
        %7153 = vmatpush1.msra.mxu0 0.0
        %7154 = vmatprep.subr.mxu0 0.0
        %7155 = vmatpush1.msra.mxu0 0.0
        %7156 = vmatprep.subr.mxu0 0.0
        %7157 = vmatpush1.msra.mxu0 0.0
        %7158 = vmatprep.subr.mxu0 0.0
        %7159 = vmatpush1.msra.mxu0 0.0
        %7160 = vmatprep.subr.mxu0 0.0
        %7161 = vmatpush1.msra.mxu0 0.0
        %7162 = vmatprep.subr.mxu0 0.0
        %7163 = vmatpush1.msra.mxu0 0.0
        %7164 = vmatprep.subr.mxu0 0.0
        %7165 = vmatpush1.msra.mxu0 0.0
        %7166 = vmatprep.subr.mxu0 0.0
        %7167 = vmatpush1.msra.mxu0 0.0
        %7168 = vmatprep.subr.mxu0 0.0
        %7169 = vmatpush1.msra.mxu0 0.0
        %7170 = vmatprep.subr.mxu0 0.0
        %7171 = vmatpush1.msra.mxu0 0.0
        %7172 = vmatprep.subr.mxu0 0.0
        %7173 = vmatpush1.msra.mxu0 0.0
        %7174 = vmatprep.subr.mxu0 0.0
        %7175 = vmatpush1.msra.mxu0 0.0
        %7176 = vmatprep.subr.mxu0 0.0
        %7177 = vmatpush1.msra.mxu0 0.0
        %7178 = vmatprep.subr.mxu0 0.0
        %7179 = vmatpush1.msra.mxu0 0.0
        %7180 = vmatprep.subr.mxu0 0.0
        %7181 = vmatpush1.msra.mxu0 0.0
        %7182 = vmatprep.subr.mxu0 0.0
        %7183 = vmatpush1.msra.mxu0 0.0
        %7184 = vmatprep.subr.mxu0 0.0
        %7185 = vmatpush1.msra.mxu0 0.0
        %7186 = vmatprep.subr.mxu0 0.0
        %7187 = vmatpush1.msra.mxu0 0.0
        %7188 = vmatprep.subr.mxu0 0.0
        %7189 = vmatpush1.msra.mxu0 0.0
        %7190 = vmatprep.subr.mxu0 0.0
        %7191 = vmatpush1.msra.mxu0 0.0
        %7192 = vmatprep.subr.mxu0 0.0
        %7193 = vmatpush1.msra.mxu0 0.0
        %7194 = vmatprep.subr.mxu0 0.0
        %7195 = vmatpush1.msra.mxu0 0.0
        %7196 = vmatprep.subr.mxu0 0.0
        %7197 = vmatpush1.msra.mxu0 0.0
        %7198 = vmatprep.subr.mxu0 0.0
        %7199 = vmatpush1.msra.mxu0 0.0
        %7200 = vmatprep.subr.mxu0 0.0
        %7201 = vmatpush1.msra.mxu0 0.0
        %7202 = vmatprep.subr.mxu0 0.0
        %7203 = vmatpush1.msra.mxu0 0.0
        %7204 = vmatprep.subr.mxu0 0.0
        %7205 = vmatpush1.msra.mxu0 0.0
        %7206 = vmatprep.subr.mxu0 0.0
        %7207 = vmatpush1.msra.mxu0 0.0
        %7208 = vmatprep.subr.mxu0 0.0
        %7209 = vmatpush1.msra.mxu0 0.0
        %7210 = vmatprep.mubr.f32.mxu0 0.0
        %7211 = vmatmul.mubr.f32.gmra.mrb[0].mxu0 %v7067
        %v7212 = vpop.f32.mrb[0].mxu0
        %v7213 = vadd.f32 0.0, %v7212
        %v7214 = vpop.f32.mrb[0].mxu0
        %7215 = vdwg.mxu0
        %v7216 = vadd.f32 %v7031, %v7142
        %v7217 = vadd.f32 %v7032, %v7144
        %v7218 = vadd.f32 %v7033, %v7213
        %s7219 = scalar_lea.vmem %s6, 16
        %v7220 = vld [vmem:[%s7219] sm:$0xf]
        %7221 = vrot.lane.b32.xlu0 %v6497, 109
        %v7222 = vpop.permute.xlu0 %7221
        %7223 = vrot.lane.b32.xlu0 %v6498, 109
        %v7224 = vpop.permute.xlu0 %7223
        %7225 = vrot.lane.b32.xlu0 %v6499, 109
        %v7226 = vpop.permute.xlu0 %7225
        %7227 = vrot.lane.b32.xlu0 %v6500, 109
        %v7228 = vpop.permute.xlu0 %7227
        %7229 = vrot.lane.b32.xlu0 %v6501, 109
        %v7230 = vpop.permute.xlu0 %7229
        %7231 = vrot.lane.b32.xlu0 %v6502, 109
        %v7232 = vpop.permute.xlu0 %7231
        %7233 = vrot.lane.b32.xlu0 %v6503, 109
        %v7234 = vpop.permute.xlu0 %7233
        %7235 = vrot.lane.b32.xlu0 %v6504, 109
        %v7236 = vpop.permute.xlu0 %7235
        %7237 = vrot.lane.b32.xlu0 %v6505, 109
        %v7238 = vpop.permute.xlu0 %7237
        %v7239 = vsel %vm999, %v7222, %v7224
        %v7240 = vsel %vm999, %v7224, %v7226
        %v7241 = vsel %vm999, %v7228, %v7230
        %v7242 = vsel %vm999, %v7230, %v7232
        %v7243 = vsel %vm999, %v7234, %v7236
        %v7244 = vsel %vm999, %v7236, %v7238
        %v7252 = vsel %vm6548, %v7220, 0
        %v7254 = vsel %vm365, %v7243, 0
        %v7256 = vsel %vm365, %v7244, 0
        %v7258 = vsel %vm365, %v7238, 0
        %7260 = vmatprep.subr.mxu0 %v7240
        %7261 = vmatpush1.msra.mxu0 %v7239
        %7262 = vmatprep.subr.mxu0 %v7242
        %7263 = vmatpush1.msra.mxu0 %v7241
        %7264 = vmatprep.subr.mxu0 %v7256
        %7265 = vmatpush1.msra.mxu0 %v7254
        %7266 = vmatprep.subr.mxu0 0.0
        %7267 = vmatpush1.msra.mxu0 0.0
        %7268 = vmatprep.subr.mxu0 0.0
        %7269 = vmatpush1.msra.mxu0 0.0
        %7270 = vmatprep.subr.mxu0 0.0
        %7271 = vmatpush1.msra.mxu0 0.0
        %7272 = vmatprep.subr.mxu0 0.0
        %7273 = vmatpush1.msra.mxu0 0.0
        %7274 = vmatprep.subr.mxu0 0.0
        %7275 = vmatpush1.msra.mxu0 0.0
        %7276 = vmatprep.subr.mxu0 0.0
        %7277 = vmatpush1.msra.mxu0 0.0
        %7278 = vmatprep.subr.mxu0 0.0
        %7279 = vmatpush1.msra.mxu0 0.0
        %7280 = vmatprep.subr.mxu0 0.0
        %7281 = vmatpush1.msra.mxu0 0.0
        %7282 = vmatprep.subr.mxu0 0.0
        %7283 = vmatpush1.msra.mxu0 0.0
        %7284 = vmatprep.subr.mxu0 0.0
        %7285 = vmatpush1.msra.mxu0 0.0
        %7286 = vmatprep.subr.mxu0 0.0
        %7287 = vmatpush1.msra.mxu0 0.0
        %7288 = vmatprep.subr.mxu0 0.0
        %7289 = vmatpush1.msra.mxu0 0.0
        %7290 = vmatprep.subr.mxu0 0.0
        %7291 = vmatpush1.msra.mxu0 0.0
        %7292 = vmatprep.subr.mxu0 0.0
        %7293 = vmatpush1.msra.mxu0 0.0
        %7294 = vmatprep.subr.mxu0 0.0
        %7295 = vmatpush1.msra.mxu0 0.0
        %7296 = vmatprep.subr.mxu0 0.0
        %7297 = vmatpush1.msra.mxu0 0.0
        %7298 = vmatprep.subr.mxu0 0.0
        %7299 = vmatpush1.msra.mxu0 0.0
        %7300 = vmatprep.subr.mxu0 0.0
        %7301 = vmatpush1.msra.mxu0 0.0
        %7302 = vmatprep.subr.mxu0 0.0
        %7303 = vmatpush1.msra.mxu0 0.0
        %7304 = vmatprep.subr.mxu0 0.0
        %7305 = vmatpush1.msra.mxu0 0.0
        %7306 = vmatprep.subr.mxu0 0.0
        %7307 = vmatpush1.msra.mxu0 0.0
        %7308 = vmatprep.subr.mxu0 0.0
        %7309 = vmatpush1.msra.mxu0 0.0
        %7310 = vmatprep.subr.mxu0 0.0
        %7311 = vmatpush1.msra.mxu0 0.0
        %7312 = vmatprep.subr.mxu0 0.0
        %7313 = vmatpush1.msra.mxu0 0.0
        %7314 = vmatprep.subr.mxu0 0.0
        %7315 = vmatpush1.msra.mxu0 0.0
        %7316 = vmatprep.subr.mxu0 0.0
        %7317 = vmatpush1.msra.mxu0 0.0
        %7318 = vmatprep.subr.mxu0 0.0
        %7319 = vmatpush1.msra.mxu0 0.0
        %7320 = vmatprep.subr.mxu0 0.0
        %7321 = vmatpush1.msra.mxu0 0.0
        %7322 = vmatprep.subr.mxu0 0.0
        %7323 = vmatpush1.msra.mxu0 0.0
        %7324 = vmatprep.mubr.f32.mxu0 0.0
        %7325 = vmatmul.mubr.f32.gmra.mrb[0].mxu0 %v7252
        %v7326 = vpop.f32.mrb[0].mxu0
        %v7327 = vadd.f32 0.0, %v7326
        %v7328 = vpop.f32.mrb[0].mxu0
        %v7329 = vadd.f32 0.0, %v7328
        %7330 = vdwg.mxu0
        %7331 = vmatprep.subr.mxu0 0.0
        %7332 = vmatpush1.msra.mxu0 %v7226
        %7333 = vmatprep.subr.mxu0 0.0
        %7334 = vmatpush1.msra.mxu0 %v7232
        %7335 = vmatprep.subr.mxu0 0.0
        %7336 = vmatpush1.msra.mxu0 %v7258
        %7337 = vmatprep.subr.mxu0 0.0
        %7338 = vmatpush1.msra.mxu0 0.0
        %7339 = vmatprep.subr.mxu0 0.0
        %7340 = vmatpush1.msra.mxu0 0.0
        %7341 = vmatprep.subr.mxu0 0.0
        %7342 = vmatpush1.msra.mxu0 0.0
        %7343 = vmatprep.subr.mxu0 0.0
        %7344 = vmatpush1.msra.mxu0 0.0
        %7345 = vmatprep.subr.mxu0 0.0
        %7346 = vmatpush1.msra.mxu0 0.0
        %7347 = vmatprep.subr.mxu0 0.0
        %7348 = vmatpush1.msra.mxu0 0.0
        %7349 = vmatprep.subr.mxu0 0.0
        %7350 = vmatpush1.msra.mxu0 0.0
        %7351 = vmatprep.subr.mxu0 0.0
        %7352 = vmatpush1.msra.mxu0 0.0
        %7353 = vmatprep.subr.mxu0 0.0
        %7354 = vmatpush1.msra.mxu0 0.0
        %7355 = vmatprep.subr.mxu0 0.0
        %7356 = vmatpush1.msra.mxu0 0.0
        %7357 = vmatprep.subr.mxu0 0.0
        %7358 = vmatpush1.msra.mxu0 0.0
        %7359 = vmatprep.subr.mxu0 0.0
        %7360 = vmatpush1.msra.mxu0 0.0
        %7361 = vmatprep.subr.mxu0 0.0
        %7362 = vmatpush1.msra.mxu0 0.0
        %7363 = vmatprep.subr.mxu0 0.0
        %7364 = vmatpush1.msra.mxu0 0.0
        %7365 = vmatprep.subr.mxu0 0.0
        %7366 = vmatpush1.msra.mxu0 0.0
        %7367 = vmatprep.subr.mxu0 0.0
        %7368 = vmatpush1.msra.mxu0 0.0
        %7369 = vmatprep.subr.mxu0 0.0
        %7370 = vmatpush1.msra.mxu0 0.0
        %7371 = vmatprep.subr.mxu0 0.0
        %7372 = vmatpush1.msra.mxu0 0.0
        %7373 = vmatprep.subr.mxu0 0.0
        %7374 = vmatpush1.msra.mxu0 0.0
        %7375 = vmatprep.subr.mxu0 0.0
        %7376 = vmatpush1.msra.mxu0 0.0
        %7377 = vmatprep.subr.mxu0 0.0
        %7378 = vmatpush1.msra.mxu0 0.0
        %7379 = vmatprep.subr.mxu0 0.0
        %7380 = vmatpush1.msra.mxu0 0.0
        %7381 = vmatprep.subr.mxu0 0.0
        %7382 = vmatpush1.msra.mxu0 0.0
        %7383 = vmatprep.subr.mxu0 0.0
        %7384 = vmatpush1.msra.mxu0 0.0
        %7385 = vmatprep.subr.mxu0 0.0
        %7386 = vmatpush1.msra.mxu0 0.0
        %7387 = vmatprep.subr.mxu0 0.0
        %7388 = vmatpush1.msra.mxu0 0.0
        %7389 = vmatprep.subr.mxu0 0.0
        %7390 = vmatpush1.msra.mxu0 0.0
        %7391 = vmatprep.subr.mxu0 0.0
        %7392 = vmatpush1.msra.mxu0 0.0
        %7393 = vmatprep.subr.mxu0 0.0
        %7394 = vmatpush1.msra.mxu0 0.0
        %7395 = vmatprep.mubr.f32.mxu0 0.0
        %7396 = vmatmul.mubr.f32.gmra.mrb[0].mxu0 %v7252
        %v7397 = vpop.f32.mrb[0].mxu0
        %v7398 = vadd.f32 0.0, %v7397
        %v7399 = vpop.f32.mrb[0].mxu0
        %7400 = vdwg.mxu0
        %v7401 = vadd.f32 %v7216, %v7327
        %v7402 = vadd.f32 %v7217, %v7329
        %v7403 = vadd.f32 %v7218, %v7398
        %s7404 = scalar_lea.vmem %s6, 20
        %v7405 = vld [vmem:[%s7404] sm:$0xf]
        %7406 = vrot.lane.b32.xlu0 %v6497, 108
        %v7407 = vpop.permute.xlu0 %7406
        %7408 = vrot.lane.b32.xlu0 %v6498, 108
        %v7409 = vpop.permute.xlu0 %7408
        %7410 = vrot.lane.b32.xlu0 %v6499, 108
        %v7411 = vpop.permute.xlu0 %7410
        %7412 = vrot.lane.b32.xlu0 %v6500, 108
        %v7413 = vpop.permute.xlu0 %7412
        %7414 = vrot.lane.b32.xlu0 %v6501, 108
        %v7415 = vpop.permute.xlu0 %7414
        %7416 = vrot.lane.b32.xlu0 %v6502, 108
        %v7417 = vpop.permute.xlu0 %7416
        %7418 = vrot.lane.b32.xlu0 %v6503, 108
        %v7419 = vpop.permute.xlu0 %7418
        %7420 = vrot.lane.b32.xlu0 %v6504, 108
        %v7421 = vpop.permute.xlu0 %7420
        %7422 = vrot.lane.b32.xlu0 %v6505, 108
        %v7423 = vpop.permute.xlu0 %7422
        %v7424 = vsel %vm1163, %v7407, %v7409
        %v7425 = vsel %vm1163, %v7409, %v7411
        %v7426 = vsel %vm1163, %v7413, %v7415
        %v7427 = vsel %vm1163, %v7415, %v7417
        %v7428 = vsel %vm1163, %v7419, %v7421
        %v7429 = vsel %vm1163, %v7421, %v7423
        %v7437 = vsel %vm6548, %v7405, 0
        %v7439 = vsel %vm365, %v7428, 0
        %v7441 = vsel %vm365, %v7429, 0
        %v7443 = vsel %vm365, %v7423, 0
        %7445 = vmatprep.subr.mxu0 %v7425
        %7446 = vmatpush1.msra.mxu0 %v7424
        %7447 = vmatprep.subr.mxu0 %v7427
        %7448 = vmatpush1.msra.mxu0 %v7426
        %7449 = vmatprep.subr.mxu0 %v7441
        %7450 = vmatpush1.msra.mxu0 %v7439
        %7451 = vmatprep.subr.mxu0 0.0
        %7452 = vmatpush1.msra.mxu0 0.0
        %7453 = vmatprep.subr.mxu0 0.0
        %7454 = vmatpush1.msra.mxu0 0.0
        %7455 = vmatprep.subr.mxu0 0.0
        %7456 = vmatpush1.msra.mxu0 0.0
        %7457 = vmatprep.subr.mxu0 0.0
        %7458 = vmatpush1.msra.mxu0 0.0
        %7459 = vmatprep.subr.mxu0 0.0
        %7460 = vmatpush1.msra.mxu0 0.0
        %7461 = vmatprep.subr.mxu0 0.0
        %7462 = vmatpush1.msra.mxu0 0.0
        %7463 = vmatprep.subr.mxu0 0.0
        %7464 = vmatpush1.msra.mxu0 0.0
        %7465 = vmatprep.subr.mxu0 0.0
        %7466 = vmatpush1.msra.mxu0 0.0
        %7467 = vmatprep.subr.mxu0 0.0
        %7468 = vmatpush1.msra.mxu0 0.0
        %7469 = vmatprep.subr.mxu0 0.0
        %7470 = vmatpush1.msra.mxu0 0.0
        %7471 = vmatprep.subr.mxu0 0.0
        %7472 = vmatpush1.msra.mxu0 0.0
        %7473 = vmatprep.subr.mxu0 0.0
        %7474 = vmatpush1.msra.mxu0 0.0
        %7475 = vmatprep.subr.mxu0 0.0
        %7476 = vmatpush1.msra.mxu0 0.0
        %7477 = vmatprep.subr.mxu0 0.0
        %7478 = vmatpush1.msra.mxu0 0.0
        %7479 = vmatprep.subr.mxu0 0.0
        %7480 = vmatpush1.msra.mxu0 0.0
        %7481 = vmatprep.subr.mxu0 0.0
        %7482 = vmatpush1.msra.mxu0 0.0
        %7483 = vmatprep.subr.mxu0 0.0
        %7484 = vmatpush1.msra.mxu0 0.0
        %7485 = vmatprep.subr.mxu0 0.0
        %7486 = vmatpush1.msra.mxu0 0.0
        %7487 = vmatprep.subr.mxu0 0.0
        %7488 = vmatpush1.msra.mxu0 0.0
        %7489 = vmatprep.subr.mxu0 0.0
        %7490 = vmatpush1.msra.mxu0 0.0
        %7491 = vmatprep.subr.mxu0 0.0
        %7492 = vmatpush1.msra.mxu0 0.0
        %7493 = vmatprep.subr.mxu0 0.0
        %7494 = vmatpush1.msra.mxu0 0.0
        %7495 = vmatprep.subr.mxu0 0.0
        %7496 = vmatpush1.msra.mxu0 0.0
        %7497 = vmatprep.subr.mxu0 0.0
        %7498 = vmatpush1.msra.mxu0 0.0
        %7499 = vmatprep.subr.mxu0 0.0
        %7500 = vmatpush1.msra.mxu0 0.0
        %7501 = vmatprep.subr.mxu0 0.0
        %7502 = vmatpush1.msra.mxu0 0.0
        %7503 = vmatprep.subr.mxu0 0.0
        %7504 = vmatpush1.msra.mxu0 0.0
        %7505 = vmatprep.subr.mxu0 0.0
        %7506 = vmatpush1.msra.mxu0 0.0
        %7507 = vmatprep.subr.mxu0 0.0
        %7508 = vmatpush1.msra.mxu0 0.0
        %7509 = vmatprep.mubr.f32.mxu0 0.0
        %7510 = vmatmul.mubr.f32.gmra.mrb[0].mxu0 %v7437
        %v7511 = vpop.f32.mrb[0].mxu0
        %v7512 = vadd.f32 0.0, %v7511
        %v7513 = vpop.f32.mrb[0].mxu0
        %v7514 = vadd.f32 0.0, %v7513
        %7515 = vdwg.mxu0
        %7516 = vmatprep.subr.mxu0 0.0
        %7517 = vmatpush1.msra.mxu0 %v7411
        %7518 = vmatprep.subr.mxu0 0.0
        %7519 = vmatpush1.msra.mxu0 %v7417
        %7520 = vmatprep.subr.mxu0 0.0
        %7521 = vmatpush1.msra.mxu0 %v7443
        %7522 = vmatprep.subr.mxu0 0.0
        %7523 = vmatpush1.msra.mxu0 0.0
        %7524 = vmatprep.subr.mxu0 0.0
        %7525 = vmatpush1.msra.mxu0 0.0
        %7526 = vmatprep.subr.mxu0 0.0
        %7527 = vmatpush1.msra.mxu0 0.0
        %7528 = vmatprep.subr.mxu0 0.0
        %7529 = vmatpush1.msra.mxu0 0.0
        %7530 = vmatprep.subr.mxu0 0.0
        %7531 = vmatpush1.msra.mxu0 0.0
        %7532 = vmatprep.subr.mxu0 0.0
        %7533 = vmatpush1.msra.mxu0 0.0
        %7534 = vmatprep.subr.mxu0 0.0
        %7535 = vmatpush1.msra.mxu0 0.0
        %7536 = vmatprep.subr.mxu0 0.0
        %7537 = vmatpush1.msra.mxu0 0.0
        %7538 = vmatprep.subr.mxu0 0.0
        %7539 = vmatpush1.msra.mxu0 0.0
        %7540 = vmatprep.subr.mxu0 0.0
        %7541 = vmatpush1.msra.mxu0 0.0
        %7542 = vmatprep.subr.mxu0 0.0
        %7543 = vmatpush1.msra.mxu0 0.0
        %7544 = vmatprep.subr.mxu0 0.0
        %7545 = vmatpush1.msra.mxu0 0.0
        %7546 = vmatprep.subr.mxu0 0.0
        %7547 = vmatpush1.msra.mxu0 0.0
        %7548 = vmatprep.subr.mxu0 0.0
        %7549 = vmatpush1.msra.mxu0 0.0
        %7550 = vmatprep.subr.mxu0 0.0
        %7551 = vmatpush1.msra.mxu0 0.0
        %7552 = vmatprep.subr.mxu0 0.0
        %7553 = vmatpush1.msra.mxu0 0.0
        %7554 = vmatprep.subr.mxu0 0.0
        %7555 = vmatpush1.msra.mxu0 0.0
        %7556 = vmatprep.subr.mxu0 0.0
        %7557 = vmatpush1.msra.mxu0 0.0
        %7558 = vmatprep.subr.mxu0 0.0
        %7559 = vmatpush1.msra.mxu0 0.0
        %7560 = vmatprep.subr.mxu0 0.0
        %7561 = vmatpush1.msra.mxu0 0.0
        %7562 = vmatprep.subr.mxu0 0.0
        %7563 = vmatpush1.msra.mxu0 0.0
        %7564 = vmatprep.subr.mxu0 0.0
        %7565 = vmatpush1.msra.mxu0 0.0
        %7566 = vmatprep.subr.mxu0 0.0
        %7567 = vmatpush1.msra.mxu0 0.0
        %7568 = vmatprep.subr.mxu0 0.0
        %7569 = vmatpush1.msra.mxu0 0.0
        %7570 = vmatprep.subr.mxu0 0.0
        %7571 = vmatpush1.msra.mxu0 0.0
        %7572 = vmatprep.subr.mxu0 0.0
        %7573 = vmatpush1.msra.mxu0 0.0
        %7574 = vmatprep.subr.mxu0 0.0
        %7575 = vmatpush1.msra.mxu0 0.0
        %7576 = vmatprep.subr.mxu0 0.0
        %7577 = vmatpush1.msra.mxu0 0.0
        %7578 = vmatprep.subr.mxu0 0.0
        %7579 = vmatpush1.msra.mxu0 0.0
        %7580 = vmatprep.mubr.f32.mxu0 0.0
        %7581 = vmatmul.mubr.f32.gmra.mrb[0].mxu0 %v7437
        %v7582 = vpop.f32.mrb[0].mxu0
        %v7583 = vadd.f32 0.0, %v7582
        %v7584 = vpop.f32.mrb[0].mxu0
        %7585 = vdwg.mxu0
        %v7586 = vadd.f32 %v7401, %v7512
        %v7587 = vadd.f32 %v7402, %v7514
        %v7588 = vadd.f32 %v7403, %v7583
        %s7589 = scalar_lea.vmem %s6, 24
        %v7590 = vld [vmem:[%s7589] sm:$0xf]
        %7591 = vrot.lane.b32.xlu0 %v6497, 92
        %v7592 = vpop.permute.xlu0 %7591
        %7593 = vrot.lane.b32.xlu0 %v6498, 92
        %v7594 = vpop.permute.xlu0 %7593
        %7595 = vrot.lane.b32.xlu0 %v6499, 92
        %v7596 = vpop.permute.xlu0 %7595
        %7597 = vrot.lane.b32.xlu0 %v6500, 92
        %v7598 = vpop.permute.xlu0 %7597
        %7599 = vrot.lane.b32.xlu0 %v6501, 92
        %v7600 = vpop.permute.xlu0 %7599
        %7601 = vrot.lane.b32.xlu0 %v6502, 92
        %v7602 = vpop.permute.xlu0 %7601
        %7603 = vrot.lane.b32.xlu0 %v6503, 92
        %v7604 = vpop.permute.xlu0 %7603
        %7605 = vrot.lane.b32.xlu0 %v6504, 92
        %v7606 = vpop.permute.xlu0 %7605
        %7607 = vrot.lane.b32.xlu0 %v6505, 92
        %v7608 = vpop.permute.xlu0 %7607
        %v7609 = vsel %vm1327, %v7592, %v7594
        %v7610 = vsel %vm1327, %v7594, %v7596
        %v7611 = vsel %vm1327, %v7598, %v7600
        %v7612 = vsel %vm1327, %v7600, %v7602
        %v7613 = vsel %vm1327, %v7604, %v7606
        %v7614 = vsel %vm1327, %v7606, %v7608
        %v7622 = vsel %vm6548, %v7590, 0
        %v7624 = vsel %vm365, %v7613, 0
        %v7626 = vsel %vm365, %v7614, 0
        %v7628 = vsel %vm365, %v7608, 0
        %7630 = vmatprep.subr.mxu0 %v7610
        %7631 = vmatpush1.msra.mxu0 %v7609
        %7632 = vmatprep.subr.mxu0 %v7612
        %7633 = vmatpush1.msra.mxu0 %v7611
        %7634 = vmatprep.subr.mxu0 %v7626
        %7635 = vmatpush1.msra.mxu0 %v7624
        %7636 = vmatprep.subr.mxu0 0.0
        %7637 = vmatpush1.msra.mxu0 0.0
        %7638 = vmatprep.subr.mxu0 0.0
        %7639 = vmatpush1.msra.mxu0 0.0
        %7640 = vmatprep.subr.mxu0 0.0
        %7641 = vmatpush1.msra.mxu0 0.0
        %7642 = vmatprep.subr.mxu0 0.0
        %7643 = vmatpush1.msra.mxu0 0.0
        %7644 = vmatprep.subr.mxu0 0.0
        %7645 = vmatpush1.msra.mxu0 0.0
        %7646 = vmatprep.subr.mxu0 0.0
        %7647 = vmatpush1.msra.mxu0 0.0
        %7648 = vmatprep.subr.mxu0 0.0
        %7649 = vmatpush1.msra.mxu0 0.0
        %7650 = vmatprep.subr.mxu0 0.0
        %7651 = vmatpush1.msra.mxu0 0.0
        %7652 = vmatprep.subr.mxu0 0.0
        %7653 = vmatpush1.msra.mxu0 0.0
        %7654 = vmatprep.subr.mxu0 0.0
        %7655 = vmatpush1.msra.mxu0 0.0
        %7656 = vmatprep.subr.mxu0 0.0
        %7657 = vmatpush1.msra.mxu0 0.0
        %7658 = vmatprep.subr.mxu0 0.0
        %7659 = vmatpush1.msra.mxu0 0.0
        %7660 = vmatprep.subr.mxu0 0.0
        %7661 = vmatpush1.msra.mxu0 0.0
        %7662 = vmatprep.subr.mxu0 0.0
        %7663 = vmatpush1.msra.mxu0 0.0
        %7664 = vmatprep.subr.mxu0 0.0
        %7665 = vmatpush1.msra.mxu0 0.0
        %7666 = vmatprep.subr.mxu0 0.0
        %7667 = vmatpush1.msra.mxu0 0.0
        %7668 = vmatprep.subr.mxu0 0.0
        %7669 = vmatpush1.msra.mxu0 0.0
        %7670 = vmatprep.subr.mxu0 0.0
        %7671 = vmatpush1.msra.mxu0 0.0
        %7672 = vmatprep.subr.mxu0 0.0
        %7673 = vmatpush1.msra.mxu0 0.0
        %7674 = vmatprep.subr.mxu0 0.0
        %7675 = vmatpush1.msra.mxu0 0.0
        %7676 = vmatprep.subr.mxu0 0.0
        %7677 = vmatpush1.msra.mxu0 0.0
        %7678 = vmatprep.subr.mxu0 0.0
        %7679 = vmatpush1.msra.mxu0 0.0
        %7680 = vmatprep.subr.mxu0 0.0
        %7681 = vmatpush1.msra.mxu0 0.0
        %7682 = vmatprep.subr.mxu0 0.0
        %7683 = vmatpush1.msra.mxu0 0.0
        %7684 = vmatprep.subr.mxu0 0.0
        %7685 = vmatpush1.msra.mxu0 0.0
        %7686 = vmatprep.subr.mxu0 0.0
        %7687 = vmatpush1.msra.mxu0 0.0
        %7688 = vmatprep.subr.mxu0 0.0
        %7689 = vmatpush1.msra.mxu0 0.0
        %7690 = vmatprep.subr.mxu0 0.0
        %7691 = vmatpush1.msra.mxu0 0.0
        %7692 = vmatprep.subr.mxu0 0.0
        %7693 = vmatpush1.msra.mxu0 0.0
        %7694 = vmatprep.mubr.f32.mxu0 0.0
        %7695 = vmatmul.mubr.f32.gmra.mrb[0].mxu0 %v7622
        %v7696 = vpop.f32.mrb[0].mxu0
        %v7697 = vadd.f32 0.0, %v7696
        %v7698 = vpop.f32.mrb[0].mxu0
        %v7699 = vadd.f32 0.0, %v7698
        %7700 = vdwg.mxu0
        %7701 = vmatprep.subr.mxu0 0.0
        %7702 = vmatpush1.msra.mxu0 %v7596
        %7703 = vmatprep.subr.mxu0 0.0
        %7704 = vmatpush1.msra.mxu0 %v7602
        %7705 = vmatprep.subr.mxu0 0.0
        %7706 = vmatpush1.msra.mxu0 %v7628
        %7707 = vmatprep.subr.mxu0 0.0
        %7708 = vmatpush1.msra.mxu0 0.0
        %7709 = vmatprep.subr.mxu0 0.0
        %7710 = vmatpush1.msra.mxu0 0.0
        %7711 = vmatprep.subr.mxu0 0.0
        %7712 = vmatpush1.msra.mxu0 0.0
        %7713 = vmatprep.subr.mxu0 0.0
        %7714 = vmatpush1.msra.mxu0 0.0
        %7715 = vmatprep.subr.mxu0 0.0
        %7716 = vmatpush1.msra.mxu0 0.0
        %7717 = vmatprep.subr.mxu0 0.0
        %7718 = vmatpush1.msra.mxu0 0.0
        %7719 = vmatprep.subr.mxu0 0.0
        %7720 = vmatpush1.msra.mxu0 0.0
        %7721 = vmatprep.subr.mxu0 0.0
        %7722 = vmatpush1.msra.mxu0 0.0
        %7723 = vmatprep.subr.mxu0 0.0
        %7724 = vmatpush1.msra.mxu0 0.0
        %7725 = vmatprep.subr.mxu0 0.0
        %7726 = vmatpush1.msra.mxu0 0.0
        %7727 = vmatprep.subr.mxu0 0.0
        %7728 = vmatpush1.msra.mxu0 0.0
        %7729 = vmatprep.subr.mxu0 0.0
        %7730 = vmatpush1.msra.mxu0 0.0
        %7731 = vmatprep.subr.mxu0 0.0
        %7732 = vmatpush1.msra.mxu0 0.0
        %7733 = vmatprep.subr.mxu0 0.0
        %7734 = vmatpush1.msra.mxu0 0.0
        %7735 = vmatprep.subr.mxu0 0.0
        %7736 = vmatpush1.msra.mxu0 0.0
        %7737 = vmatprep.subr.mxu0 0.0
        %7738 = vmatpush1.msra.mxu0 0.0
        %7739 = vmatprep.subr.mxu0 0.0
        %7740 = vmatpush1.msra.mxu0 0.0
        %7741 = vmatprep.subr.mxu0 0.0
        %7742 = vmatpush1.msra.mxu0 0.0
        %7743 = vmatprep.subr.mxu0 0.0
        %7744 = vmatpush1.msra.mxu0 0.0
        %7745 = vmatprep.subr.mxu0 0.0
        %7746 = vmatpush1.msra.mxu0 0.0
        %7747 = vmatprep.subr.mxu0 0.0
        %7748 = vmatpush1.msra.mxu0 0.0
        %7749 = vmatprep.subr.mxu0 0.0
        %7750 = vmatpush1.msra.mxu0 0.0
        %7751 = vmatprep.subr.mxu0 0.0
        %7752 = vmatpush1.msra.mxu0 0.0
        %7753 = vmatprep.subr.mxu0 0.0
        %7754 = vmatpush1.msra.mxu0 0.0
        %7755 = vmatprep.subr.mxu0 0.0
        %7756 = vmatpush1.msra.mxu0 0.0
        %7757 = vmatprep.subr.mxu0 0.0
        %7758 = vmatpush1.msra.mxu0 0.0
        %7759 = vmatprep.subr.mxu0 0.0
        %7760 = vmatpush1.msra.mxu0 0.0
        %7761 = vmatprep.subr.mxu0 0.0
        %7762 = vmatpush1.msra.mxu0 0.0
        %7763 = vmatprep.subr.mxu0 0.0
        %7764 = vmatpush1.msra.mxu0 0.0
        %7765 = vmatprep.mubr.f32.mxu0 0.0
        %7766 = vmatmul.mubr.f32.gmra.mrb[0].mxu0 %v7622
        %v7767 = vpop.f32.mrb[0].mxu0
        %v7768 = vadd.f32 0.0, %v7767
        %v7769 = vpop.f32.mrb[0].mxu0
        %7770 = vdwg.mxu0
        %v7771 = vadd.f32 %v7586, %v7697
        %v7772 = vadd.f32 %v7587, %v7699
        %v7773 = vadd.f32 %v7588, %v7768
        %s7774 = scalar_lea.vmem %s6, 28
        %v7775 = vld [vmem:[%s7774] sm:$0xf]
        %7776 = vrot.lane.b32.xlu0 %v6497, 91
        %v7777 = vpop.permute.xlu0 %7776
        %7778 = vrot.lane.b32.xlu0 %v6498, 91
        %v7779 = vpop.permute.xlu0 %7778
        %7780 = vrot.lane.b32.xlu0 %v6499, 91
        %v7781 = vpop.permute.xlu0 %7780
        %7782 = vrot.lane.b32.xlu0 %v6500, 91
        %v7783 = vpop.permute.xlu0 %7782
        %7784 = vrot.lane.b32.xlu0 %v6501, 91
        %v7785 = vpop.permute.xlu0 %7784
        %7786 = vrot.lane.b32.xlu0 %v6502, 91
        %v7787 = vpop.permute.xlu0 %7786
        %7788 = vrot.lane.b32.xlu0 %v6503, 91
        %v7789 = vpop.permute.xlu0 %7788
        %7790 = vrot.lane.b32.xlu0 %v6504, 91
        %v7791 = vpop.permute.xlu0 %7790
        %7792 = vrot.lane.b32.xlu0 %v6505, 91
        %v7793 = vpop.permute.xlu0 %7792
        %v7794 = vsel %vm1491, %v7777, %v7779
        %v7795 = vsel %vm1491, %v7779, %v7781
        %v7796 = vsel %vm1491, %v7783, %v7785
        %v7797 = vsel %vm1491, %v7785, %v7787
        %v7798 = vsel %vm1491, %v7789, %v7791
        %v7799 = vsel %vm1491, %v7791, %v7793
        %v7807 = vsel %vm6548, %v7775, 0
        %v7809 = vsel %vm365, %v7798, 0
        %v7811 = vsel %vm365, %v7799, 0
        %v7813 = vsel %vm365, %v7793, 0
        %7815 = vmatprep.subr.mxu0 %v7795
        %7816 = vmatpush1.msra.mxu0 %v7794
        %7817 = vmatprep.subr.mxu0 %v7797
        %7818 = vmatpush1.msra.mxu0 %v7796
        %7819 = vmatprep.subr.mxu0 %v7811
        %7820 = vmatpush1.msra.mxu0 %v7809
        %7821 = vmatprep.subr.mxu0 0.0
        %7822 = vmatpush1.msra.mxu0 0.0
        %7823 = vmatprep.subr.mxu0 0.0
        %7824 = vmatpush1.msra.mxu0 0.0
        %7825 = vmatprep.subr.mxu0 0.0
        %7826 = vmatpush1.msra.mxu0 0.0
        %7827 = vmatprep.subr.mxu0 0.0
        %7828 = vmatpush1.msra.mxu0 0.0
        %7829 = vmatprep.subr.mxu0 0.0
        %7830 = vmatpush1.msra.mxu0 0.0
        %7831 = vmatprep.subr.mxu0 0.0
        %7832 = vmatpush1.msra.mxu0 0.0
        %7833 = vmatprep.subr.mxu0 0.0
        %7834 = vmatpush1.msra.mxu0 0.0
        %7835 = vmatprep.subr.mxu0 0.0
        %7836 = vmatpush1.msra.mxu0 0.0
        %7837 = vmatprep.subr.mxu0 0.0
        %7838 = vmatpush1.msra.mxu0 0.0
        %7839 = vmatprep.subr.mxu0 0.0
        %7840 = vmatpush1.msra.mxu0 0.0
        %7841 = vmatprep.subr.mxu0 0.0
        %7842 = vmatpush1.msra.mxu0 0.0
        %7843 = vmatprep.subr.mxu0 0.0
        %7844 = vmatpush1.msra.mxu0 0.0
        %7845 = vmatprep.subr.mxu0 0.0
        %7846 = vmatpush1.msra.mxu0 0.0
        %7847 = vmatprep.subr.mxu0 0.0
        %7848 = vmatpush1.msra.mxu0 0.0
        %7849 = vmatprep.subr.mxu0 0.0
        %7850 = vmatpush1.msra.mxu0 0.0
        %7851 = vmatprep.subr.mxu0 0.0
        %7852 = vmatpush1.msra.mxu0 0.0
        %7853 = vmatprep.subr.mxu0 0.0
        %7854 = vmatpush1.msra.mxu0 0.0
        %7855 = vmatprep.subr.mxu0 0.0
        %7856 = vmatpush1.msra.mxu0 0.0
        %7857 = vmatprep.subr.mxu0 0.0
        %7858 = vmatpush1.msra.mxu0 0.0
        %7859 = vmatprep.subr.mxu0 0.0
        %7860 = vmatpush1.msra.mxu0 0.0
        %7861 = vmatprep.subr.mxu0 0.0
        %7862 = vmatpush1.msra.mxu0 0.0
        %7863 = vmatprep.subr.mxu0 0.0
        %7864 = vmatpush1.msra.mxu0 0.0
        %7865 = vmatprep.subr.mxu0 0.0
        %7866 = vmatpush1.msra.mxu0 0.0
        %7867 = vmatprep.subr.mxu0 0.0
        %7868 = vmatpush1.msra.mxu0 0.0
        %7869 = vmatprep.subr.mxu0 0.0
        %7870 = vmatpush1.msra.mxu0 0.0
        %7871 = vmatprep.subr.mxu0 0.0
        %7872 = vmatpush1.msra.mxu0 0.0
        %7873 = vmatprep.subr.mxu0 0.0
        %7874 = vmatpush1.msra.mxu0 0.0
        %7875 = vmatprep.subr.mxu0 0.0
        %7876 = vmatpush1.msra.mxu0 0.0
        %7877 = vmatprep.subr.mxu0 0.0
        %7878 = vmatpush1.msra.mxu0 0.0
        %7879 = vmatprep.mubr.f32.mxu0 0.0
        %7880 = vmatmul.mubr.f32.gmra.mrb[0].mxu0 %v7807
        %v7881 = vpop.f32.mrb[0].mxu0
        %v7882 = vadd.f32 0.0, %v7881
        %v7883 = vpop.f32.mrb[0].mxu0
        %v7884 = vadd.f32 0.0, %v7883
        %7885 = vdwg.mxu0
        %7886 = vmatprep.subr.mxu0 0.0
        %7887 = vmatpush1.msra.mxu0 %v7781
        %7888 = vmatprep.subr.mxu0 0.0
        %7889 = vmatpush1.msra.mxu0 %v7787
        %7890 = vmatprep.subr.mxu0 0.0
        %7891 = vmatpush1.msra.mxu0 %v7813
        %7892 = vmatprep.subr.mxu0 0.0
        %7893 = vmatpush1.msra.mxu0 0.0
        %7894 = vmatprep.subr.mxu0 0.0
        %7895 = vmatpush1.msra.mxu0 0.0
        %7896 = vmatprep.subr.mxu0 0.0
        %7897 = vmatpush1.msra.mxu0 0.0
        %7898 = vmatprep.subr.mxu0 0.0
        %7899 = vmatpush1.msra.mxu0 0.0
        %7900 = vmatprep.subr.mxu0 0.0
        %7901 = vmatpush1.msra.mxu0 0.0
        %7902 = vmatprep.subr.mxu0 0.0
        %7903 = vmatpush1.msra.mxu0 0.0
        %7904 = vmatprep.subr.mxu0 0.0
        %7905 = vmatpush1.msra.mxu0 0.0
        %7906 = vmatprep.subr.mxu0 0.0
        %7907 = vmatpush1.msra.mxu0 0.0
        %7908 = vmatprep.subr.mxu0 0.0
        %7909 = vmatpush1.msra.mxu0 0.0
        %7910 = vmatprep.subr.mxu0 0.0
        %7911 = vmatpush1.msra.mxu0 0.0
        %7912 = vmatprep.subr.mxu0 0.0
        %7913 = vmatpush1.msra.mxu0 0.0
        %7914 = vmatprep.subr.mxu0 0.0
        %7915 = vmatpush1.msra.mxu0 0.0
        %7916 = vmatprep.subr.mxu0 0.0
        %7917 = vmatpush1.msra.mxu0 0.0
        %7918 = vmatprep.subr.mxu0 0.0
        %7919 = vmatpush1.msra.mxu0 0.0
        %7920 = vmatprep.subr.mxu0 0.0
        %7921 = vmatpush1.msra.mxu0 0.0
        %7922 = vmatprep.subr.mxu0 0.0
        %7923 = vmatpush1.msra.mxu0 0.0
        %7924 = vmatprep.subr.mxu0 0.0
        %7925 = vmatpush1.msra.mxu0 0.0
        %7926 = vmatprep.subr.mxu0 0.0
        %7927 = vmatpush1.msra.mxu0 0.0
        %7928 = vmatprep.subr.mxu0 0.0
        %7929 = vmatpush1.msra.mxu0 0.0
        %7930 = vmatprep.subr.mxu0 0.0
        %7931 = vmatpush1.msra.mxu0 0.0
        %7932 = vmatprep.subr.mxu0 0.0
        %7933 = vmatpush1.msra.mxu0 0.0
        %7934 = vmatprep.subr.mxu0 0.0
        %7935 = vmatpush1.msra.mxu0 0.0
        %7936 = vmatprep.subr.mxu0 0.0
        %7937 = vmatpush1.msra.mxu0 0.0
        %7938 = vmatprep.subr.mxu0 0.0
        %7939 = vmatpush1.msra.mxu0 0.0
        %7940 = vmatprep.subr.mxu0 0.0
        %7941 = vmatpush1.msra.mxu0 0.0
        %7942 = vmatprep.subr.mxu0 0.0
        %7943 = vmatpush1.msra.mxu0 0.0
        %7944 = vmatprep.subr.mxu0 0.0
        %7945 = vmatpush1.msra.mxu0 0.0
        %7946 = vmatprep.subr.mxu0 0.0
        %7947 = vmatpush1.msra.mxu0 0.0
        %7948 = vmatprep.subr.mxu0 0.0
        %7949 = vmatpush1.msra.mxu0 0.0
        %7950 = vmatprep.mubr.f32.mxu0 0.0
        %7951 = vmatmul.mubr.f32.gmra.mrb[0].mxu0 %v7807
        %v7952 = vpop.f32.mrb[0].mxu0
        %v7953 = vadd.f32 0.0, %v7952
        %v7954 = vpop.f32.mrb[0].mxu0
        %7955 = vdwg.mxu0
        %v7956 = vadd.f32 %v7771, %v7882
        %v7957 = vadd.f32 %v7772, %v7884
        %v7958 = vadd.f32 %v7773, %v7953
        %s7959 = scalar_lea.vmem %s6, 32
        %v7960 = vld [vmem:[%s7959] sm:$0xf]
        %7961 = vrot.lane.b32.xlu0 %v6497, 90
        %v7962 = vpop.permute.xlu0 %7961
        %7963 = vrot.lane.b32.xlu0 %v6498, 90
        %v7964 = vpop.permute.xlu0 %7963
        %7965 = vrot.lane.b32.xlu0 %v6499, 90
        %v7966 = vpop.permute.xlu0 %7965
        %7967 = vrot.lane.b32.xlu0 %v6500, 90
        %v7968 = vpop.permute.xlu0 %7967
        %7969 = vrot.lane.b32.xlu0 %v6501, 90
        %v7970 = vpop.permute.xlu0 %7969
        %7971 = vrot.lane.b32.xlu0 %v6502, 90
        %v7972 = vpop.permute.xlu0 %7971
        %7973 = vrot.lane.b32.xlu0 %v6503, 90
        %v7974 = vpop.permute.xlu0 %7973
        %7975 = vrot.lane.b32.xlu0 %v6504, 90
        %v7976 = vpop.permute.xlu0 %7975
        %7977 = vrot.lane.b32.xlu0 %v6505, 90
        %v7978 = vpop.permute.xlu0 %7977
        %v7979 = vsel %vm1655, %v7962, %v7964
        %v7980 = vsel %vm1655, %v7964, %v7966
        %v7981 = vsel %vm1655, %v7968, %v7970
        %v7982 = vsel %vm1655, %v7970, %v7972
        %v7983 = vsel %vm1655, %v7974, %v7976
        %v7984 = vsel %vm1655, %v7976, %v7978
        %v7992 = vsel %vm6548, %v7960, 0
        %v7994 = vsel %vm365, %v7983, 0
        %v7996 = vsel %vm365, %v7984, 0
        %v7998 = vsel %vm365, %v7978, 0
        %8000 = vmatprep.subr.mxu0 %v7980
        %8001 = vmatpush1.msra.mxu0 %v7979
        %8002 = vmatprep.subr.mxu0 %v7982
        %8003 = vmatpush1.msra.mxu0 %v7981
        %8004 = vmatprep.subr.mxu0 %v7996
        %8005 = vmatpush1.msra.mxu0 %v7994
        %8006 = vmatprep.subr.mxu0 0.0
        %8007 = vmatpush1.msra.mxu0 0.0
        %8008 = vmatprep.subr.mxu0 0.0
        %8009 = vmatpush1.msra.mxu0 0.0
        %8010 = vmatprep.subr.mxu0 0.0
        %8011 = vmatpush1.msra.mxu0 0.0
        %8012 = vmatprep.subr.mxu0 0.0
        %8013 = vmatpush1.msra.mxu0 0.0
        %8014 = vmatprep.subr.mxu0 0.0
        %8015 = vmatpush1.msra.mxu0 0.0
        %8016 = vmatprep.subr.mxu0 0.0
        %8017 = vmatpush1.msra.mxu0 0.0
        %8018 = vmatprep.subr.mxu0 0.0
        %8019 = vmatpush1.msra.mxu0 0.0
        %8020 = vmatprep.subr.mxu0 0.0
        %8021 = vmatpush1.msra.mxu0 0.0
        %8022 = vmatprep.subr.mxu0 0.0
        %8023 = vmatpush1.msra.mxu0 0.0
        %8024 = vmatprep.subr.mxu0 0.0
        %8025 = vmatpush1.msra.mxu0 0.0
        %8026 = vmatprep.subr.mxu0 0.0
        %8027 = vmatpush1.msra.mxu0 0.0
        %8028 = vmatprep.subr.mxu0 0.0
        %8029 = vmatpush1.msra.mxu0 0.0
        %8030 = vmatprep.subr.mxu0 0.0
        %8031 = vmatpush1.msra.mxu0 0.0
        %8032 = vmatprep.subr.mxu0 0.0
        %8033 = vmatpush1.msra.mxu0 0.0
        %8034 = vmatprep.subr.mxu0 0.0
        %8035 = vmatpush1.msra.mxu0 0.0
        %8036 = vmatprep.subr.mxu0 0.0
        %8037 = vmatpush1.msra.mxu0 0.0
        %8038 = vmatprep.subr.mxu0 0.0
        %8039 = vmatpush1.msra.mxu0 0.0
        %8040 = vmatprep.subr.mxu0 0.0
        %8041 = vmatpush1.msra.mxu0 0.0
        %8042 = vmatprep.subr.mxu0 0.0
        %8043 = vmatpush1.msra.mxu0 0.0
        %8044 = vmatprep.subr.mxu0 0.0
        %8045 = vmatpush1.msra.mxu0 0.0
        %8046 = vmatprep.subr.mxu0 0.0
        %8047 = vmatpush1.msra.mxu0 0.0
        %8048 = vmatprep.subr.mxu0 0.0
        %8049 = vmatpush1.msra.mxu0 0.0
        %8050 = vmatprep.subr.mxu0 0.0
        %8051 = vmatpush1.msra.mxu0 0.0
        %8052 = vmatprep.subr.mxu0 0.0
        %8053 = vmatpush1.msra.mxu0 0.0
        %8054 = vmatprep.subr.mxu0 0.0
        %8055 = vmatpush1.msra.mxu0 0.0
        %8056 = vmatprep.subr.mxu0 0.0
        %8057 = vmatpush1.msra.mxu0 0.0
        %8058 = vmatprep.subr.mxu0 0.0
        %8059 = vmatpush1.msra.mxu0 0.0
        %8060 = vmatprep.subr.mxu0 0.0
        %8061 = vmatpush1.msra.mxu0 0.0
        %8062 = vmatprep.subr.mxu0 0.0
        %8063 = vmatpush1.msra.mxu0 0.0
        %8064 = vmatprep.mubr.f32.mxu0 0.0
        %8065 = vmatmul.mubr.f32.gmra.mrb[0].mxu0 %v7992
        %v8066 = vpop.f32.mrb[0].mxu0
        %v8067 = vadd.f32 0.0, %v8066
        %v8068 = vpop.f32.mrb[0].mxu0
        %v8069 = vadd.f32 0.0, %v8068
        %8070 = vdwg.mxu0
        %8071 = vmatprep.subr.mxu0 0.0
        %8072 = vmatpush1.msra.mxu0 %v7966
        %8073 = vmatprep.subr.mxu0 0.0
        %8074 = vmatpush1.msra.mxu0 %v7972
        %8075 = vmatprep.subr.mxu0 0.0
        %8076 = vmatpush1.msra.mxu0 %v7998
        %8077 = vmatprep.subr.mxu0 0.0
        %8078 = vmatpush1.msra.mxu0 0.0
        %8079 = vmatprep.subr.mxu0 0.0
        %8080 = vmatpush1.msra.mxu0 0.0
        %8081 = vmatprep.subr.mxu0 0.0
        %8082 = vmatpush1.msra.mxu0 0.0
        %8083 = vmatprep.subr.mxu0 0.0
        %8084 = vmatpush1.msra.mxu0 0.0
        %8085 = vmatprep.subr.mxu0 0.0
        %8086 = vmatpush1.msra.mxu0 0.0
        %8087 = vmatprep.subr.mxu0 0.0
        %8088 = vmatpush1.msra.mxu0 0.0
        %8089 = vmatprep.subr.mxu0 0.0
        %8090 = vmatpush1.msra.mxu0 0.0
        %8091 = vmatprep.subr.mxu0 0.0
        %8092 = vmatpush1.msra.mxu0 0.0
        %8093 = vmatprep.subr.mxu0 0.0
        %8094 = vmatpush1.msra.mxu0 0.0
        %8095 = vmatprep.subr.mxu0 0.0
        %8096 = vmatpush1.msra.mxu0 0.0
        %8097 = vmatprep.subr.mxu0 0.0
        %8098 = vmatpush1.msra.mxu0 0.0
        %8099 = vmatprep.subr.mxu0 0.0
        %8100 = vmatpush1.msra.mxu0 0.0
        %8101 = vmatprep.subr.mxu0 0.0
        %8102 = vmatpush1.msra.mxu0 0.0
        %8103 = vmatprep.subr.mxu0 0.0
        %8104 = vmatpush1.msra.mxu0 0.0
        %8105 = vmatprep.subr.mxu0 0.0
        %8106 = vmatpush1.msra.mxu0 0.0
        %8107 = vmatprep.subr.mxu0 0.0
        %8108 = vmatpush1.msra.mxu0 0.0
        %8109 = vmatprep.subr.mxu0 0.0
        %8110 = vmatpush1.msra.mxu0 0.0
        %8111 = vmatprep.subr.mxu0 0.0
        %8112 = vmatpush1.msra.mxu0 0.0
        %8113 = vmatprep.subr.mxu0 0.0
        %8114 = vmatpush1.msra.mxu0 0.0
        %8115 = vmatprep.subr.mxu0 0.0
        %8116 = vmatpush1.msra.mxu0 0.0
        %8117 = vmatprep.subr.mxu0 0.0
        %8118 = vmatpush1.msra.mxu0 0.0
        %8119 = vmatprep.subr.mxu0 0.0
        %8120 = vmatpush1.msra.mxu0 0.0
        %8121 = vmatprep.subr.mxu0 0.0
        %8122 = vmatpush1.msra.mxu0 0.0
        %8123 = vmatprep.subr.mxu0 0.0
        %8124 = vmatpush1.msra.mxu0 0.0
        %8125 = vmatprep.subr.mxu0 0.0
        %8126 = vmatpush1.msra.mxu0 0.0
        %8127 = vmatprep.subr.mxu0 0.0
        %8128 = vmatpush1.msra.mxu0 0.0
        %8129 = vmatprep.subr.mxu0 0.0
        %8130 = vmatpush1.msra.mxu0 0.0
        %8131 = vmatprep.subr.mxu0 0.0
        %8132 = vmatpush1.msra.mxu0 0.0
        %8133 = vmatprep.subr.mxu0 0.0
        %8134 = vmatpush1.msra.mxu0 0.0
        %8135 = vmatprep.mubr.f32.mxu0 0.0
        %8136 = vmatmul.mubr.f32.gmra.mrb[0].mxu0 %v7992
        %v8137 = vpop.f32.mrb[0].mxu0
        %v8138 = vadd.f32 0.0, %v8137
        %v8139 = vpop.f32.mrb[0].mxu0
        %8140 = vdwg.mxu0
        %v8141 = vadd.f32 %v7956, %v8067
        %v8142 = vadd.f32 %v7957, %v8069
        %v8143 = vadd.f32 %v7958, %v8138
        %s8144 = scalar_lea.vmem %s7, 16
        %v8145 = vld [vmem:[%s8144] sm:$0xf]
        %8147 = vset.pattern.permute.xlu0 0
        %8148 = vperm.xlu0 %8147, %v8145
        %v8149 = vpop.permute.xlu0 %8148
        %v8151 = vadd.f32 %v8141, %v8149
        %v8152 = vadd.f32 %v8142, %v8149
        %v8153 = vadd.f32 %v8143, %v8149
        %v8154 = vld [vmem:[%s289] sm:$0xff]
        %v8155 = vld [vmem:[%s289 + $0x8] sm:$0xf]
        %v8156 = vmul.f32 %v8151, 0.2
        %v8157 = vmul.f32 %v8152, 0.2
        %v8158 = vmul.f32 %v8153, 0.2
        %v8161 = vcombine.high %v8154, %v8154
        %8162 = vrot.lane.b32.xlu0 %v8154, 109
        %v8163 = vpop.permute.xlu0 %8162
        %8164 = vrot.lane.b32.xlu0 %v8161, 109
        %v8165 = vpop.permute.xlu0 %8164
        %8166 = vrot.lane.b32.xlu0 %v8155, 109
        %v8167 = vpop.permute.xlu0 %8166
        %v8168 = vsel %vm999, %v8163, %v8165
        %v8169 = vsel %vm999, %v8165, %v8167
        %v8173 = vadd.f32 %v8156, %v8168
        %v8174 = vadd.f32 %v8157, %v8169
        %v8175 = vadd.f32 %v8158, %v8167
        %v8178 = vcombine.low %v8173, %v8174
        %8180 = vst [vmem:[%s321] sm:$0xff] %v8178
        %vm8181 = vcmask 257024
        %8182 = vst.msk [vmem:[%s321 + $0x8] sm:$0xf] %vm8181, %v8175
        %s8183 = sand.u32 %s206, 1
        %s8184 = scalar_lea.sflag [#allocation5], %s8183
        %s8185 = sand.u32 %s206, 1
        %s8186 = smul.addr %s8185, 12
        %s8187 = scalar_lea.vmem [#allocation6], %s8186
        // Predicated region
        $region57: #{tpu_custom_call.1} parent=51 // pred_check
          %p8188 = pneg %p216
        $region58: #{tpu_custom_call.1} parent=51 // pred_check_branch
          %8190 = sbr.rel (%p8188) target = $region60
        $region59: #{tpu_custom_call.1} parent=51 // pred_region
          %s8192 = ssub.s32 192, 192
          %8193 = vsyncadd %s8184, %s8192
          %s8194 = smul.addr %s25, 3
          %s8195 = smul.addr %s8194, 64
          %s8196 = scalar_lea.hbm %s8, %s8195
          %s8198 = sshll.u32 %s8187, 4
          %s8199 = int_to_ptr.vmem [resolvable:$true] %s8198
          %8201 = dma.vmem_to_hbm [thread:$0]  %s8199, 192, %s8196, %s8184
        $region60: #{tpu_custom_call.1} parent=51 // pred_fallthru
          _
      $region52: #{tpu_custom_call.1} parent=5 // pred_fallthru
        _
      %p8202 = scmp.le.s32.totalorder 2, %s20
      // Predicated region
      $region61: #{tpu_custom_call.1} parent=5 // pred_check
        %p8203 = pneg %p8202
      $region62: #{tpu_custom_call.1} parent=5 // pred_check_branch
        %8205 = sbr.rel (%p8203) target = $region64
      $region63: #{tpu_custom_call.1} parent=5 // pred_region
        %s8206 = ssub.s32 %s20, 2
        // Predicated region
        $region65: #{tpu_custom_call.1} parent=63 // pred_check
          %p8207 = pneg %p222
        $region66: #{tpu_custom_call.1} parent=63 // pred_check_branch
          %8209 = sbr.rel (%p8207) target = $region68
        $region67: #{tpu_custom_call.1} parent=63 // pred_region
          %s8210 = sand.u32 %s207, 1
          %s8211 = scalar_lea.sflag [#allocation5], %s8210
          %s8212 = sand.u32 %s207, 1
          %s8213 = smul.addr %s8212, 12
          %s8214 = scalar_lea.vmem [#allocation6], %s8213
          %8215 = dma.done %s8211, 192
        $region68: #{tpu_custom_call.1} parent=63 // pred_fallthru
          _
      $region64: #{tpu_custom_call.1} parent=5 // pred_fallthru
        _
    $region6: #{tpu_custom_call.1} parent=1 // loop_footer
      %s24 = sadd.s32 1, %s20
    $region7: #{tpu_custom_call.1} parent=1 // loop_footer_branch
      %19 = sbr.rel target = $region3
    $region8: #{tpu_custom_call.1} parent=1 // loop_exit
      _
    %8216 = vsyncpa [#allocation4], 1
    %s8217 = scalar_lea.sflag [#allocation4], 1
    %8218 = vsyncpa %s8217, 1
    %8219 = vsyncpa [#allocation5], 1
    %s8220 = scalar_lea.sflag [#allocation5], 1
    %8221 = vsyncpa %s8220, 1

</llo_original>
